<compile_context>
chip_gen: v7x
topology: tpu7x:2x2x1
jax: 0.10.0
libtpu: 0.0.40
codegen_flags: <defaults>
</compile_context>

<pallas_src>
import functools

import jax
import jax.numpy as jnp
from jax.experimental import pallas as pl
from jax.experimental.pallas import tpu as pltpu

# 3x3 neighbourhood offsets in (ky, kx) row-major order — must match the
# (ky, kx) ordering of the per-tap weight matrices built in the wrapper.
_OFFSETS = tuple((dy, dx) for dy in (-1, 0, 1) for dx in (-1, 0, 1))


def _encoder_fused_kernel(x_ref, w1_ref, b1_ref, w2_ref, b2_ref, out_ref, *, W):
    """Fused Conv3x3+ReLU -> Conv3x3, Bt images per grid step, lane-dense.

    x_ref  : (Bt, Cin, HW)    flattened NCHW input block (f32, VMEM)
    w1_ref : (9, Chid, Cin)   layer-1 per-tap weights, tap order (ky, kx)
    b1_ref : (Chid, 1)        f32
    w2_ref : (9, 2*Lc, Chid)  layer-2 per-tap weights
    b2_ref : (2*Lc, 1)        f32
    out_ref: (Bt, 2*Lc, HW)   lane-dense output block (transpose/split in wrapper)
    """
    Bt, cin, HW = x_ref.shape
    cdt = w1_ref.dtype  # MXU operand dtype (bf16 on v6e/v7x; f32 also works)

    # Boundary masks / roll shifts, shared by every image, layer and tap.
    # Computed once per grid step; masks depend only on the lane position.
    lane = jax.lax.broadcasted_iota(jnp.int32, (1, HW), 1)
    col = lane % W
    tap_plan = []
    for dy, dx in _OFFSETS:
        conds = []
        if dy == -1:
            conds.append(lane >= W)          # source row y-1 exists
        if dy == 1:
            conds.append(lane < HW - W)      # source row y+1 exists
        if dx == -1:
            conds.append(col >= 1)           # source col x-1 exists
        if dx == 1:
            conds.append(col <= W - 2)       # source col x+1 exists
        mask = None
        for c in conds:
            mask = c if mask is None else (mask & c)
        shift = (-(dy * W + dx)) % HW        # roll so out[p] = in[p + dy*W + dx]
        tap_plan.append((shift, mask))

    def conv3x3(src, w_taps_ref):
        """SAME 3x3 conv of a lane-dense (C, HW) map: 9 roll+mask taps,
        one small MXU matmul per tap, f32 accumulation."""
        acc = None
        for t, (shift, mask) in enumerate(tap_plan):
            if mask is None:                 # center tap: no roll, no mask
                tap = src
            else:
                tap = pltpu.roll(src, shift, 1)          # XLU lane rotate
                tap = jnp.where(mask, tap, 0.0)          # zero the halo (f32 VPU)
            part = jnp.dot(w_taps_ref[t], tap.astype(cdt),
                           preferred_element_type=jnp.float32)
            acc = part if acc is None else acc + part
        return acc

    b1 = b1_ref[...]
    b2 = b2_ref[...]
    for b in range(Bt):                      # unrolled loop: Bt images per step
        x = x_ref[b]                                          # (Cin, HW) f32
        h = jnp.maximum(conv3x3(x, w1_ref) + b1, 0.0)         # (Chid, HW) f32
        y = conv3x3(h, w2_ref) + b2                           # (2*Lc, HW) f32
        out_ref[b] = y.astype(out_ref.dtype)                  # lane-dense store


def _pick_block_batch(batch, max_block=8):
    """Largest Bt that divides the batch, amortizes per-step overhead, and
    keeps >= 2 grid steps (so both v7x TensorCores get work when batch >= 2)."""
    best = 1
    for bt in range(1, min(batch, max_block) + 1):
        if batch % bt:
            continue
        if batch >= 2 and batch // bt < 2:
            continue
        best = bt
    return best


def encoder_forward(x_nchw, params, *, block_batch=None, mxu_dtype=jnp.bfloat16):
    """Encoder.forward: (mu, log_sigma) = split(model(x)).  Input in NCHW."""
    (w1, b1), (w2, b2) = params
    B, cin, H, W = x_nchw.shape
    chid = w1.shape[-1]
    cout2 = w2.shape[-1]                    # = 2 * latent_c
    latent_c = cout2 // 2
    HW = H * W

    if block_batch is None:
        block_batch = _pick_block_batch(B)
    assert B % block_batch == 0
    grid = (B // block_batch,)

    # Per-tap weight matrices (Cout, Cin), tap order (ky, kx) row-major to
    # match _OFFSETS.  These are the MXU operands -> cast to mxu_dtype.
    w1t = jnp.transpose(w1, (0, 1, 3, 2)).reshape(9, chid, cin).astype(mxu_dtype)
    w2t = jnp.transpose(w2, (0, 1, 3, 2)).reshape(9, cout2, chid).astype(mxu_dtype)
    b1c = b1.reshape(chid, 1).astype(jnp.float32)
    b2c = b2.reshape(cout2, 1).astype(jnp.float32)

    # Lane-dense flattened spatial layout (HW on the 128-lane axis); this
    # reshape is metadata-cheap in HBM.
    x_flat = x_nchw.reshape(B, cin, HW)

    kernel = functools.partial(_encoder_fused_kernel, W=W)
    y = pl.pallas_call(
        kernel,
        out_shape=jax.ShapeDtypeStruct((B, cout2, HW), jnp.float32),
        grid=grid,
        in_specs=[
            pl.BlockSpec((block_batch, cin, HW), lambda i: (i, 0, 0)),
            # Constant index maps: weights/biases stay resident across steps.
            pl.BlockSpec((9, chid, cin), lambda i: (0, 0, 0)),
            pl.BlockSpec((chid, 1), lambda i: (0, 0)),
            pl.BlockSpec((9, cout2, chid), lambda i: (0, 0, 0)),
            pl.BlockSpec((cout2, 1), lambda i: (0, 0)),
        ],
        out_specs=pl.BlockSpec((block_batch, cout2, HW), lambda i: (i, 0, 0)),
        compiler_params=pltpu.CompilerParams(dimension_semantics=("parallel",)),
    )(x_flat, w1t, b1c, w2t, b2c)

    # Channels-last tokens + Encoder.forward split, done as cheap XLA ops so
    # the kernel's stores stay 256-lane dense instead of latent_c(=8)-wide.
    tokens = jnp.transpose(y, (0, 2, 1))            # (B, HW, 2*latent_c)
    return tokens[..., :latent_c], tokens[..., latent_c:]


def init_encoder_params(key, in_c, hidden_c, latent_c):
    """PyTorch Conv2d default init (uniform +/- 1/sqrt(fan_in)), HWIO layout."""
    k1, k2, k3, k4 = jax.random.split(key, 4)
    bound1 = 1.0 / (in_c * 9) ** 0.5
    bound2 = 1.0 / (hidden_c * 9) ** 0.5
    w1 = jax.random.uniform(k1, (3, 3, in_c, hidden_c), jnp.float32, -bound1, bound1)
    b1 = jax.random.uniform(k2, (hidden_c,), jnp.float32, -bound1, bound1)
    w2 = jax.random.uniform(k3, (3, 3, hidden_c, 2 * latent_c), jnp.float32, -bound2, bound2)
    b2 = jax.random.uniform(k4, (2 * latent_c,), jnp.float32, -bound2, bound2)
    return (w1, b1), (w2, b2)


def _reference_forward(x_nchw, params, latent_c):
    (w1, b1), (w2, b2) = params
    dn = ("NCHW", "HWIO", "NCHW")
    h = jax.lax.conv_general_dilated(x_nchw, w1, (1, 1), "SAME", dimension_numbers=dn)
    h = jnp.maximum(h + b1.reshape(1, -1, 1, 1), 0.0)
    y = jax.lax.conv_general_dilated(h, w2, (1, 1), "SAME", dimension_numbers=dn)
    y = y + b2.reshape(1, -1, 1, 1)
    B, c2, H, W = y.shape
    tokens = jnp.transpose(y, (0, 2, 3, 1)).reshape(B, H * W, c2)
    return tokens[..., :latent_c], tokens[..., latent_c:]


if __name__ == "__main__":
    key = jax.random.PRNGKey(0)
    k_x, k_p = jax.random.split(key)

    B, cin, H, W = 8, 4, 16, 16
    hidden_c, latent_c = 32, 8

    x = jax.random.normal(k_x, (B, cin, H, W), jnp.float32)
    params = init_encoder_params(k_p, cin, hidden_c, latent_c)
    mu_ref, ls_ref = _reference_forward(x, params, latent_c)
    mu_ref = jax.block_until_ready(mu_ref)
    ls_ref = jax.block_until_ready(ls_ref)

    # Production config: bf16 MXU operands (f32 accumulation), Bt images/step.
    mu, log_sigma = encoder_forward(x, params, mxu_dtype=jnp.bfloat16)
    mu = jax.block_until_ready(mu)
    log_sigma = jax.block_until_ready(log_sigma)

    assert mu.shape == (B, H * W, latent_c)
    assert log_sigma.shape == (B, H * W, latent_c)
    assert jnp.allclose(mu, mu_ref, atol=3e-2, rtol=3e-2)
    assert jnp.allclose(log_sigma, ls_ref, atol=3e-2, rtol=3e-2)

    # Tight numerical check of the roll/mask/tap logic with f32 MXU operands.
    mu32, ls32 = encoder_forward(x, params, mxu_dtype=jnp.float32)
    mu32 = jax.block_until_ready(mu32)
    ls32 = jax.block_until_ready(ls32)
    assert jnp.allclose(mu32, mu_ref, atol=1e-3, rtol=1e-3)
    assert jnp.allclose(ls32, ls_ref, atol=1e-3, rtol=1e-3)

    print("KERNEL_OK")
</pallas_src>

<mosaic_0001>
module attributes {stable_mosaic.version = 11 : i64} {
  func.func @_encoder_fused_kernel(%arg0: i32, %arg1: memref<4x4x256xf32, #tpu.memory_space<vmem>>, %arg2: memref<9x32x4xbf16, #tpu.memory_space<vmem>>, %arg3: memref<32x1xf32, #tpu.memory_space<vmem>>, %arg4: memref<9x16x32xbf16, #tpu.memory_space<vmem>>, %arg5: memref<16x1xf32, #tpu.memory_space<vmem>>, %arg6: memref<4x16x256xf32, #tpu.memory_space<vmem>>) attributes {dimension_semantics = [#tpu.dimension_semantics<parallel>], iteration_bounds = array<i64: 2>, scalar_prefetch = 0 : i64, scratch_operands = 0 : i64, tpu.core_type = #tpu.core_type<tc>, window_params = [{transform_indices = @transform_0, window_bounds = array<i64: 4, 4, 256>}, {pipeline_mode = #tpu.pipeline_mode<synchronous>, transform_indices = @transform_1, window_bounds = array<i64: 9, 32, 4>}, {pipeline_mode = #tpu.pipeline_mode<synchronous>, transform_indices = @transform_2, window_bounds = array<i64: 32, 1>}, {pipeline_mode = #tpu.pipeline_mode<synchronous>, transform_indices = @transform_3, window_bounds = array<i64: 9, 16, 32>}, {pipeline_mode = #tpu.pipeline_mode<synchronous>, transform_indices = @transform_4, window_bounds = array<i64: 16, 1>}, {transform_indices = @transform_5, window_bounds = array<i64: 4, 16, 256>}]} {
    %0 = tpu.iota {dimensions = array<i32: 1>} : vector<1x256xi32>
    %c16_i32 = arith.constant 16 : i32
    %c0_i32 = arith.constant 0 : i32
    %1 = arith.cmpi eq, %c16_i32, %c0_i32 : i32
    %c1_i32 = arith.constant 1 : i32
    %2 = arith.select %1, %c1_i32, %c16_i32 : i32
    %3 = vector.broadcast %2 : i32 to vector<1x256xi32>
    %4 = arith.remsi %0, %3 : vector<1x256xi32>
    %c0_i32_0 = arith.constant 0 : i32
    %5 = vector.broadcast %c0_i32_0 : i32 to vector<1x256xi32>
    %6 = arith.cmpi ne, %4, %5 : vector<1x256xi32>
    %c0_i32_1 = arith.constant 0 : i32
    %7 = vector.broadcast %c0_i32_1 : i32 to vector<1x256xi32>
    %8 = arith.cmpi slt, %4, %7 : vector<1x256xi32>
    %c0_i32_2 = arith.constant 0 : i32
    %9 = arith.cmpi slt, %2, %c0_i32_2 : i32
    %10 = vector.broadcast %9 : i1 to vector<1x256xi1>
    %11 = vector.broadcast %10 : vector<1x256xi1> to vector<1x256xi1>
    %12 = arith.xori %8, %11 : vector<1x256xi1>
    %13 = arith.andi %12, %6 : vector<1x256xi1>
    %14 = vector.broadcast %2 : i32 to vector<1x256xi32>
    %15 = arith.addi %4, %14 : vector<1x256xi32>
    %16 = arith.select %13, %15, %4 : vector<1x256xi1>, vector<1x256xi32>
    %c16_i32_3 = arith.constant 16 : i32
    %17 = vector.broadcast %c16_i32_3 : i32 to vector<1x256xi32>
    %18 = arith.cmpi sge, %0, %17 : vector<1x256xi32>
    %c1_i32_4 = arith.constant 1 : i32
    %19 = vector.broadcast %c1_i32_4 : i32 to vector<1x256xi32>
    %20 = arith.cmpi sge, %16, %19 : vector<1x256xi32>
    %21 = arith.andi %18, %20 : vector<1x256xi1>
    %c16_i32_5 = arith.constant 16 : i32
    %22 = vector.broadcast %c16_i32_5 : i32 to vector<1x256xi32>
    %23 = arith.cmpi sge, %0, %22 : vector<1x256xi32>
    %c16_i32_6 = arith.constant 16 : i32
    %24 = vector.broadcast %c16_i32_6 : i32 to vector<1x256xi32>
    %25 = arith.cmpi sge, %0, %24 : vector<1x256xi32>
    %c14_i32 = arith.constant 14 : i32
    %26 = vector.broadcast %c14_i32 : i32 to vector<1x256xi32>
    %27 = arith.cmpi sle, %16, %26 : vector<1x256xi32>
    %28 = arith.andi %25, %27 : vector<1x256xi1>
    %c1_i32_7 = arith.constant 1 : i32
    %29 = vector.broadcast %c1_i32_7 : i32 to vector<1x256xi32>
    %30 = arith.cmpi sge, %16, %29 : vector<1x256xi32>
    %c14_i32_8 = arith.constant 14 : i32
    %31 = vector.broadcast %c14_i32_8 : i32 to vector<1x256xi32>
    %32 = arith.cmpi sle, %16, %31 : vector<1x256xi32>
    %c240_i32 = arith.constant 240 : i32
    %33 = vector.broadcast %c240_i32 : i32 to vector<1x256xi32>
    %34 = arith.cmpi slt, %0, %33 : vector<1x256xi32>
    %c1_i32_9 = arith.constant 1 : i32
    %35 = vector.broadcast %c1_i32_9 : i32 to vector<1x256xi32>
    %36 = arith.cmpi sge, %16, %35 : vector<1x256xi32>
    %37 = arith.andi %34, %36 : vector<1x256xi1>
    %c240_i32_10 = arith.constant 240 : i32
    %38 = vector.broadcast %c240_i32_10 : i32 to vector<1x256xi32>
    %39 = arith.cmpi slt, %0, %38 : vector<1x256xi32>
    %c240_i32_11 = arith.constant 240 : i32
    %40 = vector.broadcast %c240_i32_11 : i32 to vector<1x256xi32>
    %41 = arith.cmpi slt, %0, %40 : vector<1x256xi32>
    %c14_i32_12 = arith.constant 14 : i32
    %42 = vector.broadcast %c14_i32_12 : i32 to vector<1x256xi32>
    %43 = arith.cmpi sle, %16, %42 : vector<1x256xi32>
    %44 = arith.andi %41, %43 : vector<1x256xi1>
    %c0 = arith.constant 0 : index
    %c0_13 = arith.constant 0 : index
    %45 = vector.load %arg3[%c0, %c0_13] : memref<32x1xf32, #tpu.memory_space<vmem>>, vector<32x1xf32>
    %c0_14 = arith.constant 0 : index
    %c0_15 = arith.constant 0 : index
    %46 = vector.load %arg5[%c0_14, %c0_15] : memref<16x1xf32, #tpu.memory_space<vmem>>, vector<16x1xf32>
    %c0_16 = arith.constant 0 : index
    %c0_17 = arith.constant 0 : index
    %c0_18 = arith.constant 0 : index
    %47 = vector.load %arg1[%c0_16, %c0_17, %c0_18] : memref<4x4x256xf32, #tpu.memory_space<vmem>>, vector<1x4x256xf32>
    %48 = vector.shape_cast %47 : vector<1x4x256xf32> to vector<4x256xf32>
    %c17_i32 = arith.constant 17 : i32
    %49 = tpu.dynamic_rotate %48 by %c17_i32 dim 1 : vector<4x256xf32>, i32 -> vector<4x256xf32>
    %cst = arith.constant 0.000000e+00 : f32
    %50 = vector.shape_cast %21 : vector<1x256xi1> to vector<1x256xi1>
    %51 = vector.broadcast %50 : vector<1x256xi1> to vector<4x256xi1>
    %52 = vector.broadcast %cst : f32 to vector<4x256xf32>
    %53 = arith.select %51, %49, %52 : vector<4x256xi1>, vector<4x256xf32>
    %c0_19 = arith.constant 0 : index
    %c0_20 = arith.constant 0 : index
    %c0_21 = arith.constant 0 : index
    %54 = vector.load %arg2[%c0_19, %c0_20, %c0_21] : memref<9x32x4xbf16, #tpu.memory_space<vmem>>, vector<1x32x4xbf16>
    %55 = vector.shape_cast %54 : vector<1x32x4xbf16> to vector<32x4xbf16>
    %56 = arith.truncf %53 : vector<4x256xf32> to vector<4x256xbf16>
    %cst_22 = arith.constant dense<0.000000e+00> : vector<32x256xf32>
    %57 = tpu.matmul %55, %56, %cst_22 {dimension_numbers = #tpu.dot_dimension_numbers<[1], [0], [0], [1], [0, 0, 1, 1], [], []>} : vector<32x4xbf16>, vector<4x256xbf16>, vector<32x256xf32> -> vector<32x256xf32>
    %c16_i32_23 = arith.constant 16 : i32
    %58 = tpu.dynamic_rotate %48 by %c16_i32_23 dim 1 : vector<4x256xf32>, i32 -> vector<4x256xf32>
    %cst_24 = arith.constant 0.000000e+00 : f32
    %59 = vector.shape_cast %23 : vector<1x256xi1> to vector<1x256xi1>
    %60 = vector.broadcast %59 : vector<1x256xi1> to vector<4x256xi1>
    %61 = vector.broadcast %cst_24 : f32 to vector<4x256xf32>
    %62 = arith.select %60, %58, %61 : vector<4x256xi1>, vector<4x256xf32>
    %c1 = arith.constant 1 : index
    %c0_25 = arith.constant 0 : index
    %c0_26 = arith.constant 0 : index
    %63 = vector.load %arg2[%c1, %c0_25, %c0_26] : memref<9x32x4xbf16, #tpu.memory_space<vmem>>, vector<1x32x4xbf16>
    %64 = vector.shape_cast %63 : vector<1x32x4xbf16> to vector<32x4xbf16>
    %65 = arith.truncf %62 : vector<4x256xf32> to vector<4x256xbf16>
    %cst_27 = arith.constant dense<0.000000e+00> : vector<32x256xf32>
    %66 = tpu.matmul %64, %65, %cst_27 {dimension_numbers = #tpu.dot_dimension_numbers<[1], [0], [0], [1], [0, 0, 1, 1], [], []>} : vector<32x4xbf16>, vector<4x256xbf16>, vector<32x256xf32> -> vector<32x256xf32>
    %67 = arith.addf %57, %66 : vector<32x256xf32>
    %c15_i32 = arith.constant 15 : i32
    %68 = tpu.dynamic_rotate %48 by %c15_i32 dim 1 : vector<4x256xf32>, i32 -> vector<4x256xf32>
    %cst_28 = arith.constant 0.000000e+00 : f32
    %69 = vector.shape_cast %28 : vector<1x256xi1> to vector<1x256xi1>
    %70 = vector.broadcast %69 : vector<1x256xi1> to vector<4x256xi1>
    %71 = vector.broadcast %cst_28 : f32 to vector<4x256xf32>
    %72 = arith.select %70, %68, %71 : vector<4x256xi1>, vector<4x256xf32>
    %c2 = arith.constant 2 : index
    %c0_29 = arith.constant 0 : index
    %c0_30 = arith.constant 0 : index
    %73 = vector.load %arg2[%c2, %c0_29, %c0_30] : memref<9x32x4xbf16, #tpu.memory_space<vmem>>, vector<1x32x4xbf16>
    %74 = vector.shape_cast %73 : vector<1x32x4xbf16> to vector<32x4xbf16>
    %75 = arith.truncf %72 : vector<4x256xf32> to vector<4x256xbf16>
    %cst_31 = arith.constant dense<0.000000e+00> : vector<32x256xf32>
    %76 = tpu.matmul %74, %75, %cst_31 {dimension_numbers = #tpu.dot_dimension_numbers<[1], [0], [0], [1], [0, 0, 1, 1], [], []>} : vector<32x4xbf16>, vector<4x256xbf16>, vector<32x256xf32> -> vector<32x256xf32>
    %77 = arith.addf %67, %76 : vector<32x256xf32>
    %c1_i32_32 = arith.constant 1 : i32
    %78 = tpu.dynamic_rotate %48 by %c1_i32_32 dim 1 : vector<4x256xf32>, i32 -> vector<4x256xf32>
    %cst_33 = arith.constant 0.000000e+00 : f32
    %79 = vector.shape_cast %30 : vector<1x256xi1> to vector<1x256xi1>
    %80 = vector.broadcast %79 : vector<1x256xi1> to vector<4x256xi1>
    %81 = vector.broadcast %cst_33 : f32 to vector<4x256xf32>
    %82 = arith.select %80, %78, %81 : vector<4x256xi1>, vector<4x256xf32>
    %c3 = arith.constant 3 : index
    %c0_34 = arith.constant 0 : index
    %c0_35 = arith.constant 0 : index
    %83 = vector.load %arg2[%c3, %c0_34, %c0_35] : memref<9x32x4xbf16, #tpu.memory_space<vmem>>, vector<1x32x4xbf16>
    %84 = vector.shape_cast %83 : vector<1x32x4xbf16> to vector<32x4xbf16>
    %85 = arith.truncf %82 : vector<4x256xf32> to vector<4x256xbf16>
    %cst_36 = arith.constant dense<0.000000e+00> : vector<32x256xf32>
    %86 = tpu.matmul %84, %85, %cst_36 {dimension_numbers = #tpu.dot_dimension_numbers<[1], [0], [0], [1], [0, 0, 1, 1], [], []>} : vector<32x4xbf16>, vector<4x256xbf16>, vector<32x256xf32> -> vector<32x256xf32>
    %87 = arith.addf %77, %86 : vector<32x256xf32>
    %c4 = arith.constant 4 : index
    %c0_37 = arith.constant 0 : index
    %c0_38 = arith.constant 0 : index
    %88 = vector.load %arg2[%c4, %c0_37, %c0_38] : memref<9x32x4xbf16, #tpu.memory_space<vmem>>, vector<1x32x4xbf16>
    %89 = vector.shape_cast %88 : vector<1x32x4xbf16> to vector<32x4xbf16>
    %90 = arith.truncf %48 : vector<4x256xf32> to vector<4x256xbf16>
    %cst_39 = arith.constant dense<0.000000e+00> : vector<32x256xf32>
    %91 = tpu.matmul %89, %90, %cst_39 {dimension_numbers = #tpu.dot_dimension_numbers<[1], [0], [0], [1], [0, 0, 1, 1], [], []>} : vector<32x4xbf16>, vector<4x256xbf16>, vector<32x256xf32> -> vector<32x256xf32>
    %92 = arith.addf %87, %91 : vector<32x256xf32>
    %c255_i32 = arith.constant 255 : i32
    %93 = tpu.dynamic_rotate %48 by %c255_i32 dim 1 : vector<4x256xf32>, i32 -> vector<4x256xf32>
    %cst_40 = arith.constant 0.000000e+00 : f32
    %94 = vector.shape_cast %32 : vector<1x256xi1> to vector<1x256xi1>
    %95 = vector.broadcast %94 : vector<1x256xi1> to vector<4x256xi1>
    %96 = vector.broadcast %cst_40 : f32 to vector<4x256xf32>
    %97 = arith.select %95, %93, %96 : vector<4x256xi1>, vector<4x256xf32>
    %c5 = arith.constant 5 : index
    %c0_41 = arith.constant 0 : index
    %c0_42 = arith.constant 0 : index
    %98 = vector.load %arg2[%c5, %c0_41, %c0_42] : memref<9x32x4xbf16, #tpu.memory_space<vmem>>, vector<1x32x4xbf16>
    %99 = vector.shape_cast %98 : vector<1x32x4xbf16> to vector<32x4xbf16>
    %100 = arith.truncf %97 : vector<4x256xf32> to vector<4x256xbf16>
    %cst_43 = arith.constant dense<0.000000e+00> : vector<32x256xf32>
    %101 = tpu.matmul %99, %100, %cst_43 {dimension_numbers = #tpu.dot_dimension_numbers<[1], [0], [0], [1], [0, 0, 1, 1], [], []>} : vector<32x4xbf16>, vector<4x256xbf16>, vector<32x256xf32> -> vector<32x256xf32>
    %102 = arith.addf %92, %101 : vector<32x256xf32>
    %c241_i32 = arith.constant 241 : i32
    %103 = tpu.dynamic_rotate %48 by %c241_i32 dim 1 : vector<4x256xf32>, i32 -> vector<4x256xf32>
    %cst_44 = arith.constant 0.000000e+00 : f32
    %104 = vector.shape_cast %37 : vector<1x256xi1> to vector<1x256xi1>
    %105 = vector.broadcast %104 : vector<1x256xi1> to vector<4x256xi1>
    %106 = vector.broadcast %cst_44 : f32 to vector<4x256xf32>
    %107 = arith.select %105, %103, %106 : vector<4x256xi1>, vector<4x256xf32>
    %c6 = arith.constant 6 : index
    %c0_45 = arith.constant 0 : index
    %c0_46 = arith.constant 0 : index
    %108 = vector.load %arg2[%c6, %c0_45, %c0_46] : memref<9x32x4xbf16, #tpu.memory_space<vmem>>, vector<1x32x4xbf16>
    %109 = vector.shape_cast %108 : vector<1x32x4xbf16> to vector<32x4xbf16>
    %110 = arith.truncf %107 : vector<4x256xf32> to vector<4x256xbf16>
    %cst_47 = arith.constant dense<0.000000e+00> : vector<32x256xf32>
    %111 = tpu.matmul %109, %110, %cst_47 {dimension_numbers = #tpu.dot_dimension_numbers<[1], [0], [0], [1], [0, 0, 1, 1], [], []>} : vector<32x4xbf16>, vector<4x256xbf16>, vector<32x256xf32> -> vector<32x256xf32>
    %112 = arith.addf %102, %111 : vector<32x256xf32>
    %c240_i32_48 = arith.constant 240 : i32
    %113 = tpu.dynamic_rotate %48 by %c240_i32_48 dim 1 : vector<4x256xf32>, i32 -> vector<4x256xf32>
    %cst_49 = arith.constant 0.000000e+00 : f32
    %114 = vector.shape_cast %39 : vector<1x256xi1> to vector<1x256xi1>
    %115 = vector.broadcast %114 : vector<1x256xi1> to vector<4x256xi1>
    %116 = vector.broadcast %cst_49 : f32 to vector<4x256xf32>
    %117 = arith.select %115, %113, %116 : vector<4x256xi1>, vector<4x256xf32>
    %c7 = arith.constant 7 : index
    %c0_50 = arith.constant 0 : index
    %c0_51 = arith.constant 0 : index
    %118 = vector.load %arg2[%c7, %c0_50, %c0_51] : memref<9x32x4xbf16, #tpu.memory_space<vmem>>, vector<1x32x4xbf16>
    %119 = vector.shape_cast %118 : vector<1x32x4xbf16> to vector<32x4xbf16>
    %120 = arith.truncf %117 : vector<4x256xf32> to vector<4x256xbf16>
    %cst_52 = arith.constant dense<0.000000e+00> : vector<32x256xf32>
    %121 = tpu.matmul %119, %120, %cst_52 {dimension_numbers = #tpu.dot_dimension_numbers<[1], [0], [0], [1], [0, 0, 1, 1], [], []>} : vector<32x4xbf16>, vector<4x256xbf16>, vector<32x256xf32> -> vector<32x256xf32>
    %122 = arith.addf %112, %121 : vector<32x256xf32>
    %c239_i32 = arith.constant 239 : i32
    %123 = tpu.dynamic_rotate %48 by %c239_i32 dim 1 : vector<4x256xf32>, i32 -> vector<4x256xf32>
    %cst_53 = arith.constant 0.000000e+00 : f32
    %124 = vector.shape_cast %44 : vector<1x256xi1> to vector<1x256xi1>
    %125 = vector.broadcast %124 : vector<1x256xi1> to vector<4x256xi1>
    %126 = vector.broadcast %cst_53 : f32 to vector<4x256xf32>
    %127 = arith.select %125, %123, %126 : vector<4x256xi1>, vector<4x256xf32>
    %c8 = arith.constant 8 : index
    %c0_54 = arith.constant 0 : index
    %c0_55 = arith.constant 0 : index
    %128 = vector.load %arg2[%c8, %c0_54, %c0_55] : memref<9x32x4xbf16, #tpu.memory_space<vmem>>, vector<1x32x4xbf16>
    %129 = vector.shape_cast %128 : vector<1x32x4xbf16> to vector<32x4xbf16>
    %130 = arith.truncf %127 : vector<4x256xf32> to vector<4x256xbf16>
    %cst_56 = arith.constant dense<0.000000e+00> : vector<32x256xf32>
    %131 = tpu.matmul %129, %130, %cst_56 {dimension_numbers = #tpu.dot_dimension_numbers<[1], [0], [0], [1], [0, 0, 1, 1], [], []>} : vector<32x4xbf16>, vector<4x256xbf16>, vector<32x256xf32> -> vector<32x256xf32>
    %132 = arith.addf %122, %131 : vector<32x256xf32>
    %133 = vector.broadcast %45 : vector<32x1xf32> to vector<32x256xf32>
    %134 = arith.addf %132, %133 : vector<32x256xf32>
    %cst_57 = arith.constant 0.000000e+00 : f32
    %135 = vector.broadcast %cst_57 : f32 to vector<32x256xf32>
    %136 = arith.maximumf %134, %135 : vector<32x256xf32>
    %c17_i32_58 = arith.constant 17 : i32
    %137 = tpu.dynamic_rotate %136 by %c17_i32_58 dim 1 : vector<32x256xf32>, i32 -> vector<32x256xf32>
    %cst_59 = arith.constant 0.000000e+00 : f32
    %138 = vector.shape_cast %21 : vector<1x256xi1> to vector<1x256xi1>
    %139 = vector.broadcast %138 : vector<1x256xi1> to vector<32x256xi1>
    %140 = vector.broadcast %cst_59 : f32 to vector<32x256xf32>
    %141 = arith.select %139, %137, %140 : vector<32x256xi1>, vector<32x256xf32>
    %c0_60 = arith.constant 0 : index
    %c0_61 = arith.constant 0 : index
    %c0_62 = arith.constant 0 : index
    %142 = vector.load %arg4[%c0_60, %c0_61, %c0_62] : memref<9x16x32xbf16, #tpu.memory_space<vmem>>, vector<1x16x32xbf16>
    %143 = vector.shape_cast %142 : vector<1x16x32xbf16> to vector<16x32xbf16>
    %144 = arith.truncf %141 : vector<32x256xf32> to vector<32x256xbf16>
    %cst_63 = arith.constant dense<0.000000e+00> : vector<16x256xf32>
    %145 = tpu.matmul %143, %144, %cst_63 {dimension_numbers = #tpu.dot_dimension_numbers<[1], [0], [0], [1], [0, 0, 1, 1], [], []>} : vector<16x32xbf16>, vector<32x256xbf16>, vector<16x256xf32> -> vector<16x256xf32>
    %c16_i32_64 = arith.constant 16 : i32
    %146 = tpu.dynamic_rotate %136 by %c16_i32_64 dim 1 : vector<32x256xf32>, i32 -> vector<32x256xf32>
    %cst_65 = arith.constant 0.000000e+00 : f32
    %147 = vector.shape_cast %23 : vector<1x256xi1> to vector<1x256xi1>
    %148 = vector.broadcast %147 : vector<1x256xi1> to vector<32x256xi1>
    %149 = vector.broadcast %cst_65 : f32 to vector<32x256xf32>
    %150 = arith.select %148, %146, %149 : vector<32x256xi1>, vector<32x256xf32>
    %c1_66 = arith.constant 1 : index
    %c0_67 = arith.constant 0 : index
    %c0_68 = arith.constant 0 : index
    %151 = vector.load %arg4[%c1_66, %c0_67, %c0_68] : memref<9x16x32xbf16, #tpu.memory_space<vmem>>, vector<1x16x32xbf16>
    %152 = vector.shape_cast %151 : vector<1x16x32xbf16> to vector<16x32xbf16>
    %153 = arith.truncf %150 : vector<32x256xf32> to vector<32x256xbf16>
    %cst_69 = arith.constant dense<0.000000e+00> : vector<16x256xf32>
    %154 = tpu.matmul %152, %153, %cst_69 {dimension_numbers = #tpu.dot_dimension_numbers<[1], [0], [0], [1], [0, 0, 1, 1], [], []>} : vector<16x32xbf16>, vector<32x256xbf16>, vector<16x256xf32> -> vector<16x256xf32>
    %155 = arith.addf %145, %154 : vector<16x256xf32>
    %c15_i32_70 = arith.constant 15 : i32
    %156 = tpu.dynamic_rotate %136 by %c15_i32_70 dim 1 : vector<32x256xf32>, i32 -> vector<32x256xf32>
    %cst_71 = arith.constant 0.000000e+00 : f32
    %157 = vector.shape_cast %28 : vector<1x256xi1> to vector<1x256xi1>
    %158 = vector.broadcast %157 : vector<1x256xi1> to vector<32x256xi1>
    %159 = vector.broadcast %cst_71 : f32 to vector<32x256xf32>
    %160 = arith.select %158, %156, %159 : vector<32x256xi1>, vector<32x256xf32>
    %c2_72 = arith.constant 2 : index
    %c0_73 = arith.constant 0 : index
    %c0_74 = arith.constant 0 : index
    %161 = vector.load %arg4[%c2_72, %c0_73, %c0_74] : memref<9x16x32xbf16, #tpu.memory_space<vmem>>, vector<1x16x32xbf16>
    %162 = vector.shape_cast %161 : vector<1x16x32xbf16> to vector<16x32xbf16>
    %163 = arith.truncf %160 : vector<32x256xf32> to vector<32x256xbf16>
    %cst_75 = arith.constant dense<0.000000e+00> : vector<16x256xf32>
    %164 = tpu.matmul %162, %163, %cst_75 {dimension_numbers = #tpu.dot_dimension_numbers<[1], [0], [0], [1], [0, 0, 1, 1], [], []>} : vector<16x32xbf16>, vector<32x256xbf16>, vector<16x256xf32> -> vector<16x256xf32>
    %165 = arith.addf %155, %164 : vector<16x256xf32>
    %c1_i32_76 = arith.constant 1 : i32
    %166 = tpu.dynamic_rotate %136 by %c1_i32_76 dim 1 : vector<32x256xf32>, i32 -> vector<32x256xf32>
    %cst_77 = arith.constant 0.000000e+00 : f32
    %167 = vector.shape_cast %30 : vector<1x256xi1> to vector<1x256xi1>
    %168 = vector.broadcast %167 : vector<1x256xi1> to vector<32x256xi1>
    %169 = vector.broadcast %cst_77 : f32 to vector<32x256xf32>
    %170 = arith.select %168, %166, %169 : vector<32x256xi1>, vector<32x256xf32>
    %c3_78 = arith.constant 3 : index
    %c0_79 = arith.constant 0 : index
    %c0_80 = arith.constant 0 : index
    %171 = vector.load %arg4[%c3_78, %c0_79, %c0_80] : memref<9x16x32xbf16, #tpu.memory_space<vmem>>, vector<1x16x32xbf16>
    %172 = vector.shape_cast %171 : vector<1x16x32xbf16> to vector<16x32xbf16>
    %173 = arith.truncf %170 : vector<32x256xf32> to vector<32x256xbf16>
    %cst_81 = arith.constant dense<0.000000e+00> : vector<16x256xf32>
    %174 = tpu.matmul %172, %173, %cst_81 {dimension_numbers = #tpu.dot_dimension_numbers<[1], [0], [0], [1], [0, 0, 1, 1], [], []>} : vector<16x32xbf16>, vector<32x256xbf16>, vector<16x256xf32> -> vector<16x256xf32>
    %175 = arith.addf %165, %174 : vector<16x256xf32>
    %c4_82 = arith.constant 4 : index
    %c0_83 = arith.constant 0 : index
    %c0_84 = arith.constant 0 : index
    %176 = vector.load %arg4[%c4_82, %c0_83, %c0_84] : memref<9x16x32xbf16, #tpu.memory_space<vmem>>, vector<1x16x32xbf16>
    %177 = vector.shape_cast %176 : vector<1x16x32xbf16> to vector<16x32xbf16>
    %178 = arith.truncf %136 : vector<32x256xf32> to vector<32x256xbf16>
    %cst_85 = arith.constant dense<0.000000e+00> : vector<16x256xf32>
    %179 = tpu.matmul %177, %178, %cst_85 {dimension_numbers = #tpu.dot_dimension_numbers<[1], [0], [0], [1], [0, 0, 1, 1], [], []>} : vector<16x32xbf16>, vector<32x256xbf16>, vector<16x256xf32> -> vector<16x256xf32>
    %180 = arith.addf %175, %179 : vector<16x256xf32>
    %c255_i32_86 = arith.constant 255 : i32
    %181 = tpu.dynamic_rotate %136 by %c255_i32_86 dim 1 : vector<32x256xf32>, i32 -> vector<32x256xf32>
    %cst_87 = arith.constant 0.000000e+00 : f32
    %182 = vector.shape_cast %32 : vector<1x256xi1> to vector<1x256xi1>
    %183 = vector.broadcast %182 : vector<1x256xi1> to vector<32x256xi1>
    %184 = vector.broadcast %cst_87 : f32 to vector<32x256xf32>
    %185 = arith.select %183, %181, %184 : vector<32x256xi1>, vector<32x256xf32>
    %c5_88 = arith.constant 5 : index
    %c0_89 = arith.constant 0 : index
    %c0_90 = arith.constant 0 : index
    %186 = vector.load %arg4[%c5_88, %c0_89, %c0_90] : memref<9x16x32xbf16, #tpu.memory_space<vmem>>, vector<1x16x32xbf16>
    %187 = vector.shape_cast %186 : vector<1x16x32xbf16> to vector<16x32xbf16>
    %188 = arith.truncf %185 : vector<32x256xf32> to vector<32x256xbf16>
    %cst_91 = arith.constant dense<0.000000e+00> : vector<16x256xf32>
    %189 = tpu.matmul %187, %188, %cst_91 {dimension_numbers = #tpu.dot_dimension_numbers<[1], [0], [0], [1], [0, 0, 1, 1], [], []>} : vector<16x32xbf16>, vector<32x256xbf16>, vector<16x256xf32> -> vector<16x256xf32>
    %190 = arith.addf %180, %189 : vector<16x256xf32>
    %c241_i32_92 = arith.constant 241 : i32
    %191 = tpu.dynamic_rotate %136 by %c241_i32_92 dim 1 : vector<32x256xf32>, i32 -> vector<32x256xf32>
    %cst_93 = arith.constant 0.000000e+00 : f32
    %192 = vector.shape_cast %37 : vector<1x256xi1> to vector<1x256xi1>
    %193 = vector.broadcast %192 : vector<1x256xi1> to vector<32x256xi1>
    %194 = vector.broadcast %cst_93 : f32 to vector<32x256xf32>
    %195 = arith.select %193, %191, %194 : vector<32x256xi1>, vector<32x256xf32>
    %c6_94 = arith.constant 6 : index
    %c0_95 = arith.constant 0 : index
    %c0_96 = arith.constant 0 : index
    %196 = vector.load %arg4[%c6_94, %c0_95, %c0_96] : memref<9x16x32xbf16, #tpu.memory_space<vmem>>, vector<1x16x32xbf16>
    %197 = vector.shape_cast %196 : vector<1x16x32xbf16> to vector<16x32xbf16>
    %198 = arith.truncf %195 : vector<32x256xf32> to vector<32x256xbf16>
    %cst_97 = arith.constant dense<0.000000e+00> : vector<16x256xf32>
    %199 = tpu.matmul %197, %198, %cst_97 {dimension_numbers = #tpu.dot_dimension_numbers<[1], [0], [0], [1], [0, 0, 1, 1], [], []>} : vector<16x32xbf16>, vector<32x256xbf16>, vector<16x256xf32> -> vector<16x256xf32>
    %200 = arith.addf %190, %199 : vector<16x256xf32>
    %c240_i32_98 = arith.constant 240 : i32
    %201 = tpu.dynamic_rotate %136 by %c240_i32_98 dim 1 : vector<32x256xf32>, i32 -> vector<32x256xf32>
    %cst_99 = arith.constant 0.000000e+00 : f32
    %202 = vector.shape_cast %39 : vector<1x256xi1> to vector<1x256xi1>
    %203 = vector.broadcast %202 : vector<1x256xi1> to vector<32x256xi1>
    %204 = vector.broadcast %cst_99 : f32 to vector<32x256xf32>
    %205 = arith.select %203, %201, %204 : vector<32x256xi1>, vector<32x256xf32>
    %c7_100 = arith.constant 7 : index
    %c0_101 = arith.constant 0 : index
    %c0_102 = arith.constant 0 : index
    %206 = vector.load %arg4[%c7_100, %c0_101, %c0_102] : memref<9x16x32xbf16, #tpu.memory_space<vmem>>, vector<1x16x32xbf16>
    %207 = vector.shape_cast %206 : vector<1x16x32xbf16> to vector<16x32xbf16>
    %208 = arith.truncf %205 : vector<32x256xf32> to vector<32x256xbf16>
    %cst_103 = arith.constant dense<0.000000e+00> : vector<16x256xf32>
    %209 = tpu.matmul %207, %208, %cst_103 {dimension_numbers = #tpu.dot_dimension_numbers<[1], [0], [0], [1], [0, 0, 1, 1], [], []>} : vector<16x32xbf16>, vector<32x256xbf16>, vector<16x256xf32> -> vector<16x256xf32>
    %210 = arith.addf %200, %209 : vector<16x256xf32>
    %c239_i32_104 = arith.constant 239 : i32
    %211 = tpu.dynamic_rotate %136 by %c239_i32_104 dim 1 : vector<32x256xf32>, i32 -> vector<32x256xf32>
    %cst_105 = arith.constant 0.000000e+00 : f32
    %212 = vector.shape_cast %44 : vector<1x256xi1> to vector<1x256xi1>
    %213 = vector.broadcast %212 : vector<1x256xi1> to vector<32x256xi1>
    %214 = vector.broadcast %cst_105 : f32 to vector<32x256xf32>
    %215 = arith.select %213, %211, %214 : vector<32x256xi1>, vector<32x256xf32>
    %c8_106 = arith.constant 8 : index
    %c0_107 = arith.constant 0 : index
    %c0_108 = arith.constant 0 : index
    %216 = vector.load %arg4[%c8_106, %c0_107, %c0_108] : memref<9x16x32xbf16, #tpu.memory_space<vmem>>, vector<1x16x32xbf16>
    %217 = vector.shape_cast %216 : vector<1x16x32xbf16> to vector<16x32xbf16>
    %218 = arith.truncf %215 : vector<32x256xf32> to vector<32x256xbf16>
    %cst_109 = arith.constant dense<0.000000e+00> : vector<16x256xf32>
    %219 = tpu.matmul %217, %218, %cst_109 {dimension_numbers = #tpu.dot_dimension_numbers<[1], [0], [0], [1], [0, 0, 1, 1], [], []>} : vector<16x32xbf16>, vector<32x256xbf16>, vector<16x256xf32> -> vector<16x256xf32>
    %220 = arith.addf %210, %219 : vector<16x256xf32>
    %221 = vector.broadcast %46 : vector<16x1xf32> to vector<16x256xf32>
    %222 = arith.addf %220, %221 : vector<16x256xf32>
    %c0_110 = arith.constant 0 : index
    %c0_111 = arith.constant 0 : index
    %c0_112 = arith.constant 0 : index
    %223 = vector.load %arg6[%c0_110, %c0_111, %c0_112] : memref<4x16x256xf32, #tpu.memory_space<vmem>>, vector<1x16x256xf32>
    %224 = vector.shape_cast %223 : vector<1x16x256xf32> to vector<16x256xf32>
    %225 = vector.shape_cast %222 : vector<16x256xf32> to vector<1x16x256xf32>
    tpu.vector_store %arg6[%c0_110, %c0_111, %c0_112], %225 {strides = array<i32>} : memref<4x16x256xf32, #tpu.memory_space<vmem>>, vector<1x16x256xf32>,
    %c1_113 = arith.constant 1 : index
    %c0_114 = arith.constant 0 : index
    %c0_115 = arith.constant 0 : index
    %226 = vector.load %arg1[%c1_113, %c0_114, %c0_115] : memref<4x4x256xf32, #tpu.memory_space<vmem>>, vector<1x4x256xf32>
    %227 = vector.shape_cast %226 : vector<1x4x256xf32> to vector<4x256xf32>
    %c17_i32_116 = arith.constant 17 : i32
    %228 = tpu.dynamic_rotate %227 by %c17_i32_116 dim 1 : vector<4x256xf32>, i32 -> vector<4x256xf32>
    %cst_117 = arith.constant 0.000000e+00 : f32
    %229 = vector.shape_cast %21 : vector<1x256xi1> to vector<1x256xi1>
    %230 = vector.broadcast %229 : vector<1x256xi1> to vector<4x256xi1>
    %231 = vector.broadcast %cst_117 : f32 to vector<4x256xf32>
    %232 = arith.select %230, %228, %231 : vector<4x256xi1>, vector<4x256xf32>
    %c0_118 = arith.constant 0 : index
    %c0_119 = arith.constant 0 : index
    %c0_120 = arith.constant 0 : index
    %233 = vector.load %arg2[%c0_118, %c0_119, %c0_120] : memref<9x32x4xbf16, #tpu.memory_space<vmem>>, vector<1x32x4xbf16>
    %234 = vector.shape_cast %233 : vector<1x32x4xbf16> to vector<32x4xbf16>
    %235 = arith.truncf %232 : vector<4x256xf32> to vector<4x256xbf16>
    %cst_121 = arith.constant dense<0.000000e+00> : vector<32x256xf32>
    %236 = tpu.matmul %234, %235, %cst_121 {dimension_numbers = #tpu.dot_dimension_numbers<[1], [0], [0], [1], [0, 0, 1, 1], [], []>} : vector<32x4xbf16>, vector<4x256xbf16>, vector<32x256xf32> -> vector<32x256xf32>
    %c16_i32_122 = arith.constant 16 : i32
    %237 = tpu.dynamic_rotate %227 by %c16_i32_122 dim 1 : vector<4x256xf32>, i32 -> vector<4x256xf32>
    %cst_123 = arith.constant 0.000000e+00 : f32
    %238 = vector.shape_cast %23 : vector<1x256xi1> to vector<1x256xi1>
    %239 = vector.broadcast %238 : vector<1x256xi1> to vector<4x256xi1>
    %240 = vector.broadcast %cst_123 : f32 to vector<4x256xf32>
    %241 = arith.select %239, %237, %240 : vector<4x256xi1>, vector<4x256xf32>
    %c1_124 = arith.constant 1 : index
    %c0_125 = arith.constant 0 : index
    %c0_126 = arith.constant 0 : index
    %242 = vector.load %arg2[%c1_124, %c0_125, %c0_126] : memref<9x32x4xbf16, #tpu.memory_space<vmem>>, vector<1x32x4xbf16>
    %243 = vector.shape_cast %242 : vector<1x32x4xbf16> to vector<32x4xbf16>
    %244 = arith.truncf %241 : vector<4x256xf32> to vector<4x256xbf16>
    %cst_127 = arith.constant dense<0.000000e+00> : vector<32x256xf32>
    %245 = tpu.matmul %243, %244, %cst_127 {dimension_numbers = #tpu.dot_dimension_numbers<[1], [0], [0], [1], [0, 0, 1, 1], [], []>} : vector<32x4xbf16>, vector<4x256xbf16>, vector<32x256xf32> -> vector<32x256xf32>
    %246 = arith.addf %236, %245 : vector<32x256xf32>
    %c15_i32_128 = arith.constant 15 : i32
    %247 = tpu.dynamic_rotate %227 by %c15_i32_128 dim 1 : vector<4x256xf32>, i32 -> vector<4x256xf32>
    %cst_129 = arith.constant 0.000000e+00 : f32
    %248 = vector.shape_cast %28 : vector<1x256xi1> to vector<1x256xi1>
    %249 = vector.broadcast %248 : vector<1x256xi1> to vector<4x256xi1>
    %250 = vector.broadcast %cst_129 : f32 to vector<4x256xf32>
    %251 = arith.select %249, %247, %250 : vector<4x256xi1>, vector<4x256xf32>
    %c2_130 = arith.constant 2 : index
    %c0_131 = arith.constant 0 : index
    %c0_132 = arith.constant 0 : index
    %252 = vector.load %arg2[%c2_130, %c0_131, %c0_132] : memref<9x32x4xbf16, #tpu.memory_space<vmem>>, vector<1x32x4xbf16>
    %253 = vector.shape_cast %252 : vector<1x32x4xbf16> to vector<32x4xbf16>
    %254 = arith.truncf %251 : vector<4x256xf32> to vector<4x256xbf16>
    %cst_133 = arith.constant dense<0.000000e+00> : vector<32x256xf32>
    %255 = tpu.matmul %253, %254, %cst_133 {dimension_numbers = #tpu.dot_dimension_numbers<[1], [0], [0], [1], [0, 0, 1, 1], [], []>} : vector<32x4xbf16>, vector<4x256xbf16>, vector<32x256xf32> -> vector<32x256xf32>
    %256 = arith.addf %246, %255 : vector<32x256xf32>
    %c1_i32_134 = arith.constant 1 : i32
    %257 = tpu.dynamic_rotate %227 by %c1_i32_134 dim 1 : vector<4x256xf32>, i32 -> vector<4x256xf32>
    %cst_135 = arith.constant 0.000000e+00 : f32
    %258 = vector.shape_cast %30 : vector<1x256xi1> to vector<1x256xi1>
    %259 = vector.broadcast %258 : vector<1x256xi1> to vector<4x256xi1>
    %260 = vector.broadcast %cst_135 : f32 to vector<4x256xf32>
    %261 = arith.select %259, %257, %260 : vector<4x256xi1>, vector<4x256xf32>
    %c3_136 = arith.constant 3 : index
    %c0_137 = arith.constant 0 : index
    %c0_138 = arith.constant 0 : index
    %262 = vector.load %arg2[%c3_136, %c0_137, %c0_138] : memref<9x32x4xbf16, #tpu.memory_space<vmem>>, vector<1x32x4xbf16>
    %263 = vector.shape_cast %262 : vector<1x32x4xbf16> to vector<32x4xbf16>
    %264 = arith.truncf %261 : vector<4x256xf32> to vector<4x256xbf16>
    %cst_139 = arith.constant dense<0.000000e+00> : vector<32x256xf32>
    %265 = tpu.matmul %263, %264, %cst_139 {dimension_numbers = #tpu.dot_dimension_numbers<[1], [0], [0], [1], [0, 0, 1, 1], [], []>} : vector<32x4xbf16>, vector<4x256xbf16>, vector<32x256xf32> -> vector<32x256xf32>
    %266 = arith.addf %256, %265 : vector<32x256xf32>
    %c4_140 = arith.constant 4 : index
    %c0_141 = arith.constant 0 : index
    %c0_142 = arith.constant 0 : index
    %267 = vector.load %arg2[%c4_140, %c0_141, %c0_142] : memref<9x32x4xbf16, #tpu.memory_space<vmem>>, vector<1x32x4xbf16>
    %268 = vector.shape_cast %267 : vector<1x32x4xbf16> to vector<32x4xbf16>
    %269 = arith.truncf %227 : vector<4x256xf32> to vector<4x256xbf16>
    %cst_143 = arith.constant dense<0.000000e+00> : vector<32x256xf32>
    %270 = tpu.matmul %268, %269, %cst_143 {dimension_numbers = #tpu.dot_dimension_numbers<[1], [0], [0], [1], [0, 0, 1, 1], [], []>} : vector<32x4xbf16>, vector<4x256xbf16>, vector<32x256xf32> -> vector<32x256xf32>
    %271 = arith.addf %266, %270 : vector<32x256xf32>
    %c255_i32_144 = arith.constant 255 : i32
    %272 = tpu.dynamic_rotate %227 by %c255_i32_144 dim 1 : vector<4x256xf32>, i32 -> vector<4x256xf32>
    %cst_145 = arith.constant 0.000000e+00 : f32
    %273 = vector.shape_cast %32 : vector<1x256xi1> to vector<1x256xi1>
    %274 = vector.broadcast %273 : vector<1x256xi1> to vector<4x256xi1>
    %275 = vector.broadcast %cst_145 : f32 to vector<4x256xf32>
    %276 = arith.select %274, %272, %275 : vector<4x256xi1>, vector<4x256xf32>
    %c5_146 = arith.constant 5 : index
    %c0_147 = arith.constant 0 : index
    %c0_148 = arith.constant 0 : index
    %277 = vector.load %arg2[%c5_146, %c0_147, %c0_148] : memref<9x32x4xbf16, #tpu.memory_space<vmem>>, vector<1x32x4xbf16>
    %278 = vector.shape_cast %277 : vector<1x32x4xbf16> to vector<32x4xbf16>
    %279 = arith.truncf %276 : vector<4x256xf32> to vector<4x256xbf16>
    %cst_149 = arith.constant dense<0.000000e+00> : vector<32x256xf32>
    %280 = tpu.matmul %278, %279, %cst_149 {dimension_numbers = #tpu.dot_dimension_numbers<[1], [0], [0], [1], [0, 0, 1, 1], [], []>} : vector<32x4xbf16>, vector<4x256xbf16>, vector<32x256xf32> -> vector<32x256xf32>
    %281 = arith.addf %271, %280 : vector<32x256xf32>
    %c241_i32_150 = arith.constant 241 : i32
    %282 = tpu.dynamic_rotate %227 by %c241_i32_150 dim 1 : vector<4x256xf32>, i32 -> vector<4x256xf32>
    %cst_151 = arith.constant 0.000000e+00 : f32
    %283 = vector.shape_cast %37 : vector<1x256xi1> to vector<1x256xi1>
    %284 = vector.broadcast %283 : vector<1x256xi1> to vector<4x256xi1>
    %285 = vector.broadcast %cst_151 : f32 to vector<4x256xf32>
    %286 = arith.select %284, %282, %285 : vector<4x256xi1>, vector<4x256xf32>
    %c6_152 = arith.constant 6 : index
    %c0_153 = arith.constant 0 : index
    %c0_154 = arith.constant 0 : index
    %287 = vector.load %arg2[%c6_152, %c0_153, %c0_154] : memref<9x32x4xbf16, #tpu.memory_space<vmem>>, vector<1x32x4xbf16>
    %288 = vector.shape_cast %287 : vector<1x32x4xbf16> to vector<32x4xbf16>
    %289 = arith.truncf %286 : vector<4x256xf32> to vector<4x256xbf16>
    %cst_155 = arith.constant dense<0.000000e+00> : vector<32x256xf32>
    %290 = tpu.matmul %288, %289, %cst_155 {dimension_numbers = #tpu.dot_dimension_numbers<[1], [0], [0], [1], [0, 0, 1, 1], [], []>} : vector<32x4xbf16>, vector<4x256xbf16>, vector<32x256xf32> -> vector<32x256xf32>
    %291 = arith.addf %281, %290 : vector<32x256xf32>
    %c240_i32_156 = arith.constant 240 : i32
    %292 = tpu.dynamic_rotate %227 by %c240_i32_156 dim 1 : vector<4x256xf32>, i32 -> vector<4x256xf32>
    %cst_157 = arith.constant 0.000000e+00 : f32
    %293 = vector.shape_cast %39 : vector<1x256xi1> to vector<1x256xi1>
    %294 = vector.broadcast %293 : vector<1x256xi1> to vector<4x256xi1>
    %295 = vector.broadcast %cst_157 : f32 to vector<4x256xf32>
    %296 = arith.select %294, %292, %295 : vector<4x256xi1>, vector<4x256xf32>
    %c7_158 = arith.constant 7 : index
    %c0_159 = arith.constant 0 : index
    %c0_160 = arith.constant 0 : index
    %297 = vector.load %arg2[%c7_158, %c0_159, %c0_160] : memref<9x32x4xbf16, #tpu.memory_space<vmem>>, vector<1x32x4xbf16>
    %298 = vector.shape_cast %297 : vector<1x32x4xbf16> to vector<32x4xbf16>
    %299 = arith.truncf %296 : vector<4x256xf32> to vector<4x256xbf16>
    %cst_161 = arith.constant dense<0.000000e+00> : vector<32x256xf32>
    %300 = tpu.matmul %298, %299, %cst_161 {dimension_numbers = #tpu.dot_dimension_numbers<[1], [0], [0], [1], [0, 0, 1, 1], [], []>} : vector<32x4xbf16>, vector<4x256xbf16>, vector<32x256xf32> -> vector<32x256xf32>
    %301 = arith.addf %291, %300 : vector<32x256xf32>
    %c239_i32_162 = arith.constant 239 : i32
    %302 = tpu.dynamic_rotate %227 by %c239_i32_162 dim 1 : vector<4x256xf32>, i32 -> vector<4x256xf32>
    %cst_163 = arith.constant 0.000000e+00 : f32
    %303 = vector.shape_cast %44 : vector<1x256xi1> to vector<1x256xi1>
    %304 = vector.broadcast %303 : vector<1x256xi1> to vector<4x256xi1>
    %305 = vector.broadcast %cst_163 : f32 to vector<4x256xf32>
    %306 = arith.select %304, %302, %305 : vector<4x256xi1>, vector<4x256xf32>
    %c8_164 = arith.constant 8 : index
    %c0_165 = arith.constant 0 : index
    %c0_166 = arith.constant 0 : index
    %307 = vector.load %arg2[%c8_164, %c0_165, %c0_166] : memref<9x32x4xbf16, #tpu.memory_space<vmem>>, vector<1x32x4xbf16>
    %308 = vector.shape_cast %307 : vector<1x32x4xbf16> to vector<32x4xbf16>
    %309 = arith.truncf %306 : vector<4x256xf32> to vector<4x256xbf16>
    %cst_167 = arith.constant dense<0.000000e+00> : vector<32x256xf32>
    %310 = tpu.matmul %308, %309, %cst_167 {dimension_numbers = #tpu.dot_dimension_numbers<[1], [0], [0], [1], [0, 0, 1, 1], [], []>} : vector<32x4xbf16>, vector<4x256xbf16>, vector<32x256xf32> -> vector<32x256xf32>
    %311 = arith.addf %301, %310 : vector<32x256xf32>
    %312 = vector.broadcast %45 : vector<32x1xf32> to vector<32x256xf32>
    %313 = arith.addf %311, %312 : vector<32x256xf32>
    %cst_168 = arith.constant 0.000000e+00 : f32
    %314 = vector.broadcast %cst_168 : f32 to vector<32x256xf32>
    %315 = arith.maximumf %313, %314 : vector<32x256xf32>
    %c17_i32_169 = arith.constant 17 : i32
    %316 = tpu.dynamic_rotate %315 by %c17_i32_169 dim 1 : vector<32x256xf32>, i32 -> vector<32x256xf32>
    %cst_170 = arith.constant 0.000000e+00 : f32
    %317 = vector.shape_cast %21 : vector<1x256xi1> to vector<1x256xi1>
    %318 = vector.broadcast %317 : vector<1x256xi1> to vector<32x256xi1>
    %319 = vector.broadcast %cst_170 : f32 to vector<32x256xf32>
    %320 = arith.select %318, %316, %319 : vector<32x256xi1>, vector<32x256xf32>
    %c0_171 = arith.constant 0 : index
    %c0_172 = arith.constant 0 : index
    %c0_173 = arith.constant 0 : index
    %321 = vector.load %arg4[%c0_171, %c0_172, %c0_173] : memref<9x16x32xbf16, #tpu.memory_space<vmem>>, vector<1x16x32xbf16>
    %322 = vector.shape_cast %321 : vector<1x16x32xbf16> to vector<16x32xbf16>
    %323 = arith.truncf %320 : vector<32x256xf32> to vector<32x256xbf16>
    %cst_174 = arith.constant dense<0.000000e+00> : vector<16x256xf32>
    %324 = tpu.matmul %322, %323, %cst_174 {dimension_numbers = #tpu.dot_dimension_numbers<[1], [0], [0], [1], [0, 0, 1, 1], [], []>} : vector<16x32xbf16>, vector<32x256xbf16>, vector<16x256xf32> -> vector<16x256xf32>
    %c16_i32_175 = arith.constant 16 : i32
    %325 = tpu.dynamic_rotate %315 by %c16_i32_175 dim 1 : vector<32x256xf32>, i32 -> vector<32x256xf32>
    %cst_176 = arith.constant 0.000000e+00 : f32
    %326 = vector.shape_cast %23 : vector<1x256xi1> to vector<1x256xi1>
    %327 = vector.broadcast %326 : vector<1x256xi1> to vector<32x256xi1>
    %328 = vector.broadcast %cst_176 : f32 to vector<32x256xf32>
    %329 = arith.select %327, %325, %328 : vector<32x256xi1>, vector<32x256xf32>
    %c1_177 = arith.constant 1 : index
    %c0_178 = arith.constant 0 : index
    %c0_179 = arith.constant 0 : index
    %330 = vector.load %arg4[%c1_177, %c0_178, %c0_179] : memref<9x16x32xbf16, #tpu.memory_space<vmem>>, vector<1x16x32xbf16>
    %331 = vector.shape_cast %330 : vector<1x16x32xbf16> to vector<16x32xbf16>
    %332 = arith.truncf %329 : vector<32x256xf32> to vector<32x256xbf16>
    %cst_180 = arith.constant dense<0.000000e+00> : vector<16x256xf32>
    %333 = tpu.matmul %331, %332, %cst_180 {dimension_numbers = #tpu.dot_dimension_numbers<[1], [0], [0], [1], [0, 0, 1, 1], [], []>} : vector<16x32xbf16>, vector<32x256xbf16>, vector<16x256xf32> -> vector<16x256xf32>
    %334 = arith.addf %324, %333 : vector<16x256xf32>
    %c15_i32_181 = arith.constant 15 : i32
    %335 = tpu.dynamic_rotate %315 by %c15_i32_181 dim 1 : vector<32x256xf32>, i32 -> vector<32x256xf32>
    %cst_182 = arith.constant 0.000000e+00 : f32
    %336 = vector.shape_cast %28 : vector<1x256xi1> to vector<1x256xi1>
    %337 = vector.broadcast %336 : vector<1x256xi1> to vector<32x256xi1>
    %338 = vector.broadcast %cst_182 : f32 to vector<32x256xf32>
    %339 = arith.select %337, %335, %338 : vector<32x256xi1>, vector<32x256xf32>
    %c2_183 = arith.constant 2 : index
    %c0_184 = arith.constant 0 : index
    %c0_185 = arith.constant 0 : index
    %340 = vector.load %arg4[%c2_183, %c0_184, %c0_185] : memref<9x16x32xbf16, #tpu.memory_space<vmem>>, vector<1x16x32xbf16>
    %341 = vector.shape_cast %340 : vector<1x16x32xbf16> to vector<16x32xbf16>
    %342 = arith.truncf %339 : vector<32x256xf32> to vector<32x256xbf16>
    %cst_186 = arith.constant dense<0.000000e+00> : vector<16x256xf32>
    %343 = tpu.matmul %341, %342, %cst_186 {dimension_numbers = #tpu.dot_dimension_numbers<[1], [0], [0], [1], [0, 0, 1, 1], [], []>} : vector<16x32xbf16>, vector<32x256xbf16>, vector<16x256xf32> -> vector<16x256xf32>
    %344 = arith.addf %334, %343 : vector<16x256xf32>
    %c1_i32_187 = arith.constant 1 : i32
    %345 = tpu.dynamic_rotate %315 by %c1_i32_187 dim 1 : vector<32x256xf32>, i32 -> vector<32x256xf32>
    %cst_188 = arith.constant 0.000000e+00 : f32
    %346 = vector.shape_cast %30 : vector<1x256xi1> to vector<1x256xi1>
    %347 = vector.broadcast %346 : vector<1x256xi1> to vector<32x256xi1>
    %348 = vector.broadcast %cst_188 : f32 to vector<32x256xf32>
    %349 = arith.select %347, %345, %348 : vector<32x256xi1>, vector<32x256xf32>
    %c3_189 = arith.constant 3 : index
    %c0_190 = arith.constant 0 : index
    %c0_191 = arith.constant 0 : index
    %350 = vector.load %arg4[%c3_189, %c0_190, %c0_191] : memref<9x16x32xbf16, #tpu.memory_space<vmem>>, vector<1x16x32xbf16>
    %351 = vector.shape_cast %350 : vector<1x16x32xbf16> to vector<16x32xbf16>
    %352 = arith.truncf %349 : vector<32x256xf32> to vector<32x256xbf16>
    %cst_192 = arith.constant dense<0.000000e+00> : vector<16x256xf32>
    %353 = tpu.matmul %351, %352, %cst_192 {dimension_numbers = #tpu.dot_dimension_numbers<[1], [0], [0], [1], [0, 0, 1, 1], [], []>} : vector<16x32xbf16>, vector<32x256xbf16>, vector<16x256xf32> -> vector<16x256xf32>
    %354 = arith.addf %344, %353 : vector<16x256xf32>
    %c4_193 = arith.constant 4 : index
    %c0_194 = arith.constant 0 : index
    %c0_195 = arith.constant 0 : index
    %355 = vector.load %arg4[%c4_193, %c0_194, %c0_195] : memref<9x16x32xbf16, #tpu.memory_space<vmem>>, vector<1x16x32xbf16>
    %356 = vector.shape_cast %355 : vector<1x16x32xbf16> to vector<16x32xbf16>
    %357 = arith.truncf %315 : vector<32x256xf32> to vector<32x256xbf16>
    %cst_196 = arith.constant dense<0.000000e+00> : vector<16x256xf32>
    %358 = tpu.matmul %356, %357, %cst_196 {dimension_numbers = #tpu.dot_dimension_numbers<[1], [0], [0], [1], [0, 0, 1, 1], [], []>} : vector<16x32xbf16>, vector<32x256xbf16>, vector<16x256xf32> -> vector<16x256xf32>
    %359 = arith.addf %354, %358 : vector<16x256xf32>
    %c255_i32_197 = arith.constant 255 : i32
    %360 = tpu.dynamic_rotate %315 by %c255_i32_197 dim 1 : vector<32x256xf32>, i32 -> vector<32x256xf32>
    %cst_198 = arith.constant 0.000000e+00 : f32
    %361 = vector.shape_cast %32 : vector<1x256xi1> to vector<1x256xi1>
    %362 = vector.broadcast %361 : vector<1x256xi1> to vector<32x256xi1>
    %363 = vector.broadcast %cst_198 : f32 to vector<32x256xf32>
    %364 = arith.select %362, %360, %363 : vector<32x256xi1>, vector<32x256xf32>
    %c5_199 = arith.constant 5 : index
    %c0_200 = arith.constant 0 : index
    %c0_201 = arith.constant 0 : index
    %365 = vector.load %arg4[%c5_199, %c0_200, %c0_201] : memref<9x16x32xbf16, #tpu.memory_space<vmem>>, vector<1x16x32xbf16>
    %366 = vector.shape_cast %365 : vector<1x16x32xbf16> to vector<16x32xbf16>
    %367 = arith.truncf %364 : vector<32x256xf32> to vector<32x256xbf16>
    %cst_202 = arith.constant dense<0.000000e+00> : vector<16x256xf32>
    %368 = tpu.matmul %366, %367, %cst_202 {dimension_numbers = #tpu.dot_dimension_numbers<[1], [0], [0], [1], [0, 0, 1, 1], [], []>} : vector<16x32xbf16>, vector<32x256xbf16>, vector<16x256xf32> -> vector<16x256xf32>
    %369 = arith.addf %359, %368 : vector<16x256xf32>
    %c241_i32_203 = arith.constant 241 : i32
    %370 = tpu.dynamic_rotate %315 by %c241_i32_203 dim 1 : vector<32x256xf32>, i32 -> vector<32x256xf32>
    %cst_204 = arith.constant 0.000000e+00 : f32
    %371 = vector.shape_cast %37 : vector<1x256xi1> to vector<1x256xi1>
    %372 = vector.broadcast %371 : vector<1x256xi1> to vector<32x256xi1>
    %373 = vector.broadcast %cst_204 : f32 to vector<32x256xf32>
    %374 = arith.select %372, %370, %373 : vector<32x256xi1>, vector<32x256xf32>
    %c6_205 = arith.constant 6 : index
    %c0_206 = arith.constant 0 : index
    %c0_207 = arith.constant 0 : index
    %375 = vector.load %arg4[%c6_205, %c0_206, %c0_207] : memref<9x16x32xbf16, #tpu.memory_space<vmem>>, vector<1x16x32xbf16>
    %376 = vector.shape_cast %375 : vector<1x16x32xbf16> to vector<16x32xbf16>
    %377 = arith.truncf %374 : vector<32x256xf32> to vector<32x256xbf16>
    %cst_208 = arith.constant dense<0.000000e+00> : vector<16x256xf32>
    %378 = tpu.matmul %376, %377, %cst_208 {dimension_numbers = #tpu.dot_dimension_numbers<[1], [0], [0], [1], [0, 0, 1, 1], [], []>} : vector<16x32xbf16>, vector<32x256xbf16>, vector<16x256xf32> -> vector<16x256xf32>
    %379 = arith.addf %369, %378 : vector<16x256xf32>
    %c240_i32_209 = arith.constant 240 : i32
    %380 = tpu.dynamic_rotate %315 by %c240_i32_209 dim 1 : vector<32x256xf32>, i32 -> vector<32x256xf32>
    %cst_210 = arith.constant 0.000000e+00 : f32
    %381 = vector.shape_cast %39 : vector<1x256xi1> to vector<1x256xi1>
    %382 = vector.broadcast %381 : vector<1x256xi1> to vector<32x256xi1>
    %383 = vector.broadcast %cst_210 : f32 to vector<32x256xf32>
    %384 = arith.select %382, %380, %383 : vector<32x256xi1>, vector<32x256xf32>
    %c7_211 = arith.constant 7 : index
    %c0_212 = arith.constant 0 : index
    %c0_213 = arith.constant 0 : index
    %385 = vector.load %arg4[%c7_211, %c0_212, %c0_213] : memref<9x16x32xbf16, #tpu.memory_space<vmem>>, vector<1x16x32xbf16>
    %386 = vector.shape_cast %385 : vector<1x16x32xbf16> to vector<16x32xbf16>
    %387 = arith.truncf %384 : vector<32x256xf32> to vector<32x256xbf16>
    %cst_214 = arith.constant dense<0.000000e+00> : vector<16x256xf32>
    %388 = tpu.matmul %386, %387, %cst_214 {dimension_numbers = #tpu.dot_dimension_numbers<[1], [0], [0], [1], [0, 0, 1, 1], [], []>} : vector<16x32xbf16>, vector<32x256xbf16>, vector<16x256xf32> -> vector<16x256xf32>
    %389 = arith.addf %379, %388 : vector<16x256xf32>
    %c239_i32_215 = arith.constant 239 : i32
    %390 = tpu.dynamic_rotate %315 by %c239_i32_215 dim 1 : vector<32x256xf32>, i32 -> vector<32x256xf32>
    %cst_216 = arith.constant 0.000000e+00 : f32
    %391 = vector.shape_cast %44 : vector<1x256xi1> to vector<1x256xi1>
    %392 = vector.broadcast %391 : vector<1x256xi1> to vector<32x256xi1>
    %393 = vector.broadcast %cst_216 : f32 to vector<32x256xf32>
    %394 = arith.select %392, %390, %393 : vector<32x256xi1>, vector<32x256xf32>
    %c8_217 = arith.constant 8 : index
    %c0_218 = arith.constant 0 : index
    %c0_219 = arith.constant 0 : index
    %395 = vector.load %arg4[%c8_217, %c0_218, %c0_219] : memref<9x16x32xbf16, #tpu.memory_space<vmem>>, vector<1x16x32xbf16>
    %396 = vector.shape_cast %395 : vector<1x16x32xbf16> to vector<16x32xbf16>
    %397 = arith.truncf %394 : vector<32x256xf32> to vector<32x256xbf16>
    %cst_220 = arith.constant dense<0.000000e+00> : vector<16x256xf32>
    %398 = tpu.matmul %396, %397, %cst_220 {dimension_numbers = #tpu.dot_dimension_numbers<[1], [0], [0], [1], [0, 0, 1, 1], [], []>} : vector<16x32xbf16>, vector<32x256xbf16>, vector<16x256xf32> -> vector<16x256xf32>
    %399 = arith.addf %389, %398 : vector<16x256xf32>
    %400 = vector.broadcast %46 : vector<16x1xf32> to vector<16x256xf32>
    %401 = arith.addf %399, %400 : vector<16x256xf32>
    %c1_221 = arith.constant 1 : index
    %c0_222 = arith.constant 0 : index
    %c0_223 = arith.constant 0 : index
    %402 = vector.load %arg6[%c1_221, %c0_222, %c0_223] : memref<4x16x256xf32, #tpu.memory_space<vmem>>, vector<1x16x256xf32>
    %403 = vector.shape_cast %402 : vector<1x16x256xf32> to vector<16x256xf32>
    %404 = vector.shape_cast %401 : vector<16x256xf32> to vector<1x16x256xf32>
    tpu.vector_store %arg6[%c1_221, %c0_222, %c0_223], %404 {strides = array<i32>} : memref<4x16x256xf32, #tpu.memory_space<vmem>>, vector<1x16x256xf32>,
    %c2_224 = arith.constant 2 : index
    %c0_225 = arith.constant 0 : index
    %c0_226 = arith.constant 0 : index
    %405 = vector.load %arg1[%c2_224, %c0_225, %c0_226] : memref<4x4x256xf32, #tpu.memory_space<vmem>>, vector<1x4x256xf32>
    %406 = vector.shape_cast %405 : vector<1x4x256xf32> to vector<4x256xf32>
    %c17_i32_227 = arith.constant 17 : i32
    %407 = tpu.dynamic_rotate %406 by %c17_i32_227 dim 1 : vector<4x256xf32>, i32 -> vector<4x256xf32>
    %cst_228 = arith.constant 0.000000e+00 : f32
    %408 = vector.shape_cast %21 : vector<1x256xi1> to vector<1x256xi1>
    %409 = vector.broadcast %408 : vector<1x256xi1> to vector<4x256xi1>
    %410 = vector.broadcast %cst_228 : f32 to vector<4x256xf32>
    %411 = arith.select %409, %407, %410 : vector<4x256xi1>, vector<4x256xf32>
    %c0_229 = arith.constant 0 : index
    %c0_230 = arith.constant 0 : index
    %c0_231 = arith.constant 0 : index
    %412 = vector.load %arg2[%c0_229, %c0_230, %c0_231] : memref<9x32x4xbf16, #tpu.memory_space<vmem>>, vector<1x32x4xbf16>
    %413 = vector.shape_cast %412 : vector<1x32x4xbf16> to vector<32x4xbf16>
    %414 = arith.truncf %411 : vector<4x256xf32> to vector<4x256xbf16>
    %cst_232 = arith.constant dense<0.000000e+00> : vector<32x256xf32>
    %415 = tpu.matmul %413, %414, %cst_232 {dimension_numbers = #tpu.dot_dimension_numbers<[1], [0], [0], [1], [0, 0, 1, 1], [], []>} : vector<32x4xbf16>, vector<4x256xbf16>, vector<32x256xf32> -> vector<32x256xf32>
    %c16_i32_233 = arith.constant 16 : i32
    %416 = tpu.dynamic_rotate %406 by %c16_i32_233 dim 1 : vector<4x256xf32>, i32 -> vector<4x256xf32>
    %cst_234 = arith.constant 0.000000e+00 : f32
    %417 = vector.shape_cast %23 : vector<1x256xi1> to vector<1x256xi1>
    %418 = vector.broadcast %417 : vector<1x256xi1> to vector<4x256xi1>
    %419 = vector.broadcast %cst_234 : f32 to vector<4x256xf32>
    %420 = arith.select %418, %416, %419 : vector<4x256xi1>, vector<4x256xf32>
    %c1_235 = arith.constant 1 : index
    %c0_236 = arith.constant 0 : index
    %c0_237 = arith.constant 0 : index
    %421 = vector.load %arg2[%c1_235, %c0_236, %c0_237] : memref<9x32x4xbf16, #tpu.memory_space<vmem>>, vector<1x32x4xbf16>
    %422 = vector.shape_cast %421 : vector<1x32x4xbf16> to vector<32x4xbf16>
    %423 = arith.truncf %420 : vector<4x256xf32> to vector<4x256xbf16>
    %cst_238 = arith.constant dense<0.000000e+00> : vector<32x256xf32>
    %424 = tpu.matmul %422, %423, %cst_238 {dimension_numbers = #tpu.dot_dimension_numbers<[1], [0], [0], [1], [0, 0, 1, 1], [], []>} : vector<32x4xbf16>, vector<4x256xbf16>, vector<32x256xf32> -> vector<32x256xf32>
    %425 = arith.addf %415, %424 : vector<32x256xf32>
    %c15_i32_239 = arith.constant 15 : i32
    %426 = tpu.dynamic_rotate %406 by %c15_i32_239 dim 1 : vector<4x256xf32>, i32 -> vector<4x256xf32>
    %cst_240 = arith.constant 0.000000e+00 : f32
    %427 = vector.shape_cast %28 : vector<1x256xi1> to vector<1x256xi1>
    %428 = vector.broadcast %427 : vector<1x256xi1> to vector<4x256xi1>
    %429 = vector.broadcast %cst_240 : f32 to vector<4x256xf32>
    %430 = arith.select %428, %426, %429 : vector<4x256xi1>, vector<4x256xf32>
    %c2_241 = arith.constant 2 : index
    %c0_242 = arith.constant 0 : index
    %c0_243 = arith.constant 0 : index
    %431 = vector.load %arg2[%c2_241, %c0_242, %c0_243] : memref<9x32x4xbf16, #tpu.memory_space<vmem>>, vector<1x32x4xbf16>
    %432 = vector.shape_cast %431 : vector<1x32x4xbf16> to vector<32x4xbf16>
    %433 = arith.truncf %430 : vector<4x256xf32> to vector<4x256xbf16>
    %cst_244 = arith.constant dense<0.000000e+00> : vector<32x256xf32>
    %434 = tpu.matmul %432, %433, %cst_244 {dimension_numbers = #tpu.dot_dimension_numbers<[1], [0], [0], [1], [0, 0, 1, 1], [], []>} : vector<32x4xbf16>, vector<4x256xbf16>, vector<32x256xf32> -> vector<32x256xf32>
    %435 = arith.addf %425, %434 : vector<32x256xf32>
    %c1_i32_245 = arith.constant 1 : i32
    %436 = tpu.dynamic_rotate %406 by %c1_i32_245 dim 1 : vector<4x256xf32>, i32 -> vector<4x256xf32>
    %cst_246 = arith.constant 0.000000e+00 : f32
    %437 = vector.shape_cast %30 : vector<1x256xi1> to vector<1x256xi1>
    %438 = vector.broadcast %437 : vector<1x256xi1> to vector<4x256xi1>
    %439 = vector.broadcast %cst_246 : f32 to vector<4x256xf32>
    %440 = arith.select %438, %436, %439 : vector<4x256xi1>, vector<4x256xf32>
    %c3_247 = arith.constant 3 : index
    %c0_248 = arith.constant 0 : index
    %c0_249 = arith.constant 0 : index
    %441 = vector.load %arg2[%c3_247, %c0_248, %c0_249] : memref<9x32x4xbf16, #tpu.memory_space<vmem>>, vector<1x32x4xbf16>
    %442 = vector.shape_cast %441 : vector<1x32x4xbf16> to vector<32x4xbf16>
    %443 = arith.truncf %440 : vector<4x256xf32> to vector<4x256xbf16>
    %cst_250 = arith.constant dense<0.000000e+00> : vector<32x256xf32>
    %444 = tpu.matmul %442, %443, %cst_250 {dimension_numbers = #tpu.dot_dimension_numbers<[1], [0], [0], [1], [0, 0, 1, 1], [], []>} : vector<32x4xbf16>, vector<4x256xbf16>, vector<32x256xf32> -> vector<32x256xf32>
    %445 = arith.addf %435, %444 : vector<32x256xf32>
    %c4_251 = arith.constant 4 : index
    %c0_252 = arith.constant 0 : index
    %c0_253 = arith.constant 0 : index
    %446 = vector.load %arg2[%c4_251, %c0_252, %c0_253] : memref<9x32x4xbf16, #tpu.memory_space<vmem>>, vector<1x32x4xbf16>
    %447 = vector.shape_cast %446 : vector<1x32x4xbf16> to vector<32x4xbf16>
    %448 = arith.truncf %406 : vector<4x256xf32> to vector<4x256xbf16>
    %cst_254 = arith.constant dense<0.000000e+00> : vector<32x256xf32>
    %449 = tpu.matmul %447, %448, %cst_254 {dimension_numbers = #tpu.dot_dimension_numbers<[1], [0], [0], [1], [0, 0, 1, 1], [], []>} : vector<32x4xbf16>, vector<4x256xbf16>, vector<32x256xf32> -> vector<32x256xf32>
    %450 = arith.addf %445, %449 : vector<32x256xf32>
    %c255_i32_255 = arith.constant 255 : i32
    %451 = tpu.dynamic_rotate %406 by %c255_i32_255 dim 1 : vector<4x256xf32>, i32 -> vector<4x256xf32>
    %cst_256 = arith.constant 0.000000e+00 : f32
    %452 = vector.shape_cast %32 : vector<1x256xi1> to vector<1x256xi1>
    %453 = vector.broadcast %452 : vector<1x256xi1> to vector<4x256xi1>
    %454 = vector.broadcast %cst_256 : f32 to vector<4x256xf32>
    %455 = arith.select %453, %451, %454 : vector<4x256xi1>, vector<4x256xf32>
    %c5_257 = arith.constant 5 : index
    %c0_258 = arith.constant 0 : index
    %c0_259 = arith.constant 0 : index
    %456 = vector.load %arg2[%c5_257, %c0_258, %c0_259] : memref<9x32x4xbf16, #tpu.memory_space<vmem>>, vector<1x32x4xbf16>
    %457 = vector.shape_cast %456 : vector<1x32x4xbf16> to vector<32x4xbf16>
    %458 = arith.truncf %455 : vector<4x256xf32> to vector<4x256xbf16>
    %cst_260 = arith.constant dense<0.000000e+00> : vector<32x256xf32>
    %459 = tpu.matmul %457, %458, %cst_260 {dimension_numbers = #tpu.dot_dimension_numbers<[1], [0], [0], [1], [0, 0, 1, 1], [], []>} : vector<32x4xbf16>, vector<4x256xbf16>, vector<32x256xf32> -> vector<32x256xf32>
    %460 = arith.addf %450, %459 : vector<32x256xf32>
    %c241_i32_261 = arith.constant 241 : i32
    %461 = tpu.dynamic_rotate %406 by %c241_i32_261 dim 1 : vector<4x256xf32>, i32 -> vector<4x256xf32>
    %cst_262 = arith.constant 0.000000e+00 : f32
    %462 = vector.shape_cast %37 : vector<1x256xi1> to vector<1x256xi1>
    %463 = vector.broadcast %462 : vector<1x256xi1> to vector<4x256xi1>
    %464 = vector.broadcast %cst_262 : f32 to vector<4x256xf32>
    %465 = arith.select %463, %461, %464 : vector<4x256xi1>, vector<4x256xf32>
    %c6_263 = arith.constant 6 : index
    %c0_264 = arith.constant 0 : index
    %c0_265 = arith.constant 0 : index
    %466 = vector.load %arg2[%c6_263, %c0_264, %c0_265] : memref<9x32x4xbf16, #tpu.memory_space<vmem>>, vector<1x32x4xbf16>
    %467 = vector.shape_cast %466 : vector<1x32x4xbf16> to vector<32x4xbf16>
    %468 = arith.truncf %465 : vector<4x256xf32> to vector<4x256xbf16>
    %cst_266 = arith.constant dense<0.000000e+00> : vector<32x256xf32>
    %469 = tpu.matmul %467, %468, %cst_266 {dimension_numbers = #tpu.dot_dimension_numbers<[1], [0], [0], [1], [0, 0, 1, 1], [], []>} : vector<32x4xbf16>, vector<4x256xbf16>, vector<32x256xf32> -> vector<32x256xf32>
    %470 = arith.addf %460, %469 : vector<32x256xf32>
    %c240_i32_267 = arith.constant 240 : i32
    %471 = tpu.dynamic_rotate %406 by %c240_i32_267 dim 1 : vector<4x256xf32>, i32 -> vector<4x256xf32>
    %cst_268 = arith.constant 0.000000e+00 : f32
    %472 = vector.shape_cast %39 : vector<1x256xi1> to vector<1x256xi1>
    %473 = vector.broadcast %472 : vector<1x256xi1> to vector<4x256xi1>
    %474 = vector.broadcast %cst_268 : f32 to vector<4x256xf32>
    %475 = arith.select %473, %471, %474 : vector<4x256xi1>, vector<4x256xf32>
    %c7_269 = arith.constant 7 : index
    %c0_270 = arith.constant 0 : index
    %c0_271 = arith.constant 0 : index
    %476 = vector.load %arg2[%c7_269, %c0_270, %c0_271] : memref<9x32x4xbf16, #tpu.memory_space<vmem>>, vector<1x32x4xbf16>
    %477 = vector.shape_cast %476 : vector<1x32x4xbf16> to vector<32x4xbf16>
    %478 = arith.truncf %475 : vector<4x256xf32> to vector<4x256xbf16>
    %cst_272 = arith.constant dense<0.000000e+00> : vector<32x256xf32>
    %479 = tpu.matmul %477, %478, %cst_272 {dimension_numbers = #tpu.dot_dimension_numbers<[1], [0], [0], [1], [0, 0, 1, 1], [], []>} : vector<32x4xbf16>, vector<4x256xbf16>, vector<32x256xf32> -> vector<32x256xf32>
    %480 = arith.addf %470, %479 : vector<32x256xf32>
    %c239_i32_273 = arith.constant 239 : i32
    %481 = tpu.dynamic_rotate %406 by %c239_i32_273 dim 1 : vector<4x256xf32>, i32 -> vector<4x256xf32>
    %cst_274 = arith.constant 0.000000e+00 : f32
    %482 = vector.shape_cast %44 : vector<1x256xi1> to vector<1x256xi1>
    %483 = vector.broadcast %482 : vector<1x256xi1> to vector<4x256xi1>
    %484 = vector.broadcast %cst_274 : f32 to vector<4x256xf32>
    %485 = arith.select %483, %481, %484 : vector<4x256xi1>, vector<4x256xf32>
    %c8_275 = arith.constant 8 : index
    %c0_276 = arith.constant 0 : index
    %c0_277 = arith.constant 0 : index
    %486 = vector.load %arg2[%c8_275, %c0_276, %c0_277] : memref<9x32x4xbf16, #tpu.memory_space<vmem>>, vector<1x32x4xbf16>
    %487 = vector.shape_cast %486 : vector<1x32x4xbf16> to vector<32x4xbf16>
    %488 = arith.truncf %485 : vector<4x256xf32> to vector<4x256xbf16>
    %cst_278 = arith.constant dense<0.000000e+00> : vector<32x256xf32>
    %489 = tpu.matmul %487, %488, %cst_278 {dimension_numbers = #tpu.dot_dimension_numbers<[1], [0], [0], [1], [0, 0, 1, 1], [], []>} : vector<32x4xbf16>, vector<4x256xbf16>, vector<32x256xf32> -> vector<32x256xf32>
    %490 = arith.addf %480, %489 : vector<32x256xf32>
    %491 = vector.broadcast %45 : vector<32x1xf32> to vector<32x256xf32>
    %492 = arith.addf %490, %491 : vector<32x256xf32>
    %cst_279 = arith.constant 0.000000e+00 : f32
    %493 = vector.broadcast %cst_279 : f32 to vector<32x256xf32>
    %494 = arith.maximumf %492, %493 : vector<32x256xf32>
    %c17_i32_280 = arith.constant 17 : i32
    %495 = tpu.dynamic_rotate %494 by %c17_i32_280 dim 1 : vector<32x256xf32>, i32 -> vector<32x256xf32>
    %cst_281 = arith.constant 0.000000e+00 : f32
    %496 = vector.shape_cast %21 : vector<1x256xi1> to vector<1x256xi1>
    %497 = vector.broadcast %496 : vector<1x256xi1> to vector<32x256xi1>
    %498 = vector.broadcast %cst_281 : f32 to vector<32x256xf32>
    %499 = arith.select %497, %495, %498 : vector<32x256xi1>, vector<32x256xf32>
    %c0_282 = arith.constant 0 : index
    %c0_283 = arith.constant 0 : index
    %c0_284 = arith.constant 0 : index
    %500 = vector.load %arg4[%c0_282, %c0_283, %c0_284] : memref<9x16x32xbf16, #tpu.memory_space<vmem>>, vector<1x16x32xbf16>
    %501 = vector.shape_cast %500 : vector<1x16x32xbf16> to vector<16x32xbf16>
    %502 = arith.truncf %499 : vector<32x256xf32> to vector<32x256xbf16>
    %cst_285 = arith.constant dense<0.000000e+00> : vector<16x256xf32>
    %503 = tpu.matmul %501, %502, %cst_285 {dimension_numbers = #tpu.dot_dimension_numbers<[1], [0], [0], [1], [0, 0, 1, 1], [], []>} : vector<16x32xbf16>, vector<32x256xbf16>, vector<16x256xf32> -> vector<16x256xf32>
    %c16_i32_286 = arith.constant 16 : i32
    %504 = tpu.dynamic_rotate %494 by %c16_i32_286 dim 1 : vector<32x256xf32>, i32 -> vector<32x256xf32>
    %cst_287 = arith.constant 0.000000e+00 : f32
    %505 = vector.shape_cast %23 : vector<1x256xi1> to vector<1x256xi1>
    %506 = vector.broadcast %505 : vector<1x256xi1> to vector<32x256xi1>
    %507 = vector.broadcast %cst_287 : f32 to vector<32x256xf32>
    %508 = arith.select %506, %504, %507 : vector<32x256xi1>, vector<32x256xf32>
    %c1_288 = arith.constant 1 : index
    %c0_289 = arith.constant 0 : index
    %c0_290 = arith.constant 0 : index
    %509 = vector.load %arg4[%c1_288, %c0_289, %c0_290] : memref<9x16x32xbf16, #tpu.memory_space<vmem>>, vector<1x16x32xbf16>
    %510 = vector.shape_cast %509 : vector<1x16x32xbf16> to vector<16x32xbf16>
    %511 = arith.truncf %508 : vector<32x256xf32> to vector<32x256xbf16>
    %cst_291 = arith.constant dense<0.000000e+00> : vector<16x256xf32>
    %512 = tpu.matmul %510, %511, %cst_291 {dimension_numbers = #tpu.dot_dimension_numbers<[1], [0], [0], [1], [0, 0, 1, 1], [], []>} : vector<16x32xbf16>, vector<32x256xbf16>, vector<16x256xf32> -> vector<16x256xf32>
    %513 = arith.addf %503, %512 : vector<16x256xf32>
    %c15_i32_292 = arith.constant 15 : i32
    %514 = tpu.dynamic_rotate %494 by %c15_i32_292 dim 1 : vector<32x256xf32>, i32 -> vector<32x256xf32>
    %cst_293 = arith.constant 0.000000e+00 : f32
    %515 = vector.shape_cast %28 : vector<1x256xi1> to vector<1x256xi1>
    %516 = vector.broadcast %515 : vector<1x256xi1> to vector<32x256xi1>
    %517 = vector.broadcast %cst_293 : f32 to vector<32x256xf32>
    %518 = arith.select %516, %514, %517 : vector<32x256xi1>, vector<32x256xf32>
    %c2_294 = arith.constant 2 : index
    %c0_295 = arith.constant 0 : index
    %c0_296 = arith.constant 0 : index
    %519 = vector.load %arg4[%c2_294, %c0_295, %c0_296] : memref<9x16x32xbf16, #tpu.memory_space<vmem>>, vector<1x16x32xbf16>
    %520 = vector.shape_cast %519 : vector<1x16x32xbf16> to vector<16x32xbf16>
    %521 = arith.truncf %518 : vector<32x256xf32> to vector<32x256xbf16>
    %cst_297 = arith.constant dense<0.000000e+00> : vector<16x256xf32>
    %522 = tpu.matmul %520, %521, %cst_297 {dimension_numbers = #tpu.dot_dimension_numbers<[1], [0], [0], [1], [0, 0, 1, 1], [], []>} : vector<16x32xbf16>, vector<32x256xbf16>, vector<16x256xf32> -> vector<16x256xf32>
    %523 = arith.addf %513, %522 : vector<16x256xf32>
    %c1_i32_298 = arith.constant 1 : i32
    %524 = tpu.dynamic_rotate %494 by %c1_i32_298 dim 1 : vector<32x256xf32>, i32 -> vector<32x256xf32>
    %cst_299 = arith.constant 0.000000e+00 : f32
    %525 = vector.shape_cast %30 : vector<1x256xi1> to vector<1x256xi1>
    %526 = vector.broadcast %525 : vector<1x256xi1> to vector<32x256xi1>
    %527 = vector.broadcast %cst_299 : f32 to vector<32x256xf32>
    %528 = arith.select %526, %524, %527 : vector<32x256xi1>, vector<32x256xf32>
    %c3_300 = arith.constant 3 : index
    %c0_301 = arith.constant 0 : index
    %c0_302 = arith.constant 0 : index
    %529 = vector.load %arg4[%c3_300, %c0_301, %c0_302] : memref<9x16x32xbf16, #tpu.memory_space<vmem>>, vector<1x16x32xbf16>
    %530 = vector.shape_cast %529 : vector<1x16x32xbf16> to vector<16x32xbf16>
    %531 = arith.truncf %528 : vector<32x256xf32> to vector<32x256xbf16>
    %cst_303 = arith.constant dense<0.000000e+00> : vector<16x256xf32>
    %532 = tpu.matmul %530, %531, %cst_303 {dimension_numbers = #tpu.dot_dimension_numbers<[1], [0], [0], [1], [0, 0, 1, 1], [], []>} : vector<16x32xbf16>, vector<32x256xbf16>, vector<16x256xf32> -> vector<16x256xf32>
    %533 = arith.addf %523, %532 : vector<16x256xf32>
    %c4_304 = arith.constant 4 : index
    %c0_305 = arith.constant 0 : index
    %c0_306 = arith.constant 0 : index
    %534 = vector.load %arg4[%c4_304, %c0_305, %c0_306] : memref<9x16x32xbf16, #tpu.memory_space<vmem>>, vector<1x16x32xbf16>
    %535 = vector.shape_cast %534 : vector<1x16x32xbf16> to vector<16x32xbf16>
    %536 = arith.truncf %494 : vector<32x256xf32> to vector<32x256xbf16>
    %cst_307 = arith.constant dense<0.000000e+00> : vector<16x256xf32>
    %537 = tpu.matmul %535, %536, %cst_307 {dimension_numbers = #tpu.dot_dimension_numbers<[1], [0], [0], [1], [0, 0, 1, 1], [], []>} : vector<16x32xbf16>, vector<32x256xbf16>, vector<16x256xf32> -> vector<16x256xf32>
    %538 = arith.addf %533, %537 : vector<16x256xf32>
    %c255_i32_308 = arith.constant 255 : i32
    %539 = tpu.dynamic_rotate %494 by %c255_i32_308 dim 1 : vector<32x256xf32>, i32 -> vector<32x256xf32>
    %cst_309 = arith.constant 0.000000e+00 : f32
    %540 = vector.shape_cast %32 : vector<1x256xi1> to vector<1x256xi1>
    %541 = vector.broadcast %540 : vector<1x256xi1> to vector<32x256xi1>
    %542 = vector.broadcast %cst_309 : f32 to vector<32x256xf32>
    %543 = arith.select %541, %539, %542 : vector<32x256xi1>, vector<32x256xf32>
    %c5_310 = arith.constant 5 : index
    %c0_311 = arith.constant 0 : index
    %c0_312 = arith.constant 0 : index
    %544 = vector.load %arg4[%c5_310, %c0_311, %c0_312] : memref<9x16x32xbf16, #tpu.memory_space<vmem>>, vector<1x16x32xbf16>
    %545 = vector.shape_cast %544 : vector<1x16x32xbf16> to vector<16x32xbf16>
    %546 = arith.truncf %543 : vector<32x256xf32> to vector<32x256xbf16>
    %cst_313 = arith.constant dense<0.000000e+00> : vector<16x256xf32>
    %547 = tpu.matmul %545, %546, %cst_313 {dimension_numbers = #tpu.dot_dimension_numbers<[1], [0], [0], [1], [0, 0, 1, 1], [], []>} : vector<16x32xbf16>, vector<32x256xbf16>, vector<16x256xf32> -> vector<16x256xf32>
    %548 = arith.addf %538, %547 : vector<16x256xf32>
    %c241_i32_314 = arith.constant 241 : i32
    %549 = tpu.dynamic_rotate %494 by %c241_i32_314 dim 1 : vector<32x256xf32>, i32 -> vector<32x256xf32>
    %cst_315 = arith.constant 0.000000e+00 : f32
    %550 = vector.shape_cast %37 : vector<1x256xi1> to vector<1x256xi1>
    %551 = vector.broadcast %550 : vector<1x256xi1> to vector<32x256xi1>
    %552 = vector.broadcast %cst_315 : f32 to vector<32x256xf32>
    %553 = arith.select %551, %549, %552 : vector<32x256xi1>, vector<32x256xf32>
    %c6_316 = arith.constant 6 : index
    %c0_317 = arith.constant 0 : index
    %c0_318 = arith.constant 0 : index
    %554 = vector.load %arg4[%c6_316, %c0_317, %c0_318] : memref<9x16x32xbf16, #tpu.memory_space<vmem>>, vector<1x16x32xbf16>
    %555 = vector.shape_cast %554 : vector<1x16x32xbf16> to vector<16x32xbf16>
    %556 = arith.truncf %553 : vector<32x256xf32> to vector<32x256xbf16>
    %cst_319 = arith.constant dense<0.000000e+00> : vector<16x256xf32>
    %557 = tpu.matmul %555, %556, %cst_319 {dimension_numbers = #tpu.dot_dimension_numbers<[1], [0], [0], [1], [0, 0, 1, 1], [], []>} : vector<16x32xbf16>, vector<32x256xbf16>, vector<16x256xf32> -> vector<16x256xf32>
    %558 = arith.addf %548, %557 : vector<16x256xf32>
    %c240_i32_320 = arith.constant 240 : i32
    %559 = tpu.dynamic_rotate %494 by %c240_i32_320 dim 1 : vector<32x256xf32>, i32 -> vector<32x256xf32>
    %cst_321 = arith.constant 0.000000e+00 : f32
    %560 = vector.shape_cast %39 : vector<1x256xi1> to vector<1x256xi1>
    %561 = vector.broadcast %560 : vector<1x256xi1> to vector<32x256xi1>
    %562 = vector.broadcast %cst_321 : f32 to vector<32x256xf32>
    %563 = arith.select %561, %559, %562 : vector<32x256xi1>, vector<32x256xf32>
    %c7_322 = arith.constant 7 : index
    %c0_323 = arith.constant 0 : index
    %c0_324 = arith.constant 0 : index
    %564 = vector.load %arg4[%c7_322, %c0_323, %c0_324] : memref<9x16x32xbf16, #tpu.memory_space<vmem>>, vector<1x16x32xbf16>
    %565 = vector.shape_cast %564 : vector<1x16x32xbf16> to vector<16x32xbf16>
    %566 = arith.truncf %563 : vector<32x256xf32> to vector<32x256xbf16>
    %cst_325 = arith.constant dense<0.000000e+00> : vector<16x256xf32>
    %567 = tpu.matmul %565, %566, %cst_325 {dimension_numbers = #tpu.dot_dimension_numbers<[1], [0], [0], [1], [0, 0, 1, 1], [], []>} : vector<16x32xbf16>, vector<32x256xbf16>, vector<16x256xf32> -> vector<16x256xf32>
    %568 = arith.addf %558, %567 : vector<16x256xf32>
    %c239_i32_326 = arith.constant 239 : i32
    %569 = tpu.dynamic_rotate %494 by %c239_i32_326 dim 1 : vector<32x256xf32>, i32 -> vector<32x256xf32>
    %cst_327 = arith.constant 0.000000e+00 : f32
    %570 = vector.shape_cast %44 : vector<1x256xi1> to vector<1x256xi1>
    %571 = vector.broadcast %570 : vector<1x256xi1> to vector<32x256xi1>
    %572 = vector.broadcast %cst_327 : f32 to vector<32x256xf32>
    %573 = arith.select %571, %569, %572 : vector<32x256xi1>, vector<32x256xf32>
    %c8_328 = arith.constant 8 : index
    %c0_329 = arith.constant 0 : index
    %c0_330 = arith.constant 0 : index
    %574 = vector.load %arg4[%c8_328, %c0_329, %c0_330] : memref<9x16x32xbf16, #tpu.memory_space<vmem>>, vector<1x16x32xbf16>
    %575 = vector.shape_cast %574 : vector<1x16x32xbf16> to vector<16x32xbf16>
    %576 = arith.truncf %573 : vector<32x256xf32> to vector<32x256xbf16>
    %cst_331 = arith.constant dense<0.000000e+00> : vector<16x256xf32>
    %577 = tpu.matmul %575, %576, %cst_331 {dimension_numbers = #tpu.dot_dimension_numbers<[1], [0], [0], [1], [0, 0, 1, 1], [], []>} : vector<16x32xbf16>, vector<32x256xbf16>, vector<16x256xf32> -> vector<16x256xf32>
    %578 = arith.addf %568, %577 : vector<16x256xf32>
    %579 = vector.broadcast %46 : vector<16x1xf32> to vector<16x256xf32>
    %580 = arith.addf %578, %579 : vector<16x256xf32>
    %c2_332 = arith.constant 2 : index
    %c0_333 = arith.constant 0 : index
    %c0_334 = arith.constant 0 : index
    %581 = vector.load %arg6[%c2_332, %c0_333, %c0_334] : memref<4x16x256xf32, #tpu.memory_space<vmem>>, vector<1x16x256xf32>
    %582 = vector.shape_cast %581 : vector<1x16x256xf32> to vector<16x256xf32>
    %583 = vector.shape_cast %580 : vector<16x256xf32> to vector<1x16x256xf32>
    tpu.vector_store %arg6[%c2_332, %c0_333, %c0_334], %583 {strides = array<i32>} : memref<4x16x256xf32, #tpu.memory_space<vmem>>, vector<1x16x256xf32>,
    %c3_335 = arith.constant 3 : index
    %c0_336 = arith.constant 0 : index
    %c0_337 = arith.constant 0 : index
    %584 = vector.load %arg1[%c3_335, %c0_336, %c0_337] : memref<4x4x256xf32, #tpu.memory_space<vmem>>, vector<1x4x256xf32>
    %585 = vector.shape_cast %584 : vector<1x4x256xf32> to vector<4x256xf32>
    %c17_i32_338 = arith.constant 17 : i32
    %586 = tpu.dynamic_rotate %585 by %c17_i32_338 dim 1 : vector<4x256xf32>, i32 -> vector<4x256xf32>
    %cst_339 = arith.constant 0.000000e+00 : f32
    %587 = vector.shape_cast %21 : vector<1x256xi1> to vector<1x256xi1>
    %588 = vector.broadcast %587 : vector<1x256xi1> to vector<4x256xi1>
    %589 = vector.broadcast %cst_339 : f32 to vector<4x256xf32>
    %590 = arith.select %588, %586, %589 : vector<4x256xi1>, vector<4x256xf32>
    %c0_340 = arith.constant 0 : index
    %c0_341 = arith.constant 0 : index
    %c0_342 = arith.constant 0 : index
    %591 = vector.load %arg2[%c0_340, %c0_341, %c0_342] : memref<9x32x4xbf16, #tpu.memory_space<vmem>>, vector<1x32x4xbf16>
    %592 = vector.shape_cast %591 : vector<1x32x4xbf16> to vector<32x4xbf16>
    %593 = arith.truncf %590 : vector<4x256xf32> to vector<4x256xbf16>
    %cst_343 = arith.constant dense<0.000000e+00> : vector<32x256xf32>
    %594 = tpu.matmul %592, %593, %cst_343 {dimension_numbers = #tpu.dot_dimension_numbers<[1], [0], [0], [1], [0, 0, 1, 1], [], []>} : vector<32x4xbf16>, vector<4x256xbf16>, vector<32x256xf32> -> vector<32x256xf32>
    %c16_i32_344 = arith.constant 16 : i32
    %595 = tpu.dynamic_rotate %585 by %c16_i32_344 dim 1 : vector<4x256xf32>, i32 -> vector<4x256xf32>
    %cst_345 = arith.constant 0.000000e+00 : f32
    %596 = vector.shape_cast %23 : vector<1x256xi1> to vector<1x256xi1>
    %597 = vector.broadcast %596 : vector<1x256xi1> to vector<4x256xi1>
    %598 = vector.broadcast %cst_345 : f32 to vector<4x256xf32>
    %599 = arith.select %597, %595, %598 : vector<4x256xi1>, vector<4x256xf32>
    %c1_346 = arith.constant 1 : index
    %c0_347 = arith.constant 0 : index
    %c0_348 = arith.constant 0 : index
    %600 = vector.load %arg2[%c1_346, %c0_347, %c0_348] : memref<9x32x4xbf16, #tpu.memory_space<vmem>>, vector<1x32x4xbf16>
    %601 = vector.shape_cast %600 : vector<1x32x4xbf16> to vector<32x4xbf16>
    %602 = arith.truncf %599 : vector<4x256xf32> to vector<4x256xbf16>
    %cst_349 = arith.constant dense<0.000000e+00> : vector<32x256xf32>
    %603 = tpu.matmul %601, %602, %cst_349 {dimension_numbers = #tpu.dot_dimension_numbers<[1], [0], [0], [1], [0, 0, 1, 1], [], []>} : vector<32x4xbf16>, vector<4x256xbf16>, vector<32x256xf32> -> vector<32x256xf32>
    %604 = arith.addf %594, %603 : vector<32x256xf32>
    %c15_i32_350 = arith.constant 15 : i32
    %605 = tpu.dynamic_rotate %585 by %c15_i32_350 dim 1 : vector<4x256xf32>, i32 -> vector<4x256xf32>
    %cst_351 = arith.constant 0.000000e+00 : f32
    %606 = vector.shape_cast %28 : vector<1x256xi1> to vector<1x256xi1>
    %607 = vector.broadcast %606 : vector<1x256xi1> to vector<4x256xi1>
    %608 = vector.broadcast %cst_351 : f32 to vector<4x256xf32>
    %609 = arith.select %607, %605, %608 : vector<4x256xi1>, vector<4x256xf32>
    %c2_352 = arith.constant 2 : index
    %c0_353 = arith.constant 0 : index
    %c0_354 = arith.constant 0 : index
    %610 = vector.load %arg2[%c2_352, %c0_353, %c0_354] : memref<9x32x4xbf16, #tpu.memory_space<vmem>>, vector<1x32x4xbf16>
    %611 = vector.shape_cast %610 : vector<1x32x4xbf16> to vector<32x4xbf16>
    %612 = arith.truncf %609 : vector<4x256xf32> to vector<4x256xbf16>
    %cst_355 = arith.constant dense<0.000000e+00> : vector<32x256xf32>
    %613 = tpu.matmul %611, %612, %cst_355 {dimension_numbers = #tpu.dot_dimension_numbers<[1], [0], [0], [1], [0, 0, 1, 1], [], []>} : vector<32x4xbf16>, vector<4x256xbf16>, vector<32x256xf32> -> vector<32x256xf32>
    %614 = arith.addf %604, %613 : vector<32x256xf32>
    %c1_i32_356 = arith.constant 1 : i32
    %615 = tpu.dynamic_rotate %585 by %c1_i32_356 dim 1 : vector<4x256xf32>, i32 -> vector<4x256xf32>
    %cst_357 = arith.constant 0.000000e+00 : f32
    %616 = vector.shape_cast %30 : vector<1x256xi1> to vector<1x256xi1>
    %617 = vector.broadcast %616 : vector<1x256xi1> to vector<4x256xi1>
    %618 = vector.broadcast %cst_357 : f32 to vector<4x256xf32>
    %619 = arith.select %617, %615, %618 : vector<4x256xi1>, vector<4x256xf32>
    %c3_358 = arith.constant 3 : index
    %c0_359 = arith.constant 0 : index
    %c0_360 = arith.constant 0 : index
    %620 = vector.load %arg2[%c3_358, %c0_359, %c0_360] : memref<9x32x4xbf16, #tpu.memory_space<vmem>>, vector<1x32x4xbf16>
    %621 = vector.shape_cast %620 : vector<1x32x4xbf16> to vector<32x4xbf16>
    %622 = arith.truncf %619 : vector<4x256xf32> to vector<4x256xbf16>
    %cst_361 = arith.constant dense<0.000000e+00> : vector<32x256xf32>
    %623 = tpu.matmul %621, %622, %cst_361 {dimension_numbers = #tpu.dot_dimension_numbers<[1], [0], [0], [1], [0, 0, 1, 1], [], []>} : vector<32x4xbf16>, vector<4x256xbf16>, vector<32x256xf32> -> vector<32x256xf32>
    %624 = arith.addf %614, %623 : vector<32x256xf32>
    %c4_362 = arith.constant 4 : index
    %c0_363 = arith.constant 0 : index
    %c0_364 = arith.constant 0 : index
    %625 = vector.load %arg2[%c4_362, %c0_363, %c0_364] : memref<9x32x4xbf16, #tpu.memory_space<vmem>>, vector<1x32x4xbf16>
    %626 = vector.shape_cast %625 : vector<1x32x4xbf16> to vector<32x4xbf16>
    %627 = arith.truncf %585 : vector<4x256xf32> to vector<4x256xbf16>
    %cst_365 = arith.constant dense<0.000000e+00> : vector<32x256xf32>
    %628 = tpu.matmul %626, %627, %cst_365 {dimension_numbers = #tpu.dot_dimension_numbers<[1], [0], [0], [1], [0, 0, 1, 1], [], []>} : vector<32x4xbf16>, vector<4x256xbf16>, vector<32x256xf32> -> vector<32x256xf32>
    %629 = arith.addf %624, %628 : vector<32x256xf32>
    %c255_i32_366 = arith.constant 255 : i32
    %630 = tpu.dynamic_rotate %585 by %c255_i32_366 dim 1 : vector<4x256xf32>, i32 -> vector<4x256xf32>
    %cst_367 = arith.constant 0.000000e+00 : f32
    %631 = vector.shape_cast %32 : vector<1x256xi1> to vector<1x256xi1>
    %632 = vector.broadcast %631 : vector<1x256xi1> to vector<4x256xi1>
    %633 = vector.broadcast %cst_367 : f32 to vector<4x256xf32>
    %634 = arith.select %632, %630, %633 : vector<4x256xi1>, vector<4x256xf32>
    %c5_368 = arith.constant 5 : index
    %c0_369 = arith.constant 0 : index
    %c0_370 = arith.constant 0 : index
    %635 = vector.load %arg2[%c5_368, %c0_369, %c0_370] : memref<9x32x4xbf16, #tpu.memory_space<vmem>>, vector<1x32x4xbf16>
    %636 = vector.shape_cast %635 : vector<1x32x4xbf16> to vector<32x4xbf16>
    %637 = arith.truncf %634 : vector<4x256xf32> to vector<4x256xbf16>
    %cst_371 = arith.constant dense<0.000000e+00> : vector<32x256xf32>
    %638 = tpu.matmul %636, %637, %cst_371 {dimension_numbers = #tpu.dot_dimension_numbers<[1], [0], [0], [1], [0, 0, 1, 1], [], []>} : vector<32x4xbf16>, vector<4x256xbf16>, vector<32x256xf32> -> vector<32x256xf32>
    %639 = arith.addf %629, %638 : vector<32x256xf32>
    %c241_i32_372 = arith.constant 241 : i32
    %640 = tpu.dynamic_rotate %585 by %c241_i32_372 dim 1 : vector<4x256xf32>, i32 -> vector<4x256xf32>
    %cst_373 = arith.constant 0.000000e+00 : f32
    %641 = vector.shape_cast %37 : vector<1x256xi1> to vector<1x256xi1>
    %642 = vector.broadcast %641 : vector<1x256xi1> to vector<4x256xi1>
    %643 = vector.broadcast %cst_373 : f32 to vector<4x256xf32>
    %644 = arith.select %642, %640, %643 : vector<4x256xi1>, vector<4x256xf32>
    %c6_374 = arith.constant 6 : index
    %c0_375 = arith.constant 0 : index
    %c0_376 = arith.constant 0 : index
    %645 = vector.load %arg2[%c6_374, %c0_375, %c0_376] : memref<9x32x4xbf16, #tpu.memory_space<vmem>>, vector<1x32x4xbf16>
    %646 = vector.shape_cast %645 : vector<1x32x4xbf16> to vector<32x4xbf16>
    %647 = arith.truncf %644 : vector<4x256xf32> to vector<4x256xbf16>
    %cst_377 = arith.constant dense<0.000000e+00> : vector<32x256xf32>
    %648 = tpu.matmul %646, %647, %cst_377 {dimension_numbers = #tpu.dot_dimension_numbers<[1], [0], [0], [1], [0, 0, 1, 1], [], []>} : vector<32x4xbf16>, vector<4x256xbf16>, vector<32x256xf32> -> vector<32x256xf32>
    %649 = arith.addf %639, %648 : vector<32x256xf32>
    %c240_i32_378 = arith.constant 240 : i32
    %650 = tpu.dynamic_rotate %585 by %c240_i32_378 dim 1 : vector<4x256xf32>, i32 -> vector<4x256xf32>
    %cst_379 = arith.constant 0.000000e+00 : f32
    %651 = vector.shape_cast %39 : vector<1x256xi1> to vector<1x256xi1>
    %652 = vector.broadcast %651 : vector<1x256xi1> to vector<4x256xi1>
    %653 = vector.broadcast %cst_379 : f32 to vector<4x256xf32>
    %654 = arith.select %652, %650, %653 : vector<4x256xi1>, vector<4x256xf32>
    %c7_380 = arith.constant 7 : index
    %c0_381 = arith.constant 0 : index
    %c0_382 = arith.constant 0 : index
    %655 = vector.load %arg2[%c7_380, %c0_381, %c0_382] : memref<9x32x4xbf16, #tpu.memory_space<vmem>>, vector<1x32x4xbf16>
    %656 = vector.shape_cast %655 : vector<1x32x4xbf16> to vector<32x4xbf16>
    %657 = arith.truncf %654 : vector<4x256xf32> to vector<4x256xbf16>
    %cst_383 = arith.constant dense<0.000000e+00> : vector<32x256xf32>
    %658 = tpu.matmul %656, %657, %cst_383 {dimension_numbers = #tpu.dot_dimension_numbers<[1], [0], [0], [1], [0, 0, 1, 1], [], []>} : vector<32x4xbf16>, vector<4x256xbf16>, vector<32x256xf32> -> vector<32x256xf32>
    %659 = arith.addf %649, %658 : vector<32x256xf32>
    %c239_i32_384 = arith.constant 239 : i32
    %660 = tpu.dynamic_rotate %585 by %c239_i32_384 dim 1 : vector<4x256xf32>, i32 -> vector<4x256xf32>
    %cst_385 = arith.constant 0.000000e+00 : f32
    %661 = vector.shape_cast %44 : vector<1x256xi1> to vector<1x256xi1>
    %662 = vector.broadcast %661 : vector<1x256xi1> to vector<4x256xi1>
    %663 = vector.broadcast %cst_385 : f32 to vector<4x256xf32>
    %664 = arith.select %662, %660, %663 : vector<4x256xi1>, vector<4x256xf32>
    %c8_386 = arith.constant 8 : index
    %c0_387 = arith.constant 0 : index
    %c0_388 = arith.constant 0 : index
    %665 = vector.load %arg2[%c8_386, %c0_387, %c0_388] : memref<9x32x4xbf16, #tpu.memory_space<vmem>>, vector<1x32x4xbf16>
    %666 = vector.shape_cast %665 : vector<1x32x4xbf16> to vector<32x4xbf16>
    %667 = arith.truncf %664 : vector<4x256xf32> to vector<4x256xbf16>
    %cst_389 = arith.constant dense<0.000000e+00> : vector<32x256xf32>
    %668 = tpu.matmul %666, %667, %cst_389 {dimension_numbers = #tpu.dot_dimension_numbers<[1], [0], [0], [1], [0, 0, 1, 1], [], []>} : vector<32x4xbf16>, vector<4x256xbf16>, vector<32x256xf32> -> vector<32x256xf32>
    %669 = arith.addf %659, %668 : vector<32x256xf32>
    %670 = vector.broadcast %45 : vector<32x1xf32> to vector<32x256xf32>
    %671 = arith.addf %669, %670 : vector<32x256xf32>
    %cst_390 = arith.constant 0.000000e+00 : f32
    %672 = vector.broadcast %cst_390 : f32 to vector<32x256xf32>
    %673 = arith.maximumf %671, %672 : vector<32x256xf32>
    %c17_i32_391 = arith.constant 17 : i32
    %674 = tpu.dynamic_rotate %673 by %c17_i32_391 dim 1 : vector<32x256xf32>, i32 -> vector<32x256xf32>
    %cst_392 = arith.constant 0.000000e+00 : f32
    %675 = vector.shape_cast %21 : vector<1x256xi1> to vector<1x256xi1>
    %676 = vector.broadcast %675 : vector<1x256xi1> to vector<32x256xi1>
    %677 = vector.broadcast %cst_392 : f32 to vector<32x256xf32>
    %678 = arith.select %676, %674, %677 : vector<32x256xi1>, vector<32x256xf32>
    %c0_393 = arith.constant 0 : index
    %c0_394 = arith.constant 0 : index
    %c0_395 = arith.constant 0 : index
    %679 = vector.load %arg4[%c0_393, %c0_394, %c0_395] : memref<9x16x32xbf16, #tpu.memory_space<vmem>>, vector<1x16x32xbf16>
    %680 = vector.shape_cast %679 : vector<1x16x32xbf16> to vector<16x32xbf16>
    %681 = arith.truncf %678 : vector<32x256xf32> to vector<32x256xbf16>
    %cst_396 = arith.constant dense<0.000000e+00> : vector<16x256xf32>
    %682 = tpu.matmul %680, %681, %cst_396 {dimension_numbers = #tpu.dot_dimension_numbers<[1], [0], [0], [1], [0, 0, 1, 1], [], []>} : vector<16x32xbf16>, vector<32x256xbf16>, vector<16x256xf32> -> vector<16x256xf32>
    %c16_i32_397 = arith.constant 16 : i32
    %683 = tpu.dynamic_rotate %673 by %c16_i32_397 dim 1 : vector<32x256xf32>, i32 -> vector<32x256xf32>
    %cst_398 = arith.constant 0.000000e+00 : f32
    %684 = vector.shape_cast %23 : vector<1x256xi1> to vector<1x256xi1>
    %685 = vector.broadcast %684 : vector<1x256xi1> to vector<32x256xi1>
    %686 = vector.broadcast %cst_398 : f32 to vector<32x256xf32>
    %687 = arith.select %685, %683, %686 : vector<32x256xi1>, vector<32x256xf32>
    %c1_399 = arith.constant 1 : index
    %c0_400 = arith.constant 0 : index
    %c0_401 = arith.constant 0 : index
    %688 = vector.load %arg4[%c1_399, %c0_400, %c0_401] : memref<9x16x32xbf16, #tpu.memory_space<vmem>>, vector<1x16x32xbf16>
    %689 = vector.shape_cast %688 : vector<1x16x32xbf16> to vector<16x32xbf16>
    %690 = arith.truncf %687 : vector<32x256xf32> to vector<32x256xbf16>
    %cst_402 = arith.constant dense<0.000000e+00> : vector<16x256xf32>
    %691 = tpu.matmul %689, %690, %cst_402 {dimension_numbers = #tpu.dot_dimension_numbers<[1], [0], [0], [1], [0, 0, 1, 1], [], []>} : vector<16x32xbf16>, vector<32x256xbf16>, vector<16x256xf32> -> vector<16x256xf32>
    %692 = arith.addf %682, %691 : vector<16x256xf32>
    %c15_i32_403 = arith.constant 15 : i32
    %693 = tpu.dynamic_rotate %673 by %c15_i32_403 dim 1 : vector<32x256xf32>, i32 -> vector<32x256xf32>
    %cst_404 = arith.constant 0.000000e+00 : f32
    %694 = vector.shape_cast %28 : vector<1x256xi1> to vector<1x256xi1>
    %695 = vector.broadcast %694 : vector<1x256xi1> to vector<32x256xi1>
    %696 = vector.broadcast %cst_404 : f32 to vector<32x256xf32>
    %697 = arith.select %695, %693, %696 : vector<32x256xi1>, vector<32x256xf32>
    %c2_405 = arith.constant 2 : index
    %c0_406 = arith.constant 0 : index
    %c0_407 = arith.constant 0 : index
    %698 = vector.load %arg4[%c2_405, %c0_406, %c0_407] : memref<9x16x32xbf16, #tpu.memory_space<vmem>>, vector<1x16x32xbf16>
    %699 = vector.shape_cast %698 : vector<1x16x32xbf16> to vector<16x32xbf16>
    %700 = arith.truncf %697 : vector<32x256xf32> to vector<32x256xbf16>
    %cst_408 = arith.constant dense<0.000000e+00> : vector<16x256xf32>
    %701 = tpu.matmul %699, %700, %cst_408 {dimension_numbers = #tpu.dot_dimension_numbers<[1], [0], [0], [1], [0, 0, 1, 1], [], []>} : vector<16x32xbf16>, vector<32x256xbf16>, vector<16x256xf32> -> vector<16x256xf32>
    %702 = arith.addf %692, %701 : vector<16x256xf32>
    %c1_i32_409 = arith.constant 1 : i32
    %703 = tpu.dynamic_rotate %673 by %c1_i32_409 dim 1 : vector<32x256xf32>, i32 -> vector<32x256xf32>
    %cst_410 = arith.constant 0.000000e+00 : f32
    %704 = vector.shape_cast %30 : vector<1x256xi1> to vector<1x256xi1>
    %705 = vector.broadcast %704 : vector<1x256xi1> to vector<32x256xi1>
    %706 = vector.broadcast %cst_410 : f32 to vector<32x256xf32>
    %707 = arith.select %705, %703, %706 : vector<32x256xi1>, vector<32x256xf32>
    %c3_411 = arith.constant 3 : index
    %c0_412 = arith.constant 0 : index
    %c0_413 = arith.constant 0 : index
    %708 = vector.load %arg4[%c3_411, %c0_412, %c0_413] : memref<9x16x32xbf16, #tpu.memory_space<vmem>>, vector<1x16x32xbf16>
    %709 = vector.shape_cast %708 : vector<1x16x32xbf16> to vector<16x32xbf16>
    %710 = arith.truncf %707 : vector<32x256xf32> to vector<32x256xbf16>
    %cst_414 = arith.constant dense<0.000000e+00> : vector<16x256xf32>
    %711 = tpu.matmul %709, %710, %cst_414 {dimension_numbers = #tpu.dot_dimension_numbers<[1], [0], [0], [1], [0, 0, 1, 1], [], []>} : vector<16x32xbf16>, vector<32x256xbf16>, vector<16x256xf32> -> vector<16x256xf32>
    %712 = arith.addf %702, %711 : vector<16x256xf32>
    %c4_415 = arith.constant 4 : index
    %c0_416 = arith.constant 0 : index
    %c0_417 = arith.constant 0 : index
    %713 = vector.load %arg4[%c4_415, %c0_416, %c0_417] : memref<9x16x32xbf16, #tpu.memory_space<vmem>>, vector<1x16x32xbf16>
    %714 = vector.shape_cast %713 : vector<1x16x32xbf16> to vector<16x32xbf16>
    %715 = arith.truncf %673 : vector<32x256xf32> to vector<32x256xbf16>
    %cst_418 = arith.constant dense<0.000000e+00> : vector<16x256xf32>
    %716 = tpu.matmul %714, %715, %cst_418 {dimension_numbers = #tpu.dot_dimension_numbers<[1], [0], [0], [1], [0, 0, 1, 1], [], []>} : vector<16x32xbf16>, vector<32x256xbf16>, vector<16x256xf32> -> vector<16x256xf32>
    %717 = arith.addf %712, %716 : vector<16x256xf32>
    %c255_i32_419 = arith.constant 255 : i32
    %718 = tpu.dynamic_rotate %673 by %c255_i32_419 dim 1 : vector<32x256xf32>, i32 -> vector<32x256xf32>
    %cst_420 = arith.constant 0.000000e+00 : f32
    %719 = vector.shape_cast %32 : vector<1x256xi1> to vector<1x256xi1>
    %720 = vector.broadcast %719 : vector<1x256xi1> to vector<32x256xi1>
    %721 = vector.broadcast %cst_420 : f32 to vector<32x256xf32>
    %722 = arith.select %720, %718, %721 : vector<32x256xi1>, vector<32x256xf32>
    %c5_421 = arith.constant 5 : index
    %c0_422 = arith.constant 0 : index
    %c0_423 = arith.constant 0 : index
    %723 = vector.load %arg4[%c5_421, %c0_422, %c0_423] : memref<9x16x32xbf16, #tpu.memory_space<vmem>>, vector<1x16x32xbf16>
    %724 = vector.shape_cast %723 : vector<1x16x32xbf16> to vector<16x32xbf16>
    %725 = arith.truncf %722 : vector<32x256xf32> to vector<32x256xbf16>
    %cst_424 = arith.constant dense<0.000000e+00> : vector<16x256xf32>
    %726 = tpu.matmul %724, %725, %cst_424 {dimension_numbers = #tpu.dot_dimension_numbers<[1], [0], [0], [1], [0, 0, 1, 1], [], []>} : vector<16x32xbf16>, vector<32x256xbf16>, vector<16x256xf32> -> vector<16x256xf32>
    %727 = arith.addf %717, %726 : vector<16x256xf32>
    %c241_i32_425 = arith.constant 241 : i32
    %728 = tpu.dynamic_rotate %673 by %c241_i32_425 dim 1 : vector<32x256xf32>, i32 -> vector<32x256xf32>
    %cst_426 = arith.constant 0.000000e+00 : f32
    %729 = vector.shape_cast %37 : vector<1x256xi1> to vector<1x256xi1>
    %730 = vector.broadcast %729 : vector<1x256xi1> to vector<32x256xi1>
    %731 = vector.broadcast %cst_426 : f32 to vector<32x256xf32>
    %732 = arith.select %730, %728, %731 : vector<32x256xi1>, vector<32x256xf32>
    %c6_427 = arith.constant 6 : index
    %c0_428 = arith.constant 0 : index
    %c0_429 = arith.constant 0 : index
    %733 = vector.load %arg4[%c6_427, %c0_428, %c0_429] : memref<9x16x32xbf16, #tpu.memory_space<vmem>>, vector<1x16x32xbf16>
    %734 = vector.shape_cast %733 : vector<1x16x32xbf16> to vector<16x32xbf16>
    %735 = arith.truncf %732 : vector<32x256xf32> to vector<32x256xbf16>
    %cst_430 = arith.constant dense<0.000000e+00> : vector<16x256xf32>
    %736 = tpu.matmul %734, %735, %cst_430 {dimension_numbers = #tpu.dot_dimension_numbers<[1], [0], [0], [1], [0, 0, 1, 1], [], []>} : vector<16x32xbf16>, vector<32x256xbf16>, vector<16x256xf32> -> vector<16x256xf32>
    %737 = arith.addf %727, %736 : vector<16x256xf32>
    %c240_i32_431 = arith.constant 240 : i32
    %738 = tpu.dynamic_rotate %673 by %c240_i32_431 dim 1 : vector<32x256xf32>, i32 -> vector<32x256xf32>
    %cst_432 = arith.constant 0.000000e+00 : f32
    %739 = vector.shape_cast %39 : vector<1x256xi1> to vector<1x256xi1>
    %740 = vector.broadcast %739 : vector<1x256xi1> to vector<32x256xi1>
    %741 = vector.broadcast %cst_432 : f32 to vector<32x256xf32>
    %742 = arith.select %740, %738, %741 : vector<32x256xi1>, vector<32x256xf32>
    %c7_433 = arith.constant 7 : index
    %c0_434 = arith.constant 0 : index
    %c0_435 = arith.constant 0 : index
    %743 = vector.load %arg4[%c7_433, %c0_434, %c0_435] : memref<9x16x32xbf16, #tpu.memory_space<vmem>>, vector<1x16x32xbf16>
    %744 = vector.shape_cast %743 : vector<1x16x32xbf16> to vector<16x32xbf16>
    %745 = arith.truncf %742 : vector<32x256xf32> to vector<32x256xbf16>
    %cst_436 = arith.constant dense<0.000000e+00> : vector<16x256xf32>
    %746 = tpu.matmul %744, %745, %cst_436 {dimension_numbers = #tpu.dot_dimension_numbers<[1], [0], [0], [1], [0, 0, 1, 1], [], []>} : vector<16x32xbf16>, vector<32x256xbf16>, vector<16x256xf32> -> vector<16x256xf32>
    %747 = arith.addf %737, %746 : vector<16x256xf32>
    %c239_i32_437 = arith.constant 239 : i32
    %748 = tpu.dynamic_rotate %673 by %c239_i32_437 dim 1 : vector<32x256xf32>, i32 -> vector<32x256xf32>
    %cst_438 = arith.constant 0.000000e+00 : f32
    %749 = vector.shape_cast %44 : vector<1x256xi1> to vector<1x256xi1>
    %750 = vector.broadcast %749 : vector<1x256xi1> to vector<32x256xi1>
    %751 = vector.broadcast %cst_438 : f32 to vector<32x256xf32>
    %752 = arith.select %750, %748, %751 : vector<32x256xi1>, vector<32x256xf32>
    %c8_439 = arith.constant 8 : index
    %c0_440 = arith.constant 0 : index
    %c0_441 = arith.constant 0 : index
    %753 = vector.load %arg4[%c8_439, %c0_440, %c0_441] : memref<9x16x32xbf16, #tpu.memory_space<vmem>>, vector<1x16x32xbf16>
    %754 = vector.shape_cast %753 : vector<1x16x32xbf16> to vector<16x32xbf16>
    %755 = arith.truncf %752 : vector<32x256xf32> to vector<32x256xbf16>
    %cst_442 = arith.constant dense<0.000000e+00> : vector<16x256xf32>
    %756 = tpu.matmul %754, %755, %cst_442 {dimension_numbers = #tpu.dot_dimension_numbers<[1], [0], [0], [1], [0, 0, 1, 1], [], []>} : vector<16x32xbf16>, vector<32x256xbf16>, vector<16x256xf32> -> vector<16x256xf32>
    %757 = arith.addf %747, %756 : vector<16x256xf32>
    %758 = vector.broadcast %46 : vector<16x1xf32> to vector<16x256xf32>
    %759 = arith.addf %757, %758 : vector<16x256xf32>
    %c3_443 = arith.constant 3 : index
    %c0_444 = arith.constant 0 : index
    %c0_445 = arith.constant 0 : index
    %760 = vector.load %arg6[%c3_443, %c0_444, %c0_445] : memref<4x16x256xf32, #tpu.memory_space<vmem>>, vector<1x16x256xf32>
    %761 = vector.shape_cast %760 : vector<1x16x256xf32> to vector<16x256xf32>
    %762 = vector.shape_cast %759 : vector<16x256xf32> to vector<1x16x256xf32>
    tpu.vector_store %arg6[%c3_443, %c0_444, %c0_445], %762 {strides = array<i32>} : memref<4x16x256xf32, #tpu.memory_space<vmem>>, vector<1x16x256xf32>,
    return
  }
  func.func @transform_0(%arg0: i32) -> (i32, i32, i32) {
    %c0_i32 = arith.constant 0 : i32
    %c0_i32_0 = arith.constant 0 : i32
    %c0_i32_1 = arith.constant 0 : i32
    return %arg0, %c0_i32, %c0_i32_0 : i32, i32, i32
  }
  func.func @transform_1(%arg0: i32) -> (i32, i32, i32) {
    %c0_i32 = arith.constant 0 : i32
    %c0_i32_0 = arith.constant 0 : i32
    %c0_i32_1 = arith.constant 0 : i32
    %c0_i32_2 = arith.constant 0 : i32
    return %c0_i32, %c0_i32_0, %c0_i32_1 : i32, i32, i32
  }
  func.func @transform_2(%arg0: i32) -> (i32, i32) {
    %c0_i32 = arith.constant 0 : i32
    %c0_i32_0 = arith.constant 0 : i32
    %c0_i32_1 = arith.constant 0 : i32
    return %c0_i32, %c0_i32_0 : i32, i32
  }
  func.func @transform_3(%arg0: i32) -> (i32, i32, i32) {
    %c0_i32 = arith.constant 0 : i32
    %c0_i32_0 = arith.constant 0 : i32
    %c0_i32_1 = arith.constant 0 : i32
    %c0_i32_2 = arith.constant 0 : i32
    return %c0_i32, %c0_i32_0, %c0_i32_1 : i32, i32, i32
  }
  func.func @transform_4(%arg0: i32) -> (i32, i32) {
    %c0_i32 = arith.constant 0 : i32
    %c0_i32_0 = arith.constant 0 : i32
    %c0_i32_1 = arith.constant 0 : i32
    return %c0_i32, %c0_i32_0 : i32, i32
  }
  func.func @transform_5(%arg0: i32) -> (i32, i32, i32) {
    %c0_i32 = arith.constant 0 : i32
    %c0_i32_0 = arith.constant 0 : i32
    %c0_i32_1 = arith.constant 0 : i32
    return %arg0, %c0_i32, %c0_i32_0 : i32, i32, i32
  }
}

</mosaic_0001>

<llo_original>
// kernel: tpu_custom_call.1
$region0: #{tpu_custom_call.1}
  #allocation0 [shape = 'u32[]', space=smem, size = 0x4, offset = 0x4, fixed_abs, tag = 'smem constant byte address 0x4 - core index']
  #allocation1 [shape = 'u32[144,128]{1,0:T(1,128)}', space=vmem, size = 0x12000, scoped, tag = 'internal scratch']
  %s0 = inlined_call_operand.vmem [shape: f32[8,4,256], index: 0, kind: input, shape index: {}]
  %s1 = inlined_call_operand.vmem [shape: bf16[9,32,4], index: 1, kind: input, shape index: {}]
  %s2 = inlined_call_operand.vmem [shape: f32[32,1], index: 2, kind: input, shape index: {}]
  %s3 = inlined_call_operand.vmem [shape: bf16[9,16,32], index: 3, kind: input, shape index: {}]
  %s4 = inlined_call_operand.vmem [shape: f32[16,1], index: 4, kind: input, shape index: {}]
  %s5 = inlined_call_operand.hbm [shape: f32[8,16,256], index: 5, kind: output, shape index: {}]
  %s6 = sld [smem:[#allocation0]]
  $region53: #{tpu_custom_call.1} parent=0
    _
  %s8 = ssub.s32 1, %s6
  %s9 = scalar_select 0, %s8, %s6
  $region1: #{tpu_custom_call.1} parent=0
    #allocation2 [shape = 'u8[131072]{0}', space=vmem, size = 0x20000, scoped, tag = 'output window, operand 0']
    #allocation3 [shape = 's32[2]{0}', space=sflag, size = 0x8, scoped, tag = 'scoped memory for tpu_custom_call.1']
    %10 = vsyncpa [#allocation3], 0
    %s11 = scalar_lea.sflag [#allocation3], 1
    %12 = vsyncpa %s11, 0
    loop: start=0, step=1, limit=4
    $region2: #{tpu_custom_call.1} parent=1 // loop_pre_header
      _
    $region3: #{tpu_custom_call.1} parent=1 // loop_header
      %s14 = sphi 0, %s18
      %p15 = scmp.ge.s32.totalorder %s14, 4
      %s24 = sphi 0, %s26
      %s27 = sphi 0, %s24
      %s28 = sphi 0, %s27
      %s44 = sphi 0, %s28
      %s48 = sphi 0, %s48
      %s50 = sphi 0, %s48
      %s51 = sphi 0, %s50
      %s65 = sphi 0, %s51
      %s69 = sphi 0, %s69
      %s71 = sphi 0, %s69
      %s72 = sphi 0, %s71
      %s86 = sphi 0, %s72
      %s90 = sphi 0, %s90
      %s92 = sphi 0, %s90
      %s93 = sphi 0, %s92
      %s107 = sphi 0, %s93
      %s111 = sphi 0, %s111
      %s113 = sphi 0, %s111
      %s114 = sphi 0, %s113
      %s128 = sphi 0, %s114
      %s134 = sphi 0, %s136
      %s137 = sphi 0, %s134
      %s138 = sphi 0, %s137
      %s154 = sphi 0, %s138
    $region4: #{tpu_custom_call.1} parent=1 // loop_header_branch
      %17 = sbr.rel (%p15) target = $region8
    $region5: #{tpu_custom_call.1} parent=1 // loop_body
      %s19 = ssub.s32 %s14, 1
      %s20 = ssub.s32 %s14, 2
      %s21 = sadd.s32 %s14, 1
      %s22 = ssub.s32 %s14, %s21
      %p23 = scmp.eq.s32.totalorder %s22, 0
      %s25 = sadd.s32 %s24, 1
      %s26 = scalar_select %p23, %s24, %s25
      %p29 = pneg %p23
      %p30 = scmp.eq.s32.totalorder %s14, 1
      %p31 = por %p29, %p30
      %p32 = scmp.ne.s32.totalorder %s24, %s27
      %p33 = scmp.eq.s32.totalorder %s14, 0
      %p34 = por %p32, %p33
      %p35 = scmp.ne.s32.totalorder %s24, %s27
      %p36 = scmp.eq.s32.totalorder %s19, 1
      %p37 = por %p35, %p36
      %p38 = scmp.ne.s32.totalorder %s27, %s28
      %p39 = scmp.eq.s32.totalorder %s19, 0
      %p40 = por %p38, %p39
      %p41 = scmp.ne.s32.totalorder %s27, %s28
      %p42 = scmp.eq.s32.totalorder %s20, 1
      %p43 = por %p41, %p42
      %p45 = scmp.ne.s32.totalorder %s28, %s44
      %p46 = scmp.eq.s32.totalorder %s20, 0
      %p47 = por %p45, %p46
      %s49 = sadd.s32 %s48, 1
      %p52 = scmp.eq.s32.totalorder %s14, 1
      %p53 = scmp.ne.s32.totalorder %s48, %s50
      %p54 = scmp.eq.s32.totalorder %s14, 0
      %p55 = por %p53, %p54
      %p56 = scmp.ne.s32.totalorder %s48, %s50
      %p57 = scmp.eq.s32.totalorder %s19, 1
      %p58 = por %p56, %p57
      %p59 = scmp.ne.s32.totalorder %s50, %s51
      %p60 = scmp.eq.s32.totalorder %s19, 0
      %p61 = por %p59, %p60
      %p62 = scmp.ne.s32.totalorder %s50, %s51
      %p63 = scmp.eq.s32.totalorder %s20, 1
      %p64 = por %p62, %p63
      %p66 = scmp.ne.s32.totalorder %s51, %s65
      %p67 = scmp.eq.s32.totalorder %s20, 0
      %p68 = por %p66, %p67
      %s70 = sadd.s32 %s69, 1
      %p73 = scmp.eq.s32.totalorder %s14, 1
      %p74 = scmp.ne.s32.totalorder %s69, %s71
      %p75 = scmp.eq.s32.totalorder %s14, 0
      %p76 = por %p74, %p75
      %p77 = scmp.ne.s32.totalorder %s69, %s71
      %p78 = scmp.eq.s32.totalorder %s19, 1
      %p79 = por %p77, %p78
      %p80 = scmp.ne.s32.totalorder %s71, %s72
      %p81 = scmp.eq.s32.totalorder %s19, 0
      %p82 = por %p80, %p81
      %p83 = scmp.ne.s32.totalorder %s71, %s72
      %p84 = scmp.eq.s32.totalorder %s20, 1
      %p85 = por %p83, %p84
      %p87 = scmp.ne.s32.totalorder %s72, %s86
      %p88 = scmp.eq.s32.totalorder %s20, 0
      %p89 = por %p87, %p88
      %s91 = sadd.s32 %s90, 1
      %p94 = scmp.eq.s32.totalorder %s14, 1
      %p95 = scmp.ne.s32.totalorder %s90, %s92
      %p96 = scmp.eq.s32.totalorder %s14, 0
      %p97 = por %p95, %p96
      %p98 = scmp.ne.s32.totalorder %s90, %s92
      %p99 = scmp.eq.s32.totalorder %s19, 1
      %p100 = por %p98, %p99
      %p101 = scmp.ne.s32.totalorder %s92, %s93
      %p102 = scmp.eq.s32.totalorder %s19, 0
      %p103 = por %p101, %p102
      %p104 = scmp.ne.s32.totalorder %s92, %s93
      %p105 = scmp.eq.s32.totalorder %s20, 1
      %p106 = por %p104, %p105
      %p108 = scmp.ne.s32.totalorder %s93, %s107
      %p109 = scmp.eq.s32.totalorder %s20, 0
      %p110 = por %p108, %p109
      %s112 = sadd.s32 %s111, 1
      %p115 = scmp.eq.s32.totalorder %s14, 1
      %p116 = scmp.ne.s32.totalorder %s111, %s113
      %p117 = scmp.eq.s32.totalorder %s14, 0
      %p118 = por %p116, %p117
      %p119 = scmp.ne.s32.totalorder %s111, %s113
      %p120 = scmp.eq.s32.totalorder %s19, 1
      %p121 = por %p119, %p120
      %p122 = scmp.ne.s32.totalorder %s113, %s114
      %p123 = scmp.eq.s32.totalorder %s19, 0
      %p124 = por %p122, %p123
      %p125 = scmp.ne.s32.totalorder %s113, %s114
      %p126 = scmp.eq.s32.totalorder %s20, 1
      %p127 = por %p125, %p126
      %p129 = scmp.ne.s32.totalorder %s114, %s128
      %p130 = scmp.eq.s32.totalorder %s20, 0
      %p131 = por %p129, %p130
      %s132 = ssub.s32 %s14, %s21
      %p133 = scmp.eq.s32.totalorder %s132, 0
      %s135 = sadd.s32 %s134, 1
      %s136 = scalar_select %p133, %s134, %s135
      %p139 = pneg %p133
      %p140 = scmp.eq.s32.totalorder %s14, 1
      %p141 = por %p139, %p140
      %p142 = scmp.ne.s32.totalorder %s134, %s137
      %p143 = scmp.eq.s32.totalorder %s14, 0
      %p144 = por %p142, %p143
      %p145 = scmp.ne.s32.totalorder %s134, %s137
      %p146 = scmp.eq.s32.totalorder %s19, 1
      %p147 = por %p145, %p146
      %p148 = scmp.ne.s32.totalorder %s137, %s138
      %p149 = scmp.eq.s32.totalorder %s19, 0
      %p150 = por %p148, %p149
      %p151 = scmp.ne.s32.totalorder %s137, %s138
      %p152 = scmp.eq.s32.totalorder %s20, 1
      %p153 = por %p151, %p152
      %p155 = scmp.ne.s32.totalorder %s138, %s154
      %p156 = scmp.eq.s32.totalorder %s20, 0
      %p157 = por %p155, %p156
      %p158 = scmp.le.s32.totalorder 1, %s14
      %p159 = scmp.lt.s32.totalorder %s14, 3
      %p160 = pnand %p158, %p159
      %p161 = pneg %p160
      // Predicated region
      $region9: #{tpu_custom_call.1} parent=5 // pred_check
        _
      $region10: #{tpu_custom_call.1} parent=5 // pred_check_branch
        %163 = sbr.rel (%p160) target = $region12
      $region11: #{tpu_custom_call.1} parent=5 // pred_region
        %s164 = ssub.s32 %s14, 1
        // Predicated region
        $region13: #{tpu_custom_call.1} parent=11 // pred_check
          %p165 = pneg %p61
        $region14: #{tpu_custom_call.1} parent=11 // pred_check_branch
          %167 = sbr.rel (%p165) target = $region16
        $region15: #{tpu_custom_call.1} parent=11 // pred_region
          _
        $region16: #{tpu_custom_call.1} parent=11 // pred_fallthru
          _
        // Predicated region
        $region17: #{tpu_custom_call.1} parent=11 // pred_check
          %p168 = pneg %p82
        $region18: #{tpu_custom_call.1} parent=11 // pred_check_branch
          %170 = sbr.rel (%p168) target = $region20
        $region19: #{tpu_custom_call.1} parent=11 // pred_region
          _
        $region20: #{tpu_custom_call.1} parent=11 // pred_fallthru
          _
        // Predicated region
        $region21: #{tpu_custom_call.1} parent=11 // pred_check
          %p171 = pneg %p103
        $region22: #{tpu_custom_call.1} parent=11 // pred_check_branch
          %173 = sbr.rel (%p171) target = $region24
        $region23: #{tpu_custom_call.1} parent=11 // pred_region
          _
        $region24: #{tpu_custom_call.1} parent=11 // pred_fallthru
          _
        // Predicated region
        $region25: #{tpu_custom_call.1} parent=11 // pred_check
          %p174 = pneg %p124
        $region26: #{tpu_custom_call.1} parent=11 // pred_check_branch
          %176 = sbr.rel (%p174) target = $region28
        $region27: #{tpu_custom_call.1} parent=11 // pred_region
          _
        $region28: #{tpu_custom_call.1} parent=11 // pred_fallthru
          _
      $region12: #{tpu_custom_call.1} parent=5 // pred_fallthru
        _
      %p177 = scmp.lt.s32.totalorder %s14, 2
      // Predicated region
      $region29: #{tpu_custom_call.1} parent=5 // pred_check
        %p178 = pneg %p177
      $region30: #{tpu_custom_call.1} parent=5 // pred_check_branch
        %180 = sbr.rel (%p178) target = $region32
      $region31: #{tpu_custom_call.1} parent=5 // pred_region
        // Predicated region
        $region33: #{tpu_custom_call.1} parent=31 // pred_check
          %p181 = pneg %p34
        $region34: #{tpu_custom_call.1} parent=31 // pred_check_branch
          %183 = sbr.rel (%p181) target = $region36
        $region35: #{tpu_custom_call.1} parent=31 // pred_region
          %s184 = smul.u32 4, %s14
          %p185 = scmp.lt.s32.totalorder %s184, 7
          %s186 = scalar_select %p185, %s184, 7
          %s187 = smul.addr %s186, 2
          %s188 = smul.addr %s187, 4
          %s189 = scalar_lea.vmem %s0, %s188
          %s190 = smul.u32 4, %s14
        $region36: #{tpu_custom_call.1} parent=31 // pred_fallthru
          _
      $region32: #{tpu_custom_call.1} parent=5 // pred_fallthru
        _
      %p191 = scmp.le.s32.totalorder 1, %s14
      %p192 = scmp.lt.s32.totalorder %s14, 3
      %p193 = pnand %p191, %p192
      %p194 = pneg %p193
      // Predicated region
      $region37: #{tpu_custom_call.1} parent=5 // pred_check
        _
      $region38: #{tpu_custom_call.1} parent=5 // pred_check_branch
        %196 = sbr.rel (%p193) target = $region40
      $region39: #{tpu_custom_call.1} parent=5 // pred_region
        %s197 = ssub.s32 %s14, 1
        %s198 = smul.u32 4, %s19
        %p199 = scmp.lt.s32.totalorder %s198, 7
        %s200 = scalar_select %p199, %s198, 7
        %s201 = smul.addr %s200, 2
        %s202 = smul.addr %s201, 4
        %s203 = scalar_lea.vmem %s0, %s202
        %p204 = pneg %p40
        %p205 = pneg %p37
        %p206 = pneg %p61
        %p207 = pneg %p58
        %p208 = pneg %p82
        %p209 = pneg %p79
        %p210 = pneg %p103
        %p211 = pneg %p100
        %p212 = pneg %p124
        %p213 = pneg %p121
        %p214 = pneg %p150
        %p215 = pneg %p147
        %s216 = sand.u32 %s137, 1
        %s217 = scalar_lea.sflag [#allocation3], %s216
        %s218 = sand.u32 %s137, 1
        %s219 = smul.addr %s218, 128
        %s220 = scalar_lea.vmem [#allocation2], %s219
        %s221 = smul.u32 4, %s19
        %p222 = scmp.lt.s32.totalorder %s221, 7
        %s223 = scalar_select %p222, %s221, 7
        %s224 = smul.addr %s223, 2
        %s225 = smul.addr %s224, 4
        %s226 = scalar_lea.vmem %s0, %s225
        %s227 = smul.u32 4, %s19
        %s228 = smul.u32 4, %s19
        %v230 = vlaneseq
        %v231 = vand.u32 %v230, 127
        %v232 = vadd.s32 %v231, 128
        %vm233 = vcmp.lt.s32.totalorder %v231, 0
        %v234 = vsub.s32 0, %v231
        %v235 = vsel %vm233, %v234, %v231
        %v236 = vshrl.u32 %v235, 4
        %v237 = vand.u32 %v235, 15
        %v238 = vsub.s32 0, %v237
        %v239 = vsel %vm233, %v238, %v237
        %vm240 = vcmp.lt.s32.totalorder %v232, 0
        %v241 = vsub.s32 0, %v232
        %v242 = vsel %vm240, %v241, %v232
        %v243 = vshrl.u32 %v242, 4
        %v244 = vand.u32 %v242, 15
        %v245 = vsub.s32 0, %v244
        %v246 = vsel %vm240, %v245, %v244
        %vm247 = vcmp.ne.s32.totalorder %v239, 0
        %vm248 = vcmp.ne.s32.totalorder %v246, 0
        %vm249 = vcmp.lt.s32.totalorder %v239, 0
        %vm250 = vcmp.lt.s32.totalorder %v246, 0
        %vm251 = vmand %vm249, %vm247
        %vm252 = vmand %vm250, %vm248
        %v253 = vadd.s32 %v239, 16
        %v254 = vadd.s32 %v246, 16
        %v255 = vsel %vm251, %v253, %v239
        %v256 = vsel %vm252, %v254, %v246
        %vm257 = vcmp.ge.s32.totalorder %v231, 16
        %vm258 = vcmp.ge.s32.totalorder %v232, 16
        %vm259 = vcmp.ge.s32.totalorder %v255, 1
        %vm260 = vcmp.ge.s32.totalorder %v256, 1
        %vm261 = vmand %vm257, %vm259
        %vm262 = vmand %vm258, %vm260
        %vm263 = vcmp.le.s32.totalorder %v255, 14
        %vm264 = vcmp.le.s32.totalorder %v256, 14
        %vm265 = vmand %vm257, %vm263
        %vm266 = vmand %vm258, %vm264
        %vm267 = vcmp.lt.s32.totalorder %v231, 240
        %vm268 = vcmp.lt.s32.totalorder %v232, 240
        %vm269 = vmand %vm267, %vm259
        %vm270 = vmand %vm268, %vm260
        %vm271 = vmand %vm267, %vm263
        %vm272 = vmand %vm268, %vm264
        %v273 = vld [vmem:[%s2] sm:$0xff]
        %v274 = vld [vmem:[%s2 + $0x8] sm:$0xff]
        %v275 = vld [vmem:[%s2 + $0x10] sm:$0xff]
        %v276 = vld [vmem:[%s2 + $0x18] sm:$0xff]
        %v277 = vld [vmem:[%s4] sm:$0xff]
        %v278 = vld [vmem:[%s4 + $0x8] sm:$0xff]
        %v279 = vld [vmem:[%s226] sm:$0xff]
        %v281 = vcombine.high %v279, %v279
        %283 = vrot.lane.b32.xlu0 %v279, 17
        %v284 = vpop.permute.xlu0 %283
        %285 = vrot.lane.b32.xlu0 %v281, 17
        %v286 = vpop.permute.xlu0 %285
        %vm287 = vcmp.lt.s32.totalorder %v231, 17
        %v288 = vsel %vm287, %v284, %v286
        %v289 = vsel %vm287, %v286, %v284
        %v290 = vsel %vm261, 1, 0
        %v291 = vsel %vm262, 1, 0
        %vm292 = vcmp.eq.s32.totalorder %v290, 1
        %vm293 = vcmp.eq.s32.totalorder %v291, 1
        %v294 = vsel %vm292, %v289, 0.0
        %v295 = vsel %vm293, %v288, 0.0
        %v296 = vld [vmem:[%s1] sm:$0xf]
        %v297 = vld [vmem:[%s1 + $0x4] sm:$0xf]
        %v298 = vld [vmem:[%s1 + $0x8] sm:$0xf]
        %v299 = vld [vmem:[%s1 + $0xc] sm:$0xf]
        %v300 = vpack.c.bf16 %v294, %v294
        %v301 = vpack.c.bf16 %v295, %v295
        %302 = vrot.lane.b32.xlu0 %v279, 16
        %v303 = vpop.permute.xlu0 %302
        %304 = vrot.lane.b32.xlu0 %v281, 16
        %v305 = vpop.permute.xlu0 %304
        %vm306 = vcmp.lt.s32.totalorder %v231, 16
        %v307 = vsel %vm306, %v303, %v305
        %v308 = vsel %vm306, %v305, %v303
        %v309 = vsel %vm257, 1, 0
        %v310 = vsel %vm258, 1, 0
        %vm311 = vcmp.eq.s32.totalorder %v309, 1
        %vm312 = vcmp.eq.s32.totalorder %v310, 1
        %v313 = vsel %vm311, %v308, 0.0
        %v314 = vsel %vm312, %v307, 0.0
        %s315 = scalar_lea.vmem %s1, 16
        %v316 = vld [vmem:[%s315] sm:$0xf]
        %v317 = vld [vmem:[%s315 + $0x4] sm:$0xf]
        %v318 = vld [vmem:[%s315 + $0x8] sm:$0xf]
        %v319 = vld [vmem:[%s315 + $0xc] sm:$0xf]
        %v320 = vpack.c.bf16 %v313, %v313
        %v321 = vpack.c.bf16 %v314, %v314
        %v326 = vunpack.c.l.b16 %v316
        %v327 = vunpack.c.l.b16 %v317
        %v328 = vunpack.c.l.b16 %v318
        %v329 = vunpack.c.l.b16 %v319
        %v330 = vpack.c.b16 %v327, %v326
        %v331 = vpack.c.b16 %v329, %v328
        %vm332 = vcmask 31744
        %v334 = vsel %vm332, %v330, 0
        %v337 = vsel %vm332, %v331, 0
        %vm339 = vcmask 1041408
        %v341 = vsel %vm339, %v320, 0
        %v344 = vsel %vm339, %v321, 0
        %346 = vmatprep.subr.bf16.mxu0 %v344
        %347 = vmatpush1.bf16.msra.mxu0 %v341
        %348 = vmatprep.subr.bf16.mxu0 0
        %349 = vmatpush1.bf16.msra.mxu0 0
        %350 = vmatprep.subr.bf16.mxu0 0
        %351 = vmatpush1.bf16.msra.mxu0 0
        %352 = vmatprep.subr.bf16.mxu0 0
        %353 = vmatpush1.bf16.msra.mxu0 0
        %354 = vmatprep.subr.bf16.mxu0 0
        %355 = vmatpush1.bf16.msra.mxu0 0
        %356 = vmatprep.subr.bf16.mxu0 0
        %357 = vmatpush1.bf16.msra.mxu0 0
        %358 = vmatprep.subr.bf16.mxu0 0
        %359 = vmatpush1.bf16.msra.mxu0 0
        %360 = vmatprep.subr.bf16.mxu0 0
        %361 = vmatpush1.bf16.msra.mxu0 0
        %362 = vmatprep.subr.bf16.mxu0 0
        %363 = vmatpush1.bf16.msra.mxu0 0
        %364 = vmatprep.subr.bf16.mxu0 0
        %365 = vmatpush1.bf16.msra.mxu0 0
        %366 = vmatprep.subr.bf16.mxu0 0
        %367 = vmatpush1.bf16.msra.mxu0 0
        %368 = vmatprep.subr.bf16.mxu0 0
        %369 = vmatpush1.bf16.msra.mxu0 0
        %370 = vmatprep.subr.bf16.mxu0 0
        %371 = vmatpush1.bf16.msra.mxu0 0
        %372 = vmatprep.subr.bf16.mxu0 0
        %373 = vmatpush1.bf16.msra.mxu0 0
        %374 = vmatprep.subr.bf16.mxu0 0
        %375 = vmatpush1.bf16.msra.mxu0 0
        %376 = vmatprep.subr.bf16.mxu0 0
        %377 = vmatpush1.bf16.msra.mxu0 0
        %378 = vmatprep.mubr.bf16.mxu0 0
        %379 = vmatmul.mubr.bf16.gmra.mrb[0].mxu0 %v334
        %v380 = vpop.f32.mrb[0].mxu0
        %v381 = vadd.f32 0.0, %v380
        %v382 = vpop.f32.mrb[0].mxu0
        %v383 = vadd.f32 0.0, %v382
        %v384 = vpop.f32.mrb[0].mxu0
        %v385 = vadd.f32 0.0, %v384
        %v386 = vpop.f32.mrb[0].mxu0
        %v387 = vadd.f32 0.0, %v386
        %388 = vmatprep.mubr.bf16.mxu0 0
        %389 = vmatmul.mubr.bf16.gmra.mrb[0].mxu0 %v337
        %v390 = vpop.f32.mrb[0].mxu0
        %v391 = vadd.f32 0.0, %v390
        %v392 = vpop.f32.mrb[0].mxu0
        %v393 = vadd.f32 0.0, %v392
        %v394 = vpop.f32.mrb[0].mxu0
        %v395 = vadd.f32 0.0, %v394
        %v396 = vpop.f32.mrb[0].mxu0
        %v397 = vadd.f32 0.0, %v396
        %398 = vdwg.mxu0
        %v403 = vunpack.c.l.b16 %v296
        %v404 = vunpack.c.l.b16 %v297
        %v405 = vunpack.c.l.b16 %v298
        %v406 = vunpack.c.l.b16 %v299
        %v407 = vpack.c.b16 %v404, %v403
        %v408 = vpack.c.b16 %v406, %v405
        %v410 = vsel %vm332, %v407, 0
        %v413 = vsel %vm332, %v408, 0
        %v416 = vsel %vm339, %v300, 0
        %v419 = vsel %vm339, %v301, 0
        %421 = vmatprep.subr.bf16.mxu0 %v419
        %422 = vmatpush1.bf16.msra.mxu0 %v416
        %423 = vmatprep.subr.bf16.mxu0 0
        %424 = vmatpush1.bf16.msra.mxu0 0
        %425 = vmatprep.subr.bf16.mxu0 0
        %426 = vmatpush1.bf16.msra.mxu0 0
        %427 = vmatprep.subr.bf16.mxu0 0
        %428 = vmatpush1.bf16.msra.mxu0 0
        %429 = vmatprep.subr.bf16.mxu0 0
        %430 = vmatpush1.bf16.msra.mxu0 0
        %431 = vmatprep.subr.bf16.mxu0 0
        %432 = vmatpush1.bf16.msra.mxu0 0
        %433 = vmatprep.subr.bf16.mxu0 0
        %434 = vmatpush1.bf16.msra.mxu0 0
        %435 = vmatprep.subr.bf16.mxu0 0
        %436 = vmatpush1.bf16.msra.mxu0 0
        %437 = vmatprep.subr.bf16.mxu0 0
        %438 = vmatpush1.bf16.msra.mxu0 0
        %439 = vmatprep.subr.bf16.mxu0 0
        %440 = vmatpush1.bf16.msra.mxu0 0
        %441 = vmatprep.subr.bf16.mxu0 0
        %442 = vmatpush1.bf16.msra.mxu0 0
        %443 = vmatprep.subr.bf16.mxu0 0
        %444 = vmatpush1.bf16.msra.mxu0 0
        %445 = vmatprep.subr.bf16.mxu0 0
        %446 = vmatpush1.bf16.msra.mxu0 0
        %447 = vmatprep.subr.bf16.mxu0 0
        %448 = vmatpush1.bf16.msra.mxu0 0
        %449 = vmatprep.subr.bf16.mxu0 0
        %450 = vmatpush1.bf16.msra.mxu0 0
        %451 = vmatprep.subr.bf16.mxu0 0
        %452 = vmatpush1.bf16.msra.mxu0 0
        %453 = vmatprep.mubr.bf16.mxu0 0
        %454 = vmatmul.mubr.bf16.gmra.mrb[0].mxu0 %v410
        %v455 = vpop.f32.mrb[0].mxu0
        %v456 = vadd.f32 %v381, %v455
        %v457 = vpop.f32.mrb[0].mxu0
        %v458 = vadd.f32 %v383, %v457
        %v459 = vpop.f32.mrb[0].mxu0
        %v460 = vadd.f32 %v385, %v459
        %v461 = vpop.f32.mrb[0].mxu0
        %v462 = vadd.f32 %v387, %v461
        %463 = vmatprep.mubr.bf16.mxu0 0
        %464 = vmatmul.mubr.bf16.gmra.mrb[0].mxu0 %v413
        %v465 = vpop.f32.mrb[0].mxu0
        %v466 = vadd.f32 %v391, %v465
        %v467 = vpop.f32.mrb[0].mxu0
        %v468 = vadd.f32 %v393, %v467
        %v469 = vpop.f32.mrb[0].mxu0
        %v470 = vadd.f32 %v395, %v469
        %v471 = vpop.f32.mrb[0].mxu0
        %v472 = vadd.f32 %v397, %v471
        %473 = vdwg.mxu0
        %474 = vrot.lane.b32.xlu0 %v279, 15
        %v475 = vpop.permute.xlu0 %474
        %476 = vrot.lane.b32.xlu0 %v281, 15
        %v477 = vpop.permute.xlu0 %476
        %vm478 = vcmp.lt.s32.totalorder %v231, 15
        %v479 = vsel %vm478, %v475, %v477
        %v480 = vsel %vm478, %v477, %v475
        %v481 = vsel %vm265, 1, 0
        %v482 = vsel %vm266, 1, 0
        %vm483 = vcmp.eq.s32.totalorder %v481, 1
        %vm484 = vcmp.eq.s32.totalorder %v482, 1
        %v485 = vsel %vm483, %v480, 0.0
        %v486 = vsel %vm484, %v479, 0.0
        %s487 = scalar_lea.vmem %s1, 32
        %v488 = vld [vmem:[%s487] sm:$0xf]
        %v489 = vld [vmem:[%s487 + $0x4] sm:$0xf]
        %v490 = vld [vmem:[%s487 + $0x8] sm:$0xf]
        %v491 = vld [vmem:[%s487 + $0xc] sm:$0xf]
        %v492 = vpack.c.bf16 %v485, %v485
        %v493 = vpack.c.bf16 %v486, %v486
        %v498 = vunpack.c.l.b16 %v488
        %v499 = vunpack.c.l.b16 %v489
        %v500 = vunpack.c.l.b16 %v490
        %v501 = vunpack.c.l.b16 %v491
        %v502 = vpack.c.b16 %v499, %v498
        %v503 = vpack.c.b16 %v501, %v500
        %v505 = vsel %vm332, %v502, 0
        %v508 = vsel %vm332, %v503, 0
        %v511 = vsel %vm339, %v492, 0
        %v514 = vsel %vm339, %v493, 0
        %516 = vmatprep.subr.bf16.mxu0 %v514
        %517 = vmatpush1.bf16.msra.mxu0 %v511
        %518 = vmatprep.subr.bf16.mxu0 0
        %519 = vmatpush1.bf16.msra.mxu0 0
        %520 = vmatprep.subr.bf16.mxu0 0
        %521 = vmatpush1.bf16.msra.mxu0 0
        %522 = vmatprep.subr.bf16.mxu0 0
        %523 = vmatpush1.bf16.msra.mxu0 0
        %524 = vmatprep.subr.bf16.mxu0 0
        %525 = vmatpush1.bf16.msra.mxu0 0
        %526 = vmatprep.subr.bf16.mxu0 0
        %527 = vmatpush1.bf16.msra.mxu0 0
        %528 = vmatprep.subr.bf16.mxu0 0
        %529 = vmatpush1.bf16.msra.mxu0 0
        %530 = vmatprep.subr.bf16.mxu0 0
        %531 = vmatpush1.bf16.msra.mxu0 0
        %532 = vmatprep.subr.bf16.mxu0 0
        %533 = vmatpush1.bf16.msra.mxu0 0
        %534 = vmatprep.subr.bf16.mxu0 0
        %535 = vmatpush1.bf16.msra.mxu0 0
        %536 = vmatprep.subr.bf16.mxu0 0
        %537 = vmatpush1.bf16.msra.mxu0 0
        %538 = vmatprep.subr.bf16.mxu0 0
        %539 = vmatpush1.bf16.msra.mxu0 0
        %540 = vmatprep.subr.bf16.mxu0 0
        %541 = vmatpush1.bf16.msra.mxu0 0
        %542 = vmatprep.subr.bf16.mxu0 0
        %543 = vmatpush1.bf16.msra.mxu0 0
        %544 = vmatprep.subr.bf16.mxu0 0
        %545 = vmatpush1.bf16.msra.mxu0 0
        %546 = vmatprep.subr.bf16.mxu0 0
        %547 = vmatpush1.bf16.msra.mxu0 0
        %548 = vmatprep.mubr.bf16.mxu0 0
        %549 = vmatmul.mubr.bf16.gmra.mrb[0].mxu0 %v505
        %v550 = vpop.f32.mrb[0].mxu0
        %v551 = vadd.f32 0.0, %v550
        %v552 = vpop.f32.mrb[0].mxu0
        %v553 = vadd.f32 0.0, %v552
        %v554 = vpop.f32.mrb[0].mxu0
        %v555 = vadd.f32 0.0, %v554
        %v556 = vpop.f32.mrb[0].mxu0
        %v557 = vadd.f32 0.0, %v556
        %558 = vmatprep.mubr.bf16.mxu0 0
        %559 = vmatmul.mubr.bf16.gmra.mrb[0].mxu0 %v508
        %v560 = vpop.f32.mrb[0].mxu0
        %v561 = vadd.f32 0.0, %v560
        %v562 = vpop.f32.mrb[0].mxu0
        %v563 = vadd.f32 0.0, %v562
        %v564 = vpop.f32.mrb[0].mxu0
        %v565 = vadd.f32 0.0, %v564
        %v566 = vpop.f32.mrb[0].mxu0
        %v567 = vadd.f32 0.0, %v566
        %568 = vdwg.mxu0
        %v569 = vadd.f32 %v456, %v551
        %v570 = vadd.f32 %v458, %v553
        %v571 = vadd.f32 %v460, %v555
        %v572 = vadd.f32 %v462, %v557
        %v573 = vadd.f32 %v466, %v561
        %v574 = vadd.f32 %v468, %v563
        %v575 = vadd.f32 %v470, %v565
        %v576 = vadd.f32 %v472, %v567
        %577 = vrot.lane.b32.xlu0 %v279, 1
        %v578 = vpop.permute.xlu0 %577
        %579 = vrot.lane.b32.xlu0 %v281, 1
        %v580 = vpop.permute.xlu0 %579
        %vm581 = vcmp.lt.s32.totalorder %v231, 1
        %v582 = vsel %vm581, %v578, %v580
        %v583 = vsel %vm581, %v580, %v578
        %v584 = vsel %vm259, 1, 0
        %v585 = vsel %vm260, 1, 0
        %vm586 = vcmp.eq.s32.totalorder %v584, 1
        %vm587 = vcmp.eq.s32.totalorder %v585, 1
        %v588 = vsel %vm586, %v583, 0.0
        %v589 = vsel %vm587, %v582, 0.0
        %s590 = scalar_lea.vmem %s1, 48
        %v591 = vld [vmem:[%s590] sm:$0xf]
        %v592 = vld [vmem:[%s590 + $0x4] sm:$0xf]
        %v593 = vld [vmem:[%s590 + $0x8] sm:$0xf]
        %v594 = vld [vmem:[%s590 + $0xc] sm:$0xf]
        %v595 = vpack.c.bf16 %v588, %v588
        %v596 = vpack.c.bf16 %v589, %v589
        %v601 = vunpack.c.l.b16 %v591
        %v602 = vunpack.c.l.b16 %v592
        %v603 = vunpack.c.l.b16 %v593
        %v604 = vunpack.c.l.b16 %v594
        %v605 = vpack.c.b16 %v602, %v601
        %v606 = vpack.c.b16 %v604, %v603
        %v608 = vsel %vm332, %v605, 0
        %v611 = vsel %vm332, %v606, 0
        %v614 = vsel %vm339, %v595, 0
        %v617 = vsel %vm339, %v596, 0
        %619 = vmatprep.subr.bf16.mxu0 %v617
        %620 = vmatpush1.bf16.msra.mxu0 %v614
        %621 = vmatprep.subr.bf16.mxu0 0
        %622 = vmatpush1.bf16.msra.mxu0 0
        %623 = vmatprep.subr.bf16.mxu0 0
        %624 = vmatpush1.bf16.msra.mxu0 0
        %625 = vmatprep.subr.bf16.mxu0 0
        %626 = vmatpush1.bf16.msra.mxu0 0
        %627 = vmatprep.subr.bf16.mxu0 0
        %628 = vmatpush1.bf16.msra.mxu0 0
        %629 = vmatprep.subr.bf16.mxu0 0
        %630 = vmatpush1.bf16.msra.mxu0 0
        %631 = vmatprep.subr.bf16.mxu0 0
        %632 = vmatpush1.bf16.msra.mxu0 0
        %633 = vmatprep.subr.bf16.mxu0 0
        %634 = vmatpush1.bf16.msra.mxu0 0
        %635 = vmatprep.subr.bf16.mxu0 0
        %636 = vmatpush1.bf16.msra.mxu0 0
        %637 = vmatprep.subr.bf16.mxu0 0
        %638 = vmatpush1.bf16.msra.mxu0 0
        %639 = vmatprep.subr.bf16.mxu0 0
        %640 = vmatpush1.bf16.msra.mxu0 0
        %641 = vmatprep.subr.bf16.mxu0 0
        %642 = vmatpush1.bf16.msra.mxu0 0
        %643 = vmatprep.subr.bf16.mxu0 0
        %644 = vmatpush1.bf16.msra.mxu0 0
        %645 = vmatprep.subr.bf16.mxu0 0
        %646 = vmatpush1.bf16.msra.mxu0 0
        %647 = vmatprep.subr.bf16.mxu0 0
        %648 = vmatpush1.bf16.msra.mxu0 0
        %649 = vmatprep.subr.bf16.mxu0 0
        %650 = vmatpush1.bf16.msra.mxu0 0
        %651 = vmatprep.mubr.bf16.mxu0 0
        %652 = vmatmul.mubr.bf16.gmra.mrb[0].mxu0 %v608
        %v653 = vpop.f32.mrb[0].mxu0
        %v654 = vadd.f32 0.0, %v653
        %v655 = vpop.f32.mrb[0].mxu0
        %v656 = vadd.f32 0.0, %v655
        %v657 = vpop.f32.mrb[0].mxu0
        %v658 = vadd.f32 0.0, %v657
        %v659 = vpop.f32.mrb[0].mxu0
        %v660 = vadd.f32 0.0, %v659
        %661 = vmatprep.mubr.bf16.mxu0 0
        %662 = vmatmul.mubr.bf16.gmra.mrb[0].mxu0 %v611
        %v663 = vpop.f32.mrb[0].mxu0
        %v664 = vadd.f32 0.0, %v663
        %v665 = vpop.f32.mrb[0].mxu0
        %v666 = vadd.f32 0.0, %v665
        %v667 = vpop.f32.mrb[0].mxu0
        %v668 = vadd.f32 0.0, %v667
        %v669 = vpop.f32.mrb[0].mxu0
        %v670 = vadd.f32 0.0, %v669
        %671 = vdwg.mxu0
        %v672 = vadd.f32 %v569, %v654
        %v673 = vadd.f32 %v570, %v656
        %v674 = vadd.f32 %v571, %v658
        %v675 = vadd.f32 %v572, %v660
        %v676 = vadd.f32 %v573, %v664
        %v677 = vadd.f32 %v574, %v666
        %v678 = vadd.f32 %v575, %v668
        %v679 = vadd.f32 %v576, %v670
        %s680 = scalar_lea.vmem %s1, 64
        %v681 = vld [vmem:[%s680] sm:$0xf]
        %v682 = vld [vmem:[%s680 + $0x4] sm:$0xf]
        %v683 = vld [vmem:[%s680 + $0x8] sm:$0xf]
        %v684 = vld [vmem:[%s680 + $0xc] sm:$0xf]
        %v685 = vpack.c.bf16 %v279, %v279
        %v686 = vpack.c.bf16 %v281, %v281
        %v691 = vunpack.c.l.b16 %v681
        %v692 = vunpack.c.l.b16 %v682
        %v693 = vunpack.c.l.b16 %v683
        %v694 = vunpack.c.l.b16 %v684
        %v695 = vpack.c.b16 %v692, %v691
        %v696 = vpack.c.b16 %v694, %v693
        %v698 = vsel %vm332, %v695, 0
        %v701 = vsel %vm332, %v696, 0
        %v704 = vsel %vm339, %v685, 0
        %v707 = vsel %vm339, %v686, 0
        %709 = vmatprep.subr.bf16.mxu0 %v707
        %710 = vmatpush1.bf16.msra.mxu0 %v704
        %711 = vmatprep.subr.bf16.mxu0 0
        %712 = vmatpush1.bf16.msra.mxu0 0
        %713 = vmatprep.subr.bf16.mxu0 0
        %714 = vmatpush1.bf16.msra.mxu0 0
        %715 = vmatprep.subr.bf16.mxu0 0
        %716 = vmatpush1.bf16.msra.mxu0 0
        %717 = vmatprep.subr.bf16.mxu0 0
        %718 = vmatpush1.bf16.msra.mxu0 0
        %719 = vmatprep.subr.bf16.mxu0 0
        %720 = vmatpush1.bf16.msra.mxu0 0
        %721 = vmatprep.subr.bf16.mxu0 0
        %722 = vmatpush1.bf16.msra.mxu0 0
        %723 = vmatprep.subr.bf16.mxu0 0
        %724 = vmatpush1.bf16.msra.mxu0 0
        %725 = vmatprep.subr.bf16.mxu0 0
        %726 = vmatpush1.bf16.msra.mxu0 0
        %727 = vmatprep.subr.bf16.mxu0 0
        %728 = vmatpush1.bf16.msra.mxu0 0
        %729 = vmatprep.subr.bf16.mxu0 0
        %730 = vmatpush1.bf16.msra.mxu0 0
        %731 = vmatprep.subr.bf16.mxu0 0
        %732 = vmatpush1.bf16.msra.mxu0 0
        %733 = vmatprep.subr.bf16.mxu0 0
        %734 = vmatpush1.bf16.msra.mxu0 0
        %735 = vmatprep.subr.bf16.mxu0 0
        %736 = vmatpush1.bf16.msra.mxu0 0
        %737 = vmatprep.subr.bf16.mxu0 0
        %738 = vmatpush1.bf16.msra.mxu0 0
        %739 = vmatprep.subr.bf16.mxu0 0
        %740 = vmatpush1.bf16.msra.mxu0 0
        %741 = vmatprep.mubr.bf16.mxu0 0
        %742 = vmatmul.mubr.bf16.gmra.mrb[0].mxu0 %v698
        %v743 = vpop.f32.mrb[0].mxu0
        %v744 = vadd.f32 0.0, %v743
        %v745 = vpop.f32.mrb[0].mxu0
        %v746 = vadd.f32 0.0, %v745
        %v747 = vpop.f32.mrb[0].mxu0
        %v748 = vadd.f32 0.0, %v747
        %v749 = vpop.f32.mrb[0].mxu0
        %v750 = vadd.f32 0.0, %v749
        %751 = vmatprep.mubr.bf16.mxu0 0
        %752 = vmatmul.mubr.bf16.gmra.mrb[0].mxu0 %v701
        %v753 = vpop.f32.mrb[0].mxu0
        %v754 = vadd.f32 0.0, %v753
        %v755 = vpop.f32.mrb[0].mxu0
        %v756 = vadd.f32 0.0, %v755
        %v757 = vpop.f32.mrb[0].mxu0
        %v758 = vadd.f32 0.0, %v757
        %v759 = vpop.f32.mrb[0].mxu0
        %v760 = vadd.f32 0.0, %v759
        %761 = vdwg.mxu0
        %v762 = vadd.f32 %v672, %v744
        %v763 = vadd.f32 %v673, %v746
        %v764 = vadd.f32 %v674, %v748
        %v765 = vadd.f32 %v675, %v750
        %v766 = vadd.f32 %v676, %v754
        %v767 = vadd.f32 %v677, %v756
        %v768 = vadd.f32 %v678, %v758
        %v769 = vadd.f32 %v679, %v760
        %770 = vrot.lane.b32.xlu0 %v279, 127
        %v771 = vpop.permute.xlu0 %770
        %772 = vrot.lane.b32.xlu0 %v281, 127
        %v773 = vpop.permute.xlu0 %772
        %vm774 = vcmp.lt.s32.totalorder %v231, 127
        %v775 = vsel %vm774, %v771, %v773
        %v776 = vsel %vm774, %v773, %v771
        %v777 = vsel %vm263, 1, 0
        %v778 = vsel %vm264, 1, 0
        %vm779 = vcmp.eq.s32.totalorder %v777, 1
        %vm780 = vcmp.eq.s32.totalorder %v778, 1
        %v781 = vsel %vm779, %v775, 0.0
        %v782 = vsel %vm780, %v776, 0.0
        %s783 = scalar_lea.vmem %s1, 80
        %v784 = vld [vmem:[%s783] sm:$0xf]
        %v785 = vld [vmem:[%s783 + $0x4] sm:$0xf]
        %v786 = vld [vmem:[%s783 + $0x8] sm:$0xf]
        %v787 = vld [vmem:[%s783 + $0xc] sm:$0xf]
        %v788 = vpack.c.bf16 %v781, %v781
        %v789 = vpack.c.bf16 %v782, %v782
        %v794 = vunpack.c.l.b16 %v784
        %v795 = vunpack.c.l.b16 %v785
        %v796 = vunpack.c.l.b16 %v786
        %v797 = vunpack.c.l.b16 %v787
        %v798 = vpack.c.b16 %v795, %v794
        %v799 = vpack.c.b16 %v797, %v796
        %v801 = vsel %vm332, %v798, 0
        %v804 = vsel %vm332, %v799, 0
        %v807 = vsel %vm339, %v788, 0
        %v810 = vsel %vm339, %v789, 0
        %812 = vmatprep.subr.bf16.mxu0 %v810
        %813 = vmatpush1.bf16.msra.mxu0 %v807
        %814 = vmatprep.subr.bf16.mxu0 0
        %815 = vmatpush1.bf16.msra.mxu0 0
        %816 = vmatprep.subr.bf16.mxu0 0
        %817 = vmatpush1.bf16.msra.mxu0 0
        %818 = vmatprep.subr.bf16.mxu0 0
        %819 = vmatpush1.bf16.msra.mxu0 0
        %820 = vmatprep.subr.bf16.mxu0 0
        %821 = vmatpush1.bf16.msra.mxu0 0
        %822 = vmatprep.subr.bf16.mxu0 0
        %823 = vmatpush1.bf16.msra.mxu0 0
        %824 = vmatprep.subr.bf16.mxu0 0
        %825 = vmatpush1.bf16.msra.mxu0 0
        %826 = vmatprep.subr.bf16.mxu0 0
        %827 = vmatpush1.bf16.msra.mxu0 0
        %828 = vmatprep.subr.bf16.mxu0 0
        %829 = vmatpush1.bf16.msra.mxu0 0
        %830 = vmatprep.subr.bf16.mxu0 0
        %831 = vmatpush1.bf16.msra.mxu0 0
        %832 = vmatprep.subr.bf16.mxu0 0
        %833 = vmatpush1.bf16.msra.mxu0 0
        %834 = vmatprep.subr.bf16.mxu0 0
        %835 = vmatpush1.bf16.msra.mxu0 0
        %836 = vmatprep.subr.bf16.mxu0 0
        %837 = vmatpush1.bf16.msra.mxu0 0
        %838 = vmatprep.subr.bf16.mxu0 0
        %839 = vmatpush1.bf16.msra.mxu0 0
        %840 = vmatprep.subr.bf16.mxu0 0
        %841 = vmatpush1.bf16.msra.mxu0 0
        %842 = vmatprep.subr.bf16.mxu0 0
        %843 = vmatpush1.bf16.msra.mxu0 0
        %844 = vmatprep.mubr.bf16.mxu0 0
        %845 = vmatmul.mubr.bf16.gmra.mrb[0].mxu0 %v801
        %v846 = vpop.f32.mrb[0].mxu0
        %v847 = vadd.f32 0.0, %v846
        %v848 = vpop.f32.mrb[0].mxu0
        %v849 = vadd.f32 0.0, %v848
        %v850 = vpop.f32.mrb[0].mxu0
        %v851 = vadd.f32 0.0, %v850
        %v852 = vpop.f32.mrb[0].mxu0
        %v853 = vadd.f32 0.0, %v852
        %854 = vmatprep.mubr.bf16.mxu0 0
        %855 = vmatmul.mubr.bf16.gmra.mrb[0].mxu0 %v804
        %v856 = vpop.f32.mrb[0].mxu0
        %v857 = vadd.f32 0.0, %v856
        %v858 = vpop.f32.mrb[0].mxu0
        %v859 = vadd.f32 0.0, %v858
        %v860 = vpop.f32.mrb[0].mxu0
        %v861 = vadd.f32 0.0, %v860
        %v862 = vpop.f32.mrb[0].mxu0
        %v863 = vadd.f32 0.0, %v862
        %864 = vdwg.mxu0
        %v865 = vadd.f32 %v762, %v847
        %v866 = vadd.f32 %v763, %v849
        %v867 = vadd.f32 %v764, %v851
        %v868 = vadd.f32 %v765, %v853
        %v869 = vadd.f32 %v766, %v857
        %v870 = vadd.f32 %v767, %v859
        %v871 = vadd.f32 %v768, %v861
        %v872 = vadd.f32 %v769, %v863
        %873 = vrot.lane.b32.xlu0 %v279, 113
        %v874 = vpop.permute.xlu0 %873
        %875 = vrot.lane.b32.xlu0 %v281, 113
        %v876 = vpop.permute.xlu0 %875
        %vm877 = vcmp.lt.s32.totalorder %v231, 113
        %v878 = vsel %vm877, %v874, %v876
        %v879 = vsel %vm877, %v876, %v874
        %v880 = vsel %vm269, 1, 0
        %v881 = vsel %vm270, 1, 0
        %vm882 = vcmp.eq.s32.totalorder %v880, 1
        %vm883 = vcmp.eq.s32.totalorder %v881, 1
        %v884 = vsel %vm882, %v878, 0.0
        %v885 = vsel %vm883, %v879, 0.0
        %s886 = scalar_lea.vmem %s1, 96
        %v887 = vld [vmem:[%s886] sm:$0xf]
        %v888 = vld [vmem:[%s886 + $0x4] sm:$0xf]
        %v889 = vld [vmem:[%s886 + $0x8] sm:$0xf]
        %v890 = vld [vmem:[%s886 + $0xc] sm:$0xf]
        %v891 = vpack.c.bf16 %v884, %v884
        %v892 = vpack.c.bf16 %v885, %v885
        %v897 = vunpack.c.l.b16 %v887
        %v898 = vunpack.c.l.b16 %v888
        %v899 = vunpack.c.l.b16 %v889
        %v900 = vunpack.c.l.b16 %v890
        %v901 = vpack.c.b16 %v898, %v897
        %v902 = vpack.c.b16 %v900, %v899
        %v904 = vsel %vm332, %v901, 0
        %v907 = vsel %vm332, %v902, 0
        %v910 = vsel %vm339, %v891, 0
        %v913 = vsel %vm339, %v892, 0
        %915 = vmatprep.subr.bf16.mxu0 %v913
        %916 = vmatpush1.bf16.msra.mxu0 %v910
        %917 = vmatprep.subr.bf16.mxu0 0
        %918 = vmatpush1.bf16.msra.mxu0 0
        %919 = vmatprep.subr.bf16.mxu0 0
        %920 = vmatpush1.bf16.msra.mxu0 0
        %921 = vmatprep.subr.bf16.mxu0 0
        %922 = vmatpush1.bf16.msra.mxu0 0
        %923 = vmatprep.subr.bf16.mxu0 0
        %924 = vmatpush1.bf16.msra.mxu0 0
        %925 = vmatprep.subr.bf16.mxu0 0
        %926 = vmatpush1.bf16.msra.mxu0 0
        %927 = vmatprep.subr.bf16.mxu0 0
        %928 = vmatpush1.bf16.msra.mxu0 0
        %929 = vmatprep.subr.bf16.mxu0 0
        %930 = vmatpush1.bf16.msra.mxu0 0
        %931 = vmatprep.subr.bf16.mxu0 0
        %932 = vmatpush1.bf16.msra.mxu0 0
        %933 = vmatprep.subr.bf16.mxu0 0
        %934 = vmatpush1.bf16.msra.mxu0 0
        %935 = vmatprep.subr.bf16.mxu0 0
        %936 = vmatpush1.bf16.msra.mxu0 0
        %937 = vmatprep.subr.bf16.mxu0 0
        %938 = vmatpush1.bf16.msra.mxu0 0
        %939 = vmatprep.subr.bf16.mxu0 0
        %940 = vmatpush1.bf16.msra.mxu0 0
        %941 = vmatprep.subr.bf16.mxu0 0
        %942 = vmatpush1.bf16.msra.mxu0 0
        %943 = vmatprep.subr.bf16.mxu0 0
        %944 = vmatpush1.bf16.msra.mxu0 0
        %945 = vmatprep.subr.bf16.mxu0 0
        %946 = vmatpush1.bf16.msra.mxu0 0
        %947 = vmatprep.mubr.bf16.mxu0 0
        %948 = vmatmul.mubr.bf16.gmra.mrb[0].mxu0 %v904
        %v949 = vpop.f32.mrb[0].mxu0
        %v950 = vadd.f32 0.0, %v949
        %v951 = vpop.f32.mrb[0].mxu0
        %v952 = vadd.f32 0.0, %v951
        %v953 = vpop.f32.mrb[0].mxu0
        %v954 = vadd.f32 0.0, %v953
        %v955 = vpop.f32.mrb[0].mxu0
        %v956 = vadd.f32 0.0, %v955
        %957 = vmatprep.mubr.bf16.mxu0 0
        %958 = vmatmul.mubr.bf16.gmra.mrb[0].mxu0 %v907
        %v959 = vpop.f32.mrb[0].mxu0
        %v960 = vadd.f32 0.0, %v959
        %v961 = vpop.f32.mrb[0].mxu0
        %v962 = vadd.f32 0.0, %v961
        %v963 = vpop.f32.mrb[0].mxu0
        %v964 = vadd.f32 0.0, %v963
        %v965 = vpop.f32.mrb[0].mxu0
        %v966 = vadd.f32 0.0, %v965
        %967 = vdwg.mxu0
        %v968 = vadd.f32 %v865, %v950
        %v969 = vadd.f32 %v866, %v952
        %v970 = vadd.f32 %v867, %v954
        %v971 = vadd.f32 %v868, %v956
        %v972 = vadd.f32 %v869, %v960
        %v973 = vadd.f32 %v870, %v962
        %v974 = vadd.f32 %v871, %v964
        %v975 = vadd.f32 %v872, %v966
        %976 = vrot.lane.b32.xlu0 %v279, 112
        %v977 = vpop.permute.xlu0 %976
        %978 = vrot.lane.b32.xlu0 %v281, 112
        %v979 = vpop.permute.xlu0 %978
        %vm980 = vcmp.lt.s32.totalorder %v231, 112
        %v981 = vsel %vm980, %v977, %v979
        %v982 = vsel %vm980, %v979, %v977
        %v983 = vsel %vm267, 1, 0
        %v984 = vsel %vm268, 1, 0
        %vm985 = vcmp.eq.s32.totalorder %v983, 1
        %vm986 = vcmp.eq.s32.totalorder %v984, 1
        %v987 = vsel %vm985, %v981, 0.0
        %v988 = vsel %vm986, %v982, 0.0
        %s989 = scalar_lea.vmem %s1, 112
        %v990 = vld [vmem:[%s989] sm:$0xf]
        %v991 = vld [vmem:[%s989 + $0x4] sm:$0xf]
        %v992 = vld [vmem:[%s989 + $0x8] sm:$0xf]
        %v993 = vld [vmem:[%s989 + $0xc] sm:$0xf]
        %v994 = vpack.c.bf16 %v987, %v987
        %v995 = vpack.c.bf16 %v988, %v988
        %v1000 = vunpack.c.l.b16 %v990
        %v1001 = vunpack.c.l.b16 %v991
        %v1002 = vunpack.c.l.b16 %v992
        %v1003 = vunpack.c.l.b16 %v993
        %v1004 = vpack.c.b16 %v1001, %v1000
        %v1005 = vpack.c.b16 %v1003, %v1002
        %v1007 = vsel %vm332, %v1004, 0
        %v1010 = vsel %vm332, %v1005, 0
        %v1013 = vsel %vm339, %v994, 0
        %v1016 = vsel %vm339, %v995, 0
        %1018 = vmatprep.subr.bf16.mxu0 %v1016
        %1019 = vmatpush1.bf16.msra.mxu0 %v1013
        %1020 = vmatprep.subr.bf16.mxu0 0
        %1021 = vmatpush1.bf16.msra.mxu0 0
        %1022 = vmatprep.subr.bf16.mxu0 0
        %1023 = vmatpush1.bf16.msra.mxu0 0
        %1024 = vmatprep.subr.bf16.mxu0 0
        %1025 = vmatpush1.bf16.msra.mxu0 0
        %1026 = vmatprep.subr.bf16.mxu0 0
        %1027 = vmatpush1.bf16.msra.mxu0 0
        %1028 = vmatprep.subr.bf16.mxu0 0
        %1029 = vmatpush1.bf16.msra.mxu0 0
        %1030 = vmatprep.subr.bf16.mxu0 0
        %1031 = vmatpush1.bf16.msra.mxu0 0
        %1032 = vmatprep.subr.bf16.mxu0 0
        %1033 = vmatpush1.bf16.msra.mxu0 0
        %1034 = vmatprep.subr.bf16.mxu0 0
        %1035 = vmatpush1.bf16.msra.mxu0 0
        %1036 = vmatprep.subr.bf16.mxu0 0
        %1037 = vmatpush1.bf16.msra.mxu0 0
        %1038 = vmatprep.subr.bf16.mxu0 0
        %1039 = vmatpush1.bf16.msra.mxu0 0
        %1040 = vmatprep.subr.bf16.mxu0 0
        %1041 = vmatpush1.bf16.msra.mxu0 0
        %1042 = vmatprep.subr.bf16.mxu0 0
        %1043 = vmatpush1.bf16.msra.mxu0 0
        %1044 = vmatprep.subr.bf16.mxu0 0
        %1045 = vmatpush1.bf16.msra.mxu0 0
        %1046 = vmatprep.subr.bf16.mxu0 0
        %1047 = vmatpush1.bf16.msra.mxu0 0
        %1048 = vmatprep.subr.bf16.mxu0 0
        %1049 = vmatpush1.bf16.msra.mxu0 0
        %1050 = vmatprep.mubr.bf16.mxu0 0
        %1051 = vmatmul.mubr.bf16.gmra.mrb[0].mxu0 %v1007
        %v1052 = vpop.f32.mrb[0].mxu0
        %v1053 = vadd.f32 0.0, %v1052
        %v1054 = vpop.f32.mrb[0].mxu0
        %v1055 = vadd.f32 0.0, %v1054
        %v1056 = vpop.f32.mrb[0].mxu0
        %v1057 = vadd.f32 0.0, %v1056
        %v1058 = vpop.f32.mrb[0].mxu0
        %v1059 = vadd.f32 0.0, %v1058
        %1060 = vmatprep.mubr.bf16.mxu0 0
        %1061 = vmatmul.mubr.bf16.gmra.mrb[0].mxu0 %v1010
        %v1062 = vpop.f32.mrb[0].mxu0
        %v1063 = vadd.f32 0.0, %v1062
        %v1064 = vpop.f32.mrb[0].mxu0
        %v1065 = vadd.f32 0.0, %v1064
        %v1066 = vpop.f32.mrb[0].mxu0
        %v1067 = vadd.f32 0.0, %v1066
        %v1068 = vpop.f32.mrb[0].mxu0
        %v1069 = vadd.f32 0.0, %v1068
        %1070 = vdwg.mxu0
        %v1071 = vadd.f32 %v968, %v1053
        %v1072 = vadd.f32 %v969, %v1055
        %v1073 = vadd.f32 %v970, %v1057
        %v1074 = vadd.f32 %v971, %v1059
        %v1075 = vadd.f32 %v972, %v1063
        %v1076 = vadd.f32 %v973, %v1065
        %v1077 = vadd.f32 %v974, %v1067
        %v1078 = vadd.f32 %v975, %v1069
        %1079 = vrot.lane.b32.xlu0 %v279, 111
        %v1080 = vpop.permute.xlu0 %1079
        %1081 = vrot.lane.b32.xlu0 %v281, 111
        %v1082 = vpop.permute.xlu0 %1081
        %vm1083 = vcmp.lt.s32.totalorder %v231, 111
        %v1084 = vsel %vm1083, %v1080, %v1082
        %v1085 = vsel %vm1083, %v1082, %v1080
        %v1086 = vsel %vm271, 1, 0
        %v1087 = vsel %vm272, 1, 0
        %vm1088 = vcmp.eq.s32.totalorder %v1086, 1
        %vm1089 = vcmp.eq.s32.totalorder %v1087, 1
        %v1090 = vsel %vm1088, %v1084, 0.0
        %v1091 = vsel %vm1089, %v1085, 0.0
        %s1092 = scalar_lea.vmem %s1, 128
        %v1093 = vld [vmem:[%s1092] sm:$0xf]
        %v1094 = vld [vmem:[%s1092 + $0x4] sm:$0xf]
        %v1095 = vld [vmem:[%s1092 + $0x8] sm:$0xf]
        %v1096 = vld [vmem:[%s1092 + $0xc] sm:$0xf]
        %v1097 = vpack.c.bf16 %v1090, %v1090
        %v1098 = vpack.c.bf16 %v1091, %v1091
        %v1103 = vunpack.c.l.b16 %v1093
        %v1104 = vunpack.c.l.b16 %v1094
        %v1105 = vunpack.c.l.b16 %v1095
        %v1106 = vunpack.c.l.b16 %v1096
        %v1107 = vpack.c.b16 %v1104, %v1103
        %v1108 = vpack.c.b16 %v1106, %v1105
        %v1110 = vsel %vm332, %v1107, 0
        %v1113 = vsel %vm332, %v1108, 0
        %v1116 = vsel %vm339, %v1097, 0
        %v1119 = vsel %vm339, %v1098, 0
        %1121 = vmatprep.subr.bf16.mxu0 %v1119
        %1122 = vmatpush1.bf16.msra.mxu0 %v1116
        %1123 = vmatprep.subr.bf16.mxu0 0
        %1124 = vmatpush1.bf16.msra.mxu0 0
        %1125 = vmatprep.subr.bf16.mxu0 0
        %1126 = vmatpush1.bf16.msra.mxu0 0
        %1127 = vmatprep.subr.bf16.mxu0 0
        %1128 = vmatpush1.bf16.msra.mxu0 0
        %1129 = vmatprep.subr.bf16.mxu0 0
        %1130 = vmatpush1.bf16.msra.mxu0 0
        %1131 = vmatprep.subr.bf16.mxu0 0
        %1132 = vmatpush1.bf16.msra.mxu0 0
        %1133 = vmatprep.subr.bf16.mxu0 0
        %1134 = vmatpush1.bf16.msra.mxu0 0
        %1135 = vmatprep.subr.bf16.mxu0 0
        %1136 = vmatpush1.bf16.msra.mxu0 0
        %1137 = vmatprep.subr.bf16.mxu0 0
        %1138 = vmatpush1.bf16.msra.mxu0 0
        %1139 = vmatprep.subr.bf16.mxu0 0
        %1140 = vmatpush1.bf16.msra.mxu0 0
        %1141 = vmatprep.subr.bf16.mxu0 0
        %1142 = vmatpush1.bf16.msra.mxu0 0
        %1143 = vmatprep.subr.bf16.mxu0 0
        %1144 = vmatpush1.bf16.msra.mxu0 0
        %1145 = vmatprep.subr.bf16.mxu0 0
        %1146 = vmatpush1.bf16.msra.mxu0 0
        %1147 = vmatprep.subr.bf16.mxu0 0
        %1148 = vmatpush1.bf16.msra.mxu0 0
        %1149 = vmatprep.subr.bf16.mxu0 0
        %1150 = vmatpush1.bf16.msra.mxu0 0
        %1151 = vmatprep.subr.bf16.mxu0 0
        %1152 = vmatpush1.bf16.msra.mxu0 0
        %1153 = vmatprep.mubr.bf16.mxu0 0
        %1154 = vmatmul.mubr.bf16.gmra.mrb[0].mxu0 %v1110
        %v1155 = vpop.f32.mrb[0].mxu0
        %v1156 = vadd.f32 0.0, %v1155
        %v1157 = vpop.f32.mrb[0].mxu0
        %v1158 = vadd.f32 0.0, %v1157
        %v1159 = vpop.f32.mrb[0].mxu0
        %v1160 = vadd.f32 0.0, %v1159
        %v1161 = vpop.f32.mrb[0].mxu0
        %v1162 = vadd.f32 0.0, %v1161
        %1163 = vmatprep.mubr.bf16.mxu0 0
        %1164 = vmatmul.mubr.bf16.gmra.mrb[0].mxu0 %v1113
        %v1165 = vpop.f32.mrb[0].mxu0
        %v1166 = vadd.f32 0.0, %v1165
        %v1167 = vpop.f32.mrb[0].mxu0
        %v1168 = vadd.f32 0.0, %v1167
        %v1169 = vpop.f32.mrb[0].mxu0
        %v1170 = vadd.f32 0.0, %v1169
        %v1171 = vpop.f32.mrb[0].mxu0
        %v1172 = vadd.f32 0.0, %v1171
        %1173 = vdwg.mxu0
        %v1174 = vadd.f32 %v1071, %v1156
        %v1175 = vadd.f32 %v1072, %v1158
        %v1176 = vadd.f32 %v1073, %v1160
        %v1177 = vadd.f32 %v1074, %v1162
        %v1178 = vadd.f32 %v1075, %v1166
        %v1179 = vadd.f32 %v1076, %v1168
        %v1180 = vadd.f32 %v1077, %v1170
        %v1181 = vadd.f32 %v1078, %v1172
        %1183 = vset.pattern.permute.xlu0 0
        %1184 = vperm.xlu0 %1183, %v273
        %v1185 = vpop.permute.xlu0 %1184
        %1188 = vset.pattern.permute.xlu0 0
        %1189 = vperm.xlu0 %1188, %v274
        %v1190 = vpop.permute.xlu0 %1189
        %1193 = vset.pattern.permute.xlu0 0
        %1194 = vperm.xlu0 %1193, %v275
        %v1195 = vpop.permute.xlu0 %1194
        %1198 = vset.pattern.permute.xlu0 0
        %1199 = vperm.xlu0 %1198, %v276
        %v1200 = vpop.permute.xlu0 %1199
        %v1202 = vadd.f32 %v1174, %v1185
        %v1203 = vadd.f32 %v1175, %v1185
        %v1204 = vadd.f32 %v1176, %v1190
        %v1205 = vadd.f32 %v1177, %v1190
        %v1206 = vadd.f32 %v1178, %v1195
        %v1207 = vadd.f32 %v1179, %v1195
        %v1208 = vadd.f32 %v1180, %v1200
        %v1209 = vadd.f32 %v1181, %v1200
        %v1210 = vmax.f32 %v1202, 0.0
        %v1211 = vmax.f32 %v1203, 0.0
        %v1212 = vmax.f32 %v1204, 0.0
        %v1213 = vmax.f32 %v1205, 0.0
        %v1214 = vmax.f32 %v1206, 0.0
        %v1215 = vmax.f32 %v1207, 0.0
        %v1216 = vmax.f32 %v1208, 0.0
        %v1217 = vmax.f32 %v1209, 0.0
        %1218 = vrot.lane.b32.xlu0 %v1210, 17
        %v1219 = vpop.permute.xlu0 %1218
        %1220 = vrot.lane.b32.xlu0 %v1212, 17
        %v1221 = vpop.permute.xlu0 %1220
        %1222 = vrot.lane.b32.xlu0 %v1214, 17
        %v1223 = vpop.permute.xlu0 %1222
        %1224 = vrot.lane.b32.xlu0 %v1216, 17
        %v1225 = vpop.permute.xlu0 %1224
        %1226 = vrot.lane.b32.xlu0 %v1211, 17
        %v1227 = vpop.permute.xlu0 %1226
        %1228 = vrot.lane.b32.xlu0 %v1213, 17
        %v1229 = vpop.permute.xlu0 %1228
        %1230 = vrot.lane.b32.xlu0 %v1215, 17
        %v1231 = vpop.permute.xlu0 %1230
        %1232 = vrot.lane.b32.xlu0 %v1217, 17
        %v1233 = vpop.permute.xlu0 %1232
        %v1234 = vsel %vm287, %v1219, %v1227
        %v1235 = vsel %vm287, %v1221, %v1229
        %v1236 = vsel %vm287, %v1223, %v1231
        %v1237 = vsel %vm287, %v1225, %v1233
        %v1238 = vsel %vm287, %v1227, %v1219
        %v1239 = vsel %vm287, %v1229, %v1221
        %v1240 = vsel %vm287, %v1231, %v1223
        %v1241 = vsel %vm287, %v1233, %v1225
        %v1242 = vsel %vm292, %v1238, 0.0
        %v1243 = vsel %vm293, %v1234, 0.0
        %v1244 = vsel %vm292, %v1239, 0.0
        %v1245 = vsel %vm293, %v1235, 0.0
        %v1246 = vsel %vm292, %v1240, 0.0
        %v1247 = vsel %vm293, %v1236, 0.0
        %v1248 = vsel %vm292, %v1241, 0.0
        %v1249 = vsel %vm293, %v1237, 0.0
        %v1250 = vld [vmem:[%s3] sm:$0xf]
        %v1251 = vld [vmem:[%s3 + $0x4] sm:$0xf]
        %v1252 = vpack.c.bf16 %v1244, %v1242
        %v1253 = vpack.c.bf16 %v1245, %v1243
        %v1254 = vpack.c.bf16 %v1248, %v1246
        %v1255 = vpack.c.bf16 %v1249, %v1247
        %1256 = vrot.lane.b32.xlu0 %v1210, 16
        %v1257 = vpop.permute.xlu0 %1256
        %1258 = vrot.lane.b32.xlu0 %v1212, 16
        %v1259 = vpop.permute.xlu0 %1258
        %1260 = vrot.lane.b32.xlu0 %v1214, 16
        %v1261 = vpop.permute.xlu0 %1260
        %1262 = vrot.lane.b32.xlu0 %v1216, 16
        %v1263 = vpop.permute.xlu0 %1262
        %1264 = vrot.lane.b32.xlu0 %v1211, 16
        %v1265 = vpop.permute.xlu0 %1264
        %1266 = vrot.lane.b32.xlu0 %v1213, 16
        %v1267 = vpop.permute.xlu0 %1266
        %1268 = vrot.lane.b32.xlu0 %v1215, 16
        %v1269 = vpop.permute.xlu0 %1268
        %1270 = vrot.lane.b32.xlu0 %v1217, 16
        %v1271 = vpop.permute.xlu0 %1270
        %v1272 = vsel %vm306, %v1257, %v1265
        %v1273 = vsel %vm306, %v1259, %v1267
        %v1274 = vsel %vm306, %v1261, %v1269
        %v1275 = vsel %vm306, %v1263, %v1271
        %v1276 = vsel %vm306, %v1265, %v1257
        %v1277 = vsel %vm306, %v1267, %v1259
        %v1278 = vsel %vm306, %v1269, %v1261
        %v1279 = vsel %vm306, %v1271, %v1263
        %v1280 = vsel %vm311, %v1276, 0.0
        %v1281 = vsel %vm312, %v1272, 0.0
        %v1282 = vsel %vm311, %v1277, 0.0
        %v1283 = vsel %vm312, %v1273, 0.0
        %v1284 = vsel %vm311, %v1278, 0.0
        %v1285 = vsel %vm312, %v1274, 0.0
        %v1286 = vsel %vm311, %v1279, 0.0
        %v1287 = vsel %vm312, %v1275, 0.0
        %s1288 = scalar_lea.vmem %s3, 8
        %v1289 = vld [vmem:[%s1288] sm:$0xf]
        %v1290 = vld [vmem:[%s1288 + $0x4] sm:$0xf]
        %v1291 = vpack.c.bf16 %v1282, %v1280
        %v1292 = vpack.c.bf16 %v1283, %v1281
        %v1293 = vpack.c.bf16 %v1286, %v1284
        %v1294 = vpack.c.bf16 %v1287, %v1285
        %v1297 = vunpack.c.l.b16 %v1289
        %v1298 = vunpack.c.l.b16 %v1290
        %v1299 = vpack.c.b16 %v1298, %v1297
        %vm1300 = vcmask 261120
        %v1302 = vsel %vm1300, %v1299, 0
        %1304 = vmatprep.subr.bf16.mxu0 %v1292
        %1305 = vmatpush1.bf16.msra.mxu0 %v1291
        %1306 = vmatprep.subr.bf16.mxu0 %v1294
        %1307 = vmatpush1.bf16.msra.mxu0 %v1293
        %1308 = vmatprep.subr.bf16.mxu0 0
        %1309 = vmatpush1.bf16.msra.mxu0 0
        %1310 = vmatprep.subr.bf16.mxu0 0
        %1311 = vmatpush1.bf16.msra.mxu0 0
        %1312 = vmatprep.subr.bf16.mxu0 0
        %1313 = vmatpush1.bf16.msra.mxu0 0
        %1314 = vmatprep.subr.bf16.mxu0 0
        %1315 = vmatpush1.bf16.msra.mxu0 0
        %1316 = vmatprep.subr.bf16.mxu0 0
        %1317 = vmatpush1.bf16.msra.mxu0 0
        %1318 = vmatprep.subr.bf16.mxu0 0
        %1319 = vmatpush1.bf16.msra.mxu0 0
        %1320 = vmatprep.subr.bf16.mxu0 0
        %1321 = vmatpush1.bf16.msra.mxu0 0
        %1322 = vmatprep.subr.bf16.mxu0 0
        %1323 = vmatpush1.bf16.msra.mxu0 0
        %1324 = vmatprep.subr.bf16.mxu0 0
        %1325 = vmatpush1.bf16.msra.mxu0 0
        %1326 = vmatprep.subr.bf16.mxu0 0
        %1327 = vmatpush1.bf16.msra.mxu0 0
        %1328 = vmatprep.subr.bf16.mxu0 0
        %1329 = vmatpush1.bf16.msra.mxu0 0
        %1330 = vmatprep.subr.bf16.mxu0 0
        %1331 = vmatpush1.bf16.msra.mxu0 0
        %1332 = vmatprep.subr.bf16.mxu0 0
        %1333 = vmatpush1.bf16.msra.mxu0 0
        %1334 = vmatprep.subr.bf16.mxu0 0
        %1335 = vmatpush1.bf16.msra.mxu0 0
        %1336 = vmatprep.mubr.bf16.mxu0 0
        %1337 = vmatmul.mubr.bf16.gmra.mrb[0].mxu0 %v1302
        %v1338 = vpop.f32.mrb[0].mxu0
        %v1339 = vadd.f32 0.0, %v1338
        %v1340 = vpop.f32.mrb[0].mxu0
        %v1341 = vadd.f32 0.0, %v1340
        %v1342 = vpop.f32.mrb[0].mxu0
        %v1343 = vadd.f32 0.0, %v1342
        %v1344 = vpop.f32.mrb[0].mxu0
        %v1345 = vadd.f32 0.0, %v1344
        %1346 = vdwg.mxu0
        %v1349 = vunpack.c.l.b16 %v1250
        %v1350 = vunpack.c.l.b16 %v1251
        %v1351 = vpack.c.b16 %v1350, %v1349
        %v1353 = vsel %vm1300, %v1351, 0
        %1355 = vmatprep.subr.bf16.mxu0 %v1253
        %1356 = vmatpush1.bf16.msra.mxu0 %v1252
        %1357 = vmatprep.subr.bf16.mxu0 %v1255
        %1358 = vmatpush1.bf16.msra.mxu0 %v1254
        %1359 = vmatprep.subr.bf16.mxu0 0
        %1360 = vmatpush1.bf16.msra.mxu0 0
        %1361 = vmatprep.subr.bf16.mxu0 0
        %1362 = vmatpush1.bf16.msra.mxu0 0
        %1363 = vmatprep.subr.bf16.mxu0 0
        %1364 = vmatpush1.bf16.msra.mxu0 0
        %1365 = vmatprep.subr.bf16.mxu0 0
        %1366 = vmatpush1.bf16.msra.mxu0 0
        %1367 = vmatprep.subr.bf16.mxu0 0
        %1368 = vmatpush1.bf16.msra.mxu0 0
        %1369 = vmatprep.subr.bf16.mxu0 0
        %1370 = vmatpush1.bf16.msra.mxu0 0
        %1371 = vmatprep.subr.bf16.mxu0 0
        %1372 = vmatpush1.bf16.msra.mxu0 0
        %1373 = vmatprep.subr.bf16.mxu0 0
        %1374 = vmatpush1.bf16.msra.mxu0 0
        %1375 = vmatprep.subr.bf16.mxu0 0
        %1376 = vmatpush1.bf16.msra.mxu0 0
        %1377 = vmatprep.subr.bf16.mxu0 0
        %1378 = vmatpush1.bf16.msra.mxu0 0
        %1379 = vmatprep.subr.bf16.mxu0 0
        %1380 = vmatpush1.bf16.msra.mxu0 0
        %1381 = vmatprep.subr.bf16.mxu0 0
        %1382 = vmatpush1.bf16.msra.mxu0 0
        %1383 = vmatprep.subr.bf16.mxu0 0
        %1384 = vmatpush1.bf16.msra.mxu0 0
        %1385 = vmatprep.subr.bf16.mxu0 0
        %1386 = vmatpush1.bf16.msra.mxu0 0
        %1387 = vmatprep.mubr.bf16.mxu0 0
        %1388 = vmatmul.mubr.bf16.gmra.mrb[0].mxu0 %v1353
        %v1389 = vpop.f32.mrb[0].mxu0
        %v1390 = vadd.f32 %v1339, %v1389
        %v1391 = vpop.f32.mrb[0].mxu0
        %v1392 = vadd.f32 %v1341, %v1391
        %v1393 = vpop.f32.mrb[0].mxu0
        %v1394 = vadd.f32 %v1343, %v1393
        %v1395 = vpop.f32.mrb[0].mxu0
        %v1396 = vadd.f32 %v1345, %v1395
        %1397 = vdwg.mxu0
        %1398 = vrot.lane.b32.xlu0 %v1210, 15
        %v1399 = vpop.permute.xlu0 %1398
        %1400 = vrot.lane.b32.xlu0 %v1212, 15
        %v1401 = vpop.permute.xlu0 %1400
        %1402 = vrot.lane.b32.xlu0 %v1214, 15
        %v1403 = vpop.permute.xlu0 %1402
        %1404 = vrot.lane.b32.xlu0 %v1216, 15
        %v1405 = vpop.permute.xlu0 %1404
        %1406 = vrot.lane.b32.xlu0 %v1211, 15
        %v1407 = vpop.permute.xlu0 %1406
        %1408 = vrot.lane.b32.xlu0 %v1213, 15
        %v1409 = vpop.permute.xlu0 %1408
        %1410 = vrot.lane.b32.xlu0 %v1215, 15
        %v1411 = vpop.permute.xlu0 %1410
        %1412 = vrot.lane.b32.xlu0 %v1217, 15
        %v1413 = vpop.permute.xlu0 %1412
        %v1414 = vsel %vm478, %v1399, %v1407
        %v1415 = vsel %vm478, %v1401, %v1409
        %v1416 = vsel %vm478, %v1403, %v1411
        %v1417 = vsel %vm478, %v1405, %v1413
        %v1418 = vsel %vm478, %v1407, %v1399
        %v1419 = vsel %vm478, %v1409, %v1401
        %v1420 = vsel %vm478, %v1411, %v1403
        %v1421 = vsel %vm478, %v1413, %v1405
        %v1422 = vsel %vm483, %v1418, 0.0
        %v1423 = vsel %vm484, %v1414, 0.0
        %v1424 = vsel %vm483, %v1419, 0.0
        %v1425 = vsel %vm484, %v1415, 0.0
        %v1426 = vsel %vm483, %v1420, 0.0
        %v1427 = vsel %vm484, %v1416, 0.0
        %v1428 = vsel %vm483, %v1421, 0.0
        %v1429 = vsel %vm484, %v1417, 0.0
        %s1430 = scalar_lea.vmem %s3, 16
        %v1431 = vld [vmem:[%s1430] sm:$0xf]
        %v1432 = vld [vmem:[%s1430 + $0x4] sm:$0xf]
        %v1433 = vpack.c.bf16 %v1424, %v1422
        %v1434 = vpack.c.bf16 %v1425, %v1423
        %v1435 = vpack.c.bf16 %v1428, %v1426
        %v1436 = vpack.c.bf16 %v1429, %v1427
        %v1439 = vunpack.c.l.b16 %v1431
        %v1440 = vunpack.c.l.b16 %v1432
        %v1441 = vpack.c.b16 %v1440, %v1439
        %v1443 = vsel %vm1300, %v1441, 0
        %1445 = vmatprep.subr.bf16.mxu0 %v1434
        %1446 = vmatpush1.bf16.msra.mxu0 %v1433
        %1447 = vmatprep.subr.bf16.mxu0 %v1436
        %1448 = vmatpush1.bf16.msra.mxu0 %v1435
        %1449 = vmatprep.subr.bf16.mxu0 0
        %1450 = vmatpush1.bf16.msra.mxu0 0
        %1451 = vmatprep.subr.bf16.mxu0 0
        %1452 = vmatpush1.bf16.msra.mxu0 0
        %1453 = vmatprep.subr.bf16.mxu0 0
        %1454 = vmatpush1.bf16.msra.mxu0 0
        %1455 = vmatprep.subr.bf16.mxu0 0
        %1456 = vmatpush1.bf16.msra.mxu0 0
        %1457 = vmatprep.subr.bf16.mxu0 0
        %1458 = vmatpush1.bf16.msra.mxu0 0
        %1459 = vmatprep.subr.bf16.mxu0 0
        %1460 = vmatpush1.bf16.msra.mxu0 0
        %1461 = vmatprep.subr.bf16.mxu0 0
        %1462 = vmatpush1.bf16.msra.mxu0 0
        %1463 = vmatprep.subr.bf16.mxu0 0
        %1464 = vmatpush1.bf16.msra.mxu0 0
        %1465 = vmatprep.subr.bf16.mxu0 0
        %1466 = vmatpush1.bf16.msra.mxu0 0
        %1467 = vmatprep.subr.bf16.mxu0 0
        %1468 = vmatpush1.bf16.msra.mxu0 0
        %1469 = vmatprep.subr.bf16.mxu0 0
        %1470 = vmatpush1.bf16.msra.mxu0 0
        %1471 = vmatprep.subr.bf16.mxu0 0
        %1472 = vmatpush1.bf16.msra.mxu0 0
        %1473 = vmatprep.subr.bf16.mxu0 0
        %1474 = vmatpush1.bf16.msra.mxu0 0
        %1475 = vmatprep.subr.bf16.mxu0 0
        %1476 = vmatpush1.bf16.msra.mxu0 0
        %1477 = vmatprep.mubr.bf16.mxu0 0
        %1478 = vmatmul.mubr.bf16.gmra.mrb[0].mxu0 %v1443
        %v1479 = vpop.f32.mrb[0].mxu0
        %v1480 = vadd.f32 0.0, %v1479
        %v1481 = vpop.f32.mrb[0].mxu0
        %v1482 = vadd.f32 0.0, %v1481
        %v1483 = vpop.f32.mrb[0].mxu0
        %v1484 = vadd.f32 0.0, %v1483
        %v1485 = vpop.f32.mrb[0].mxu0
        %v1486 = vadd.f32 0.0, %v1485
        %1487 = vdwg.mxu0
        %v1488 = vadd.f32 %v1390, %v1480
        %v1489 = vadd.f32 %v1392, %v1482
        %v1490 = vadd.f32 %v1394, %v1484
        %v1491 = vadd.f32 %v1396, %v1486
        %1492 = vrot.lane.b32.xlu0 %v1210, 1
        %v1493 = vpop.permute.xlu0 %1492
        %1494 = vrot.lane.b32.xlu0 %v1212, 1
        %v1495 = vpop.permute.xlu0 %1494
        %1496 = vrot.lane.b32.xlu0 %v1214, 1
        %v1497 = vpop.permute.xlu0 %1496
        %1498 = vrot.lane.b32.xlu0 %v1216, 1
        %v1499 = vpop.permute.xlu0 %1498
        %1500 = vrot.lane.b32.xlu0 %v1211, 1
        %v1501 = vpop.permute.xlu0 %1500
        %1502 = vrot.lane.b32.xlu0 %v1213, 1
        %v1503 = vpop.permute.xlu0 %1502
        %1504 = vrot.lane.b32.xlu0 %v1215, 1
        %v1505 = vpop.permute.xlu0 %1504
        %1506 = vrot.lane.b32.xlu0 %v1217, 1
        %v1507 = vpop.permute.xlu0 %1506
        %v1508 = vsel %vm581, %v1493, %v1501
        %v1509 = vsel %vm581, %v1495, %v1503
        %v1510 = vsel %vm581, %v1497, %v1505
        %v1511 = vsel %vm581, %v1499, %v1507
        %v1512 = vsel %vm581, %v1501, %v1493
        %v1513 = vsel %vm581, %v1503, %v1495
        %v1514 = vsel %vm581, %v1505, %v1497
        %v1515 = vsel %vm581, %v1507, %v1499
        %v1516 = vsel %vm586, %v1512, 0.0
        %v1517 = vsel %vm587, %v1508, 0.0
        %v1518 = vsel %vm586, %v1513, 0.0
        %v1519 = vsel %vm587, %v1509, 0.0
        %v1520 = vsel %vm586, %v1514, 0.0
        %v1521 = vsel %vm587, %v1510, 0.0
        %v1522 = vsel %vm586, %v1515, 0.0
        %v1523 = vsel %vm587, %v1511, 0.0
        %s1524 = scalar_lea.vmem %s3, 24
        %v1525 = vld [vmem:[%s1524] sm:$0xf]
        %v1526 = vld [vmem:[%s1524 + $0x4] sm:$0xf]
        %v1527 = vpack.c.bf16 %v1518, %v1516
        %v1528 = vpack.c.bf16 %v1519, %v1517
        %v1529 = vpack.c.bf16 %v1522, %v1520
        %v1530 = vpack.c.bf16 %v1523, %v1521
        %v1533 = vunpack.c.l.b16 %v1525
        %v1534 = vunpack.c.l.b16 %v1526
        %v1535 = vpack.c.b16 %v1534, %v1533
        %v1537 = vsel %vm1300, %v1535, 0
        %1539 = vmatprep.subr.bf16.mxu0 %v1528
        %1540 = vmatpush1.bf16.msra.mxu0 %v1527
        %1541 = vmatprep.subr.bf16.mxu0 %v1530
        %1542 = vmatpush1.bf16.msra.mxu0 %v1529
        %1543 = vmatprep.subr.bf16.mxu0 0
        %1544 = vmatpush1.bf16.msra.mxu0 0
        %1545 = vmatprep.subr.bf16.mxu0 0
        %1546 = vmatpush1.bf16.msra.mxu0 0
        %1547 = vmatprep.subr.bf16.mxu0 0
        %1548 = vmatpush1.bf16.msra.mxu0 0
        %1549 = vmatprep.subr.bf16.mxu0 0
        %1550 = vmatpush1.bf16.msra.mxu0 0
        %1551 = vmatprep.subr.bf16.mxu0 0
        %1552 = vmatpush1.bf16.msra.mxu0 0
        %1553 = vmatprep.subr.bf16.mxu0 0
        %1554 = vmatpush1.bf16.msra.mxu0 0
        %1555 = vmatprep.subr.bf16.mxu0 0
        %1556 = vmatpush1.bf16.msra.mxu0 0
        %1557 = vmatprep.subr.bf16.mxu0 0
        %1558 = vmatpush1.bf16.msra.mxu0 0
        %1559 = vmatprep.subr.bf16.mxu0 0
        %1560 = vmatpush1.bf16.msra.mxu0 0
        %1561 = vmatprep.subr.bf16.mxu0 0
        %1562 = vmatpush1.bf16.msra.mxu0 0
        %1563 = vmatprep.subr.bf16.mxu0 0
        %1564 = vmatpush1.bf16.msra.mxu0 0
        %1565 = vmatprep.subr.bf16.mxu0 0
        %1566 = vmatpush1.bf16.msra.mxu0 0
        %1567 = vmatprep.subr.bf16.mxu0 0
        %1568 = vmatpush1.bf16.msra.mxu0 0
        %1569 = vmatprep.subr.bf16.mxu0 0
        %1570 = vmatpush1.bf16.msra.mxu0 0
        %1571 = vmatprep.mubr.bf16.mxu0 0
        %1572 = vmatmul.mubr.bf16.gmra.mrb[0].mxu0 %v1537
        %v1573 = vpop.f32.mrb[0].mxu0
        %v1574 = vadd.f32 0.0, %v1573
        %v1575 = vpop.f32.mrb[0].mxu0
        %v1576 = vadd.f32 0.0, %v1575
        %v1577 = vpop.f32.mrb[0].mxu0
        %v1578 = vadd.f32 0.0, %v1577
        %v1579 = vpop.f32.mrb[0].mxu0
        %v1580 = vadd.f32 0.0, %v1579
        %1581 = vdwg.mxu0
        %v1582 = vadd.f32 %v1488, %v1574
        %v1583 = vadd.f32 %v1489, %v1576
        %v1584 = vadd.f32 %v1490, %v1578
        %v1585 = vadd.f32 %v1491, %v1580
        %s1586 = scalar_lea.vmem %s3, 32
        %v1587 = vld [vmem:[%s1586] sm:$0xf]
        %v1588 = vld [vmem:[%s1586 + $0x4] sm:$0xf]
        %v1589 = vpack.c.bf16 %v1212, %v1210
        %v1590 = vpack.c.bf16 %v1213, %v1211
        %v1591 = vpack.c.bf16 %v1216, %v1214
        %v1592 = vpack.c.bf16 %v1217, %v1215
        %v1595 = vunpack.c.l.b16 %v1587
        %v1596 = vunpack.c.l.b16 %v1588
        %v1597 = vpack.c.b16 %v1596, %v1595
        %v1599 = vsel %vm1300, %v1597, 0
        %1601 = vmatprep.subr.bf16.mxu0 %v1590
        %1602 = vmatpush1.bf16.msra.mxu0 %v1589
        %1603 = vmatprep.subr.bf16.mxu0 %v1592
        %1604 = vmatpush1.bf16.msra.mxu0 %v1591
        %1605 = vmatprep.subr.bf16.mxu0 0
        %1606 = vmatpush1.bf16.msra.mxu0 0
        %1607 = vmatprep.subr.bf16.mxu0 0
        %1608 = vmatpush1.bf16.msra.mxu0 0
        %1609 = vmatprep.subr.bf16.mxu0 0
        %1610 = vmatpush1.bf16.msra.mxu0 0
        %1611 = vmatprep.subr.bf16.mxu0 0
        %1612 = vmatpush1.bf16.msra.mxu0 0
        %1613 = vmatprep.subr.bf16.mxu0 0
        %1614 = vmatpush1.bf16.msra.mxu0 0
        %1615 = vmatprep.subr.bf16.mxu0 0
        %1616 = vmatpush1.bf16.msra.mxu0 0
        %1617 = vmatprep.subr.bf16.mxu0 0
        %1618 = vmatpush1.bf16.msra.mxu0 0
        %1619 = vmatprep.subr.bf16.mxu0 0
        %1620 = vmatpush1.bf16.msra.mxu0 0
        %1621 = vmatprep.subr.bf16.mxu0 0
        %1622 = vmatpush1.bf16.msra.mxu0 0
        %1623 = vmatprep.subr.bf16.mxu0 0
        %1624 = vmatpush1.bf16.msra.mxu0 0
        %1625 = vmatprep.subr.bf16.mxu0 0
        %1626 = vmatpush1.bf16.msra.mxu0 0
        %1627 = vmatprep.subr.bf16.mxu0 0
        %1628 = vmatpush1.bf16.msra.mxu0 0
        %1629 = vmatprep.subr.bf16.mxu0 0
        %1630 = vmatpush1.bf16.msra.mxu0 0
        %1631 = vmatprep.subr.bf16.mxu0 0
        %1632 = vmatpush1.bf16.msra.mxu0 0
        %1633 = vmatprep.mubr.bf16.mxu0 0
        %1634 = vmatmul.mubr.bf16.gmra.mrb[0].mxu0 %v1599
        %v1635 = vpop.f32.mrb[0].mxu0
        %v1636 = vadd.f32 0.0, %v1635
        %v1637 = vpop.f32.mrb[0].mxu0
        %v1638 = vadd.f32 0.0, %v1637
        %v1639 = vpop.f32.mrb[0].mxu0
        %v1640 = vadd.f32 0.0, %v1639
        %v1641 = vpop.f32.mrb[0].mxu0
        %v1642 = vadd.f32 0.0, %v1641
        %1643 = vdwg.mxu0
        %v1644 = vadd.f32 %v1582, %v1636
        %v1645 = vadd.f32 %v1583, %v1638
        %v1646 = vadd.f32 %v1584, %v1640
        %v1647 = vadd.f32 %v1585, %v1642
        %1648 = vrot.lane.b32.xlu0 %v1210, 127
        %v1649 = vpop.permute.xlu0 %1648
        %1650 = vrot.lane.b32.xlu0 %v1212, 127
        %v1651 = vpop.permute.xlu0 %1650
        %1652 = vrot.lane.b32.xlu0 %v1214, 127
        %v1653 = vpop.permute.xlu0 %1652
        %1654 = vrot.lane.b32.xlu0 %v1216, 127
        %v1655 = vpop.permute.xlu0 %1654
        %1656 = vrot.lane.b32.xlu0 %v1211, 127
        %v1657 = vpop.permute.xlu0 %1656
        %1658 = vrot.lane.b32.xlu0 %v1213, 127
        %v1659 = vpop.permute.xlu0 %1658
        %1660 = vrot.lane.b32.xlu0 %v1215, 127
        %v1661 = vpop.permute.xlu0 %1660
        %1662 = vrot.lane.b32.xlu0 %v1217, 127
        %v1663 = vpop.permute.xlu0 %1662
        %v1664 = vsel %vm774, %v1649, %v1657
        %v1665 = vsel %vm774, %v1651, %v1659
        %v1666 = vsel %vm774, %v1653, %v1661
        %v1667 = vsel %vm774, %v1655, %v1663
        %v1668 = vsel %vm774, %v1657, %v1649
        %v1669 = vsel %vm774, %v1659, %v1651
        %v1670 = vsel %vm774, %v1661, %v1653
        %v1671 = vsel %vm774, %v1663, %v1655
        %v1672 = vsel %vm779, %v1664, 0.0
        %v1673 = vsel %vm780, %v1668, 0.0
        %v1674 = vsel %vm779, %v1665, 0.0
        %v1675 = vsel %vm780, %v1669, 0.0
        %v1676 = vsel %vm779, %v1666, 0.0
        %v1677 = vsel %vm780, %v1670, 0.0
        %v1678 = vsel %vm779, %v1667, 0.0
        %v1679 = vsel %vm780, %v1671, 0.0
        %s1680 = scalar_lea.vmem %s3, 40
        %v1681 = vld [vmem:[%s1680] sm:$0xf]
        %v1682 = vld [vmem:[%s1680 + $0x4] sm:$0xf]
        %v1683 = vpack.c.bf16 %v1674, %v1672
        %v1684 = vpack.c.bf16 %v1675, %v1673
        %v1685 = vpack.c.bf16 %v1678, %v1676
        %v1686 = vpack.c.bf16 %v1679, %v1677
        %v1689 = vunpack.c.l.b16 %v1681
        %v1690 = vunpack.c.l.b16 %v1682
        %v1691 = vpack.c.b16 %v1690, %v1689
        %v1693 = vsel %vm1300, %v1691, 0
        %1695 = vmatprep.subr.bf16.mxu0 %v1684
        %1696 = vmatpush1.bf16.msra.mxu0 %v1683
        %1697 = vmatprep.subr.bf16.mxu0 %v1686
        %1698 = vmatpush1.bf16.msra.mxu0 %v1685
        %1699 = vmatprep.subr.bf16.mxu0 0
        %1700 = vmatpush1.bf16.msra.mxu0 0
        %1701 = vmatprep.subr.bf16.mxu0 0
        %1702 = vmatpush1.bf16.msra.mxu0 0
        %1703 = vmatprep.subr.bf16.mxu0 0
        %1704 = vmatpush1.bf16.msra.mxu0 0
        %1705 = vmatprep.subr.bf16.mxu0 0
        %1706 = vmatpush1.bf16.msra.mxu0 0
        %1707 = vmatprep.subr.bf16.mxu0 0
        %1708 = vmatpush1.bf16.msra.mxu0 0
        %1709 = vmatprep.subr.bf16.mxu0 0
        %1710 = vmatpush1.bf16.msra.mxu0 0
        %1711 = vmatprep.subr.bf16.mxu0 0
        %1712 = vmatpush1.bf16.msra.mxu0 0
        %1713 = vmatprep.subr.bf16.mxu0 0
        %1714 = vmatpush1.bf16.msra.mxu0 0
        %1715 = vmatprep.subr.bf16.mxu0 0
        %1716 = vmatpush1.bf16.msra.mxu0 0
        %1717 = vmatprep.subr.bf16.mxu0 0
        %1718 = vmatpush1.bf16.msra.mxu0 0
        %1719 = vmatprep.subr.bf16.mxu0 0
        %1720 = vmatpush1.bf16.msra.mxu0 0
        %1721 = vmatprep.subr.bf16.mxu0 0
        %1722 = vmatpush1.bf16.msra.mxu0 0
        %1723 = vmatprep.subr.bf16.mxu0 0
        %1724 = vmatpush1.bf16.msra.mxu0 0
        %1725 = vmatprep.subr.bf16.mxu0 0
        %1726 = vmatpush1.bf16.msra.mxu0 0
        %1727 = vmatprep.mubr.bf16.mxu0 0
        %1728 = vmatmul.mubr.bf16.gmra.mrb[0].mxu0 %v1693
        %v1729 = vpop.f32.mrb[0].mxu0
        %v1730 = vadd.f32 0.0, %v1729
        %v1731 = vpop.f32.mrb[0].mxu0
        %v1732 = vadd.f32 0.0, %v1731
        %v1733 = vpop.f32.mrb[0].mxu0
        %v1734 = vadd.f32 0.0, %v1733
        %v1735 = vpop.f32.mrb[0].mxu0
        %v1736 = vadd.f32 0.0, %v1735
        %1737 = vdwg.mxu0
        %v1738 = vadd.f32 %v1644, %v1730
        %v1739 = vadd.f32 %v1645, %v1732
        %v1740 = vadd.f32 %v1646, %v1734
        %v1741 = vadd.f32 %v1647, %v1736
        %1742 = vrot.lane.b32.xlu0 %v1210, 113
        %v1743 = vpop.permute.xlu0 %1742
        %1744 = vrot.lane.b32.xlu0 %v1212, 113
        %v1745 = vpop.permute.xlu0 %1744
        %1746 = vrot.lane.b32.xlu0 %v1214, 113
        %v1747 = vpop.permute.xlu0 %1746
        %1748 = vrot.lane.b32.xlu0 %v1216, 113
        %v1749 = vpop.permute.xlu0 %1748
        %1750 = vrot.lane.b32.xlu0 %v1211, 113
        %v1751 = vpop.permute.xlu0 %1750
        %1752 = vrot.lane.b32.xlu0 %v1213, 113
        %v1753 = vpop.permute.xlu0 %1752
        %1754 = vrot.lane.b32.xlu0 %v1215, 113
        %v1755 = vpop.permute.xlu0 %1754
        %1756 = vrot.lane.b32.xlu0 %v1217, 113
        %v1757 = vpop.permute.xlu0 %1756
        %v1758 = vsel %vm877, %v1743, %v1751
        %v1759 = vsel %vm877, %v1745, %v1753
        %v1760 = vsel %vm877, %v1747, %v1755
        %v1761 = vsel %vm877, %v1749, %v1757
        %v1762 = vsel %vm877, %v1751, %v1743
        %v1763 = vsel %vm877, %v1753, %v1745
        %v1764 = vsel %vm877, %v1755, %v1747
        %v1765 = vsel %vm877, %v1757, %v1749
        %v1766 = vsel %vm882, %v1758, 0.0
        %v1767 = vsel %vm883, %v1762, 0.0
        %v1768 = vsel %vm882, %v1759, 0.0
        %v1769 = vsel %vm883, %v1763, 0.0
        %v1770 = vsel %vm882, %v1760, 0.0
        %v1771 = vsel %vm883, %v1764, 0.0
        %v1772 = vsel %vm882, %v1761, 0.0
        %v1773 = vsel %vm883, %v1765, 0.0
        %s1774 = scalar_lea.vmem %s3, 48
        %v1775 = vld [vmem:[%s1774] sm:$0xf]
        %v1776 = vld [vmem:[%s1774 + $0x4] sm:$0xf]
        %v1777 = vpack.c.bf16 %v1768, %v1766
        %v1778 = vpack.c.bf16 %v1769, %v1767
        %v1779 = vpack.c.bf16 %v1772, %v1770
        %v1780 = vpack.c.bf16 %v1773, %v1771
        %v1783 = vunpack.c.l.b16 %v1775
        %v1784 = vunpack.c.l.b16 %v1776
        %v1785 = vpack.c.b16 %v1784, %v1783
        %v1787 = vsel %vm1300, %v1785, 0
        %1789 = vmatprep.subr.bf16.mxu0 %v1778
        %1790 = vmatpush1.bf16.msra.mxu0 %v1777
        %1791 = vmatprep.subr.bf16.mxu0 %v1780
        %1792 = vmatpush1.bf16.msra.mxu0 %v1779
        %1793 = vmatprep.subr.bf16.mxu0 0
        %1794 = vmatpush1.bf16.msra.mxu0 0
        %1795 = vmatprep.subr.bf16.mxu0 0
        %1796 = vmatpush1.bf16.msra.mxu0 0
        %1797 = vmatprep.subr.bf16.mxu0 0
        %1798 = vmatpush1.bf16.msra.mxu0 0
        %1799 = vmatprep.subr.bf16.mxu0 0
        %1800 = vmatpush1.bf16.msra.mxu0 0
        %1801 = vmatprep.subr.bf16.mxu0 0
        %1802 = vmatpush1.bf16.msra.mxu0 0
        %1803 = vmatprep.subr.bf16.mxu0 0
        %1804 = vmatpush1.bf16.msra.mxu0 0
        %1805 = vmatprep.subr.bf16.mxu0 0
        %1806 = vmatpush1.bf16.msra.mxu0 0
        %1807 = vmatprep.subr.bf16.mxu0 0
        %1808 = vmatpush1.bf16.msra.mxu0 0
        %1809 = vmatprep.subr.bf16.mxu0 0
        %1810 = vmatpush1.bf16.msra.mxu0 0
        %1811 = vmatprep.subr.bf16.mxu0 0
        %1812 = vmatpush1.bf16.msra.mxu0 0
        %1813 = vmatprep.subr.bf16.mxu0 0
        %1814 = vmatpush1.bf16.msra.mxu0 0
        %1815 = vmatprep.subr.bf16.mxu0 0
        %1816 = vmatpush1.bf16.msra.mxu0 0
        %1817 = vmatprep.subr.bf16.mxu0 0
        %1818 = vmatpush1.bf16.msra.mxu0 0
        %1819 = vmatprep.subr.bf16.mxu0 0
        %1820 = vmatpush1.bf16.msra.mxu0 0
        %1821 = vmatprep.mubr.bf16.mxu0 0
        %1822 = vmatmul.mubr.bf16.gmra.mrb[0].mxu0 %v1787
        %v1823 = vpop.f32.mrb[0].mxu0
        %v1824 = vadd.f32 0.0, %v1823
        %v1825 = vpop.f32.mrb[0].mxu0
        %v1826 = vadd.f32 0.0, %v1825
        %v1827 = vpop.f32.mrb[0].mxu0
        %v1828 = vadd.f32 0.0, %v1827
        %v1829 = vpop.f32.mrb[0].mxu0
        %v1830 = vadd.f32 0.0, %v1829
        %1831 = vdwg.mxu0
        %v1832 = vadd.f32 %v1738, %v1824
        %v1833 = vadd.f32 %v1739, %v1826
        %v1834 = vadd.f32 %v1740, %v1828
        %v1835 = vadd.f32 %v1741, %v1830
        %1836 = vrot.lane.b32.xlu0 %v1210, 112
        %v1837 = vpop.permute.xlu0 %1836
        %1838 = vrot.lane.b32.xlu0 %v1212, 112
        %v1839 = vpop.permute.xlu0 %1838
        %1840 = vrot.lane.b32.xlu0 %v1214, 112
        %v1841 = vpop.permute.xlu0 %1840
        %1842 = vrot.lane.b32.xlu0 %v1216, 112
        %v1843 = vpop.permute.xlu0 %1842
        %1844 = vrot.lane.b32.xlu0 %v1211, 112
        %v1845 = vpop.permute.xlu0 %1844
        %1846 = vrot.lane.b32.xlu0 %v1213, 112
        %v1847 = vpop.permute.xlu0 %1846
        %1848 = vrot.lane.b32.xlu0 %v1215, 112
        %v1849 = vpop.permute.xlu0 %1848
        %1850 = vrot.lane.b32.xlu0 %v1217, 112
        %v1851 = vpop.permute.xlu0 %1850
        %v1852 = vsel %vm980, %v1837, %v1845
        %v1853 = vsel %vm980, %v1839, %v1847
        %v1854 = vsel %vm980, %v1841, %v1849
        %v1855 = vsel %vm980, %v1843, %v1851
        %v1856 = vsel %vm980, %v1845, %v1837
        %v1857 = vsel %vm980, %v1847, %v1839
        %v1858 = vsel %vm980, %v1849, %v1841
        %v1859 = vsel %vm980, %v1851, %v1843
        %v1860 = vsel %vm985, %v1852, 0.0
        %v1861 = vsel %vm986, %v1856, 0.0
        %v1862 = vsel %vm985, %v1853, 0.0
        %v1863 = vsel %vm986, %v1857, 0.0
        %v1864 = vsel %vm985, %v1854, 0.0
        %v1865 = vsel %vm986, %v1858, 0.0
        %v1866 = vsel %vm985, %v1855, 0.0
        %v1867 = vsel %vm986, %v1859, 0.0
        %s1868 = scalar_lea.vmem %s3, 56
        %v1869 = vld [vmem:[%s1868] sm:$0xf]
        %v1870 = vld [vmem:[%s1868 + $0x4] sm:$0xf]
        %v1871 = vpack.c.bf16 %v1862, %v1860
        %v1872 = vpack.c.bf16 %v1863, %v1861
        %v1873 = vpack.c.bf16 %v1866, %v1864
        %v1874 = vpack.c.bf16 %v1867, %v1865
        %v1877 = vunpack.c.l.b16 %v1869
        %v1878 = vunpack.c.l.b16 %v1870
        %v1879 = vpack.c.b16 %v1878, %v1877
        %v1881 = vsel %vm1300, %v1879, 0
        %1883 = vmatprep.subr.bf16.mxu0 %v1872
        %1884 = vmatpush1.bf16.msra.mxu0 %v1871
        %1885 = vmatprep.subr.bf16.mxu0 %v1874
        %1886 = vmatpush1.bf16.msra.mxu0 %v1873
        %1887 = vmatprep.subr.bf16.mxu0 0
        %1888 = vmatpush1.bf16.msra.mxu0 0
        %1889 = vmatprep.subr.bf16.mxu0 0
        %1890 = vmatpush1.bf16.msra.mxu0 0
        %1891 = vmatprep.subr.bf16.mxu0 0
        %1892 = vmatpush1.bf16.msra.mxu0 0
        %1893 = vmatprep.subr.bf16.mxu0 0
        %1894 = vmatpush1.bf16.msra.mxu0 0
        %1895 = vmatprep.subr.bf16.mxu0 0
        %1896 = vmatpush1.bf16.msra.mxu0 0
        %1897 = vmatprep.subr.bf16.mxu0 0
        %1898 = vmatpush1.bf16.msra.mxu0 0
        %1899 = vmatprep.subr.bf16.mxu0 0
        %1900 = vmatpush1.bf16.msra.mxu0 0
        %1901 = vmatprep.subr.bf16.mxu0 0
        %1902 = vmatpush1.bf16.msra.mxu0 0
        %1903 = vmatprep.subr.bf16.mxu0 0
        %1904 = vmatpush1.bf16.msra.mxu0 0
        %1905 = vmatprep.subr.bf16.mxu0 0
        %1906 = vmatpush1.bf16.msra.mxu0 0
        %1907 = vmatprep.subr.bf16.mxu0 0
        %1908 = vmatpush1.bf16.msra.mxu0 0
        %1909 = vmatprep.subr.bf16.mxu0 0
        %1910 = vmatpush1.bf16.msra.mxu0 0
        %1911 = vmatprep.subr.bf16.mxu0 0
        %1912 = vmatpush1.bf16.msra.mxu0 0
        %1913 = vmatprep.subr.bf16.mxu0 0
        %1914 = vmatpush1.bf16.msra.mxu0 0
        %1915 = vmatprep.mubr.bf16.mxu0 0
        %1916 = vmatmul.mubr.bf16.gmra.mrb[0].mxu0 %v1881
        %v1917 = vpop.f32.mrb[0].mxu0
        %v1918 = vadd.f32 0.0, %v1917
        %v1919 = vpop.f32.mrb[0].mxu0
        %v1920 = vadd.f32 0.0, %v1919
        %v1921 = vpop.f32.mrb[0].mxu0
        %v1922 = vadd.f32 0.0, %v1921
        %v1923 = vpop.f32.mrb[0].mxu0
        %v1924 = vadd.f32 0.0, %v1923
        %1925 = vdwg.mxu0
        %v1926 = vadd.f32 %v1832, %v1918
        %v1927 = vadd.f32 %v1833, %v1920
        %v1928 = vadd.f32 %v1834, %v1922
        %v1929 = vadd.f32 %v1835, %v1924
        %1930 = vrot.lane.b32.xlu0 %v1210, 111
        %v1931 = vpop.permute.xlu0 %1930
        %1932 = vrot.lane.b32.xlu0 %v1212, 111
        %v1933 = vpop.permute.xlu0 %1932
        %1934 = vrot.lane.b32.xlu0 %v1214, 111
        %v1935 = vpop.permute.xlu0 %1934
        %1936 = vrot.lane.b32.xlu0 %v1216, 111
        %v1937 = vpop.permute.xlu0 %1936
        %1938 = vrot.lane.b32.xlu0 %v1211, 111
        %v1939 = vpop.permute.xlu0 %1938
        %1940 = vrot.lane.b32.xlu0 %v1213, 111
        %v1941 = vpop.permute.xlu0 %1940
        %1942 = vrot.lane.b32.xlu0 %v1215, 111
        %v1943 = vpop.permute.xlu0 %1942
        %1944 = vrot.lane.b32.xlu0 %v1217, 111
        %v1945 = vpop.permute.xlu0 %1944
        %v1946 = vsel %vm1083, %v1931, %v1939
        %v1947 = vsel %vm1083, %v1933, %v1941
        %v1948 = vsel %vm1083, %v1935, %v1943
        %v1949 = vsel %vm1083, %v1937, %v1945
        %v1950 = vsel %vm1083, %v1939, %v1931
        %v1951 = vsel %vm1083, %v1941, %v1933
        %v1952 = vsel %vm1083, %v1943, %v1935
        %v1953 = vsel %vm1083, %v1945, %v1937
        %v1954 = vsel %vm1088, %v1946, 0.0
        %v1955 = vsel %vm1089, %v1950, 0.0
        %v1956 = vsel %vm1088, %v1947, 0.0
        %v1957 = vsel %vm1089, %v1951, 0.0
        %v1958 = vsel %vm1088, %v1948, 0.0
        %v1959 = vsel %vm1089, %v1952, 0.0
        %v1960 = vsel %vm1088, %v1949, 0.0
        %v1961 = vsel %vm1089, %v1953, 0.0
        %s1962 = scalar_lea.vmem %s3, 64
        %v1963 = vld [vmem:[%s1962] sm:$0xf]
        %v1964 = vld [vmem:[%s1962 + $0x4] sm:$0xf]
        %v1965 = vpack.c.bf16 %v1956, %v1954
        %v1966 = vpack.c.bf16 %v1957, %v1955
        %v1967 = vpack.c.bf16 %v1960, %v1958
        %v1968 = vpack.c.bf16 %v1961, %v1959
        %v1971 = vunpack.c.l.b16 %v1963
        %v1972 = vunpack.c.l.b16 %v1964
        %v1973 = vpack.c.b16 %v1972, %v1971
        %v1975 = vsel %vm1300, %v1973, 0
        %1977 = vmatprep.subr.bf16.mxu0 %v1966
        %1978 = vmatpush1.bf16.msra.mxu0 %v1965
        %1979 = vmatprep.subr.bf16.mxu0 %v1968
        %1980 = vmatpush1.bf16.msra.mxu0 %v1967
        %1981 = vmatprep.subr.bf16.mxu0 0
        %1982 = vmatpush1.bf16.msra.mxu0 0
        %1983 = vmatprep.subr.bf16.mxu0 0
        %1984 = vmatpush1.bf16.msra.mxu0 0
        %1985 = vmatprep.subr.bf16.mxu0 0
        %1986 = vmatpush1.bf16.msra.mxu0 0
        %1987 = vmatprep.subr.bf16.mxu0 0
        %1988 = vmatpush1.bf16.msra.mxu0 0
        %1989 = vmatprep.subr.bf16.mxu0 0
        %1990 = vmatpush1.bf16.msra.mxu0 0
        %1991 = vmatprep.subr.bf16.mxu0 0
        %1992 = vmatpush1.bf16.msra.mxu0 0
        %1993 = vmatprep.subr.bf16.mxu0 0
        %1994 = vmatpush1.bf16.msra.mxu0 0
        %1995 = vmatprep.subr.bf16.mxu0 0
        %1996 = vmatpush1.bf16.msra.mxu0 0
        %1997 = vmatprep.subr.bf16.mxu0 0
        %1998 = vmatpush1.bf16.msra.mxu0 0
        %1999 = vmatprep.subr.bf16.mxu0 0
        %2000 = vmatpush1.bf16.msra.mxu0 0
        %2001 = vmatprep.subr.bf16.mxu0 0
        %2002 = vmatpush1.bf16.msra.mxu0 0
        %2003 = vmatprep.subr.bf16.mxu0 0
        %2004 = vmatpush1.bf16.msra.mxu0 0
        %2005 = vmatprep.subr.bf16.mxu0 0
        %2006 = vmatpush1.bf16.msra.mxu0 0
        %2007 = vmatprep.subr.bf16.mxu0 0
        %2008 = vmatpush1.bf16.msra.mxu0 0
        %2009 = vmatprep.mubr.bf16.mxu0 0
        %2010 = vmatmul.mubr.bf16.gmra.mrb[0].mxu0 %v1975
        %v2011 = vpop.f32.mrb[0].mxu0
        %v2012 = vadd.f32 0.0, %v2011
        %v2013 = vpop.f32.mrb[0].mxu0
        %v2014 = vadd.f32 0.0, %v2013
        %v2015 = vpop.f32.mrb[0].mxu0
        %v2016 = vadd.f32 0.0, %v2015
        %v2017 = vpop.f32.mrb[0].mxu0
        %v2018 = vadd.f32 0.0, %v2017
        %2019 = vdwg.mxu0
        %v2020 = vadd.f32 %v1926, %v2012
        %v2021 = vadd.f32 %v1927, %v2014
        %v2022 = vadd.f32 %v1928, %v2016
        %v2023 = vadd.f32 %v1929, %v2018
        %2025 = vset.pattern.permute.xlu0 0
        %2026 = vperm.xlu0 %2025, %v277
        %v2027 = vpop.permute.xlu0 %2026
        %2030 = vset.pattern.permute.xlu0 0
        %2031 = vperm.xlu0 %2030, %v278
        %v2032 = vpop.permute.xlu0 %2031
        %v2034 = vadd.f32 %v2020, %v2027
        %v2035 = vadd.f32 %v2021, %v2027
        %v2036 = vadd.f32 %v2022, %v2032
        %v2037 = vadd.f32 %v2023, %v2032
        %2038 = vst [vmem:[%s220] sm:$0xff] %v2034
        %2039 = vst [vmem:[%s220 + $0x8] sm:$0xff] %v2035
        %2040 = vst [vmem:[%s220 + $0x10] sm:$0xff] %v2036
        %2041 = vst [vmem:[%s220 + $0x18] sm:$0xff] %v2037
        %s2042 = scalar_lea.vmem %s226, 8
        %v2043 = vld [vmem:[%s2042] sm:$0xff]
        %v2045 = vcombine.high %v2043, %v2043
        %2047 = vrot.lane.b32.xlu0 %v2043, 17
        %v2048 = vpop.permute.xlu0 %2047
        %2049 = vrot.lane.b32.xlu0 %v2045, 17
        %v2050 = vpop.permute.xlu0 %2049
        %v2051 = vsel %vm287, %v2048, %v2050
        %v2052 = vsel %vm287, %v2050, %v2048
        %v2053 = vsel %vm292, %v2052, 0.0
        %v2054 = vsel %vm293, %v2051, 0.0
        %v2055 = vld [vmem:[%s1] sm:$0xf]
        %v2056 = vld [vmem:[%s1 + $0x4] sm:$0xf]
        %v2057 = vld [vmem:[%s1 + $0x8] sm:$0xf]
        %v2058 = vld [vmem:[%s1 + $0xc] sm:$0xf]
        %v2059 = vpack.c.bf16 %v2053, %v2053
        %v2060 = vpack.c.bf16 %v2054, %v2054
        %2061 = vrot.lane.b32.xlu0 %v2043, 16
        %v2062 = vpop.permute.xlu0 %2061
        %2063 = vrot.lane.b32.xlu0 %v2045, 16
        %v2064 = vpop.permute.xlu0 %2063
        %v2065 = vsel %vm306, %v2062, %v2064
        %v2066 = vsel %vm306, %v2064, %v2062
        %v2067 = vsel %vm311, %v2066, 0.0
        %v2068 = vsel %vm312, %v2065, 0.0
        %v2069 = vld [vmem:[%s315] sm:$0xf]
        %v2070 = vld [vmem:[%s315 + $0x4] sm:$0xf]
        %v2071 = vld [vmem:[%s315 + $0x8] sm:$0xf]
        %v2072 = vld [vmem:[%s315 + $0xc] sm:$0xf]
        %v2073 = vpack.c.bf16 %v2067, %v2067
        %v2074 = vpack.c.bf16 %v2068, %v2068
        %v2079 = vunpack.c.l.b16 %v2069
        %v2080 = vunpack.c.l.b16 %v2070
        %v2081 = vunpack.c.l.b16 %v2071
        %v2082 = vunpack.c.l.b16 %v2072
        %v2083 = vpack.c.b16 %v2080, %v2079
        %v2084 = vpack.c.b16 %v2082, %v2081
        %v2086 = vsel %vm332, %v2083, 0
        %v2089 = vsel %vm332, %v2084, 0
        %v2092 = vsel %vm339, %v2073, 0
        %v2095 = vsel %vm339, %v2074, 0
        %2097 = vmatprep.subr.bf16.mxu0 %v2095
        %2098 = vmatpush1.bf16.msra.mxu0 %v2092
        %2099 = vmatprep.subr.bf16.mxu0 0
        %2100 = vmatpush1.bf16.msra.mxu0 0
        %2101 = vmatprep.subr.bf16.mxu0 0
        %2102 = vmatpush1.bf16.msra.mxu0 0
        %2103 = vmatprep.subr.bf16.mxu0 0
        %2104 = vmatpush1.bf16.msra.mxu0 0
        %2105 = vmatprep.subr.bf16.mxu0 0
        %2106 = vmatpush1.bf16.msra.mxu0 0
        %2107 = vmatprep.subr.bf16.mxu0 0
        %2108 = vmatpush1.bf16.msra.mxu0 0
        %2109 = vmatprep.subr.bf16.mxu0 0
        %2110 = vmatpush1.bf16.msra.mxu0 0
        %2111 = vmatprep.subr.bf16.mxu0 0
        %2112 = vmatpush1.bf16.msra.mxu0 0
        %2113 = vmatprep.subr.bf16.mxu0 0
        %2114 = vmatpush1.bf16.msra.mxu0 0
        %2115 = vmatprep.subr.bf16.mxu0 0
        %2116 = vmatpush1.bf16.msra.mxu0 0
        %2117 = vmatprep.subr.bf16.mxu0 0
        %2118 = vmatpush1.bf16.msra.mxu0 0
        %2119 = vmatprep.subr.bf16.mxu0 0
        %2120 = vmatpush1.bf16.msra.mxu0 0
        %2121 = vmatprep.subr.bf16.mxu0 0
        %2122 = vmatpush1.bf16.msra.mxu0 0
        %2123 = vmatprep.subr.bf16.mxu0 0
        %2124 = vmatpush1.bf16.msra.mxu0 0
        %2125 = vmatprep.subr.bf16.mxu0 0
        %2126 = vmatpush1.bf16.msra.mxu0 0
        %2127 = vmatprep.subr.bf16.mxu0 0
        %2128 = vmatpush1.bf16.msra.mxu0 0
        %2129 = vmatprep.mubr.bf16.mxu0 0
        %2130 = vmatmul.mubr.bf16.gmra.mrb[0].mxu0 %v2086
        %v2131 = vpop.f32.mrb[0].mxu0
        %v2132 = vadd.f32 0.0, %v2131
        %v2133 = vpop.f32.mrb[0].mxu0
        %v2134 = vadd.f32 0.0, %v2133
        %v2135 = vpop.f32.mrb[0].mxu0
        %v2136 = vadd.f32 0.0, %v2135
        %v2137 = vpop.f32.mrb[0].mxu0
        %v2138 = vadd.f32 0.0, %v2137
        %2139 = vmatprep.mubr.bf16.mxu0 0
        %2140 = vmatmul.mubr.bf16.gmra.mrb[0].mxu0 %v2089
        %v2141 = vpop.f32.mrb[0].mxu0
        %v2142 = vadd.f32 0.0, %v2141
        %v2143 = vpop.f32.mrb[0].mxu0
        %v2144 = vadd.f32 0.0, %v2143
        %v2145 = vpop.f32.mrb[0].mxu0
        %v2146 = vadd.f32 0.0, %v2145
        %v2147 = vpop.f32.mrb[0].mxu0
        %v2148 = vadd.f32 0.0, %v2147
        %2149 = vdwg.mxu0
        %v2154 = vunpack.c.l.b16 %v2055
        %v2155 = vunpack.c.l.b16 %v2056
        %v2156 = vunpack.c.l.b16 %v2057
        %v2157 = vunpack.c.l.b16 %v2058
        %v2158 = vpack.c.b16 %v2155, %v2154
        %v2159 = vpack.c.b16 %v2157, %v2156
        %v2161 = vsel %vm332, %v2158, 0
        %v2164 = vsel %vm332, %v2159, 0
        %v2167 = vsel %vm339, %v2059, 0
        %v2170 = vsel %vm339, %v2060, 0
        %2172 = vmatprep.subr.bf16.mxu0 %v2170
        %2173 = vmatpush1.bf16.msra.mxu0 %v2167
        %2174 = vmatprep.subr.bf16.mxu0 0
        %2175 = vmatpush1.bf16.msra.mxu0 0
        %2176 = vmatprep.subr.bf16.mxu0 0
        %2177 = vmatpush1.bf16.msra.mxu0 0
        %2178 = vmatprep.subr.bf16.mxu0 0
        %2179 = vmatpush1.bf16.msra.mxu0 0
        %2180 = vmatprep.subr.bf16.mxu0 0
        %2181 = vmatpush1.bf16.msra.mxu0 0
        %2182 = vmatprep.subr.bf16.mxu0 0
        %2183 = vmatpush1.bf16.msra.mxu0 0
        %2184 = vmatprep.subr.bf16.mxu0 0
        %2185 = vmatpush1.bf16.msra.mxu0 0
        %2186 = vmatprep.subr.bf16.mxu0 0
        %2187 = vmatpush1.bf16.msra.mxu0 0
        %2188 = vmatprep.subr.bf16.mxu0 0
        %2189 = vmatpush1.bf16.msra.mxu0 0
        %2190 = vmatprep.subr.bf16.mxu0 0
        %2191 = vmatpush1.bf16.msra.mxu0 0
        %2192 = vmatprep.subr.bf16.mxu0 0
        %2193 = vmatpush1.bf16.msra.mxu0 0
        %2194 = vmatprep.subr.bf16.mxu0 0
        %2195 = vmatpush1.bf16.msra.mxu0 0
        %2196 = vmatprep.subr.bf16.mxu0 0
        %2197 = vmatpush1.bf16.msra.mxu0 0
        %2198 = vmatprep.subr.bf16.mxu0 0
        %2199 = vmatpush1.bf16.msra.mxu0 0
        %2200 = vmatprep.subr.bf16.mxu0 0
        %2201 = vmatpush1.bf16.msra.mxu0 0
        %2202 = vmatprep.subr.bf16.mxu0 0
        %2203 = vmatpush1.bf16.msra.mxu0 0
        %2204 = vmatprep.mubr.bf16.mxu0 0
        %2205 = vmatmul.mubr.bf16.gmra.mrb[0].mxu0 %v2161
        %v2206 = vpop.f32.mrb[0].mxu0
        %v2207 = vadd.f32 %v2132, %v2206
        %v2208 = vpop.f32.mrb[0].mxu0
        %v2209 = vadd.f32 %v2134, %v2208
        %v2210 = vpop.f32.mrb[0].mxu0
        %v2211 = vadd.f32 %v2136, %v2210
        %v2212 = vpop.f32.mrb[0].mxu0
        %v2213 = vadd.f32 %v2138, %v2212
        %2214 = vmatprep.mubr.bf16.mxu0 0
        %2215 = vmatmul.mubr.bf16.gmra.mrb[0].mxu0 %v2164
        %v2216 = vpop.f32.mrb[0].mxu0
        %v2217 = vadd.f32 %v2142, %v2216
        %v2218 = vpop.f32.mrb[0].mxu0
        %v2219 = vadd.f32 %v2144, %v2218
        %v2220 = vpop.f32.mrb[0].mxu0
        %v2221 = vadd.f32 %v2146, %v2220
        %v2222 = vpop.f32.mrb[0].mxu0
        %v2223 = vadd.f32 %v2148, %v2222
        %2224 = vdwg.mxu0
        %2225 = vrot.lane.b32.xlu0 %v2043, 15
        %v2226 = vpop.permute.xlu0 %2225
        %2227 = vrot.lane.b32.xlu0 %v2045, 15
        %v2228 = vpop.permute.xlu0 %2227
        %v2229 = vsel %vm478, %v2226, %v2228
        %v2230 = vsel %vm478, %v2228, %v2226
        %v2231 = vsel %vm483, %v2230, 0.0
        %v2232 = vsel %vm484, %v2229, 0.0
        %v2233 = vld [vmem:[%s487] sm:$0xf]
        %v2234 = vld [vmem:[%s487 + $0x4] sm:$0xf]
        %v2235 = vld [vmem:[%s487 + $0x8] sm:$0xf]
        %v2236 = vld [vmem:[%s487 + $0xc] sm:$0xf]
        %v2237 = vpack.c.bf16 %v2231, %v2231
        %v2238 = vpack.c.bf16 %v2232, %v2232
        %v2243 = vunpack.c.l.b16 %v2233
        %v2244 = vunpack.c.l.b16 %v2234
        %v2245 = vunpack.c.l.b16 %v2235
        %v2246 = vunpack.c.l.b16 %v2236
        %v2247 = vpack.c.b16 %v2244, %v2243
        %v2248 = vpack.c.b16 %v2246, %v2245
        %v2250 = vsel %vm332, %v2247, 0
        %v2253 = vsel %vm332, %v2248, 0
        %v2256 = vsel %vm339, %v2237, 0
        %v2259 = vsel %vm339, %v2238, 0
        %2261 = vmatprep.subr.bf16.mxu0 %v2259
        %2262 = vmatpush1.bf16.msra.mxu0 %v2256
        %2263 = vmatprep.subr.bf16.mxu0 0
        %2264 = vmatpush1.bf16.msra.mxu0 0
        %2265 = vmatprep.subr.bf16.mxu0 0
        %2266 = vmatpush1.bf16.msra.mxu0 0
        %2267 = vmatprep.subr.bf16.mxu0 0
        %2268 = vmatpush1.bf16.msra.mxu0 0
        %2269 = vmatprep.subr.bf16.mxu0 0
        %2270 = vmatpush1.bf16.msra.mxu0 0
        %2271 = vmatprep.subr.bf16.mxu0 0
        %2272 = vmatpush1.bf16.msra.mxu0 0
        %2273 = vmatprep.subr.bf16.mxu0 0
        %2274 = vmatpush1.bf16.msra.mxu0 0
        %2275 = vmatprep.subr.bf16.mxu0 0
        %2276 = vmatpush1.bf16.msra.mxu0 0
        %2277 = vmatprep.subr.bf16.mxu0 0
        %2278 = vmatpush1.bf16.msra.mxu0 0
        %2279 = vmatprep.subr.bf16.mxu0 0
        %2280 = vmatpush1.bf16.msra.mxu0 0
        %2281 = vmatprep.subr.bf16.mxu0 0
        %2282 = vmatpush1.bf16.msra.mxu0 0
        %2283 = vmatprep.subr.bf16.mxu0 0
        %2284 = vmatpush1.bf16.msra.mxu0 0
        %2285 = vmatprep.subr.bf16.mxu0 0
        %2286 = vmatpush1.bf16.msra.mxu0 0
        %2287 = vmatprep.subr.bf16.mxu0 0
        %2288 = vmatpush1.bf16.msra.mxu0 0
        %2289 = vmatprep.subr.bf16.mxu0 0
        %2290 = vmatpush1.bf16.msra.mxu0 0
        %2291 = vmatprep.subr.bf16.mxu0 0
        %2292 = vmatpush1.bf16.msra.mxu0 0
        %2293 = vmatprep.mubr.bf16.mxu0 0
        %2294 = vmatmul.mubr.bf16.gmra.mrb[0].mxu0 %v2250
        %v2295 = vpop.f32.mrb[0].mxu0
        %v2296 = vadd.f32 0.0, %v2295
        %v2297 = vpop.f32.mrb[0].mxu0
        %v2298 = vadd.f32 0.0, %v2297
        %v2299 = vpop.f32.mrb[0].mxu0
        %v2300 = vadd.f32 0.0, %v2299
        %v2301 = vpop.f32.mrb[0].mxu0
        %v2302 = vadd.f32 0.0, %v2301
        %2303 = vmatprep.mubr.bf16.mxu0 0
        %2304 = vmatmul.mubr.bf16.gmra.mrb[0].mxu0 %v2253
        %v2305 = vpop.f32.mrb[0].mxu0
        %v2306 = vadd.f32 0.0, %v2305
        %v2307 = vpop.f32.mrb[0].mxu0
        %v2308 = vadd.f32 0.0, %v2307
        %v2309 = vpop.f32.mrb[0].mxu0
        %v2310 = vadd.f32 0.0, %v2309
        %v2311 = vpop.f32.mrb[0].mxu0
        %v2312 = vadd.f32 0.0, %v2311
        %2313 = vdwg.mxu0
        %v2314 = vadd.f32 %v2207, %v2296
        %v2315 = vadd.f32 %v2209, %v2298
        %v2316 = vadd.f32 %v2211, %v2300
        %v2317 = vadd.f32 %v2213, %v2302
        %v2318 = vadd.f32 %v2217, %v2306
        %v2319 = vadd.f32 %v2219, %v2308
        %v2320 = vadd.f32 %v2221, %v2310
        %v2321 = vadd.f32 %v2223, %v2312
        %2322 = vrot.lane.b32.xlu0 %v2043, 1
        %v2323 = vpop.permute.xlu0 %2322
        %2324 = vrot.lane.b32.xlu0 %v2045, 1
        %v2325 = vpop.permute.xlu0 %2324
        %v2326 = vsel %vm581, %v2323, %v2325
        %v2327 = vsel %vm581, %v2325, %v2323
        %v2328 = vsel %vm586, %v2327, 0.0
        %v2329 = vsel %vm587, %v2326, 0.0
        %v2330 = vld [vmem:[%s590] sm:$0xf]
        %v2331 = vld [vmem:[%s590 + $0x4] sm:$0xf]
        %v2332 = vld [vmem:[%s590 + $0x8] sm:$0xf]
        %v2333 = vld [vmem:[%s590 + $0xc] sm:$0xf]
        %v2334 = vpack.c.bf16 %v2328, %v2328
        %v2335 = vpack.c.bf16 %v2329, %v2329
        %v2340 = vunpack.c.l.b16 %v2330
        %v2341 = vunpack.c.l.b16 %v2331
        %v2342 = vunpack.c.l.b16 %v2332
        %v2343 = vunpack.c.l.b16 %v2333
        %v2344 = vpack.c.b16 %v2341, %v2340
        %v2345 = vpack.c.b16 %v2343, %v2342
        %v2347 = vsel %vm332, %v2344, 0
        %v2350 = vsel %vm332, %v2345, 0
        %v2353 = vsel %vm339, %v2334, 0
        %v2356 = vsel %vm339, %v2335, 0
        %2358 = vmatprep.subr.bf16.mxu0 %v2356
        %2359 = vmatpush1.bf16.msra.mxu0 %v2353
        %2360 = vmatprep.subr.bf16.mxu0 0
        %2361 = vmatpush1.bf16.msra.mxu0 0
        %2362 = vmatprep.subr.bf16.mxu0 0
        %2363 = vmatpush1.bf16.msra.mxu0 0
        %2364 = vmatprep.subr.bf16.mxu0 0
        %2365 = vmatpush1.bf16.msra.mxu0 0
        %2366 = vmatprep.subr.bf16.mxu0 0
        %2367 = vmatpush1.bf16.msra.mxu0 0
        %2368 = vmatprep.subr.bf16.mxu0 0
        %2369 = vmatpush1.bf16.msra.mxu0 0
        %2370 = vmatprep.subr.bf16.mxu0 0
        %2371 = vmatpush1.bf16.msra.mxu0 0
        %2372 = vmatprep.subr.bf16.mxu0 0
        %2373 = vmatpush1.bf16.msra.mxu0 0
        %2374 = vmatprep.subr.bf16.mxu0 0
        %2375 = vmatpush1.bf16.msra.mxu0 0
        %2376 = vmatprep.subr.bf16.mxu0 0
        %2377 = vmatpush1.bf16.msra.mxu0 0
        %2378 = vmatprep.subr.bf16.mxu0 0
        %2379 = vmatpush1.bf16.msra.mxu0 0
        %2380 = vmatprep.subr.bf16.mxu0 0
        %2381 = vmatpush1.bf16.msra.mxu0 0
        %2382 = vmatprep.subr.bf16.mxu0 0
        %2383 = vmatpush1.bf16.msra.mxu0 0
        %2384 = vmatprep.subr.bf16.mxu0 0
        %2385 = vmatpush1.bf16.msra.mxu0 0
        %2386 = vmatprep.subr.bf16.mxu0 0
        %2387 = vmatpush1.bf16.msra.mxu0 0
        %2388 = vmatprep.subr.bf16.mxu0 0
        %2389 = vmatpush1.bf16.msra.mxu0 0
        %2390 = vmatprep.mubr.bf16.mxu0 0
        %2391 = vmatmul.mubr.bf16.gmra.mrb[0].mxu0 %v2347
        %v2392 = vpop.f32.mrb[0].mxu0
        %v2393 = vadd.f32 0.0, %v2392
        %v2394 = vpop.f32.mrb[0].mxu0
        %v2395 = vadd.f32 0.0, %v2394
        %v2396 = vpop.f32.mrb[0].mxu0
        %v2397 = vadd.f32 0.0, %v2396
        %v2398 = vpop.f32.mrb[0].mxu0
        %v2399 = vadd.f32 0.0, %v2398
        %2400 = vmatprep.mubr.bf16.mxu0 0
        %2401 = vmatmul.mubr.bf16.gmra.mrb[0].mxu0 %v2350
        %v2402 = vpop.f32.mrb[0].mxu0
        %v2403 = vadd.f32 0.0, %v2402
        %v2404 = vpop.f32.mrb[0].mxu0
        %v2405 = vadd.f32 0.0, %v2404
        %v2406 = vpop.f32.mrb[0].mxu0
        %v2407 = vadd.f32 0.0, %v2406
        %v2408 = vpop.f32.mrb[0].mxu0
        %v2409 = vadd.f32 0.0, %v2408
        %2410 = vdwg.mxu0
        %v2411 = vadd.f32 %v2314, %v2393
        %v2412 = vadd.f32 %v2315, %v2395
        %v2413 = vadd.f32 %v2316, %v2397
        %v2414 = vadd.f32 %v2317, %v2399
        %v2415 = vadd.f32 %v2318, %v2403
        %v2416 = vadd.f32 %v2319, %v2405
        %v2417 = vadd.f32 %v2320, %v2407
        %v2418 = vadd.f32 %v2321, %v2409
        %v2419 = vld [vmem:[%s680] sm:$0xf]
        %v2420 = vld [vmem:[%s680 + $0x4] sm:$0xf]
        %v2421 = vld [vmem:[%s680 + $0x8] sm:$0xf]
        %v2422 = vld [vmem:[%s680 + $0xc] sm:$0xf]
        %v2423 = vpack.c.bf16 %v2043, %v2043
        %v2424 = vpack.c.bf16 %v2045, %v2045
        %v2429 = vunpack.c.l.b16 %v2419
        %v2430 = vunpack.c.l.b16 %v2420
        %v2431 = vunpack.c.l.b16 %v2421
        %v2432 = vunpack.c.l.b16 %v2422
        %v2433 = vpack.c.b16 %v2430, %v2429
        %v2434 = vpack.c.b16 %v2432, %v2431
        %v2436 = vsel %vm332, %v2433, 0
        %v2439 = vsel %vm332, %v2434, 0
        %v2442 = vsel %vm339, %v2423, 0
        %v2445 = vsel %vm339, %v2424, 0
        %2447 = vmatprep.subr.bf16.mxu0 %v2445
        %2448 = vmatpush1.bf16.msra.mxu0 %v2442
        %2449 = vmatprep.subr.bf16.mxu0 0
        %2450 = vmatpush1.bf16.msra.mxu0 0
        %2451 = vmatprep.subr.bf16.mxu0 0
        %2452 = vmatpush1.bf16.msra.mxu0 0
        %2453 = vmatprep.subr.bf16.mxu0 0
        %2454 = vmatpush1.bf16.msra.mxu0 0
        %2455 = vmatprep.subr.bf16.mxu0 0
        %2456 = vmatpush1.bf16.msra.mxu0 0
        %2457 = vmatprep.subr.bf16.mxu0 0
        %2458 = vmatpush1.bf16.msra.mxu0 0
        %2459 = vmatprep.subr.bf16.mxu0 0
        %2460 = vmatpush1.bf16.msra.mxu0 0
        %2461 = vmatprep.subr.bf16.mxu0 0
        %2462 = vmatpush1.bf16.msra.mxu0 0
        %2463 = vmatprep.subr.bf16.mxu0 0
        %2464 = vmatpush1.bf16.msra.mxu0 0
        %2465 = vmatprep.subr.bf16.mxu0 0
        %2466 = vmatpush1.bf16.msra.mxu0 0
        %2467 = vmatprep.subr.bf16.mxu0 0
        %2468 = vmatpush1.bf16.msra.mxu0 0
        %2469 = vmatprep.subr.bf16.mxu0 0
        %2470 = vmatpush1.bf16.msra.mxu0 0
        %2471 = vmatprep.subr.bf16.mxu0 0
        %2472 = vmatpush1.bf16.msra.mxu0 0
        %2473 = vmatprep.subr.bf16.mxu0 0
        %2474 = vmatpush1.bf16.msra.mxu0 0
        %2475 = vmatprep.subr.bf16.mxu0 0
        %2476 = vmatpush1.bf16.msra.mxu0 0
        %2477 = vmatprep.subr.bf16.mxu0 0
        %2478 = vmatpush1.bf16.msra.mxu0 0
        %2479 = vmatprep.mubr.bf16.mxu0 0
        %2480 = vmatmul.mubr.bf16.gmra.mrb[0].mxu0 %v2436
        %v2481 = vpop.f32.mrb[0].mxu0
        %v2482 = vadd.f32 0.0, %v2481
        %v2483 = vpop.f32.mrb[0].mxu0
        %v2484 = vadd.f32 0.0, %v2483
        %v2485 = vpop.f32.mrb[0].mxu0
        %v2486 = vadd.f32 0.0, %v2485
        %v2487 = vpop.f32.mrb[0].mxu0
        %v2488 = vadd.f32 0.0, %v2487
        %2489 = vmatprep.mubr.bf16.mxu0 0
        %2490 = vmatmul.mubr.bf16.gmra.mrb[0].mxu0 %v2439
        %v2491 = vpop.f32.mrb[0].mxu0
        %v2492 = vadd.f32 0.0, %v2491
        %v2493 = vpop.f32.mrb[0].mxu0
        %v2494 = vadd.f32 0.0, %v2493
        %v2495 = vpop.f32.mrb[0].mxu0
        %v2496 = vadd.f32 0.0, %v2495
        %v2497 = vpop.f32.mrb[0].mxu0
        %v2498 = vadd.f32 0.0, %v2497
        %2499 = vdwg.mxu0
        %v2500 = vadd.f32 %v2411, %v2482
        %v2501 = vadd.f32 %v2412, %v2484
        %v2502 = vadd.f32 %v2413, %v2486
        %v2503 = vadd.f32 %v2414, %v2488
        %v2504 = vadd.f32 %v2415, %v2492
        %v2505 = vadd.f32 %v2416, %v2494
        %v2506 = vadd.f32 %v2417, %v2496
        %v2507 = vadd.f32 %v2418, %v2498
        %2508 = vrot.lane.b32.xlu0 %v2043, 127
        %v2509 = vpop.permute.xlu0 %2508
        %2510 = vrot.lane.b32.xlu0 %v2045, 127
        %v2511 = vpop.permute.xlu0 %2510
        %v2512 = vsel %vm774, %v2509, %v2511
        %v2513 = vsel %vm774, %v2511, %v2509
        %v2514 = vsel %vm779, %v2512, 0.0
        %v2515 = vsel %vm780, %v2513, 0.0
        %v2516 = vld [vmem:[%s783] sm:$0xf]
        %v2517 = vld [vmem:[%s783 + $0x4] sm:$0xf]
        %v2518 = vld [vmem:[%s783 + $0x8] sm:$0xf]
        %v2519 = vld [vmem:[%s783 + $0xc] sm:$0xf]
        %v2520 = vpack.c.bf16 %v2514, %v2514
        %v2521 = vpack.c.bf16 %v2515, %v2515
        %v2526 = vunpack.c.l.b16 %v2516
        %v2527 = vunpack.c.l.b16 %v2517
        %v2528 = vunpack.c.l.b16 %v2518
        %v2529 = vunpack.c.l.b16 %v2519
        %v2530 = vpack.c.b16 %v2527, %v2526
        %v2531 = vpack.c.b16 %v2529, %v2528
        %v2533 = vsel %vm332, %v2530, 0
        %v2536 = vsel %vm332, %v2531, 0
        %v2539 = vsel %vm339, %v2520, 0
        %v2542 = vsel %vm339, %v2521, 0
        %2544 = vmatprep.subr.bf16.mxu0 %v2542
        %2545 = vmatpush1.bf16.msra.mxu0 %v2539
        %2546 = vmatprep.subr.bf16.mxu0 0
        %2547 = vmatpush1.bf16.msra.mxu0 0
        %2548 = vmatprep.subr.bf16.mxu0 0
        %2549 = vmatpush1.bf16.msra.mxu0 0
        %2550 = vmatprep.subr.bf16.mxu0 0
        %2551 = vmatpush1.bf16.msra.mxu0 0
        %2552 = vmatprep.subr.bf16.mxu0 0
        %2553 = vmatpush1.bf16.msra.mxu0 0
        %2554 = vmatprep.subr.bf16.mxu0 0
        %2555 = vmatpush1.bf16.msra.mxu0 0
        %2556 = vmatprep.subr.bf16.mxu0 0
        %2557 = vmatpush1.bf16.msra.mxu0 0
        %2558 = vmatprep.subr.bf16.mxu0 0
        %2559 = vmatpush1.bf16.msra.mxu0 0
        %2560 = vmatprep.subr.bf16.mxu0 0
        %2561 = vmatpush1.bf16.msra.mxu0 0
        %2562 = vmatprep.subr.bf16.mxu0 0
        %2563 = vmatpush1.bf16.msra.mxu0 0
        %2564 = vmatprep.subr.bf16.mxu0 0
        %2565 = vmatpush1.bf16.msra.mxu0 0
        %2566 = vmatprep.subr.bf16.mxu0 0
        %2567 = vmatpush1.bf16.msra.mxu0 0
        %2568 = vmatprep.subr.bf16.mxu0 0
        %2569 = vmatpush1.bf16.msra.mxu0 0
        %2570 = vmatprep.subr.bf16.mxu0 0
        %2571 = vmatpush1.bf16.msra.mxu0 0
        %2572 = vmatprep.subr.bf16.mxu0 0
        %2573 = vmatpush1.bf16.msra.mxu0 0
        %2574 = vmatprep.subr.bf16.mxu0 0
        %2575 = vmatpush1.bf16.msra.mxu0 0
        %2576 = vmatprep.mubr.bf16.mxu0 0
        %2577 = vmatmul.mubr.bf16.gmra.mrb[0].mxu0 %v2533
        %v2578 = vpop.f32.mrb[0].mxu0
        %v2579 = vadd.f32 0.0, %v2578
        %v2580 = vpop.f32.mrb[0].mxu0
        %v2581 = vadd.f32 0.0, %v2580
        %v2582 = vpop.f32.mrb[0].mxu0
        %v2583 = vadd.f32 0.0, %v2582
        %v2584 = vpop.f32.mrb[0].mxu0
        %v2585 = vadd.f32 0.0, %v2584
        %2586 = vmatprep.mubr.bf16.mxu0 0
        %2587 = vmatmul.mubr.bf16.gmra.mrb[0].mxu0 %v2536
        %v2588 = vpop.f32.mrb[0].mxu0
        %v2589 = vadd.f32 0.0, %v2588
        %v2590 = vpop.f32.mrb[0].mxu0
        %v2591 = vadd.f32 0.0, %v2590
        %v2592 = vpop.f32.mrb[0].mxu0
        %v2593 = vadd.f32 0.0, %v2592
        %v2594 = vpop.f32.mrb[0].mxu0
        %v2595 = vadd.f32 0.0, %v2594
        %2596 = vdwg.mxu0
        %v2597 = vadd.f32 %v2500, %v2579
        %v2598 = vadd.f32 %v2501, %v2581
        %v2599 = vadd.f32 %v2502, %v2583
        %v2600 = vadd.f32 %v2503, %v2585
        %v2601 = vadd.f32 %v2504, %v2589
        %v2602 = vadd.f32 %v2505, %v2591
        %v2603 = vadd.f32 %v2506, %v2593
        %v2604 = vadd.f32 %v2507, %v2595
        %2605 = vrot.lane.b32.xlu0 %v2043, 113
        %v2606 = vpop.permute.xlu0 %2605
        %2607 = vrot.lane.b32.xlu0 %v2045, 113
        %v2608 = vpop.permute.xlu0 %2607
        %v2609 = vsel %vm877, %v2606, %v2608
        %v2610 = vsel %vm877, %v2608, %v2606
        %v2611 = vsel %vm882, %v2609, 0.0
        %v2612 = vsel %vm883, %v2610, 0.0
        %v2613 = vld [vmem:[%s886] sm:$0xf]
        %v2614 = vld [vmem:[%s886 + $0x4] sm:$0xf]
        %v2615 = vld [vmem:[%s886 + $0x8] sm:$0xf]
        %v2616 = vld [vmem:[%s886 + $0xc] sm:$0xf]
        %v2617 = vpack.c.bf16 %v2611, %v2611
        %v2618 = vpack.c.bf16 %v2612, %v2612
        %v2623 = vunpack.c.l.b16 %v2613
        %v2624 = vunpack.c.l.b16 %v2614
        %v2625 = vunpack.c.l.b16 %v2615
        %v2626 = vunpack.c.l.b16 %v2616
        %v2627 = vpack.c.b16 %v2624, %v2623
        %v2628 = vpack.c.b16 %v2626, %v2625
        %v2630 = vsel %vm332, %v2627, 0
        %v2633 = vsel %vm332, %v2628, 0
        %v2636 = vsel %vm339, %v2617, 0
        %v2639 = vsel %vm339, %v2618, 0
        %2641 = vmatprep.subr.bf16.mxu0 %v2639
        %2642 = vmatpush1.bf16.msra.mxu0 %v2636
        %2643 = vmatprep.subr.bf16.mxu0 0
        %2644 = vmatpush1.bf16.msra.mxu0 0
        %2645 = vmatprep.subr.bf16.mxu0 0
        %2646 = vmatpush1.bf16.msra.mxu0 0
        %2647 = vmatprep.subr.bf16.mxu0 0
        %2648 = vmatpush1.bf16.msra.mxu0 0
        %2649 = vmatprep.subr.bf16.mxu0 0
        %2650 = vmatpush1.bf16.msra.mxu0 0
        %2651 = vmatprep.subr.bf16.mxu0 0
        %2652 = vmatpush1.bf16.msra.mxu0 0
        %2653 = vmatprep.subr.bf16.mxu0 0
        %2654 = vmatpush1.bf16.msra.mxu0 0
        %2655 = vmatprep.subr.bf16.mxu0 0
        %2656 = vmatpush1.bf16.msra.mxu0 0
        %2657 = vmatprep.subr.bf16.mxu0 0
        %2658 = vmatpush1.bf16.msra.mxu0 0
        %2659 = vmatprep.subr.bf16.mxu0 0
        %2660 = vmatpush1.bf16.msra.mxu0 0
        %2661 = vmatprep.subr.bf16.mxu0 0
        %2662 = vmatpush1.bf16.msra.mxu0 0
        %2663 = vmatprep.subr.bf16.mxu0 0
        %2664 = vmatpush1.bf16.msra.mxu0 0
        %2665 = vmatprep.subr.bf16.mxu0 0
        %2666 = vmatpush1.bf16.msra.mxu0 0
        %2667 = vmatprep.subr.bf16.mxu0 0
        %2668 = vmatpush1.bf16.msra.mxu0 0
        %2669 = vmatprep.subr.bf16.mxu0 0
        %2670 = vmatpush1.bf16.msra.mxu0 0
        %2671 = vmatprep.subr.bf16.mxu0 0
        %2672 = vmatpush1.bf16.msra.mxu0 0
        %2673 = vmatprep.mubr.bf16.mxu0 0
        %2674 = vmatmul.mubr.bf16.gmra.mrb[0].mxu0 %v2630
        %v2675 = vpop.f32.mrb[0].mxu0
        %v2676 = vadd.f32 0.0, %v2675
        %v2677 = vpop.f32.mrb[0].mxu0
        %v2678 = vadd.f32 0.0, %v2677
        %v2679 = vpop.f32.mrb[0].mxu0
        %v2680 = vadd.f32 0.0, %v2679
        %v2681 = vpop.f32.mrb[0].mxu0
        %v2682 = vadd.f32 0.0, %v2681
        %2683 = vmatprep.mubr.bf16.mxu0 0
        %2684 = vmatmul.mubr.bf16.gmra.mrb[0].mxu0 %v2633
        %v2685 = vpop.f32.mrb[0].mxu0
        %v2686 = vadd.f32 0.0, %v2685
        %v2687 = vpop.f32.mrb[0].mxu0
        %v2688 = vadd.f32 0.0, %v2687
        %v2689 = vpop.f32.mrb[0].mxu0
        %v2690 = vadd.f32 0.0, %v2689
        %v2691 = vpop.f32.mrb[0].mxu0
        %v2692 = vadd.f32 0.0, %v2691
        %2693 = vdwg.mxu0
        %v2694 = vadd.f32 %v2597, %v2676
        %v2695 = vadd.f32 %v2598, %v2678
        %v2696 = vadd.f32 %v2599, %v2680
        %v2697 = vadd.f32 %v2600, %v2682
        %v2698 = vadd.f32 %v2601, %v2686
        %v2699 = vadd.f32 %v2602, %v2688
        %v2700 = vadd.f32 %v2603, %v2690
        %v2701 = vadd.f32 %v2604, %v2692
        %2702 = vrot.lane.b32.xlu0 %v2043, 112
        %v2703 = vpop.permute.xlu0 %2702
        %2704 = vrot.lane.b32.xlu0 %v2045, 112
        %v2705 = vpop.permute.xlu0 %2704
        %v2706 = vsel %vm980, %v2703, %v2705
        %v2707 = vsel %vm980, %v2705, %v2703
        %v2708 = vsel %vm985, %v2706, 0.0
        %v2709 = vsel %vm986, %v2707, 0.0
        %v2710 = vld [vmem:[%s989] sm:$0xf]
        %v2711 = vld [vmem:[%s989 + $0x4] sm:$0xf]
        %v2712 = vld [vmem:[%s989 + $0x8] sm:$0xf]
        %v2713 = vld [vmem:[%s989 + $0xc] sm:$0xf]
        %v2714 = vpack.c.bf16 %v2708, %v2708
        %v2715 = vpack.c.bf16 %v2709, %v2709
        %v2720 = vunpack.c.l.b16 %v2710
        %v2721 = vunpack.c.l.b16 %v2711
        %v2722 = vunpack.c.l.b16 %v2712
        %v2723 = vunpack.c.l.b16 %v2713
        %v2724 = vpack.c.b16 %v2721, %v2720
        %v2725 = vpack.c.b16 %v2723, %v2722
        %v2727 = vsel %vm332, %v2724, 0
        %v2730 = vsel %vm332, %v2725, 0
        %v2733 = vsel %vm339, %v2714, 0
        %v2736 = vsel %vm339, %v2715, 0
        %2738 = vmatprep.subr.bf16.mxu0 %v2736
        %2739 = vmatpush1.bf16.msra.mxu0 %v2733
        %2740 = vmatprep.subr.bf16.mxu0 0
        %2741 = vmatpush1.bf16.msra.mxu0 0
        %2742 = vmatprep.subr.bf16.mxu0 0
        %2743 = vmatpush1.bf16.msra.mxu0 0
        %2744 = vmatprep.subr.bf16.mxu0 0
        %2745 = vmatpush1.bf16.msra.mxu0 0
        %2746 = vmatprep.subr.bf16.mxu0 0
        %2747 = vmatpush1.bf16.msra.mxu0 0
        %2748 = vmatprep.subr.bf16.mxu0 0
        %2749 = vmatpush1.bf16.msra.mxu0 0
        %2750 = vmatprep.subr.bf16.mxu0 0
        %2751 = vmatpush1.bf16.msra.mxu0 0
        %2752 = vmatprep.subr.bf16.mxu0 0
        %2753 = vmatpush1.bf16.msra.mxu0 0
        %2754 = vmatprep.subr.bf16.mxu0 0
        %2755 = vmatpush1.bf16.msra.mxu0 0
        %2756 = vmatprep.subr.bf16.mxu0 0
        %2757 = vmatpush1.bf16.msra.mxu0 0
        %2758 = vmatprep.subr.bf16.mxu0 0
        %2759 = vmatpush1.bf16.msra.mxu0 0
        %2760 = vmatprep.subr.bf16.mxu0 0
        %2761 = vmatpush1.bf16.msra.mxu0 0
        %2762 = vmatprep.subr.bf16.mxu0 0
        %2763 = vmatpush1.bf16.msra.mxu0 0
        %2764 = vmatprep.subr.bf16.mxu0 0
        %2765 = vmatpush1.bf16.msra.mxu0 0
        %2766 = vmatprep.subr.bf16.mxu0 0
        %2767 = vmatpush1.bf16.msra.mxu0 0
        %2768 = vmatprep.subr.bf16.mxu0 0
        %2769 = vmatpush1.bf16.msra.mxu0 0
        %2770 = vmatprep.mubr.bf16.mxu0 0
        %2771 = vmatmul.mubr.bf16.gmra.mrb[0].mxu0 %v2727
        %v2772 = vpop.f32.mrb[0].mxu0
        %v2773 = vadd.f32 0.0, %v2772
        %v2774 = vpop.f32.mrb[0].mxu0
        %v2775 = vadd.f32 0.0, %v2774
        %v2776 = vpop.f32.mrb[0].mxu0
        %v2777 = vadd.f32 0.0, %v2776
        %v2778 = vpop.f32.mrb[0].mxu0
        %v2779 = vadd.f32 0.0, %v2778
        %2780 = vmatprep.mubr.bf16.mxu0 0
        %2781 = vmatmul.mubr.bf16.gmra.mrb[0].mxu0 %v2730
        %v2782 = vpop.f32.mrb[0].mxu0
        %v2783 = vadd.f32 0.0, %v2782
        %v2784 = vpop.f32.mrb[0].mxu0
        %v2785 = vadd.f32 0.0, %v2784
        %v2786 = vpop.f32.mrb[0].mxu0
        %v2787 = vadd.f32 0.0, %v2786
        %v2788 = vpop.f32.mrb[0].mxu0
        %v2789 = vadd.f32 0.0, %v2788
        %2790 = vdwg.mxu0
        %v2791 = vadd.f32 %v2694, %v2773
        %v2792 = vadd.f32 %v2695, %v2775
        %v2793 = vadd.f32 %v2696, %v2777
        %v2794 = vadd.f32 %v2697, %v2779
        %v2795 = vadd.f32 %v2698, %v2783
        %v2796 = vadd.f32 %v2699, %v2785
        %v2797 = vadd.f32 %v2700, %v2787
        %v2798 = vadd.f32 %v2701, %v2789
        %2799 = vrot.lane.b32.xlu0 %v2043, 111
        %v2800 = vpop.permute.xlu0 %2799
        %2801 = vrot.lane.b32.xlu0 %v2045, 111
        %v2802 = vpop.permute.xlu0 %2801
        %v2803 = vsel %vm1083, %v2800, %v2802
        %v2804 = vsel %vm1083, %v2802, %v2800
        %v2805 = vsel %vm1088, %v2803, 0.0
        %v2806 = vsel %vm1089, %v2804, 0.0
        %v2807 = vld [vmem:[%s1092] sm:$0xf]
        %v2808 = vld [vmem:[%s1092 + $0x4] sm:$0xf]
        %v2809 = vld [vmem:[%s1092 + $0x8] sm:$0xf]
        %v2810 = vld [vmem:[%s1092 + $0xc] sm:$0xf]
        %v2811 = vpack.c.bf16 %v2805, %v2805
        %v2812 = vpack.c.bf16 %v2806, %v2806
        %v2817 = vunpack.c.l.b16 %v2807
        %v2818 = vunpack.c.l.b16 %v2808
        %v2819 = vunpack.c.l.b16 %v2809
        %v2820 = vunpack.c.l.b16 %v2810
        %v2821 = vpack.c.b16 %v2818, %v2817
        %v2822 = vpack.c.b16 %v2820, %v2819
        %v2824 = vsel %vm332, %v2821, 0
        %v2827 = vsel %vm332, %v2822, 0
        %v2830 = vsel %vm339, %v2811, 0
        %v2833 = vsel %vm339, %v2812, 0
        %2835 = vmatprep.subr.bf16.mxu0 %v2833
        %2836 = vmatpush1.bf16.msra.mxu0 %v2830
        %2837 = vmatprep.subr.bf16.mxu0 0
        %2838 = vmatpush1.bf16.msra.mxu0 0
        %2839 = vmatprep.subr.bf16.mxu0 0
        %2840 = vmatpush1.bf16.msra.mxu0 0
        %2841 = vmatprep.subr.bf16.mxu0 0
        %2842 = vmatpush1.bf16.msra.mxu0 0
        %2843 = vmatprep.subr.bf16.mxu0 0
        %2844 = vmatpush1.bf16.msra.mxu0 0
        %2845 = vmatprep.subr.bf16.mxu0 0
        %2846 = vmatpush1.bf16.msra.mxu0 0
        %2847 = vmatprep.subr.bf16.mxu0 0
        %2848 = vmatpush1.bf16.msra.mxu0 0
        %2849 = vmatprep.subr.bf16.mxu0 0
        %2850 = vmatpush1.bf16.msra.mxu0 0
        %2851 = vmatprep.subr.bf16.mxu0 0
        %2852 = vmatpush1.bf16.msra.mxu0 0
        %2853 = vmatprep.subr.bf16.mxu0 0
        %2854 = vmatpush1.bf16.msra.mxu0 0
        %2855 = vmatprep.subr.bf16.mxu0 0
        %2856 = vmatpush1.bf16.msra.mxu0 0
        %2857 = vmatprep.subr.bf16.mxu0 0
        %2858 = vmatpush1.bf16.msra.mxu0 0
        %2859 = vmatprep.subr.bf16.mxu0 0
        %2860 = vmatpush1.bf16.msra.mxu0 0
        %2861 = vmatprep.subr.bf16.mxu0 0
        %2862 = vmatpush1.bf16.msra.mxu0 0
        %2863 = vmatprep.subr.bf16.mxu0 0
        %2864 = vmatpush1.bf16.msra.mxu0 0
        %2865 = vmatprep.subr.bf16.mxu0 0
        %2866 = vmatpush1.bf16.msra.mxu0 0
        %2867 = vmatprep.mubr.bf16.mxu0 0
        %2868 = vmatmul.mubr.bf16.gmra.mrb[0].mxu0 %v2824
        %v2869 = vpop.f32.mrb[0].mxu0
        %v2870 = vadd.f32 0.0, %v2869
        %v2871 = vpop.f32.mrb[0].mxu0
        %v2872 = vadd.f32 0.0, %v2871
        %v2873 = vpop.f32.mrb[0].mxu0
        %v2874 = vadd.f32 0.0, %v2873
        %v2875 = vpop.f32.mrb[0].mxu0
        %v2876 = vadd.f32 0.0, %v2875
        %2877 = vmatprep.mubr.bf16.mxu0 0
        %2878 = vmatmul.mubr.bf16.gmra.mrb[0].mxu0 %v2827
        %v2879 = vpop.f32.mrb[0].mxu0
        %v2880 = vadd.f32 0.0, %v2879
        %v2881 = vpop.f32.mrb[0].mxu0
        %v2882 = vadd.f32 0.0, %v2881
        %v2883 = vpop.f32.mrb[0].mxu0
        %v2884 = vadd.f32 0.0, %v2883
        %v2885 = vpop.f32.mrb[0].mxu0
        %v2886 = vadd.f32 0.0, %v2885
        %2887 = vdwg.mxu0
        %v2888 = vadd.f32 %v2791, %v2870
        %v2889 = vadd.f32 %v2792, %v2872
        %v2890 = vadd.f32 %v2793, %v2874
        %v2891 = vadd.f32 %v2794, %v2876
        %v2892 = vadd.f32 %v2795, %v2880
        %v2893 = vadd.f32 %v2796, %v2882
        %v2894 = vadd.f32 %v2797, %v2884
        %v2895 = vadd.f32 %v2798, %v2886
        %v2896 = vadd.f32 %v2888, %v1185
        %v2897 = vadd.f32 %v2889, %v1185
        %v2898 = vadd.f32 %v2890, %v1190
        %v2899 = vadd.f32 %v2891, %v1190
        %v2900 = vadd.f32 %v2892, %v1195
        %v2901 = vadd.f32 %v2893, %v1195
        %v2902 = vadd.f32 %v2894, %v1200
        %v2903 = vadd.f32 %v2895, %v1200
        %v2904 = vmax.f32 %v2896, 0.0
        %v2905 = vmax.f32 %v2897, 0.0
        %v2906 = vmax.f32 %v2898, 0.0
        %v2907 = vmax.f32 %v2899, 0.0
        %v2908 = vmax.f32 %v2900, 0.0
        %v2909 = vmax.f32 %v2901, 0.0
        %v2910 = vmax.f32 %v2902, 0.0
        %v2911 = vmax.f32 %v2903, 0.0
        %2912 = vrot.lane.b32.xlu0 %v2904, 17
        %v2913 = vpop.permute.xlu0 %2912
        %2914 = vrot.lane.b32.xlu0 %v2906, 17
        %v2915 = vpop.permute.xlu0 %2914
        %2916 = vrot.lane.b32.xlu0 %v2908, 17
        %v2917 = vpop.permute.xlu0 %2916
        %2918 = vrot.lane.b32.xlu0 %v2910, 17
        %v2919 = vpop.permute.xlu0 %2918
        %2920 = vrot.lane.b32.xlu0 %v2905, 17
        %v2921 = vpop.permute.xlu0 %2920
        %2922 = vrot.lane.b32.xlu0 %v2907, 17
        %v2923 = vpop.permute.xlu0 %2922
        %2924 = vrot.lane.b32.xlu0 %v2909, 17
        %v2925 = vpop.permute.xlu0 %2924
        %2926 = vrot.lane.b32.xlu0 %v2911, 17
        %v2927 = vpop.permute.xlu0 %2926
        %v2928 = vsel %vm287, %v2913, %v2921
        %v2929 = vsel %vm287, %v2915, %v2923
        %v2930 = vsel %vm287, %v2917, %v2925
        %v2931 = vsel %vm287, %v2919, %v2927
        %v2932 = vsel %vm287, %v2921, %v2913
        %v2933 = vsel %vm287, %v2923, %v2915
        %v2934 = vsel %vm287, %v2925, %v2917
        %v2935 = vsel %vm287, %v2927, %v2919
        %v2936 = vsel %vm292, %v2932, 0.0
        %v2937 = vsel %vm293, %v2928, 0.0
        %v2938 = vsel %vm292, %v2933, 0.0
        %v2939 = vsel %vm293, %v2929, 0.0
        %v2940 = vsel %vm292, %v2934, 0.0
        %v2941 = vsel %vm293, %v2930, 0.0
        %v2942 = vsel %vm292, %v2935, 0.0
        %v2943 = vsel %vm293, %v2931, 0.0
        %v2944 = vld [vmem:[%s3] sm:$0xf]
        %v2945 = vld [vmem:[%s3 + $0x4] sm:$0xf]
        %v2946 = vpack.c.bf16 %v2938, %v2936
        %v2947 = vpack.c.bf16 %v2939, %v2937
        %v2948 = vpack.c.bf16 %v2942, %v2940
        %v2949 = vpack.c.bf16 %v2943, %v2941
        %2950 = vrot.lane.b32.xlu0 %v2904, 16
        %v2951 = vpop.permute.xlu0 %2950
        %2952 = vrot.lane.b32.xlu0 %v2906, 16
        %v2953 = vpop.permute.xlu0 %2952
        %2954 = vrot.lane.b32.xlu0 %v2908, 16
        %v2955 = vpop.permute.xlu0 %2954
        %2956 = vrot.lane.b32.xlu0 %v2910, 16
        %v2957 = vpop.permute.xlu0 %2956
        %2958 = vrot.lane.b32.xlu0 %v2905, 16
        %v2959 = vpop.permute.xlu0 %2958
        %2960 = vrot.lane.b32.xlu0 %v2907, 16
        %v2961 = vpop.permute.xlu0 %2960
        %2962 = vrot.lane.b32.xlu0 %v2909, 16
        %v2963 = vpop.permute.xlu0 %2962
        %2964 = vrot.lane.b32.xlu0 %v2911, 16
        %v2965 = vpop.permute.xlu0 %2964
        %v2966 = vsel %vm306, %v2951, %v2959
        %v2967 = vsel %vm306, %v2953, %v2961
        %v2968 = vsel %vm306, %v2955, %v2963
        %v2969 = vsel %vm306, %v2957, %v2965
        %v2970 = vsel %vm306, %v2959, %v2951
        %v2971 = vsel %vm306, %v2961, %v2953
        %v2972 = vsel %vm306, %v2963, %v2955
        %v2973 = vsel %vm306, %v2965, %v2957
        %v2974 = vsel %vm311, %v2970, 0.0
        %v2975 = vsel %vm312, %v2966, 0.0
        %v2976 = vsel %vm311, %v2971, 0.0
        %v2977 = vsel %vm312, %v2967, 0.0
        %v2978 = vsel %vm311, %v2972, 0.0
        %v2979 = vsel %vm312, %v2968, 0.0
        %v2980 = vsel %vm311, %v2973, 0.0
        %v2981 = vsel %vm312, %v2969, 0.0
        %v2982 = vld [vmem:[%s1288] sm:$0xf]
        %v2983 = vld [vmem:[%s1288 + $0x4] sm:$0xf]
        %v2984 = vpack.c.bf16 %v2976, %v2974
        %v2985 = vpack.c.bf16 %v2977, %v2975
        %v2986 = vpack.c.bf16 %v2980, %v2978
        %v2987 = vpack.c.bf16 %v2981, %v2979
        %v2990 = vunpack.c.l.b16 %v2982
        %v2991 = vunpack.c.l.b16 %v2983
        %v2992 = vpack.c.b16 %v2991, %v2990
        %v2994 = vsel %vm1300, %v2992, 0
        %2996 = vmatprep.subr.bf16.mxu0 %v2985
        %2997 = vmatpush1.bf16.msra.mxu0 %v2984
        %2998 = vmatprep.subr.bf16.mxu0 %v2987
        %2999 = vmatpush1.bf16.msra.mxu0 %v2986
        %3000 = vmatprep.subr.bf16.mxu0 0
        %3001 = vmatpush1.bf16.msra.mxu0 0
        %3002 = vmatprep.subr.bf16.mxu0 0
        %3003 = vmatpush1.bf16.msra.mxu0 0
        %3004 = vmatprep.subr.bf16.mxu0 0
        %3005 = vmatpush1.bf16.msra.mxu0 0
        %3006 = vmatprep.subr.bf16.mxu0 0
        %3007 = vmatpush1.bf16.msra.mxu0 0
        %3008 = vmatprep.subr.bf16.mxu0 0
        %3009 = vmatpush1.bf16.msra.mxu0 0
        %3010 = vmatprep.subr.bf16.mxu0 0
        %3011 = vmatpush1.bf16.msra.mxu0 0
        %3012 = vmatprep.subr.bf16.mxu0 0
        %3013 = vmatpush1.bf16.msra.mxu0 0
        %3014 = vmatprep.subr.bf16.mxu0 0
        %3015 = vmatpush1.bf16.msra.mxu0 0
        %3016 = vmatprep.subr.bf16.mxu0 0
        %3017 = vmatpush1.bf16.msra.mxu0 0
        %3018 = vmatprep.subr.bf16.mxu0 0
        %3019 = vmatpush1.bf16.msra.mxu0 0
        %3020 = vmatprep.subr.bf16.mxu0 0
        %3021 = vmatpush1.bf16.msra.mxu0 0
        %3022 = vmatprep.subr.bf16.mxu0 0
        %3023 = vmatpush1.bf16.msra.mxu0 0
        %3024 = vmatprep.subr.bf16.mxu0 0
        %3025 = vmatpush1.bf16.msra.mxu0 0
        %3026 = vmatprep.subr.bf16.mxu0 0
        %3027 = vmatpush1.bf16.msra.mxu0 0
        %3028 = vmatprep.mubr.bf16.mxu0 0
        %3029 = vmatmul.mubr.bf16.gmra.mrb[0].mxu0 %v2994
        %v3030 = vpop.f32.mrb[0].mxu0
        %v3031 = vadd.f32 0.0, %v3030
        %v3032 = vpop.f32.mrb[0].mxu0
        %v3033 = vadd.f32 0.0, %v3032
        %v3034 = vpop.f32.mrb[0].mxu0
        %v3035 = vadd.f32 0.0, %v3034
        %v3036 = vpop.f32.mrb[0].mxu0
        %v3037 = vadd.f32 0.0, %v3036
        %3038 = vdwg.mxu0
        %v3041 = vunpack.c.l.b16 %v2944
        %v3042 = vunpack.c.l.b16 %v2945
        %v3043 = vpack.c.b16 %v3042, %v3041
        %v3045 = vsel %vm1300, %v3043, 0
        %3047 = vmatprep.subr.bf16.mxu0 %v2947
        %3048 = vmatpush1.bf16.msra.mxu0 %v2946
        %3049 = vmatprep.subr.bf16.mxu0 %v2949
        %3050 = vmatpush1.bf16.msra.mxu0 %v2948
        %3051 = vmatprep.subr.bf16.mxu0 0
        %3052 = vmatpush1.bf16.msra.mxu0 0
        %3053 = vmatprep.subr.bf16.mxu0 0
        %3054 = vmatpush1.bf16.msra.mxu0 0
        %3055 = vmatprep.subr.bf16.mxu0 0
        %3056 = vmatpush1.bf16.msra.mxu0 0
        %3057 = vmatprep.subr.bf16.mxu0 0
        %3058 = vmatpush1.bf16.msra.mxu0 0
        %3059 = vmatprep.subr.bf16.mxu0 0
        %3060 = vmatpush1.bf16.msra.mxu0 0
        %3061 = vmatprep.subr.bf16.mxu0 0
        %3062 = vmatpush1.bf16.msra.mxu0 0
        %3063 = vmatprep.subr.bf16.mxu0 0
        %3064 = vmatpush1.bf16.msra.mxu0 0
        %3065 = vmatprep.subr.bf16.mxu0 0
        %3066 = vmatpush1.bf16.msra.mxu0 0
        %3067 = vmatprep.subr.bf16.mxu0 0
        %3068 = vmatpush1.bf16.msra.mxu0 0
        %3069 = vmatprep.subr.bf16.mxu0 0
        %3070 = vmatpush1.bf16.msra.mxu0 0
        %3071 = vmatprep.subr.bf16.mxu0 0
        %3072 = vmatpush1.bf16.msra.mxu0 0
        %3073 = vmatprep.subr.bf16.mxu0 0
        %3074 = vmatpush1.bf16.msra.mxu0 0
        %3075 = vmatprep.subr.bf16.mxu0 0
        %3076 = vmatpush1.bf16.msra.mxu0 0
        %3077 = vmatprep.subr.bf16.mxu0 0
        %3078 = vmatpush1.bf16.msra.mxu0 0
        %3079 = vmatprep.mubr.bf16.mxu0 0
        %3080 = vmatmul.mubr.bf16.gmra.mrb[0].mxu0 %v3045
        %v3081 = vpop.f32.mrb[0].mxu0
        %v3082 = vadd.f32 %v3031, %v3081
        %v3083 = vpop.f32.mrb[0].mxu0
        %v3084 = vadd.f32 %v3033, %v3083
        %v3085 = vpop.f32.mrb[0].mxu0
        %v3086 = vadd.f32 %v3035, %v3085
        %v3087 = vpop.f32.mrb[0].mxu0
        %v3088 = vadd.f32 %v3037, %v3087
        %3089 = vdwg.mxu0
        %3090 = vrot.lane.b32.xlu0 %v2904, 15
        %v3091 = vpop.permute.xlu0 %3090
        %3092 = vrot.lane.b32.xlu0 %v2906, 15
        %v3093 = vpop.permute.xlu0 %3092
        %3094 = vrot.lane.b32.xlu0 %v2908, 15
        %v3095 = vpop.permute.xlu0 %3094
        %3096 = vrot.lane.b32.xlu0 %v2910, 15
        %v3097 = vpop.permute.xlu0 %3096
        %3098 = vrot.lane.b32.xlu0 %v2905, 15
        %v3099 = vpop.permute.xlu0 %3098
        %3100 = vrot.lane.b32.xlu0 %v2907, 15
        %v3101 = vpop.permute.xlu0 %3100
        %3102 = vrot.lane.b32.xlu0 %v2909, 15
        %v3103 = vpop.permute.xlu0 %3102
        %3104 = vrot.lane.b32.xlu0 %v2911, 15
        %v3105 = vpop.permute.xlu0 %3104
        %v3106 = vsel %vm478, %v3091, %v3099
        %v3107 = vsel %vm478, %v3093, %v3101
        %v3108 = vsel %vm478, %v3095, %v3103
        %v3109 = vsel %vm478, %v3097, %v3105
        %v3110 = vsel %vm478, %v3099, %v3091
        %v3111 = vsel %vm478, %v3101, %v3093
        %v3112 = vsel %vm478, %v3103, %v3095
        %v3113 = vsel %vm478, %v3105, %v3097
        %v3114 = vsel %vm483, %v3110, 0.0
        %v3115 = vsel %vm484, %v3106, 0.0
        %v3116 = vsel %vm483, %v3111, 0.0
        %v3117 = vsel %vm484, %v3107, 0.0
        %v3118 = vsel %vm483, %v3112, 0.0
        %v3119 = vsel %vm484, %v3108, 0.0
        %v3120 = vsel %vm483, %v3113, 0.0
        %v3121 = vsel %vm484, %v3109, 0.0
        %v3122 = vld [vmem:[%s1430] sm:$0xf]
        %v3123 = vld [vmem:[%s1430 + $0x4] sm:$0xf]
        %v3124 = vpack.c.bf16 %v3116, %v3114
        %v3125 = vpack.c.bf16 %v3117, %v3115
        %v3126 = vpack.c.bf16 %v3120, %v3118
        %v3127 = vpack.c.bf16 %v3121, %v3119
        %v3130 = vunpack.c.l.b16 %v3122
        %v3131 = vunpack.c.l.b16 %v3123
        %v3132 = vpack.c.b16 %v3131, %v3130
        %v3134 = vsel %vm1300, %v3132, 0
        %3136 = vmatprep.subr.bf16.mxu0 %v3125
        %3137 = vmatpush1.bf16.msra.mxu0 %v3124
        %3138 = vmatprep.subr.bf16.mxu0 %v3127
        %3139 = vmatpush1.bf16.msra.mxu0 %v3126
        %3140 = vmatprep.subr.bf16.mxu0 0
        %3141 = vmatpush1.bf16.msra.mxu0 0
        %3142 = vmatprep.subr.bf16.mxu0 0
        %3143 = vmatpush1.bf16.msra.mxu0 0
        %3144 = vmatprep.subr.bf16.mxu0 0
        %3145 = vmatpush1.bf16.msra.mxu0 0
        %3146 = vmatprep.subr.bf16.mxu0 0
        %3147 = vmatpush1.bf16.msra.mxu0 0
        %3148 = vmatprep.subr.bf16.mxu0 0
        %3149 = vmatpush1.bf16.msra.mxu0 0
        %3150 = vmatprep.subr.bf16.mxu0 0
        %3151 = vmatpush1.bf16.msra.mxu0 0
        %3152 = vmatprep.subr.bf16.mxu0 0
        %3153 = vmatpush1.bf16.msra.mxu0 0
        %3154 = vmatprep.subr.bf16.mxu0 0
        %3155 = vmatpush1.bf16.msra.mxu0 0
        %3156 = vmatprep.subr.bf16.mxu0 0
        %3157 = vmatpush1.bf16.msra.mxu0 0
        %3158 = vmatprep.subr.bf16.mxu0 0
        %3159 = vmatpush1.bf16.msra.mxu0 0
        %3160 = vmatprep.subr.bf16.mxu0 0
        %3161 = vmatpush1.bf16.msra.mxu0 0
        %3162 = vmatprep.subr.bf16.mxu0 0
        %3163 = vmatpush1.bf16.msra.mxu0 0
        %3164 = vmatprep.subr.bf16.mxu0 0
        %3165 = vmatpush1.bf16.msra.mxu0 0
        %3166 = vmatprep.subr.bf16.mxu0 0
        %3167 = vmatpush1.bf16.msra.mxu0 0
        %3168 = vmatprep.mubr.bf16.mxu0 0
        %3169 = vmatmul.mubr.bf16.gmra.mrb[0].mxu0 %v3134
        %v3170 = vpop.f32.mrb[0].mxu0
        %v3171 = vadd.f32 0.0, %v3170
        %v3172 = vpop.f32.mrb[0].mxu0
        %v3173 = vadd.f32 0.0, %v3172
        %v3174 = vpop.f32.mrb[0].mxu0
        %v3175 = vadd.f32 0.0, %v3174
        %v3176 = vpop.f32.mrb[0].mxu0
        %v3177 = vadd.f32 0.0, %v3176
        %3178 = vdwg.mxu0
        %v3179 = vadd.f32 %v3082, %v3171
        %v3180 = vadd.f32 %v3084, %v3173
        %v3181 = vadd.f32 %v3086, %v3175
        %v3182 = vadd.f32 %v3088, %v3177
        %3183 = vrot.lane.b32.xlu0 %v2904, 1
        %v3184 = vpop.permute.xlu0 %3183
        %3185 = vrot.lane.b32.xlu0 %v2906, 1
        %v3186 = vpop.permute.xlu0 %3185
        %3187 = vrot.lane.b32.xlu0 %v2908, 1
        %v3188 = vpop.permute.xlu0 %3187
        %3189 = vrot.lane.b32.xlu0 %v2910, 1
        %v3190 = vpop.permute.xlu0 %3189
        %3191 = vrot.lane.b32.xlu0 %v2905, 1
        %v3192 = vpop.permute.xlu0 %3191
        %3193 = vrot.lane.b32.xlu0 %v2907, 1
        %v3194 = vpop.permute.xlu0 %3193
        %3195 = vrot.lane.b32.xlu0 %v2909, 1
        %v3196 = vpop.permute.xlu0 %3195
        %3197 = vrot.lane.b32.xlu0 %v2911, 1
        %v3198 = vpop.permute.xlu0 %3197
        %v3199 = vsel %vm581, %v3184, %v3192
        %v3200 = vsel %vm581, %v3186, %v3194
        %v3201 = vsel %vm581, %v3188, %v3196
        %v3202 = vsel %vm581, %v3190, %v3198
        %v3203 = vsel %vm581, %v3192, %v3184
        %v3204 = vsel %vm581, %v3194, %v3186
        %v3205 = vsel %vm581, %v3196, %v3188
        %v3206 = vsel %vm581, %v3198, %v3190
        %v3207 = vsel %vm586, %v3203, 0.0
        %v3208 = vsel %vm587, %v3199, 0.0
        %v3209 = vsel %vm586, %v3204, 0.0
        %v3210 = vsel %vm587, %v3200, 0.0
        %v3211 = vsel %vm586, %v3205, 0.0
        %v3212 = vsel %vm587, %v3201, 0.0
        %v3213 = vsel %vm586, %v3206, 0.0
        %v3214 = vsel %vm587, %v3202, 0.0
        %v3215 = vld [vmem:[%s1524] sm:$0xf]
        %v3216 = vld [vmem:[%s1524 + $0x4] sm:$0xf]
        %v3217 = vpack.c.bf16 %v3209, %v3207
        %v3218 = vpack.c.bf16 %v3210, %v3208
        %v3219 = vpack.c.bf16 %v3213, %v3211
        %v3220 = vpack.c.bf16 %v3214, %v3212
        %v3223 = vunpack.c.l.b16 %v3215
        %v3224 = vunpack.c.l.b16 %v3216
        %v3225 = vpack.c.b16 %v3224, %v3223
        %v3227 = vsel %vm1300, %v3225, 0
        %3229 = vmatprep.subr.bf16.mxu0 %v3218
        %3230 = vmatpush1.bf16.msra.mxu0 %v3217
        %3231 = vmatprep.subr.bf16.mxu0 %v3220
        %3232 = vmatpush1.bf16.msra.mxu0 %v3219
        %3233 = vmatprep.subr.bf16.mxu0 0
        %3234 = vmatpush1.bf16.msra.mxu0 0
        %3235 = vmatprep.subr.bf16.mxu0 0
        %3236 = vmatpush1.bf16.msra.mxu0 0
        %3237 = vmatprep.subr.bf16.mxu0 0
        %3238 = vmatpush1.bf16.msra.mxu0 0
        %3239 = vmatprep.subr.bf16.mxu0 0
        %3240 = vmatpush1.bf16.msra.mxu0 0
        %3241 = vmatprep.subr.bf16.mxu0 0
        %3242 = vmatpush1.bf16.msra.mxu0 0
        %3243 = vmatprep.subr.bf16.mxu0 0
        %3244 = vmatpush1.bf16.msra.mxu0 0
        %3245 = vmatprep.subr.bf16.mxu0 0
        %3246 = vmatpush1.bf16.msra.mxu0 0
        %3247 = vmatprep.subr.bf16.mxu0 0
        %3248 = vmatpush1.bf16.msra.mxu0 0
        %3249 = vmatprep.subr.bf16.mxu0 0
        %3250 = vmatpush1.bf16.msra.mxu0 0
        %3251 = vmatprep.subr.bf16.mxu0 0
        %3252 = vmatpush1.bf16.msra.mxu0 0
        %3253 = vmatprep.subr.bf16.mxu0 0
        %3254 = vmatpush1.bf16.msra.mxu0 0
        %3255 = vmatprep.subr.bf16.mxu0 0
        %3256 = vmatpush1.bf16.msra.mxu0 0
        %3257 = vmatprep.subr.bf16.mxu0 0
        %3258 = vmatpush1.bf16.msra.mxu0 0
        %3259 = vmatprep.subr.bf16.mxu0 0
        %3260 = vmatpush1.bf16.msra.mxu0 0
        %3261 = vmatprep.mubr.bf16.mxu0 0
        %3262 = vmatmul.mubr.bf16.gmra.mrb[0].mxu0 %v3227
        %v3263 = vpop.f32.mrb[0].mxu0
        %v3264 = vadd.f32 0.0, %v3263
        %v3265 = vpop.f32.mrb[0].mxu0
        %v3266 = vadd.f32 0.0, %v3265
        %v3267 = vpop.f32.mrb[0].mxu0
        %v3268 = vadd.f32 0.0, %v3267
        %v3269 = vpop.f32.mrb[0].mxu0
        %v3270 = vadd.f32 0.0, %v3269
        %3271 = vdwg.mxu0
        %v3272 = vadd.f32 %v3179, %v3264
        %v3273 = vadd.f32 %v3180, %v3266
        %v3274 = vadd.f32 %v3181, %v3268
        %v3275 = vadd.f32 %v3182, %v3270
        %v3276 = vld [vmem:[%s1586] sm:$0xf]
        %v3277 = vld [vmem:[%s1586 + $0x4] sm:$0xf]
        %v3278 = vpack.c.bf16 %v2906, %v2904
        %v3279 = vpack.c.bf16 %v2907, %v2905
        %v3280 = vpack.c.bf16 %v2910, %v2908
        %v3281 = vpack.c.bf16 %v2911, %v2909
        %v3284 = vunpack.c.l.b16 %v3276
        %v3285 = vunpack.c.l.b16 %v3277
        %v3286 = vpack.c.b16 %v3285, %v3284
        %v3288 = vsel %vm1300, %v3286, 0
        %3290 = vmatprep.subr.bf16.mxu0 %v3279
        %3291 = vmatpush1.bf16.msra.mxu0 %v3278
        %3292 = vmatprep.subr.bf16.mxu0 %v3281
        %3293 = vmatpush1.bf16.msra.mxu0 %v3280
        %3294 = vmatprep.subr.bf16.mxu0 0
        %3295 = vmatpush1.bf16.msra.mxu0 0
        %3296 = vmatprep.subr.bf16.mxu0 0
        %3297 = vmatpush1.bf16.msra.mxu0 0
        %3298 = vmatprep.subr.bf16.mxu0 0
        %3299 = vmatpush1.bf16.msra.mxu0 0
        %3300 = vmatprep.subr.bf16.mxu0 0
        %3301 = vmatpush1.bf16.msra.mxu0 0
        %3302 = vmatprep.subr.bf16.mxu0 0
        %3303 = vmatpush1.bf16.msra.mxu0 0
        %3304 = vmatprep.subr.bf16.mxu0 0
        %3305 = vmatpush1.bf16.msra.mxu0 0
        %3306 = vmatprep.subr.bf16.mxu0 0
        %3307 = vmatpush1.bf16.msra.mxu0 0
        %3308 = vmatprep.subr.bf16.mxu0 0
        %3309 = vmatpush1.bf16.msra.mxu0 0
        %3310 = vmatprep.subr.bf16.mxu0 0
        %3311 = vmatpush1.bf16.msra.mxu0 0
        %3312 = vmatprep.subr.bf16.mxu0 0
        %3313 = vmatpush1.bf16.msra.mxu0 0
        %3314 = vmatprep.subr.bf16.mxu0 0
        %3315 = vmatpush1.bf16.msra.mxu0 0
        %3316 = vmatprep.subr.bf16.mxu0 0
        %3317 = vmatpush1.bf16.msra.mxu0 0
        %3318 = vmatprep.subr.bf16.mxu0 0
        %3319 = vmatpush1.bf16.msra.mxu0 0
        %3320 = vmatprep.subr.bf16.mxu0 0
        %3321 = vmatpush1.bf16.msra.mxu0 0
        %3322 = vmatprep.mubr.bf16.mxu0 0
        %3323 = vmatmul.mubr.bf16.gmra.mrb[0].mxu0 %v3288
        %v3324 = vpop.f32.mrb[0].mxu0
        %v3325 = vadd.f32 0.0, %v3324
        %v3326 = vpop.f32.mrb[0].mxu0
        %v3327 = vadd.f32 0.0, %v3326
        %v3328 = vpop.f32.mrb[0].mxu0
        %v3329 = vadd.f32 0.0, %v3328
        %v3330 = vpop.f32.mrb[0].mxu0
        %v3331 = vadd.f32 0.0, %v3330
        %3332 = vdwg.mxu0
        %v3333 = vadd.f32 %v3272, %v3325
        %v3334 = vadd.f32 %v3273, %v3327
        %v3335 = vadd.f32 %v3274, %v3329
        %v3336 = vadd.f32 %v3275, %v3331
        %3337 = vrot.lane.b32.xlu0 %v2904, 127
        %v3338 = vpop.permute.xlu0 %3337
        %3339 = vrot.lane.b32.xlu0 %v2906, 127
        %v3340 = vpop.permute.xlu0 %3339
        %3341 = vrot.lane.b32.xlu0 %v2908, 127
        %v3342 = vpop.permute.xlu0 %3341
        %3343 = vrot.lane.b32.xlu0 %v2910, 127
        %v3344 = vpop.permute.xlu0 %3343
        %3345 = vrot.lane.b32.xlu0 %v2905, 127
        %v3346 = vpop.permute.xlu0 %3345
        %3347 = vrot.lane.b32.xlu0 %v2907, 127
        %v3348 = vpop.permute.xlu0 %3347
        %3349 = vrot.lane.b32.xlu0 %v2909, 127
        %v3350 = vpop.permute.xlu0 %3349
        %3351 = vrot.lane.b32.xlu0 %v2911, 127
        %v3352 = vpop.permute.xlu0 %3351
        %v3353 = vsel %vm774, %v3338, %v3346
        %v3354 = vsel %vm774, %v3340, %v3348
        %v3355 = vsel %vm774, %v3342, %v3350
        %v3356 = vsel %vm774, %v3344, %v3352
        %v3357 = vsel %vm774, %v3346, %v3338
        %v3358 = vsel %vm774, %v3348, %v3340
        %v3359 = vsel %vm774, %v3350, %v3342
        %v3360 = vsel %vm774, %v3352, %v3344
        %v3361 = vsel %vm779, %v3353, 0.0
        %v3362 = vsel %vm780, %v3357, 0.0
        %v3363 = vsel %vm779, %v3354, 0.0
        %v3364 = vsel %vm780, %v3358, 0.0
        %v3365 = vsel %vm779, %v3355, 0.0
        %v3366 = vsel %vm780, %v3359, 0.0
        %v3367 = vsel %vm779, %v3356, 0.0
        %v3368 = vsel %vm780, %v3360, 0.0
        %v3369 = vld [vmem:[%s1680] sm:$0xf]
        %v3370 = vld [vmem:[%s1680 + $0x4] sm:$0xf]
        %v3371 = vpack.c.bf16 %v3363, %v3361
        %v3372 = vpack.c.bf16 %v3364, %v3362
        %v3373 = vpack.c.bf16 %v3367, %v3365
        %v3374 = vpack.c.bf16 %v3368, %v3366
        %v3377 = vunpack.c.l.b16 %v3369
        %v3378 = vunpack.c.l.b16 %v3370
        %v3379 = vpack.c.b16 %v3378, %v3377
        %v3381 = vsel %vm1300, %v3379, 0
        %3383 = vmatprep.subr.bf16.mxu0 %v3372
        %3384 = vmatpush1.bf16.msra.mxu0 %v3371
        %3385 = vmatprep.subr.bf16.mxu0 %v3374
        %3386 = vmatpush1.bf16.msra.mxu0 %v3373
        %3387 = vmatprep.subr.bf16.mxu0 0
        %3388 = vmatpush1.bf16.msra.mxu0 0
        %3389 = vmatprep.subr.bf16.mxu0 0
        %3390 = vmatpush1.bf16.msra.mxu0 0
        %3391 = vmatprep.subr.bf16.mxu0 0
        %3392 = vmatpush1.bf16.msra.mxu0 0
        %3393 = vmatprep.subr.bf16.mxu0 0
        %3394 = vmatpush1.bf16.msra.mxu0 0
        %3395 = vmatprep.subr.bf16.mxu0 0
        %3396 = vmatpush1.bf16.msra.mxu0 0
        %3397 = vmatprep.subr.bf16.mxu0 0
        %3398 = vmatpush1.bf16.msra.mxu0 0
        %3399 = vmatprep.subr.bf16.mxu0 0
        %3400 = vmatpush1.bf16.msra.mxu0 0
        %3401 = vmatprep.subr.bf16.mxu0 0
        %3402 = vmatpush1.bf16.msra.mxu0 0
        %3403 = vmatprep.subr.bf16.mxu0 0
        %3404 = vmatpush1.bf16.msra.mxu0 0
        %3405 = vmatprep.subr.bf16.mxu0 0
        %3406 = vmatpush1.bf16.msra.mxu0 0
        %3407 = vmatprep.subr.bf16.mxu0 0
        %3408 = vmatpush1.bf16.msra.mxu0 0
        %3409 = vmatprep.subr.bf16.mxu0 0
        %3410 = vmatpush1.bf16.msra.mxu0 0
        %3411 = vmatprep.subr.bf16.mxu0 0
        %3412 = vmatpush1.bf16.msra.mxu0 0
        %3413 = vmatprep.subr.bf16.mxu0 0
        %3414 = vmatpush1.bf16.msra.mxu0 0
        %3415 = vmatprep.mubr.bf16.mxu0 0
        %3416 = vmatmul.mubr.bf16.gmra.mrb[0].mxu0 %v3381
        %v3417 = vpop.f32.mrb[0].mxu0
        %v3418 = vadd.f32 0.0, %v3417
        %v3419 = vpop.f32.mrb[0].mxu0
        %v3420 = vadd.f32 0.0, %v3419
        %v3421 = vpop.f32.mrb[0].mxu0
        %v3422 = vadd.f32 0.0, %v3421
        %v3423 = vpop.f32.mrb[0].mxu0
        %v3424 = vadd.f32 0.0, %v3423
        %3425 = vdwg.mxu0
        %v3426 = vadd.f32 %v3333, %v3418
        %v3427 = vadd.f32 %v3334, %v3420
        %v3428 = vadd.f32 %v3335, %v3422
        %v3429 = vadd.f32 %v3336, %v3424
        %3430 = vrot.lane.b32.xlu0 %v2904, 113
        %v3431 = vpop.permute.xlu0 %3430
        %3432 = vrot.lane.b32.xlu0 %v2906, 113
        %v3433 = vpop.permute.xlu0 %3432
        %3434 = vrot.lane.b32.xlu0 %v2908, 113
        %v3435 = vpop.permute.xlu0 %3434
        %3436 = vrot.lane.b32.xlu0 %v2910, 113
        %v3437 = vpop.permute.xlu0 %3436
        %3438 = vrot.lane.b32.xlu0 %v2905, 113
        %v3439 = vpop.permute.xlu0 %3438
        %3440 = vrot.lane.b32.xlu0 %v2907, 113
        %v3441 = vpop.permute.xlu0 %3440
        %3442 = vrot.lane.b32.xlu0 %v2909, 113
        %v3443 = vpop.permute.xlu0 %3442
        %3444 = vrot.lane.b32.xlu0 %v2911, 113
        %v3445 = vpop.permute.xlu0 %3444
        %v3446 = vsel %vm877, %v3431, %v3439
        %v3447 = vsel %vm877, %v3433, %v3441
        %v3448 = vsel %vm877, %v3435, %v3443
        %v3449 = vsel %vm877, %v3437, %v3445
        %v3450 = vsel %vm877, %v3439, %v3431
        %v3451 = vsel %vm877, %v3441, %v3433
        %v3452 = vsel %vm877, %v3443, %v3435
        %v3453 = vsel %vm877, %v3445, %v3437
        %v3454 = vsel %vm882, %v3446, 0.0
        %v3455 = vsel %vm883, %v3450, 0.0
        %v3456 = vsel %vm882, %v3447, 0.0
        %v3457 = vsel %vm883, %v3451, 0.0
        %v3458 = vsel %vm882, %v3448, 0.0
        %v3459 = vsel %vm883, %v3452, 0.0
        %v3460 = vsel %vm882, %v3449, 0.0
        %v3461 = vsel %vm883, %v3453, 0.0
        %v3462 = vld [vmem:[%s1774] sm:$0xf]
        %v3463 = vld [vmem:[%s1774 + $0x4] sm:$0xf]
        %v3464 = vpack.c.bf16 %v3456, %v3454
        %v3465 = vpack.c.bf16 %v3457, %v3455
        %v3466 = vpack.c.bf16 %v3460, %v3458
        %v3467 = vpack.c.bf16 %v3461, %v3459
        %v3470 = vunpack.c.l.b16 %v3462
        %v3471 = vunpack.c.l.b16 %v3463
        %v3472 = vpack.c.b16 %v3471, %v3470
        %v3474 = vsel %vm1300, %v3472, 0
        %3476 = vmatprep.subr.bf16.mxu0 %v3465
        %3477 = vmatpush1.bf16.msra.mxu0 %v3464
        %3478 = vmatprep.subr.bf16.mxu0 %v3467
        %3479 = vmatpush1.bf16.msra.mxu0 %v3466
        %3480 = vmatprep.subr.bf16.mxu0 0
        %3481 = vmatpush1.bf16.msra.mxu0 0
        %3482 = vmatprep.subr.bf16.mxu0 0
        %3483 = vmatpush1.bf16.msra.mxu0 0
        %3484 = vmatprep.subr.bf16.mxu0 0
        %3485 = vmatpush1.bf16.msra.mxu0 0
        %3486 = vmatprep.subr.bf16.mxu0 0
        %3487 = vmatpush1.bf16.msra.mxu0 0
        %3488 = vmatprep.subr.bf16.mxu0 0
        %3489 = vmatpush1.bf16.msra.mxu0 0
        %3490 = vmatprep.subr.bf16.mxu0 0
        %3491 = vmatpush1.bf16.msra.mxu0 0
        %3492 = vmatprep.subr.bf16.mxu0 0
        %3493 = vmatpush1.bf16.msra.mxu0 0
        %3494 = vmatprep.subr.bf16.mxu0 0
        %3495 = vmatpush1.bf16.msra.mxu0 0
        %3496 = vmatprep.subr.bf16.mxu0 0
        %3497 = vmatpush1.bf16.msra.mxu0 0
        %3498 = vmatprep.subr.bf16.mxu0 0
        %3499 = vmatpush1.bf16.msra.mxu0 0
        %3500 = vmatprep.subr.bf16.mxu0 0
        %3501 = vmatpush1.bf16.msra.mxu0 0
        %3502 = vmatprep.subr.bf16.mxu0 0
        %3503 = vmatpush1.bf16.msra.mxu0 0
        %3504 = vmatprep.subr.bf16.mxu0 0
        %3505 = vmatpush1.bf16.msra.mxu0 0
        %3506 = vmatprep.subr.bf16.mxu0 0
        %3507 = vmatpush1.bf16.msra.mxu0 0
        %3508 = vmatprep.mubr.bf16.mxu0 0
        %3509 = vmatmul.mubr.bf16.gmra.mrb[0].mxu0 %v3474
        %v3510 = vpop.f32.mrb[0].mxu0
        %v3511 = vadd.f32 0.0, %v3510
        %v3512 = vpop.f32.mrb[0].mxu0
        %v3513 = vadd.f32 0.0, %v3512
        %v3514 = vpop.f32.mrb[0].mxu0
        %v3515 = vadd.f32 0.0, %v3514
        %v3516 = vpop.f32.mrb[0].mxu0
        %v3517 = vadd.f32 0.0, %v3516
        %3518 = vdwg.mxu0
        %v3519 = vadd.f32 %v3426, %v3511
        %v3520 = vadd.f32 %v3427, %v3513
        %v3521 = vadd.f32 %v3428, %v3515
        %v3522 = vadd.f32 %v3429, %v3517
        %3523 = vrot.lane.b32.xlu0 %v2904, 112
        %v3524 = vpop.permute.xlu0 %3523
        %3525 = vrot.lane.b32.xlu0 %v2906, 112
        %v3526 = vpop.permute.xlu0 %3525
        %3527 = vrot.lane.b32.xlu0 %v2908, 112
        %v3528 = vpop.permute.xlu0 %3527
        %3529 = vrot.lane.b32.xlu0 %v2910, 112
        %v3530 = vpop.permute.xlu0 %3529
        %3531 = vrot.lane.b32.xlu0 %v2905, 112
        %v3532 = vpop.permute.xlu0 %3531
        %3533 = vrot.lane.b32.xlu0 %v2907, 112
        %v3534 = vpop.permute.xlu0 %3533
        %3535 = vrot.lane.b32.xlu0 %v2909, 112
        %v3536 = vpop.permute.xlu0 %3535
        %3537 = vrot.lane.b32.xlu0 %v2911, 112
        %v3538 = vpop.permute.xlu0 %3537
        %v3539 = vsel %vm980, %v3524, %v3532
        %v3540 = vsel %vm980, %v3526, %v3534
        %v3541 = vsel %vm980, %v3528, %v3536
        %v3542 = vsel %vm980, %v3530, %v3538
        %v3543 = vsel %vm980, %v3532, %v3524
        %v3544 = vsel %vm980, %v3534, %v3526
        %v3545 = vsel %vm980, %v3536, %v3528
        %v3546 = vsel %vm980, %v3538, %v3530
        %v3547 = vsel %vm985, %v3539, 0.0
        %v3548 = vsel %vm986, %v3543, 0.0
        %v3549 = vsel %vm985, %v3540, 0.0
        %v3550 = vsel %vm986, %v3544, 0.0
        %v3551 = vsel %vm985, %v3541, 0.0
        %v3552 = vsel %vm986, %v3545, 0.0
        %v3553 = vsel %vm985, %v3542, 0.0
        %v3554 = vsel %vm986, %v3546, 0.0
        %v3555 = vld [vmem:[%s1868] sm:$0xf]
        %v3556 = vld [vmem:[%s1868 + $0x4] sm:$0xf]
        %v3557 = vpack.c.bf16 %v3549, %v3547
        %v3558 = vpack.c.bf16 %v3550, %v3548
        %v3559 = vpack.c.bf16 %v3553, %v3551
        %v3560 = vpack.c.bf16 %v3554, %v3552
        %v3563 = vunpack.c.l.b16 %v3555
        %v3564 = vunpack.c.l.b16 %v3556
        %v3565 = vpack.c.b16 %v3564, %v3563
        %v3567 = vsel %vm1300, %v3565, 0
        %3569 = vmatprep.subr.bf16.mxu0 %v3558
        %3570 = vmatpush1.bf16.msra.mxu0 %v3557
        %3571 = vmatprep.subr.bf16.mxu0 %v3560
        %3572 = vmatpush1.bf16.msra.mxu0 %v3559
        %3573 = vmatprep.subr.bf16.mxu0 0
        %3574 = vmatpush1.bf16.msra.mxu0 0
        %3575 = vmatprep.subr.bf16.mxu0 0
        %3576 = vmatpush1.bf16.msra.mxu0 0
        %3577 = vmatprep.subr.bf16.mxu0 0
        %3578 = vmatpush1.bf16.msra.mxu0 0
        %3579 = vmatprep.subr.bf16.mxu0 0
        %3580 = vmatpush1.bf16.msra.mxu0 0
        %3581 = vmatprep.subr.bf16.mxu0 0
        %3582 = vmatpush1.bf16.msra.mxu0 0
        %3583 = vmatprep.subr.bf16.mxu0 0
        %3584 = vmatpush1.bf16.msra.mxu0 0
        %3585 = vmatprep.subr.bf16.mxu0 0
        %3586 = vmatpush1.bf16.msra.mxu0 0
        %3587 = vmatprep.subr.bf16.mxu0 0
        %3588 = vmatpush1.bf16.msra.mxu0 0
        %3589 = vmatprep.subr.bf16.mxu0 0
        %3590 = vmatpush1.bf16.msra.mxu0 0
        %3591 = vmatprep.subr.bf16.mxu0 0
        %3592 = vmatpush1.bf16.msra.mxu0 0
        %3593 = vmatprep.subr.bf16.mxu0 0
        %3594 = vmatpush1.bf16.msra.mxu0 0
        %3595 = vmatprep.subr.bf16.mxu0 0
        %3596 = vmatpush1.bf16.msra.mxu0 0
        %3597 = vmatprep.subr.bf16.mxu0 0
        %3598 = vmatpush1.bf16.msra.mxu0 0
        %3599 = vmatprep.subr.bf16.mxu0 0
        %3600 = vmatpush1.bf16.msra.mxu0 0
        %3601 = vmatprep.mubr.bf16.mxu0 0
        %3602 = vmatmul.mubr.bf16.gmra.mrb[0].mxu0 %v3567
        %v3603 = vpop.f32.mrb[0].mxu0
        %v3604 = vadd.f32 0.0, %v3603
        %v3605 = vpop.f32.mrb[0].mxu0
        %v3606 = vadd.f32 0.0, %v3605
        %v3607 = vpop.f32.mrb[0].mxu0
        %v3608 = vadd.f32 0.0, %v3607
        %v3609 = vpop.f32.mrb[0].mxu0
        %v3610 = vadd.f32 0.0, %v3609
        %3611 = vdwg.mxu0
        %v3612 = vadd.f32 %v3519, %v3604
        %v3613 = vadd.f32 %v3520, %v3606
        %v3614 = vadd.f32 %v3521, %v3608
        %v3615 = vadd.f32 %v3522, %v3610
        %3616 = vrot.lane.b32.xlu0 %v2904, 111
        %v3617 = vpop.permute.xlu0 %3616
        %3618 = vrot.lane.b32.xlu0 %v2906, 111
        %v3619 = vpop.permute.xlu0 %3618
        %3620 = vrot.lane.b32.xlu0 %v2908, 111
        %v3621 = vpop.permute.xlu0 %3620
        %3622 = vrot.lane.b32.xlu0 %v2910, 111
        %v3623 = vpop.permute.xlu0 %3622
        %3624 = vrot.lane.b32.xlu0 %v2905, 111
        %v3625 = vpop.permute.xlu0 %3624
        %3626 = vrot.lane.b32.xlu0 %v2907, 111
        %v3627 = vpop.permute.xlu0 %3626
        %3628 = vrot.lane.b32.xlu0 %v2909, 111
        %v3629 = vpop.permute.xlu0 %3628
        %3630 = vrot.lane.b32.xlu0 %v2911, 111
        %v3631 = vpop.permute.xlu0 %3630
        %v3632 = vsel %vm1083, %v3617, %v3625
        %v3633 = vsel %vm1083, %v3619, %v3627
        %v3634 = vsel %vm1083, %v3621, %v3629
        %v3635 = vsel %vm1083, %v3623, %v3631
        %v3636 = vsel %vm1083, %v3625, %v3617
        %v3637 = vsel %vm1083, %v3627, %v3619
        %v3638 = vsel %vm1083, %v3629, %v3621
        %v3639 = vsel %vm1083, %v3631, %v3623
        %v3640 = vsel %vm1088, %v3632, 0.0
        %v3641 = vsel %vm1089, %v3636, 0.0
        %v3642 = vsel %vm1088, %v3633, 0.0
        %v3643 = vsel %vm1089, %v3637, 0.0
        %v3644 = vsel %vm1088, %v3634, 0.0
        %v3645 = vsel %vm1089, %v3638, 0.0
        %v3646 = vsel %vm1088, %v3635, 0.0
        %v3647 = vsel %vm1089, %v3639, 0.0
        %v3648 = vld [vmem:[%s1962] sm:$0xf]
        %v3649 = vld [vmem:[%s1962 + $0x4] sm:$0xf]
        %v3650 = vpack.c.bf16 %v3642, %v3640
        %v3651 = vpack.c.bf16 %v3643, %v3641
        %v3652 = vpack.c.bf16 %v3646, %v3644
        %v3653 = vpack.c.bf16 %v3647, %v3645
        %v3656 = vunpack.c.l.b16 %v3648
        %v3657 = vunpack.c.l.b16 %v3649
        %v3658 = vpack.c.b16 %v3657, %v3656
        %v3660 = vsel %vm1300, %v3658, 0
        %3662 = vmatprep.subr.bf16.mxu0 %v3651
        %3663 = vmatpush1.bf16.msra.mxu0 %v3650
        %3664 = vmatprep.subr.bf16.mxu0 %v3653
        %3665 = vmatpush1.bf16.msra.mxu0 %v3652
        %3666 = vmatprep.subr.bf16.mxu0 0
        %3667 = vmatpush1.bf16.msra.mxu0 0
        %3668 = vmatprep.subr.bf16.mxu0 0
        %3669 = vmatpush1.bf16.msra.mxu0 0
        %3670 = vmatprep.subr.bf16.mxu0 0
        %3671 = vmatpush1.bf16.msra.mxu0 0
        %3672 = vmatprep.subr.bf16.mxu0 0
        %3673 = vmatpush1.bf16.msra.mxu0 0
        %3674 = vmatprep.subr.bf16.mxu0 0
        %3675 = vmatpush1.bf16.msra.mxu0 0
        %3676 = vmatprep.subr.bf16.mxu0 0
        %3677 = vmatpush1.bf16.msra.mxu0 0
        %3678 = vmatprep.subr.bf16.mxu0 0
        %3679 = vmatpush1.bf16.msra.mxu0 0
        %3680 = vmatprep.subr.bf16.mxu0 0
        %3681 = vmatpush1.bf16.msra.mxu0 0
        %3682 = vmatprep.subr.bf16.mxu0 0
        %3683 = vmatpush1.bf16.msra.mxu0 0
        %3684 = vmatprep.subr.bf16.mxu0 0
        %3685 = vmatpush1.bf16.msra.mxu0 0
        %3686 = vmatprep.subr.bf16.mxu0 0
        %3687 = vmatpush1.bf16.msra.mxu0 0
        %3688 = vmatprep.subr.bf16.mxu0 0
        %3689 = vmatpush1.bf16.msra.mxu0 0
        %3690 = vmatprep.subr.bf16.mxu0 0
        %3691 = vmatpush1.bf16.msra.mxu0 0
        %3692 = vmatprep.subr.bf16.mxu0 0
        %3693 = vmatpush1.bf16.msra.mxu0 0
        %3694 = vmatprep.mubr.bf16.mxu0 0
        %3695 = vmatmul.mubr.bf16.gmra.mrb[0].mxu0 %v3660
        %v3696 = vpop.f32.mrb[0].mxu0
        %v3697 = vadd.f32 0.0, %v3696
        %v3698 = vpop.f32.mrb[0].mxu0
        %v3699 = vadd.f32 0.0, %v3698
        %v3700 = vpop.f32.mrb[0].mxu0
        %v3701 = vadd.f32 0.0, %v3700
        %v3702 = vpop.f32.mrb[0].mxu0
        %v3703 = vadd.f32 0.0, %v3702
        %3704 = vdwg.mxu0
        %v3705 = vadd.f32 %v3612, %v3697
        %v3706 = vadd.f32 %v3613, %v3699
        %v3707 = vadd.f32 %v3614, %v3701
        %v3708 = vadd.f32 %v3615, %v3703
        %v3709 = vadd.f32 %v3705, %v2027
        %v3710 = vadd.f32 %v3706, %v2027
        %v3711 = vadd.f32 %v3707, %v2032
        %v3712 = vadd.f32 %v3708, %v2032
        %s3713 = scalar_lea.vmem %s220, 32 [#allocation2]
        %3714 = vst [vmem:[%s3713] sm:$0xff] %v3709
        %3715 = vst [vmem:[%s3713 + $0x8] sm:$0xff] %v3710
        %3716 = vst [vmem:[%s3713 + $0x10] sm:$0xff] %v3711
        %3717 = vst [vmem:[%s3713 + $0x18] sm:$0xff] %v3712
        %s3718 = scalar_lea.vmem %s226, 16
        %v3719 = vld [vmem:[%s3718] sm:$0xff]
        %v3721 = vcombine.high %v3719, %v3719
        %3723 = vrot.lane.b32.xlu0 %v3719, 17
        %v3724 = vpop.permute.xlu0 %3723
        %3725 = vrot.lane.b32.xlu0 %v3721, 17
        %v3726 = vpop.permute.xlu0 %3725
        %v3727 = vsel %vm287, %v3724, %v3726
        %v3728 = vsel %vm287, %v3726, %v3724
        %v3729 = vsel %vm292, %v3728, 0.0
        %v3730 = vsel %vm293, %v3727, 0.0
        %v3731 = vld [vmem:[%s1] sm:$0xf]
        %v3732 = vld [vmem:[%s1 + $0x4] sm:$0xf]
        %v3733 = vld [vmem:[%s1 + $0x8] sm:$0xf]
        %v3734 = vld [vmem:[%s1 + $0xc] sm:$0xf]
        %v3735 = vpack.c.bf16 %v3729, %v3729
        %v3736 = vpack.c.bf16 %v3730, %v3730
        %3737 = vrot.lane.b32.xlu0 %v3719, 16
        %v3738 = vpop.permute.xlu0 %3737
        %3739 = vrot.lane.b32.xlu0 %v3721, 16
        %v3740 = vpop.permute.xlu0 %3739
        %v3741 = vsel %vm306, %v3738, %v3740
        %v3742 = vsel %vm306, %v3740, %v3738
        %v3743 = vsel %vm311, %v3742, 0.0
        %v3744 = vsel %vm312, %v3741, 0.0
        %v3745 = vld [vmem:[%s315] sm:$0xf]
        %v3746 = vld [vmem:[%s315 + $0x4] sm:$0xf]
        %v3747 = vld [vmem:[%s315 + $0x8] sm:$0xf]
        %v3748 = vld [vmem:[%s315 + $0xc] sm:$0xf]
        %v3749 = vpack.c.bf16 %v3743, %v3743
        %v3750 = vpack.c.bf16 %v3744, %v3744
        %v3755 = vunpack.c.l.b16 %v3745
        %v3756 = vunpack.c.l.b16 %v3746
        %v3757 = vunpack.c.l.b16 %v3747
        %v3758 = vunpack.c.l.b16 %v3748
        %v3759 = vpack.c.b16 %v3756, %v3755
        %v3760 = vpack.c.b16 %v3758, %v3757
        %v3762 = vsel %vm332, %v3759, 0
        %v3765 = vsel %vm332, %v3760, 0
        %v3768 = vsel %vm339, %v3749, 0
        %v3771 = vsel %vm339, %v3750, 0
        %3773 = vmatprep.subr.bf16.mxu0 %v3771
        %3774 = vmatpush1.bf16.msra.mxu0 %v3768
        %3775 = vmatprep.subr.bf16.mxu0 0
        %3776 = vmatpush1.bf16.msra.mxu0 0
        %3777 = vmatprep.subr.bf16.mxu0 0
        %3778 = vmatpush1.bf16.msra.mxu0 0
        %3779 = vmatprep.subr.bf16.mxu0 0
        %3780 = vmatpush1.bf16.msra.mxu0 0
        %3781 = vmatprep.subr.bf16.mxu0 0
        %3782 = vmatpush1.bf16.msra.mxu0 0
        %3783 = vmatprep.subr.bf16.mxu0 0
        %3784 = vmatpush1.bf16.msra.mxu0 0
        %3785 = vmatprep.subr.bf16.mxu0 0
        %3786 = vmatpush1.bf16.msra.mxu0 0
        %3787 = vmatprep.subr.bf16.mxu0 0
        %3788 = vmatpush1.bf16.msra.mxu0 0
        %3789 = vmatprep.subr.bf16.mxu0 0
        %3790 = vmatpush1.bf16.msra.mxu0 0
        %3791 = vmatprep.subr.bf16.mxu0 0
        %3792 = vmatpush1.bf16.msra.mxu0 0
        %3793 = vmatprep.subr.bf16.mxu0 0
        %3794 = vmatpush1.bf16.msra.mxu0 0
        %3795 = vmatprep.subr.bf16.mxu0 0
        %3796 = vmatpush1.bf16.msra.mxu0 0
        %3797 = vmatprep.subr.bf16.mxu0 0
        %3798 = vmatpush1.bf16.msra.mxu0 0
        %3799 = vmatprep.subr.bf16.mxu0 0
        %3800 = vmatpush1.bf16.msra.mxu0 0
        %3801 = vmatprep.subr.bf16.mxu0 0
        %3802 = vmatpush1.bf16.msra.mxu0 0
        %3803 = vmatprep.subr.bf16.mxu0 0
        %3804 = vmatpush1.bf16.msra.mxu0 0
        %3805 = vmatprep.mubr.bf16.mxu0 0
        %3806 = vmatmul.mubr.bf16.gmra.mrb[0].mxu0 %v3762
        %v3807 = vpop.f32.mrb[0].mxu0
        %v3808 = vadd.f32 0.0, %v3807
        %v3809 = vpop.f32.mrb[0].mxu0
        %v3810 = vadd.f32 0.0, %v3809
        %v3811 = vpop.f32.mrb[0].mxu0
        %v3812 = vadd.f32 0.0, %v3811
        %v3813 = vpop.f32.mrb[0].mxu0
        %v3814 = vadd.f32 0.0, %v3813
        %3815 = vmatprep.mubr.bf16.mxu0 0
        %3816 = vmatmul.mubr.bf16.gmra.mrb[0].mxu0 %v3765
        %v3817 = vpop.f32.mrb[0].mxu0
        %v3818 = vadd.f32 0.0, %v3817
        %v3819 = vpop.f32.mrb[0].mxu0
        %v3820 = vadd.f32 0.0, %v3819
        %v3821 = vpop.f32.mrb[0].mxu0
        %v3822 = vadd.f32 0.0, %v3821
        %v3823 = vpop.f32.mrb[0].mxu0
        %v3824 = vadd.f32 0.0, %v3823
        %3825 = vdwg.mxu0
        %v3830 = vunpack.c.l.b16 %v3731
        %v3831 = vunpack.c.l.b16 %v3732
        %v3832 = vunpack.c.l.b16 %v3733
        %v3833 = vunpack.c.l.b16 %v3734
        %v3834 = vpack.c.b16 %v3831, %v3830
        %v3835 = vpack.c.b16 %v3833, %v3832
        %v3837 = vsel %vm332, %v3834, 0
        %v3840 = vsel %vm332, %v3835, 0
        %v3843 = vsel %vm339, %v3735, 0
        %v3846 = vsel %vm339, %v3736, 0
        %3848 = vmatprep.subr.bf16.mxu0 %v3846
        %3849 = vmatpush1.bf16.msra.mxu0 %v3843
        %3850 = vmatprep.subr.bf16.mxu0 0
        %3851 = vmatpush1.bf16.msra.mxu0 0
        %3852 = vmatprep.subr.bf16.mxu0 0
        %3853 = vmatpush1.bf16.msra.mxu0 0
        %3854 = vmatprep.subr.bf16.mxu0 0
        %3855 = vmatpush1.bf16.msra.mxu0 0
        %3856 = vmatprep.subr.bf16.mxu0 0
        %3857 = vmatpush1.bf16.msra.mxu0 0
        %3858 = vmatprep.subr.bf16.mxu0 0
        %3859 = vmatpush1.bf16.msra.mxu0 0
        %3860 = vmatprep.subr.bf16.mxu0 0
        %3861 = vmatpush1.bf16.msra.mxu0 0
        %3862 = vmatprep.subr.bf16.mxu0 0
        %3863 = vmatpush1.bf16.msra.mxu0 0
        %3864 = vmatprep.subr.bf16.mxu0 0
        %3865 = vmatpush1.bf16.msra.mxu0 0
        %3866 = vmatprep.subr.bf16.mxu0 0
        %3867 = vmatpush1.bf16.msra.mxu0 0
        %3868 = vmatprep.subr.bf16.mxu0 0
        %3869 = vmatpush1.bf16.msra.mxu0 0
        %3870 = vmatprep.subr.bf16.mxu0 0
        %3871 = vmatpush1.bf16.msra.mxu0 0
        %3872 = vmatprep.subr.bf16.mxu0 0
        %3873 = vmatpush1.bf16.msra.mxu0 0
        %3874 = vmatprep.subr.bf16.mxu0 0
        %3875 = vmatpush1.bf16.msra.mxu0 0
        %3876 = vmatprep.subr.bf16.mxu0 0
        %3877 = vmatpush1.bf16.msra.mxu0 0
        %3878 = vmatprep.subr.bf16.mxu0 0
        %3879 = vmatpush1.bf16.msra.mxu0 0
        %3880 = vmatprep.mubr.bf16.mxu0 0
        %3881 = vmatmul.mubr.bf16.gmra.mrb[0].mxu0 %v3837
        %v3882 = vpop.f32.mrb[0].mxu0
        %v3883 = vadd.f32 %v3808, %v3882
        %v3884 = vpop.f32.mrb[0].mxu0
        %v3885 = vadd.f32 %v3810, %v3884
        %v3886 = vpop.f32.mrb[0].mxu0
        %v3887 = vadd.f32 %v3812, %v3886
        %v3888 = vpop.f32.mrb[0].mxu0
        %v3889 = vadd.f32 %v3814, %v3888
        %3890 = vmatprep.mubr.bf16.mxu0 0
        %3891 = vmatmul.mubr.bf16.gmra.mrb[0].mxu0 %v3840
        %v3892 = vpop.f32.mrb[0].mxu0
        %v3893 = vadd.f32 %v3818, %v3892
        %v3894 = vpop.f32.mrb[0].mxu0
        %v3895 = vadd.f32 %v3820, %v3894
        %v3896 = vpop.f32.mrb[0].mxu0
        %v3897 = vadd.f32 %v3822, %v3896
        %v3898 = vpop.f32.mrb[0].mxu0
        %v3899 = vadd.f32 %v3824, %v3898
        %3900 = vdwg.mxu0
        %3901 = vrot.lane.b32.xlu0 %v3719, 15
        %v3902 = vpop.permute.xlu0 %3901
        %3903 = vrot.lane.b32.xlu0 %v3721, 15
        %v3904 = vpop.permute.xlu0 %3903
        %v3905 = vsel %vm478, %v3902, %v3904
        %v3906 = vsel %vm478, %v3904, %v3902
        %v3907 = vsel %vm483, %v3906, 0.0
        %v3908 = vsel %vm484, %v3905, 0.0
        %v3909 = vld [vmem:[%s487] sm:$0xf]
        %v3910 = vld [vmem:[%s487 + $0x4] sm:$0xf]
        %v3911 = vld [vmem:[%s487 + $0x8] sm:$0xf]
        %v3912 = vld [vmem:[%s487 + $0xc] sm:$0xf]
        %v3913 = vpack.c.bf16 %v3907, %v3907
        %v3914 = vpack.c.bf16 %v3908, %v3908
        %v3919 = vunpack.c.l.b16 %v3909
        %v3920 = vunpack.c.l.b16 %v3910
        %v3921 = vunpack.c.l.b16 %v3911
        %v3922 = vunpack.c.l.b16 %v3912
        %v3923 = vpack.c.b16 %v3920, %v3919
        %v3924 = vpack.c.b16 %v3922, %v3921
        %v3926 = vsel %vm332, %v3923, 0
        %v3929 = vsel %vm332, %v3924, 0
        %v3932 = vsel %vm339, %v3913, 0
        %v3935 = vsel %vm339, %v3914, 0
        %3937 = vmatprep.subr.bf16.mxu0 %v3935
        %3938 = vmatpush1.bf16.msra.mxu0 %v3932
        %3939 = vmatprep.subr.bf16.mxu0 0
        %3940 = vmatpush1.bf16.msra.mxu0 0
        %3941 = vmatprep.subr.bf16.mxu0 0
        %3942 = vmatpush1.bf16.msra.mxu0 0
        %3943 = vmatprep.subr.bf16.mxu0 0
        %3944 = vmatpush1.bf16.msra.mxu0 0
        %3945 = vmatprep.subr.bf16.mxu0 0
        %3946 = vmatpush1.bf16.msra.mxu0 0
        %3947 = vmatprep.subr.bf16.mxu0 0
        %3948 = vmatpush1.bf16.msra.mxu0 0
        %3949 = vmatprep.subr.bf16.mxu0 0
        %3950 = vmatpush1.bf16.msra.mxu0 0
        %3951 = vmatprep.subr.bf16.mxu0 0
        %3952 = vmatpush1.bf16.msra.mxu0 0
        %3953 = vmatprep.subr.bf16.mxu0 0
        %3954 = vmatpush1.bf16.msra.mxu0 0
        %3955 = vmatprep.subr.bf16.mxu0 0
        %3956 = vmatpush1.bf16.msra.mxu0 0
        %3957 = vmatprep.subr.bf16.mxu0 0
        %3958 = vmatpush1.bf16.msra.mxu0 0
        %3959 = vmatprep.subr.bf16.mxu0 0
        %3960 = vmatpush1.bf16.msra.mxu0 0
        %3961 = vmatprep.subr.bf16.mxu0 0
        %3962 = vmatpush1.bf16.msra.mxu0 0
        %3963 = vmatprep.subr.bf16.mxu0 0
        %3964 = vmatpush1.bf16.msra.mxu0 0
        %3965 = vmatprep.subr.bf16.mxu0 0
        %3966 = vmatpush1.bf16.msra.mxu0 0
        %3967 = vmatprep.subr.bf16.mxu0 0
        %3968 = vmatpush1.bf16.msra.mxu0 0
        %3969 = vmatprep.mubr.bf16.mxu0 0
        %3970 = vmatmul.mubr.bf16.gmra.mrb[0].mxu0 %v3926
        %v3971 = vpop.f32.mrb[0].mxu0
        %v3972 = vadd.f32 0.0, %v3971
        %v3973 = vpop.f32.mrb[0].mxu0
        %v3974 = vadd.f32 0.0, %v3973
        %v3975 = vpop.f32.mrb[0].mxu0
        %v3976 = vadd.f32 0.0, %v3975
        %v3977 = vpop.f32.mrb[0].mxu0
        %v3978 = vadd.f32 0.0, %v3977
        %3979 = vmatprep.mubr.bf16.mxu0 0
        %3980 = vmatmul.mubr.bf16.gmra.mrb[0].mxu0 %v3929
        %v3981 = vpop.f32.mrb[0].mxu0
        %v3982 = vadd.f32 0.0, %v3981
        %v3983 = vpop.f32.mrb[0].mxu0
        %v3984 = vadd.f32 0.0, %v3983
        %v3985 = vpop.f32.mrb[0].mxu0
        %v3986 = vadd.f32 0.0, %v3985
        %v3987 = vpop.f32.mrb[0].mxu0
        %v3988 = vadd.f32 0.0, %v3987
        %3989 = vdwg.mxu0
        %v3990 = vadd.f32 %v3883, %v3972
        %v3991 = vadd.f32 %v3885, %v3974
        %v3992 = vadd.f32 %v3887, %v3976
        %v3993 = vadd.f32 %v3889, %v3978
        %v3994 = vadd.f32 %v3893, %v3982
        %v3995 = vadd.f32 %v3895, %v3984
        %v3996 = vadd.f32 %v3897, %v3986
        %v3997 = vadd.f32 %v3899, %v3988
        %3998 = vrot.lane.b32.xlu0 %v3719, 1
        %v3999 = vpop.permute.xlu0 %3998
        %4000 = vrot.lane.b32.xlu0 %v3721, 1
        %v4001 = vpop.permute.xlu0 %4000
        %v4002 = vsel %vm581, %v3999, %v4001
        %v4003 = vsel %vm581, %v4001, %v3999
        %v4004 = vsel %vm586, %v4003, 0.0
        %v4005 = vsel %vm587, %v4002, 0.0
        %v4006 = vld [vmem:[%s590] sm:$0xf]
        %v4007 = vld [vmem:[%s590 + $0x4] sm:$0xf]
        %v4008 = vld [vmem:[%s590 + $0x8] sm:$0xf]
        %v4009 = vld [vmem:[%s590 + $0xc] sm:$0xf]
        %v4010 = vpack.c.bf16 %v4004, %v4004
        %v4011 = vpack.c.bf16 %v4005, %v4005
        %v4016 = vunpack.c.l.b16 %v4006
        %v4017 = vunpack.c.l.b16 %v4007
        %v4018 = vunpack.c.l.b16 %v4008
        %v4019 = vunpack.c.l.b16 %v4009
        %v4020 = vpack.c.b16 %v4017, %v4016
        %v4021 = vpack.c.b16 %v4019, %v4018
        %v4023 = vsel %vm332, %v4020, 0
        %v4026 = vsel %vm332, %v4021, 0
        %v4029 = vsel %vm339, %v4010, 0
        %v4032 = vsel %vm339, %v4011, 0
        %4034 = vmatprep.subr.bf16.mxu0 %v4032
        %4035 = vmatpush1.bf16.msra.mxu0 %v4029
        %4036 = vmatprep.subr.bf16.mxu0 0
        %4037 = vmatpush1.bf16.msra.mxu0 0
        %4038 = vmatprep.subr.bf16.mxu0 0
        %4039 = vmatpush1.bf16.msra.mxu0 0
        %4040 = vmatprep.subr.bf16.mxu0 0
        %4041 = vmatpush1.bf16.msra.mxu0 0
        %4042 = vmatprep.subr.bf16.mxu0 0
        %4043 = vmatpush1.bf16.msra.mxu0 0
        %4044 = vmatprep.subr.bf16.mxu0 0
        %4045 = vmatpush1.bf16.msra.mxu0 0
        %4046 = vmatprep.subr.bf16.mxu0 0
        %4047 = vmatpush1.bf16.msra.mxu0 0
        %4048 = vmatprep.subr.bf16.mxu0 0
        %4049 = vmatpush1.bf16.msra.mxu0 0
        %4050 = vmatprep.subr.bf16.mxu0 0
        %4051 = vmatpush1.bf16.msra.mxu0 0
        %4052 = vmatprep.subr.bf16.mxu0 0
        %4053 = vmatpush1.bf16.msra.mxu0 0
        %4054 = vmatprep.subr.bf16.mxu0 0
        %4055 = vmatpush1.bf16.msra.mxu0 0
        %4056 = vmatprep.subr.bf16.mxu0 0
        %4057 = vmatpush1.bf16.msra.mxu0 0
        %4058 = vmatprep.subr.bf16.mxu0 0
        %4059 = vmatpush1.bf16.msra.mxu0 0
        %4060 = vmatprep.subr.bf16.mxu0 0
        %4061 = vmatpush1.bf16.msra.mxu0 0
        %4062 = vmatprep.subr.bf16.mxu0 0
        %4063 = vmatpush1.bf16.msra.mxu0 0
        %4064 = vmatprep.subr.bf16.mxu0 0
        %4065 = vmatpush1.bf16.msra.mxu0 0
        %4066 = vmatprep.mubr.bf16.mxu0 0
        %4067 = vmatmul.mubr.bf16.gmra.mrb[0].mxu0 %v4023
        %v4068 = vpop.f32.mrb[0].mxu0
        %v4069 = vadd.f32 0.0, %v4068
        %v4070 = vpop.f32.mrb[0].mxu0
        %v4071 = vadd.f32 0.0, %v4070
        %v4072 = vpop.f32.mrb[0].mxu0
        %v4073 = vadd.f32 0.0, %v4072
        %v4074 = vpop.f32.mrb[0].mxu0
        %v4075 = vadd.f32 0.0, %v4074
        %4076 = vmatprep.mubr.bf16.mxu0 0
        %4077 = vmatmul.mubr.bf16.gmra.mrb[0].mxu0 %v4026
        %v4078 = vpop.f32.mrb[0].mxu0
        %v4079 = vadd.f32 0.0, %v4078
        %v4080 = vpop.f32.mrb[0].mxu0
        %v4081 = vadd.f32 0.0, %v4080
        %v4082 = vpop.f32.mrb[0].mxu0
        %v4083 = vadd.f32 0.0, %v4082
        %v4084 = vpop.f32.mrb[0].mxu0
        %v4085 = vadd.f32 0.0, %v4084
        %4086 = vdwg.mxu0
        %v4087 = vadd.f32 %v3990, %v4069
        %v4088 = vadd.f32 %v3991, %v4071
        %v4089 = vadd.f32 %v3992, %v4073
        %v4090 = vadd.f32 %v3993, %v4075
        %v4091 = vadd.f32 %v3994, %v4079
        %v4092 = vadd.f32 %v3995, %v4081
        %v4093 = vadd.f32 %v3996, %v4083
        %v4094 = vadd.f32 %v3997, %v4085
        %v4095 = vld [vmem:[%s680] sm:$0xf]
        %v4096 = vld [vmem:[%s680 + $0x4] sm:$0xf]
        %v4097 = vld [vmem:[%s680 + $0x8] sm:$0xf]
        %v4098 = vld [vmem:[%s680 + $0xc] sm:$0xf]
        %v4099 = vpack.c.bf16 %v3719, %v3719
        %v4100 = vpack.c.bf16 %v3721, %v3721
        %v4105 = vunpack.c.l.b16 %v4095
        %v4106 = vunpack.c.l.b16 %v4096
        %v4107 = vunpack.c.l.b16 %v4097
        %v4108 = vunpack.c.l.b16 %v4098
        %v4109 = vpack.c.b16 %v4106, %v4105
        %v4110 = vpack.c.b16 %v4108, %v4107
        %v4112 = vsel %vm332, %v4109, 0
        %v4115 = vsel %vm332, %v4110, 0
        %v4118 = vsel %vm339, %v4099, 0
        %v4121 = vsel %vm339, %v4100, 0
        %4123 = vmatprep.subr.bf16.mxu0 %v4121
        %4124 = vmatpush1.bf16.msra.mxu0 %v4118
        %4125 = vmatprep.subr.bf16.mxu0 0
        %4126 = vmatpush1.bf16.msra.mxu0 0
        %4127 = vmatprep.subr.bf16.mxu0 0
        %4128 = vmatpush1.bf16.msra.mxu0 0
        %4129 = vmatprep.subr.bf16.mxu0 0
        %4130 = vmatpush1.bf16.msra.mxu0 0
        %4131 = vmatprep.subr.bf16.mxu0 0
        %4132 = vmatpush1.bf16.msra.mxu0 0
        %4133 = vmatprep.subr.bf16.mxu0 0
        %4134 = vmatpush1.bf16.msra.mxu0 0
        %4135 = vmatprep.subr.bf16.mxu0 0
        %4136 = vmatpush1.bf16.msra.mxu0 0
        %4137 = vmatprep.subr.bf16.mxu0 0
        %4138 = vmatpush1.bf16.msra.mxu0 0
        %4139 = vmatprep.subr.bf16.mxu0 0
        %4140 = vmatpush1.bf16.msra.mxu0 0
        %4141 = vmatprep.subr.bf16.mxu0 0
        %4142 = vmatpush1.bf16.msra.mxu0 0
        %4143 = vmatprep.subr.bf16.mxu0 0
        %4144 = vmatpush1.bf16.msra.mxu0 0
        %4145 = vmatprep.subr.bf16.mxu0 0
        %4146 = vmatpush1.bf16.msra.mxu0 0
        %4147 = vmatprep.subr.bf16.mxu0 0
        %4148 = vmatpush1.bf16.msra.mxu0 0
        %4149 = vmatprep.subr.bf16.mxu0 0
        %4150 = vmatpush1.bf16.msra.mxu0 0
        %4151 = vmatprep.subr.bf16.mxu0 0
        %4152 = vmatpush1.bf16.msra.mxu0 0
        %4153 = vmatprep.subr.bf16.mxu0 0
        %4154 = vmatpush1.bf16.msra.mxu0 0
        %4155 = vmatprep.mubr.bf16.mxu0 0
        %4156 = vmatmul.mubr.bf16.gmra.mrb[0].mxu0 %v4112
        %v4157 = vpop.f32.mrb[0].mxu0
        %v4158 = vadd.f32 0.0, %v4157
        %v4159 = vpop.f32.mrb[0].mxu0
        %v4160 = vadd.f32 0.0, %v4159
        %v4161 = vpop.f32.mrb[0].mxu0
        %v4162 = vadd.f32 0.0, %v4161
        %v4163 = vpop.f32.mrb[0].mxu0
        %v4164 = vadd.f32 0.0, %v4163
        %4165 = vmatprep.mubr.bf16.mxu0 0
        %4166 = vmatmul.mubr.bf16.gmra.mrb[0].mxu0 %v4115
        %v4167 = vpop.f32.mrb[0].mxu0
        %v4168 = vadd.f32 0.0, %v4167
        %v4169 = vpop.f32.mrb[0].mxu0
        %v4170 = vadd.f32 0.0, %v4169
        %v4171 = vpop.f32.mrb[0].mxu0
        %v4172 = vadd.f32 0.0, %v4171
        %v4173 = vpop.f32.mrb[0].mxu0
        %v4174 = vadd.f32 0.0, %v4173
        %4175 = vdwg.mxu0
        %v4176 = vadd.f32 %v4087, %v4158
        %v4177 = vadd.f32 %v4088, %v4160
        %v4178 = vadd.f32 %v4089, %v4162
        %v4179 = vadd.f32 %v4090, %v4164
        %v4180 = vadd.f32 %v4091, %v4168
        %v4181 = vadd.f32 %v4092, %v4170
        %v4182 = vadd.f32 %v4093, %v4172
        %v4183 = vadd.f32 %v4094, %v4174
        %4184 = vrot.lane.b32.xlu0 %v3719, 127
        %v4185 = vpop.permute.xlu0 %4184
        %4186 = vrot.lane.b32.xlu0 %v3721, 127
        %v4187 = vpop.permute.xlu0 %4186
        %v4188 = vsel %vm774, %v4185, %v4187
        %v4189 = vsel %vm774, %v4187, %v4185
        %v4190 = vsel %vm779, %v4188, 0.0
        %v4191 = vsel %vm780, %v4189, 0.0
        %v4192 = vld [vmem:[%s783] sm:$0xf]
        %v4193 = vld [vmem:[%s783 + $0x4] sm:$0xf]
        %v4194 = vld [vmem:[%s783 + $0x8] sm:$0xf]
        %v4195 = vld [vmem:[%s783 + $0xc] sm:$0xf]
        %v4196 = vpack.c.bf16 %v4190, %v4190
        %v4197 = vpack.c.bf16 %v4191, %v4191
        %v4202 = vunpack.c.l.b16 %v4192
        %v4203 = vunpack.c.l.b16 %v4193
        %v4204 = vunpack.c.l.b16 %v4194
        %v4205 = vunpack.c.l.b16 %v4195
        %v4206 = vpack.c.b16 %v4203, %v4202
        %v4207 = vpack.c.b16 %v4205, %v4204
        %v4209 = vsel %vm332, %v4206, 0
        %v4212 = vsel %vm332, %v4207, 0
        %v4215 = vsel %vm339, %v4196, 0
        %v4218 = vsel %vm339, %v4197, 0
        %4220 = vmatprep.subr.bf16.mxu0 %v4218
        %4221 = vmatpush1.bf16.msra.mxu0 %v4215
        %4222 = vmatprep.subr.bf16.mxu0 0
        %4223 = vmatpush1.bf16.msra.mxu0 0
        %4224 = vmatprep.subr.bf16.mxu0 0
        %4225 = vmatpush1.bf16.msra.mxu0 0
        %4226 = vmatprep.subr.bf16.mxu0 0
        %4227 = vmatpush1.bf16.msra.mxu0 0
        %4228 = vmatprep.subr.bf16.mxu0 0
        %4229 = vmatpush1.bf16.msra.mxu0 0
        %4230 = vmatprep.subr.bf16.mxu0 0
        %4231 = vmatpush1.bf16.msra.mxu0 0
        %4232 = vmatprep.subr.bf16.mxu0 0
        %4233 = vmatpush1.bf16.msra.mxu0 0
        %4234 = vmatprep.subr.bf16.mxu0 0
        %4235 = vmatpush1.bf16.msra.mxu0 0
        %4236 = vmatprep.subr.bf16.mxu0 0
        %4237 = vmatpush1.bf16.msra.mxu0 0
        %4238 = vmatprep.subr.bf16.mxu0 0
        %4239 = vmatpush1.bf16.msra.mxu0 0
        %4240 = vmatprep.subr.bf16.mxu0 0
        %4241 = vmatpush1.bf16.msra.mxu0 0
        %4242 = vmatprep.subr.bf16.mxu0 0
        %4243 = vmatpush1.bf16.msra.mxu0 0
        %4244 = vmatprep.subr.bf16.mxu0 0
        %4245 = vmatpush1.bf16.msra.mxu0 0
        %4246 = vmatprep.subr.bf16.mxu0 0
        %4247 = vmatpush1.bf16.msra.mxu0 0
        %4248 = vmatprep.subr.bf16.mxu0 0
        %4249 = vmatpush1.bf16.msra.mxu0 0
        %4250 = vmatprep.subr.bf16.mxu0 0
        %4251 = vmatpush1.bf16.msra.mxu0 0
        %4252 = vmatprep.mubr.bf16.mxu0 0
        %4253 = vmatmul.mubr.bf16.gmra.mrb[0].mxu0 %v4209
        %v4254 = vpop.f32.mrb[0].mxu0
        %v4255 = vadd.f32 0.0, %v4254
        %v4256 = vpop.f32.mrb[0].mxu0
        %v4257 = vadd.f32 0.0, %v4256
        %v4258 = vpop.f32.mrb[0].mxu0
        %v4259 = vadd.f32 0.0, %v4258
        %v4260 = vpop.f32.mrb[0].mxu0
        %v4261 = vadd.f32 0.0, %v4260
        %4262 = vmatprep.mubr.bf16.mxu0 0
        %4263 = vmatmul.mubr.bf16.gmra.mrb[0].mxu0 %v4212
        %v4264 = vpop.f32.mrb[0].mxu0
        %v4265 = vadd.f32 0.0, %v4264
        %v4266 = vpop.f32.mrb[0].mxu0
        %v4267 = vadd.f32 0.0, %v4266
        %v4268 = vpop.f32.mrb[0].mxu0
        %v4269 = vadd.f32 0.0, %v4268
        %v4270 = vpop.f32.mrb[0].mxu0
        %v4271 = vadd.f32 0.0, %v4270
        %4272 = vdwg.mxu0
        %v4273 = vadd.f32 %v4176, %v4255
        %v4274 = vadd.f32 %v4177, %v4257
        %v4275 = vadd.f32 %v4178, %v4259
        %v4276 = vadd.f32 %v4179, %v4261
        %v4277 = vadd.f32 %v4180, %v4265
        %v4278 = vadd.f32 %v4181, %v4267
        %v4279 = vadd.f32 %v4182, %v4269
        %v4280 = vadd.f32 %v4183, %v4271
        %4281 = vrot.lane.b32.xlu0 %v3719, 113
        %v4282 = vpop.permute.xlu0 %4281
        %4283 = vrot.lane.b32.xlu0 %v3721, 113
        %v4284 = vpop.permute.xlu0 %4283
        %v4285 = vsel %vm877, %v4282, %v4284
        %v4286 = vsel %vm877, %v4284, %v4282
        %v4287 = vsel %vm882, %v4285, 0.0
        %v4288 = vsel %vm883, %v4286, 0.0
        %v4289 = vld [vmem:[%s886] sm:$0xf]
        %v4290 = vld [vmem:[%s886 + $0x4] sm:$0xf]
        %v4291 = vld [vmem:[%s886 + $0x8] sm:$0xf]
        %v4292 = vld [vmem:[%s886 + $0xc] sm:$0xf]
        %v4293 = vpack.c.bf16 %v4287, %v4287
        %v4294 = vpack.c.bf16 %v4288, %v4288
        %v4299 = vunpack.c.l.b16 %v4289
        %v4300 = vunpack.c.l.b16 %v4290
        %v4301 = vunpack.c.l.b16 %v4291
        %v4302 = vunpack.c.l.b16 %v4292
        %v4303 = vpack.c.b16 %v4300, %v4299
        %v4304 = vpack.c.b16 %v4302, %v4301
        %v4306 = vsel %vm332, %v4303, 0
        %v4309 = vsel %vm332, %v4304, 0
        %v4312 = vsel %vm339, %v4293, 0
        %v4315 = vsel %vm339, %v4294, 0
        %4317 = vmatprep.subr.bf16.mxu0 %v4315
        %4318 = vmatpush1.bf16.msra.mxu0 %v4312
        %4319 = vmatprep.subr.bf16.mxu0 0
        %4320 = vmatpush1.bf16.msra.mxu0 0
        %4321 = vmatprep.subr.bf16.mxu0 0
        %4322 = vmatpush1.bf16.msra.mxu0 0
        %4323 = vmatprep.subr.bf16.mxu0 0
        %4324 = vmatpush1.bf16.msra.mxu0 0
        %4325 = vmatprep.subr.bf16.mxu0 0
        %4326 = vmatpush1.bf16.msra.mxu0 0
        %4327 = vmatprep.subr.bf16.mxu0 0
        %4328 = vmatpush1.bf16.msra.mxu0 0
        %4329 = vmatprep.subr.bf16.mxu0 0
        %4330 = vmatpush1.bf16.msra.mxu0 0
        %4331 = vmatprep.subr.bf16.mxu0 0
        %4332 = vmatpush1.bf16.msra.mxu0 0
        %4333 = vmatprep.subr.bf16.mxu0 0
        %4334 = vmatpush1.bf16.msra.mxu0 0
        %4335 = vmatprep.subr.bf16.mxu0 0
        %4336 = vmatpush1.bf16.msra.mxu0 0
        %4337 = vmatprep.subr.bf16.mxu0 0
        %4338 = vmatpush1.bf16.msra.mxu0 0
        %4339 = vmatprep.subr.bf16.mxu0 0
        %4340 = vmatpush1.bf16.msra.mxu0 0
        %4341 = vmatprep.subr.bf16.mxu0 0
        %4342 = vmatpush1.bf16.msra.mxu0 0
        %4343 = vmatprep.subr.bf16.mxu0 0
        %4344 = vmatpush1.bf16.msra.mxu0 0
        %4345 = vmatprep.subr.bf16.mxu0 0
        %4346 = vmatpush1.bf16.msra.mxu0 0
        %4347 = vmatprep.subr.bf16.mxu0 0
        %4348 = vmatpush1.bf16.msra.mxu0 0
        %4349 = vmatprep.mubr.bf16.mxu0 0
        %4350 = vmatmul.mubr.bf16.gmra.mrb[0].mxu0 %v4306
        %v4351 = vpop.f32.mrb[0].mxu0
        %v4352 = vadd.f32 0.0, %v4351
        %v4353 = vpop.f32.mrb[0].mxu0
        %v4354 = vadd.f32 0.0, %v4353
        %v4355 = vpop.f32.mrb[0].mxu0
        %v4356 = vadd.f32 0.0, %v4355
        %v4357 = vpop.f32.mrb[0].mxu0
        %v4358 = vadd.f32 0.0, %v4357
        %4359 = vmatprep.mubr.bf16.mxu0 0
        %4360 = vmatmul.mubr.bf16.gmra.mrb[0].mxu0 %v4309
        %v4361 = vpop.f32.mrb[0].mxu0
        %v4362 = vadd.f32 0.0, %v4361
        %v4363 = vpop.f32.mrb[0].mxu0
        %v4364 = vadd.f32 0.0, %v4363
        %v4365 = vpop.f32.mrb[0].mxu0
        %v4366 = vadd.f32 0.0, %v4365
        %v4367 = vpop.f32.mrb[0].mxu0
        %v4368 = vadd.f32 0.0, %v4367
        %4369 = vdwg.mxu0
        %v4370 = vadd.f32 %v4273, %v4352
        %v4371 = vadd.f32 %v4274, %v4354
        %v4372 = vadd.f32 %v4275, %v4356
        %v4373 = vadd.f32 %v4276, %v4358
        %v4374 = vadd.f32 %v4277, %v4362
        %v4375 = vadd.f32 %v4278, %v4364
        %v4376 = vadd.f32 %v4279, %v4366
        %v4377 = vadd.f32 %v4280, %v4368
        %4378 = vrot.lane.b32.xlu0 %v3719, 112
        %v4379 = vpop.permute.xlu0 %4378
        %4380 = vrot.lane.b32.xlu0 %v3721, 112
        %v4381 = vpop.permute.xlu0 %4380
        %v4382 = vsel %vm980, %v4379, %v4381
        %v4383 = vsel %vm980, %v4381, %v4379
        %v4384 = vsel %vm985, %v4382, 0.0
        %v4385 = vsel %vm986, %v4383, 0.0
        %v4386 = vld [vmem:[%s989] sm:$0xf]
        %v4387 = vld [vmem:[%s989 + $0x4] sm:$0xf]
        %v4388 = vld [vmem:[%s989 + $0x8] sm:$0xf]
        %v4389 = vld [vmem:[%s989 + $0xc] sm:$0xf]
        %v4390 = vpack.c.bf16 %v4384, %v4384
        %v4391 = vpack.c.bf16 %v4385, %v4385
        %v4396 = vunpack.c.l.b16 %v4386
        %v4397 = vunpack.c.l.b16 %v4387
        %v4398 = vunpack.c.l.b16 %v4388
        %v4399 = vunpack.c.l.b16 %v4389
        %v4400 = vpack.c.b16 %v4397, %v4396
        %v4401 = vpack.c.b16 %v4399, %v4398
        %v4403 = vsel %vm332, %v4400, 0
        %v4406 = vsel %vm332, %v4401, 0
        %v4409 = vsel %vm339, %v4390, 0
        %v4412 = vsel %vm339, %v4391, 0
        %4414 = vmatprep.subr.bf16.mxu0 %v4412
        %4415 = vmatpush1.bf16.msra.mxu0 %v4409
        %4416 = vmatprep.subr.bf16.mxu0 0
        %4417 = vmatpush1.bf16.msra.mxu0 0
        %4418 = vmatprep.subr.bf16.mxu0 0
        %4419 = vmatpush1.bf16.msra.mxu0 0
        %4420 = vmatprep.subr.bf16.mxu0 0
        %4421 = vmatpush1.bf16.msra.mxu0 0
        %4422 = vmatprep.subr.bf16.mxu0 0
        %4423 = vmatpush1.bf16.msra.mxu0 0
        %4424 = vmatprep.subr.bf16.mxu0 0
        %4425 = vmatpush1.bf16.msra.mxu0 0
        %4426 = vmatprep.subr.bf16.mxu0 0
        %4427 = vmatpush1.bf16.msra.mxu0 0
        %4428 = vmatprep.subr.bf16.mxu0 0
        %4429 = vmatpush1.bf16.msra.mxu0 0
        %4430 = vmatprep.subr.bf16.mxu0 0
        %4431 = vmatpush1.bf16.msra.mxu0 0
        %4432 = vmatprep.subr.bf16.mxu0 0
        %4433 = vmatpush1.bf16.msra.mxu0 0
        %4434 = vmatprep.subr.bf16.mxu0 0
        %4435 = vmatpush1.bf16.msra.mxu0 0
        %4436 = vmatprep.subr.bf16.mxu0 0
        %4437 = vmatpush1.bf16.msra.mxu0 0
        %4438 = vmatprep.subr.bf16.mxu0 0
        %4439 = vmatpush1.bf16.msra.mxu0 0
        %4440 = vmatprep.subr.bf16.mxu0 0
        %4441 = vmatpush1.bf16.msra.mxu0 0
        %4442 = vmatprep.subr.bf16.mxu0 0
        %4443 = vmatpush1.bf16.msra.mxu0 0
        %4444 = vmatprep.subr.bf16.mxu0 0
        %4445 = vmatpush1.bf16.msra.mxu0 0
        %4446 = vmatprep.mubr.bf16.mxu0 0
        %4447 = vmatmul.mubr.bf16.gmra.mrb[0].mxu0 %v4403
        %v4448 = vpop.f32.mrb[0].mxu0
        %v4449 = vadd.f32 0.0, %v4448
        %v4450 = vpop.f32.mrb[0].mxu0
        %v4451 = vadd.f32 0.0, %v4450
        %v4452 = vpop.f32.mrb[0].mxu0
        %v4453 = vadd.f32 0.0, %v4452
        %v4454 = vpop.f32.mrb[0].mxu0
        %v4455 = vadd.f32 0.0, %v4454
        %4456 = vmatprep.mubr.bf16.mxu0 0
        %4457 = vmatmul.mubr.bf16.gmra.mrb[0].mxu0 %v4406
        %v4458 = vpop.f32.mrb[0].mxu0
        %v4459 = vadd.f32 0.0, %v4458
        %v4460 = vpop.f32.mrb[0].mxu0
        %v4461 = vadd.f32 0.0, %v4460
        %v4462 = vpop.f32.mrb[0].mxu0
        %v4463 = vadd.f32 0.0, %v4462
        %v4464 = vpop.f32.mrb[0].mxu0
        %v4465 = vadd.f32 0.0, %v4464
        %4466 = vdwg.mxu0
        %v4467 = vadd.f32 %v4370, %v4449
        %v4468 = vadd.f32 %v4371, %v4451
        %v4469 = vadd.f32 %v4372, %v4453
        %v4470 = vadd.f32 %v4373, %v4455
        %v4471 = vadd.f32 %v4374, %v4459
        %v4472 = vadd.f32 %v4375, %v4461
        %v4473 = vadd.f32 %v4376, %v4463
        %v4474 = vadd.f32 %v4377, %v4465
        %4475 = vrot.lane.b32.xlu0 %v3719, 111
        %v4476 = vpop.permute.xlu0 %4475
        %4477 = vrot.lane.b32.xlu0 %v3721, 111
        %v4478 = vpop.permute.xlu0 %4477
        %v4479 = vsel %vm1083, %v4476, %v4478
        %v4480 = vsel %vm1083, %v4478, %v4476
        %v4481 = vsel %vm1088, %v4479, 0.0
        %v4482 = vsel %vm1089, %v4480, 0.0
        %v4483 = vld [vmem:[%s1092] sm:$0xf]
        %v4484 = vld [vmem:[%s1092 + $0x4] sm:$0xf]
        %v4485 = vld [vmem:[%s1092 + $0x8] sm:$0xf]
        %v4486 = vld [vmem:[%s1092 + $0xc] sm:$0xf]
        %v4487 = vpack.c.bf16 %v4481, %v4481
        %v4488 = vpack.c.bf16 %v4482, %v4482
        %v4493 = vunpack.c.l.b16 %v4483
        %v4494 = vunpack.c.l.b16 %v4484
        %v4495 = vunpack.c.l.b16 %v4485
        %v4496 = vunpack.c.l.b16 %v4486
        %v4497 = vpack.c.b16 %v4494, %v4493
        %v4498 = vpack.c.b16 %v4496, %v4495
        %v4500 = vsel %vm332, %v4497, 0
        %v4503 = vsel %vm332, %v4498, 0
        %v4506 = vsel %vm339, %v4487, 0
        %v4509 = vsel %vm339, %v4488, 0
        %4511 = vmatprep.subr.bf16.mxu0 %v4509
        %4512 = vmatpush1.bf16.msra.mxu0 %v4506
        %4513 = vmatprep.subr.bf16.mxu0 0
        %4514 = vmatpush1.bf16.msra.mxu0 0
        %4515 = vmatprep.subr.bf16.mxu0 0
        %4516 = vmatpush1.bf16.msra.mxu0 0
        %4517 = vmatprep.subr.bf16.mxu0 0
        %4518 = vmatpush1.bf16.msra.mxu0 0
        %4519 = vmatprep.subr.bf16.mxu0 0
        %4520 = vmatpush1.bf16.msra.mxu0 0
        %4521 = vmatprep.subr.bf16.mxu0 0
        %4522 = vmatpush1.bf16.msra.mxu0 0
        %4523 = vmatprep.subr.bf16.mxu0 0
        %4524 = vmatpush1.bf16.msra.mxu0 0
        %4525 = vmatprep.subr.bf16.mxu0 0
        %4526 = vmatpush1.bf16.msra.mxu0 0
        %4527 = vmatprep.subr.bf16.mxu0 0
        %4528 = vmatpush1.bf16.msra.mxu0 0
        %4529 = vmatprep.subr.bf16.mxu0 0
        %4530 = vmatpush1.bf16.msra.mxu0 0
        %4531 = vmatprep.subr.bf16.mxu0 0
        %4532 = vmatpush1.bf16.msra.mxu0 0
        %4533 = vmatprep.subr.bf16.mxu0 0
        %4534 = vmatpush1.bf16.msra.mxu0 0
        %4535 = vmatprep.subr.bf16.mxu0 0
        %4536 = vmatpush1.bf16.msra.mxu0 0
        %4537 = vmatprep.subr.bf16.mxu0 0
        %4538 = vmatpush1.bf16.msra.mxu0 0
        %4539 = vmatprep.subr.bf16.mxu0 0
        %4540 = vmatpush1.bf16.msra.mxu0 0
        %4541 = vmatprep.subr.bf16.mxu0 0
        %4542 = vmatpush1.bf16.msra.mxu0 0
        %4543 = vmatprep.mubr.bf16.mxu0 0
        %4544 = vmatmul.mubr.bf16.gmra.mrb[0].mxu0 %v4500
        %v4545 = vpop.f32.mrb[0].mxu0
        %v4546 = vadd.f32 0.0, %v4545
        %v4547 = vpop.f32.mrb[0].mxu0
        %v4548 = vadd.f32 0.0, %v4547
        %v4549 = vpop.f32.mrb[0].mxu0
        %v4550 = vadd.f32 0.0, %v4549
        %v4551 = vpop.f32.mrb[0].mxu0
        %v4552 = vadd.f32 0.0, %v4551
        %4553 = vmatprep.mubr.bf16.mxu0 0
        %4554 = vmatmul.mubr.bf16.gmra.mrb[0].mxu0 %v4503
        %v4555 = vpop.f32.mrb[0].mxu0
        %v4556 = vadd.f32 0.0, %v4555
        %v4557 = vpop.f32.mrb[0].mxu0
        %v4558 = vadd.f32 0.0, %v4557
        %v4559 = vpop.f32.mrb[0].mxu0
        %v4560 = vadd.f32 0.0, %v4559
        %v4561 = vpop.f32.mrb[0].mxu0
        %v4562 = vadd.f32 0.0, %v4561
        %4563 = vdwg.mxu0
        %v4564 = vadd.f32 %v4467, %v4546
        %v4565 = vadd.f32 %v4468, %v4548
        %v4566 = vadd.f32 %v4469, %v4550
        %v4567 = vadd.f32 %v4470, %v4552
        %v4568 = vadd.f32 %v4471, %v4556
        %v4569 = vadd.f32 %v4472, %v4558
        %v4570 = vadd.f32 %v4473, %v4560
        %v4571 = vadd.f32 %v4474, %v4562
        %v4572 = vadd.f32 %v4564, %v1185
        %v4573 = vadd.f32 %v4565, %v1185
        %v4574 = vadd.f32 %v4566, %v1190
        %v4575 = vadd.f32 %v4567, %v1190
        %v4576 = vadd.f32 %v4568, %v1195
        %v4577 = vadd.f32 %v4569, %v1195
        %v4578 = vadd.f32 %v4570, %v1200
        %v4579 = vadd.f32 %v4571, %v1200
        %v4580 = vmax.f32 %v4572, 0.0
        %v4581 = vmax.f32 %v4573, 0.0
        %v4582 = vmax.f32 %v4574, 0.0
        %v4583 = vmax.f32 %v4575, 0.0
        %v4584 = vmax.f32 %v4576, 0.0
        %v4585 = vmax.f32 %v4577, 0.0
        %v4586 = vmax.f32 %v4578, 0.0
        %v4587 = vmax.f32 %v4579, 0.0
        %4588 = vrot.lane.b32.xlu0 %v4580, 17
        %v4589 = vpop.permute.xlu0 %4588
        %4590 = vrot.lane.b32.xlu0 %v4582, 17
        %v4591 = vpop.permute.xlu0 %4590
        %4592 = vrot.lane.b32.xlu0 %v4584, 17
        %v4593 = vpop.permute.xlu0 %4592
        %4594 = vrot.lane.b32.xlu0 %v4586, 17
        %v4595 = vpop.permute.xlu0 %4594
        %4596 = vrot.lane.b32.xlu0 %v4581, 17
        %v4597 = vpop.permute.xlu0 %4596
        %4598 = vrot.lane.b32.xlu0 %v4583, 17
        %v4599 = vpop.permute.xlu0 %4598
        %4600 = vrot.lane.b32.xlu0 %v4585, 17
        %v4601 = vpop.permute.xlu0 %4600
        %4602 = vrot.lane.b32.xlu0 %v4587, 17
        %v4603 = vpop.permute.xlu0 %4602
        %v4604 = vsel %vm287, %v4589, %v4597
        %v4605 = vsel %vm287, %v4591, %v4599
        %v4606 = vsel %vm287, %v4593, %v4601
        %v4607 = vsel %vm287, %v4595, %v4603
        %v4608 = vsel %vm287, %v4597, %v4589
        %v4609 = vsel %vm287, %v4599, %v4591
        %v4610 = vsel %vm287, %v4601, %v4593
        %v4611 = vsel %vm287, %v4603, %v4595
        %v4612 = vsel %vm292, %v4608, 0.0
        %v4613 = vsel %vm293, %v4604, 0.0
        %v4614 = vsel %vm292, %v4609, 0.0
        %v4615 = vsel %vm293, %v4605, 0.0
        %v4616 = vsel %vm292, %v4610, 0.0
        %v4617 = vsel %vm293, %v4606, 0.0
        %v4618 = vsel %vm292, %v4611, 0.0
        %v4619 = vsel %vm293, %v4607, 0.0
        %v4620 = vld [vmem:[%s3] sm:$0xf]
        %v4621 = vld [vmem:[%s3 + $0x4] sm:$0xf]
        %v4622 = vpack.c.bf16 %v4614, %v4612
        %v4623 = vpack.c.bf16 %v4615, %v4613
        %v4624 = vpack.c.bf16 %v4618, %v4616
        %v4625 = vpack.c.bf16 %v4619, %v4617
        %4626 = vrot.lane.b32.xlu0 %v4580, 16
        %v4627 = vpop.permute.xlu0 %4626
        %4628 = vrot.lane.b32.xlu0 %v4582, 16
        %v4629 = vpop.permute.xlu0 %4628
        %4630 = vrot.lane.b32.xlu0 %v4584, 16
        %v4631 = vpop.permute.xlu0 %4630
        %4632 = vrot.lane.b32.xlu0 %v4586, 16
        %v4633 = vpop.permute.xlu0 %4632
        %4634 = vrot.lane.b32.xlu0 %v4581, 16
        %v4635 = vpop.permute.xlu0 %4634
        %4636 = vrot.lane.b32.xlu0 %v4583, 16
        %v4637 = vpop.permute.xlu0 %4636
        %4638 = vrot.lane.b32.xlu0 %v4585, 16
        %v4639 = vpop.permute.xlu0 %4638
        %4640 = vrot.lane.b32.xlu0 %v4587, 16
        %v4641 = vpop.permute.xlu0 %4640
        %v4642 = vsel %vm306, %v4627, %v4635
        %v4643 = vsel %vm306, %v4629, %v4637
        %v4644 = vsel %vm306, %v4631, %v4639
        %v4645 = vsel %vm306, %v4633, %v4641
        %v4646 = vsel %vm306, %v4635, %v4627
        %v4647 = vsel %vm306, %v4637, %v4629
        %v4648 = vsel %vm306, %v4639, %v4631
        %v4649 = vsel %vm306, %v4641, %v4633
        %v4650 = vsel %vm311, %v4646, 0.0
        %v4651 = vsel %vm312, %v4642, 0.0
        %v4652 = vsel %vm311, %v4647, 0.0
        %v4653 = vsel %vm312, %v4643, 0.0
        %v4654 = vsel %vm311, %v4648, 0.0
        %v4655 = vsel %vm312, %v4644, 0.0
        %v4656 = vsel %vm311, %v4649, 0.0
        %v4657 = vsel %vm312, %v4645, 0.0
        %v4658 = vld [vmem:[%s1288] sm:$0xf]
        %v4659 = vld [vmem:[%s1288 + $0x4] sm:$0xf]
        %v4660 = vpack.c.bf16 %v4652, %v4650
        %v4661 = vpack.c.bf16 %v4653, %v4651
        %v4662 = vpack.c.bf16 %v4656, %v4654
        %v4663 = vpack.c.bf16 %v4657, %v4655
        %v4666 = vunpack.c.l.b16 %v4658
        %v4667 = vunpack.c.l.b16 %v4659
        %v4668 = vpack.c.b16 %v4667, %v4666
        %v4670 = vsel %vm1300, %v4668, 0
        %4672 = vmatprep.subr.bf16.mxu0 %v4661
        %4673 = vmatpush1.bf16.msra.mxu0 %v4660
        %4674 = vmatprep.subr.bf16.mxu0 %v4663
        %4675 = vmatpush1.bf16.msra.mxu0 %v4662
        %4676 = vmatprep.subr.bf16.mxu0 0
        %4677 = vmatpush1.bf16.msra.mxu0 0
        %4678 = vmatprep.subr.bf16.mxu0 0
        %4679 = vmatpush1.bf16.msra.mxu0 0
        %4680 = vmatprep.subr.bf16.mxu0 0
        %4681 = vmatpush1.bf16.msra.mxu0 0
        %4682 = vmatprep.subr.bf16.mxu0 0
        %4683 = vmatpush1.bf16.msra.mxu0 0
        %4684 = vmatprep.subr.bf16.mxu0 0
        %4685 = vmatpush1.bf16.msra.mxu0 0
        %4686 = vmatprep.subr.bf16.mxu0 0
        %4687 = vmatpush1.bf16.msra.mxu0 0
        %4688 = vmatprep.subr.bf16.mxu0 0
        %4689 = vmatpush1.bf16.msra.mxu0 0
        %4690 = vmatprep.subr.bf16.mxu0 0
        %4691 = vmatpush1.bf16.msra.mxu0 0
        %4692 = vmatprep.subr.bf16.mxu0 0
        %4693 = vmatpush1.bf16.msra.mxu0 0
        %4694 = vmatprep.subr.bf16.mxu0 0
        %4695 = vmatpush1.bf16.msra.mxu0 0
        %4696 = vmatprep.subr.bf16.mxu0 0
        %4697 = vmatpush1.bf16.msra.mxu0 0
        %4698 = vmatprep.subr.bf16.mxu0 0
        %4699 = vmatpush1.bf16.msra.mxu0 0
        %4700 = vmatprep.subr.bf16.mxu0 0
        %4701 = vmatpush1.bf16.msra.mxu0 0
        %4702 = vmatprep.subr.bf16.mxu0 0
        %4703 = vmatpush1.bf16.msra.mxu0 0
        %4704 = vmatprep.mubr.bf16.mxu0 0
        %4705 = vmatmul.mubr.bf16.gmra.mrb[0].mxu0 %v4670
        %v4706 = vpop.f32.mrb[0].mxu0
        %v4707 = vadd.f32 0.0, %v4706
        %v4708 = vpop.f32.mrb[0].mxu0
        %v4709 = vadd.f32 0.0, %v4708
        %v4710 = vpop.f32.mrb[0].mxu0
        %v4711 = vadd.f32 0.0, %v4710
        %v4712 = vpop.f32.mrb[0].mxu0
        %v4713 = vadd.f32 0.0, %v4712
        %4714 = vdwg.mxu0
        %v4717 = vunpack.c.l.b16 %v4620
        %v4718 = vunpack.c.l.b16 %v4621
        %v4719 = vpack.c.b16 %v4718, %v4717
        %v4721 = vsel %vm1300, %v4719, 0
        %4723 = vmatprep.subr.bf16.mxu0 %v4623
        %4724 = vmatpush1.bf16.msra.mxu0 %v4622
        %4725 = vmatprep.subr.bf16.mxu0 %v4625
        %4726 = vmatpush1.bf16.msra.mxu0 %v4624
        %4727 = vmatprep.subr.bf16.mxu0 0
        %4728 = vmatpush1.bf16.msra.mxu0 0
        %4729 = vmatprep.subr.bf16.mxu0 0
        %4730 = vmatpush1.bf16.msra.mxu0 0
        %4731 = vmatprep.subr.bf16.mxu0 0
        %4732 = vmatpush1.bf16.msra.mxu0 0
        %4733 = vmatprep.subr.bf16.mxu0 0
        %4734 = vmatpush1.bf16.msra.mxu0 0
        %4735 = vmatprep.subr.bf16.mxu0 0
        %4736 = vmatpush1.bf16.msra.mxu0 0
        %4737 = vmatprep.subr.bf16.mxu0 0
        %4738 = vmatpush1.bf16.msra.mxu0 0
        %4739 = vmatprep.subr.bf16.mxu0 0
        %4740 = vmatpush1.bf16.msra.mxu0 0
        %4741 = vmatprep.subr.bf16.mxu0 0
        %4742 = vmatpush1.bf16.msra.mxu0 0
        %4743 = vmatprep.subr.bf16.mxu0 0
        %4744 = vmatpush1.bf16.msra.mxu0 0
        %4745 = vmatprep.subr.bf16.mxu0 0
        %4746 = vmatpush1.bf16.msra.mxu0 0
        %4747 = vmatprep.subr.bf16.mxu0 0
        %4748 = vmatpush1.bf16.msra.mxu0 0
        %4749 = vmatprep.subr.bf16.mxu0 0
        %4750 = vmatpush1.bf16.msra.mxu0 0
        %4751 = vmatprep.subr.bf16.mxu0 0
        %4752 = vmatpush1.bf16.msra.mxu0 0
        %4753 = vmatprep.subr.bf16.mxu0 0
        %4754 = vmatpush1.bf16.msra.mxu0 0
        %4755 = vmatprep.mubr.bf16.mxu0 0
        %4756 = vmatmul.mubr.bf16.gmra.mrb[0].mxu0 %v4721
        %v4757 = vpop.f32.mrb[0].mxu0
        %v4758 = vadd.f32 %v4707, %v4757
        %v4759 = vpop.f32.mrb[0].mxu0
        %v4760 = vadd.f32 %v4709, %v4759
        %v4761 = vpop.f32.mrb[0].mxu0
        %v4762 = vadd.f32 %v4711, %v4761
        %v4763 = vpop.f32.mrb[0].mxu0
        %v4764 = vadd.f32 %v4713, %v4763
        %4765 = vdwg.mxu0
        %4766 = vrot.lane.b32.xlu0 %v4580, 15
        %v4767 = vpop.permute.xlu0 %4766
        %4768 = vrot.lane.b32.xlu0 %v4582, 15
        %v4769 = vpop.permute.xlu0 %4768
        %4770 = vrot.lane.b32.xlu0 %v4584, 15
        %v4771 = vpop.permute.xlu0 %4770
        %4772 = vrot.lane.b32.xlu0 %v4586, 15
        %v4773 = vpop.permute.xlu0 %4772
        %4774 = vrot.lane.b32.xlu0 %v4581, 15
        %v4775 = vpop.permute.xlu0 %4774
        %4776 = vrot.lane.b32.xlu0 %v4583, 15
        %v4777 = vpop.permute.xlu0 %4776
        %4778 = vrot.lane.b32.xlu0 %v4585, 15
        %v4779 = vpop.permute.xlu0 %4778
        %4780 = vrot.lane.b32.xlu0 %v4587, 15
        %v4781 = vpop.permute.xlu0 %4780
        %v4782 = vsel %vm478, %v4767, %v4775
        %v4783 = vsel %vm478, %v4769, %v4777
        %v4784 = vsel %vm478, %v4771, %v4779
        %v4785 = vsel %vm478, %v4773, %v4781
        %v4786 = vsel %vm478, %v4775, %v4767
        %v4787 = vsel %vm478, %v4777, %v4769
        %v4788 = vsel %vm478, %v4779, %v4771
        %v4789 = vsel %vm478, %v4781, %v4773
        %v4790 = vsel %vm483, %v4786, 0.0
        %v4791 = vsel %vm484, %v4782, 0.0
        %v4792 = vsel %vm483, %v4787, 0.0
        %v4793 = vsel %vm484, %v4783, 0.0
        %v4794 = vsel %vm483, %v4788, 0.0
        %v4795 = vsel %vm484, %v4784, 0.0
        %v4796 = vsel %vm483, %v4789, 0.0
        %v4797 = vsel %vm484, %v4785, 0.0
        %v4798 = vld [vmem:[%s1430] sm:$0xf]
        %v4799 = vld [vmem:[%s1430 + $0x4] sm:$0xf]
        %v4800 = vpack.c.bf16 %v4792, %v4790
        %v4801 = vpack.c.bf16 %v4793, %v4791
        %v4802 = vpack.c.bf16 %v4796, %v4794
        %v4803 = vpack.c.bf16 %v4797, %v4795
        %v4806 = vunpack.c.l.b16 %v4798
        %v4807 = vunpack.c.l.b16 %v4799
        %v4808 = vpack.c.b16 %v4807, %v4806
        %v4810 = vsel %vm1300, %v4808, 0
        %4812 = vmatprep.subr.bf16.mxu0 %v4801
        %4813 = vmatpush1.bf16.msra.mxu0 %v4800
        %4814 = vmatprep.subr.bf16.mxu0 %v4803
        %4815 = vmatpush1.bf16.msra.mxu0 %v4802
        %4816 = vmatprep.subr.bf16.mxu0 0
        %4817 = vmatpush1.bf16.msra.mxu0 0
        %4818 = vmatprep.subr.bf16.mxu0 0
        %4819 = vmatpush1.bf16.msra.mxu0 0
        %4820 = vmatprep.subr.bf16.mxu0 0
        %4821 = vmatpush1.bf16.msra.mxu0 0
        %4822 = vmatprep.subr.bf16.mxu0 0
        %4823 = vmatpush1.bf16.msra.mxu0 0
        %4824 = vmatprep.subr.bf16.mxu0 0
        %4825 = vmatpush1.bf16.msra.mxu0 0
        %4826 = vmatprep.subr.bf16.mxu0 0
        %4827 = vmatpush1.bf16.msra.mxu0 0
        %4828 = vmatprep.subr.bf16.mxu0 0
        %4829 = vmatpush1.bf16.msra.mxu0 0
        %4830 = vmatprep.subr.bf16.mxu0 0
        %4831 = vmatpush1.bf16.msra.mxu0 0
        %4832 = vmatprep.subr.bf16.mxu0 0
        %4833 = vmatpush1.bf16.msra.mxu0 0
        %4834 = vmatprep.subr.bf16.mxu0 0
        %4835 = vmatpush1.bf16.msra.mxu0 0
        %4836 = vmatprep.subr.bf16.mxu0 0
        %4837 = vmatpush1.bf16.msra.mxu0 0
        %4838 = vmatprep.subr.bf16.mxu0 0
        %4839 = vmatpush1.bf16.msra.mxu0 0
        %4840 = vmatprep.subr.bf16.mxu0 0
        %4841 = vmatpush1.bf16.msra.mxu0 0
        %4842 = vmatprep.subr.bf16.mxu0 0
        %4843 = vmatpush1.bf16.msra.mxu0 0
        %4844 = vmatprep.mubr.bf16.mxu0 0
        %4845 = vmatmul.mubr.bf16.gmra.mrb[0].mxu0 %v4810
        %v4846 = vpop.f32.mrb[0].mxu0
        %v4847 = vadd.f32 0.0, %v4846
        %v4848 = vpop.f32.mrb[0].mxu0
        %v4849 = vadd.f32 0.0, %v4848
        %v4850 = vpop.f32.mrb[0].mxu0
        %v4851 = vadd.f32 0.0, %v4850
        %v4852 = vpop.f32.mrb[0].mxu0
        %v4853 = vadd.f32 0.0, %v4852
        %4854 = vdwg.mxu0
        %v4855 = vadd.f32 %v4758, %v4847
        %v4856 = vadd.f32 %v4760, %v4849
        %v4857 = vadd.f32 %v4762, %v4851
        %v4858 = vadd.f32 %v4764, %v4853
        %4859 = vrot.lane.b32.xlu0 %v4580, 1
        %v4860 = vpop.permute.xlu0 %4859
        %4861 = vrot.lane.b32.xlu0 %v4582, 1
        %v4862 = vpop.permute.xlu0 %4861
        %4863 = vrot.lane.b32.xlu0 %v4584, 1
        %v4864 = vpop.permute.xlu0 %4863
        %4865 = vrot.lane.b32.xlu0 %v4586, 1
        %v4866 = vpop.permute.xlu0 %4865
        %4867 = vrot.lane.b32.xlu0 %v4581, 1
        %v4868 = vpop.permute.xlu0 %4867
        %4869 = vrot.lane.b32.xlu0 %v4583, 1
        %v4870 = vpop.permute.xlu0 %4869
        %4871 = vrot.lane.b32.xlu0 %v4585, 1
        %v4872 = vpop.permute.xlu0 %4871
        %4873 = vrot.lane.b32.xlu0 %v4587, 1
        %v4874 = vpop.permute.xlu0 %4873
        %v4875 = vsel %vm581, %v4860, %v4868
        %v4876 = vsel %vm581, %v4862, %v4870
        %v4877 = vsel %vm581, %v4864, %v4872
        %v4878 = vsel %vm581, %v4866, %v4874
        %v4879 = vsel %vm581, %v4868, %v4860
        %v4880 = vsel %vm581, %v4870, %v4862
        %v4881 = vsel %vm581, %v4872, %v4864
        %v4882 = vsel %vm581, %v4874, %v4866
        %v4883 = vsel %vm586, %v4879, 0.0
        %v4884 = vsel %vm587, %v4875, 0.0
        %v4885 = vsel %vm586, %v4880, 0.0
        %v4886 = vsel %vm587, %v4876, 0.0
        %v4887 = vsel %vm586, %v4881, 0.0
        %v4888 = vsel %vm587, %v4877, 0.0
        %v4889 = vsel %vm586, %v4882, 0.0
        %v4890 = vsel %vm587, %v4878, 0.0
        %v4891 = vld [vmem:[%s1524] sm:$0xf]
        %v4892 = vld [vmem:[%s1524 + $0x4] sm:$0xf]
        %v4893 = vpack.c.bf16 %v4885, %v4883
        %v4894 = vpack.c.bf16 %v4886, %v4884
        %v4895 = vpack.c.bf16 %v4889, %v4887
        %v4896 = vpack.c.bf16 %v4890, %v4888
        %v4899 = vunpack.c.l.b16 %v4891
        %v4900 = vunpack.c.l.b16 %v4892
        %v4901 = vpack.c.b16 %v4900, %v4899
        %v4903 = vsel %vm1300, %v4901, 0
        %4905 = vmatprep.subr.bf16.mxu0 %v4894
        %4906 = vmatpush1.bf16.msra.mxu0 %v4893
        %4907 = vmatprep.subr.bf16.mxu0 %v4896
        %4908 = vmatpush1.bf16.msra.mxu0 %v4895
        %4909 = vmatprep.subr.bf16.mxu0 0
        %4910 = vmatpush1.bf16.msra.mxu0 0
        %4911 = vmatprep.subr.bf16.mxu0 0
        %4912 = vmatpush1.bf16.msra.mxu0 0
        %4913 = vmatprep.subr.bf16.mxu0 0
        %4914 = vmatpush1.bf16.msra.mxu0 0
        %4915 = vmatprep.subr.bf16.mxu0 0
        %4916 = vmatpush1.bf16.msra.mxu0 0
        %4917 = vmatprep.subr.bf16.mxu0 0
        %4918 = vmatpush1.bf16.msra.mxu0 0
        %4919 = vmatprep.subr.bf16.mxu0 0
        %4920 = vmatpush1.bf16.msra.mxu0 0
        %4921 = vmatprep.subr.bf16.mxu0 0
        %4922 = vmatpush1.bf16.msra.mxu0 0
        %4923 = vmatprep.subr.bf16.mxu0 0
        %4924 = vmatpush1.bf16.msra.mxu0 0
        %4925 = vmatprep.subr.bf16.mxu0 0
        %4926 = vmatpush1.bf16.msra.mxu0 0
        %4927 = vmatprep.subr.bf16.mxu0 0
        %4928 = vmatpush1.bf16.msra.mxu0 0
        %4929 = vmatprep.subr.bf16.mxu0 0
        %4930 = vmatpush1.bf16.msra.mxu0 0
        %4931 = vmatprep.subr.bf16.mxu0 0
        %4932 = vmatpush1.bf16.msra.mxu0 0
        %4933 = vmatprep.subr.bf16.mxu0 0
        %4934 = vmatpush1.bf16.msra.mxu0 0
        %4935 = vmatprep.subr.bf16.mxu0 0
        %4936 = vmatpush1.bf16.msra.mxu0 0
        %4937 = vmatprep.mubr.bf16.mxu0 0
        %4938 = vmatmul.mubr.bf16.gmra.mrb[0].mxu0 %v4903
        %v4939 = vpop.f32.mrb[0].mxu0
        %v4940 = vadd.f32 0.0, %v4939
        %v4941 = vpop.f32.mrb[0].mxu0
        %v4942 = vadd.f32 0.0, %v4941
        %v4943 = vpop.f32.mrb[0].mxu0
        %v4944 = vadd.f32 0.0, %v4943
        %v4945 = vpop.f32.mrb[0].mxu0
        %v4946 = vadd.f32 0.0, %v4945
        %4947 = vdwg.mxu0
        %v4948 = vadd.f32 %v4855, %v4940
        %v4949 = vadd.f32 %v4856, %v4942
        %v4950 = vadd.f32 %v4857, %v4944
        %v4951 = vadd.f32 %v4858, %v4946
        %v4952 = vld [vmem:[%s1586] sm:$0xf]
        %v4953 = vld [vmem:[%s1586 + $0x4] sm:$0xf]
        %v4954 = vpack.c.bf16 %v4582, %v4580
        %v4955 = vpack.c.bf16 %v4583, %v4581
        %v4956 = vpack.c.bf16 %v4586, %v4584
        %v4957 = vpack.c.bf16 %v4587, %v4585
        %v4960 = vunpack.c.l.b16 %v4952
        %v4961 = vunpack.c.l.b16 %v4953
        %v4962 = vpack.c.b16 %v4961, %v4960
        %v4964 = vsel %vm1300, %v4962, 0
        %4966 = vmatprep.subr.bf16.mxu0 %v4955
        %4967 = vmatpush1.bf16.msra.mxu0 %v4954
        %4968 = vmatprep.subr.bf16.mxu0 %v4957
        %4969 = vmatpush1.bf16.msra.mxu0 %v4956
        %4970 = vmatprep.subr.bf16.mxu0 0
        %4971 = vmatpush1.bf16.msra.mxu0 0
        %4972 = vmatprep.subr.bf16.mxu0 0
        %4973 = vmatpush1.bf16.msra.mxu0 0
        %4974 = vmatprep.subr.bf16.mxu0 0
        %4975 = vmatpush1.bf16.msra.mxu0 0
        %4976 = vmatprep.subr.bf16.mxu0 0
        %4977 = vmatpush1.bf16.msra.mxu0 0
        %4978 = vmatprep.subr.bf16.mxu0 0
        %4979 = vmatpush1.bf16.msra.mxu0 0
        %4980 = vmatprep.subr.bf16.mxu0 0
        %4981 = vmatpush1.bf16.msra.mxu0 0
        %4982 = vmatprep.subr.bf16.mxu0 0
        %4983 = vmatpush1.bf16.msra.mxu0 0
        %4984 = vmatprep.subr.bf16.mxu0 0
        %4985 = vmatpush1.bf16.msra.mxu0 0
        %4986 = vmatprep.subr.bf16.mxu0 0
        %4987 = vmatpush1.bf16.msra.mxu0 0
        %4988 = vmatprep.subr.bf16.mxu0 0
        %4989 = vmatpush1.bf16.msra.mxu0 0
        %4990 = vmatprep.subr.bf16.mxu0 0
        %4991 = vmatpush1.bf16.msra.mxu0 0
        %4992 = vmatprep.subr.bf16.mxu0 0
        %4993 = vmatpush1.bf16.msra.mxu0 0
        %4994 = vmatprep.subr.bf16.mxu0 0
        %4995 = vmatpush1.bf16.msra.mxu0 0
        %4996 = vmatprep.subr.bf16.mxu0 0
        %4997 = vmatpush1.bf16.msra.mxu0 0
        %4998 = vmatprep.mubr.bf16.mxu0 0
        %4999 = vmatmul.mubr.bf16.gmra.mrb[0].mxu0 %v4964
        %v5000 = vpop.f32.mrb[0].mxu0
        %v5001 = vadd.f32 0.0, %v5000
        %v5002 = vpop.f32.mrb[0].mxu0
        %v5003 = vadd.f32 0.0, %v5002
        %v5004 = vpop.f32.mrb[0].mxu0
        %v5005 = vadd.f32 0.0, %v5004
        %v5006 = vpop.f32.mrb[0].mxu0
        %v5007 = vadd.f32 0.0, %v5006
        %5008 = vdwg.mxu0
        %v5009 = vadd.f32 %v4948, %v5001
        %v5010 = vadd.f32 %v4949, %v5003
        %v5011 = vadd.f32 %v4950, %v5005
        %v5012 = vadd.f32 %v4951, %v5007
        %5013 = vrot.lane.b32.xlu0 %v4580, 127
        %v5014 = vpop.permute.xlu0 %5013
        %5015 = vrot.lane.b32.xlu0 %v4582, 127
        %v5016 = vpop.permute.xlu0 %5015
        %5017 = vrot.lane.b32.xlu0 %v4584, 127
        %v5018 = vpop.permute.xlu0 %5017
        %5019 = vrot.lane.b32.xlu0 %v4586, 127
        %v5020 = vpop.permute.xlu0 %5019
        %5021 = vrot.lane.b32.xlu0 %v4581, 127
        %v5022 = vpop.permute.xlu0 %5021
        %5023 = vrot.lane.b32.xlu0 %v4583, 127
        %v5024 = vpop.permute.xlu0 %5023
        %5025 = vrot.lane.b32.xlu0 %v4585, 127
        %v5026 = vpop.permute.xlu0 %5025
        %5027 = vrot.lane.b32.xlu0 %v4587, 127
        %v5028 = vpop.permute.xlu0 %5027
        %v5029 = vsel %vm774, %v5014, %v5022
        %v5030 = vsel %vm774, %v5016, %v5024
        %v5031 = vsel %vm774, %v5018, %v5026
        %v5032 = vsel %vm774, %v5020, %v5028
        %v5033 = vsel %vm774, %v5022, %v5014
        %v5034 = vsel %vm774, %v5024, %v5016
        %v5035 = vsel %vm774, %v5026, %v5018
        %v5036 = vsel %vm774, %v5028, %v5020
        %v5037 = vsel %vm779, %v5029, 0.0
        %v5038 = vsel %vm780, %v5033, 0.0
        %v5039 = vsel %vm779, %v5030, 0.0
        %v5040 = vsel %vm780, %v5034, 0.0
        %v5041 = vsel %vm779, %v5031, 0.0
        %v5042 = vsel %vm780, %v5035, 0.0
        %v5043 = vsel %vm779, %v5032, 0.0
        %v5044 = vsel %vm780, %v5036, 0.0
        %v5045 = vld [vmem:[%s1680] sm:$0xf]
        %v5046 = vld [vmem:[%s1680 + $0x4] sm:$0xf]
        %v5047 = vpack.c.bf16 %v5039, %v5037
        %v5048 = vpack.c.bf16 %v5040, %v5038
        %v5049 = vpack.c.bf16 %v5043, %v5041
        %v5050 = vpack.c.bf16 %v5044, %v5042
        %v5053 = vunpack.c.l.b16 %v5045
        %v5054 = vunpack.c.l.b16 %v5046
        %v5055 = vpack.c.b16 %v5054, %v5053
        %v5057 = vsel %vm1300, %v5055, 0
        %5059 = vmatprep.subr.bf16.mxu0 %v5048
        %5060 = vmatpush1.bf16.msra.mxu0 %v5047
        %5061 = vmatprep.subr.bf16.mxu0 %v5050
        %5062 = vmatpush1.bf16.msra.mxu0 %v5049
        %5063 = vmatprep.subr.bf16.mxu0 0
        %5064 = vmatpush1.bf16.msra.mxu0 0
        %5065 = vmatprep.subr.bf16.mxu0 0
        %5066 = vmatpush1.bf16.msra.mxu0 0
        %5067 = vmatprep.subr.bf16.mxu0 0
        %5068 = vmatpush1.bf16.msra.mxu0 0
        %5069 = vmatprep.subr.bf16.mxu0 0
        %5070 = vmatpush1.bf16.msra.mxu0 0
        %5071 = vmatprep.subr.bf16.mxu0 0
        %5072 = vmatpush1.bf16.msra.mxu0 0
        %5073 = vmatprep.subr.bf16.mxu0 0
        %5074 = vmatpush1.bf16.msra.mxu0 0
        %5075 = vmatprep.subr.bf16.mxu0 0
        %5076 = vmatpush1.bf16.msra.mxu0 0
        %5077 = vmatprep.subr.bf16.mxu0 0
        %5078 = vmatpush1.bf16.msra.mxu0 0
        %5079 = vmatprep.subr.bf16.mxu0 0
        %5080 = vmatpush1.bf16.msra.mxu0 0
        %5081 = vmatprep.subr.bf16.mxu0 0
        %5082 = vmatpush1.bf16.msra.mxu0 0
        %5083 = vmatprep.subr.bf16.mxu0 0
        %5084 = vmatpush1.bf16.msra.mxu0 0
        %5085 = vmatprep.subr.bf16.mxu0 0
        %5086 = vmatpush1.bf16.msra.mxu0 0
        %5087 = vmatprep.subr.bf16.mxu0 0
        %5088 = vmatpush1.bf16.msra.mxu0 0
        %5089 = vmatprep.subr.bf16.mxu0 0
        %5090 = vmatpush1.bf16.msra.mxu0 0
        %5091 = vmatprep.mubr.bf16.mxu0 0
        %5092 = vmatmul.mubr.bf16.gmra.mrb[0].mxu0 %v5057
        %v5093 = vpop.f32.mrb[0].mxu0
        %v5094 = vadd.f32 0.0, %v5093
        %v5095 = vpop.f32.mrb[0].mxu0
        %v5096 = vadd.f32 0.0, %v5095
        %v5097 = vpop.f32.mrb[0].mxu0
        %v5098 = vadd.f32 0.0, %v5097
        %v5099 = vpop.f32.mrb[0].mxu0
        %v5100 = vadd.f32 0.0, %v5099
        %5101 = vdwg.mxu0
        %v5102 = vadd.f32 %v5009, %v5094
        %v5103 = vadd.f32 %v5010, %v5096
        %v5104 = vadd.f32 %v5011, %v5098
        %v5105 = vadd.f32 %v5012, %v5100
        %5106 = vrot.lane.b32.xlu0 %v4580, 113
        %v5107 = vpop.permute.xlu0 %5106
        %5108 = vrot.lane.b32.xlu0 %v4582, 113
        %v5109 = vpop.permute.xlu0 %5108
        %5110 = vrot.lane.b32.xlu0 %v4584, 113
        %v5111 = vpop.permute.xlu0 %5110
        %5112 = vrot.lane.b32.xlu0 %v4586, 113
        %v5113 = vpop.permute.xlu0 %5112
        %5114 = vrot.lane.b32.xlu0 %v4581, 113
        %v5115 = vpop.permute.xlu0 %5114
        %5116 = vrot.lane.b32.xlu0 %v4583, 113
        %v5117 = vpop.permute.xlu0 %5116
        %5118 = vrot.lane.b32.xlu0 %v4585, 113
        %v5119 = vpop.permute.xlu0 %5118
        %5120 = vrot.lane.b32.xlu0 %v4587, 113
        %v5121 = vpop.permute.xlu0 %5120
        %v5122 = vsel %vm877, %v5107, %v5115
        %v5123 = vsel %vm877, %v5109, %v5117
        %v5124 = vsel %vm877, %v5111, %v5119
        %v5125 = vsel %vm877, %v5113, %v5121
        %v5126 = vsel %vm877, %v5115, %v5107
        %v5127 = vsel %vm877, %v5117, %v5109
        %v5128 = vsel %vm877, %v5119, %v5111
        %v5129 = vsel %vm877, %v5121, %v5113
        %v5130 = vsel %vm882, %v5122, 0.0
        %v5131 = vsel %vm883, %v5126, 0.0
        %v5132 = vsel %vm882, %v5123, 0.0
        %v5133 = vsel %vm883, %v5127, 0.0
        %v5134 = vsel %vm882, %v5124, 0.0
        %v5135 = vsel %vm883, %v5128, 0.0
        %v5136 = vsel %vm882, %v5125, 0.0
        %v5137 = vsel %vm883, %v5129, 0.0
        %v5138 = vld [vmem:[%s1774] sm:$0xf]
        %v5139 = vld [vmem:[%s1774 + $0x4] sm:$0xf]
        %v5140 = vpack.c.bf16 %v5132, %v5130
        %v5141 = vpack.c.bf16 %v5133, %v5131
        %v5142 = vpack.c.bf16 %v5136, %v5134
        %v5143 = vpack.c.bf16 %v5137, %v5135
        %v5146 = vunpack.c.l.b16 %v5138
        %v5147 = vunpack.c.l.b16 %v5139
        %v5148 = vpack.c.b16 %v5147, %v5146
        %v5150 = vsel %vm1300, %v5148, 0
        %5152 = vmatprep.subr.bf16.mxu0 %v5141
        %5153 = vmatpush1.bf16.msra.mxu0 %v5140
        %5154 = vmatprep.subr.bf16.mxu0 %v5143
        %5155 = vmatpush1.bf16.msra.mxu0 %v5142
        %5156 = vmatprep.subr.bf16.mxu0 0
        %5157 = vmatpush1.bf16.msra.mxu0 0
        %5158 = vmatprep.subr.bf16.mxu0 0
        %5159 = vmatpush1.bf16.msra.mxu0 0
        %5160 = vmatprep.subr.bf16.mxu0 0
        %5161 = vmatpush1.bf16.msra.mxu0 0
        %5162 = vmatprep.subr.bf16.mxu0 0
        %5163 = vmatpush1.bf16.msra.mxu0 0
        %5164 = vmatprep.subr.bf16.mxu0 0
        %5165 = vmatpush1.bf16.msra.mxu0 0
        %5166 = vmatprep.subr.bf16.mxu0 0
        %5167 = vmatpush1.bf16.msra.mxu0 0
        %5168 = vmatprep.subr.bf16.mxu0 0
        %5169 = vmatpush1.bf16.msra.mxu0 0
        %5170 = vmatprep.subr.bf16.mxu0 0
        %5171 = vmatpush1.bf16.msra.mxu0 0
        %5172 = vmatprep.subr.bf16.mxu0 0
        %5173 = vmatpush1.bf16.msra.mxu0 0
        %5174 = vmatprep.subr.bf16.mxu0 0
        %5175 = vmatpush1.bf16.msra.mxu0 0
        %5176 = vmatprep.subr.bf16.mxu0 0
        %5177 = vmatpush1.bf16.msra.mxu0 0
        %5178 = vmatprep.subr.bf16.mxu0 0
        %5179 = vmatpush1.bf16.msra.mxu0 0
        %5180 = vmatprep.subr.bf16.mxu0 0
        %5181 = vmatpush1.bf16.msra.mxu0 0
        %5182 = vmatprep.subr.bf16.mxu0 0
        %5183 = vmatpush1.bf16.msra.mxu0 0
        %5184 = vmatprep.mubr.bf16.mxu0 0
        %5185 = vmatmul.mubr.bf16.gmra.mrb[0].mxu0 %v5150
        %v5186 = vpop.f32.mrb[0].mxu0
        %v5187 = vadd.f32 0.0, %v5186
        %v5188 = vpop.f32.mrb[0].mxu0
        %v5189 = vadd.f32 0.0, %v5188
        %v5190 = vpop.f32.mrb[0].mxu0
        %v5191 = vadd.f32 0.0, %v5190
        %v5192 = vpop.f32.mrb[0].mxu0
        %v5193 = vadd.f32 0.0, %v5192
        %5194 = vdwg.mxu0
        %v5195 = vadd.f32 %v5102, %v5187
        %v5196 = vadd.f32 %v5103, %v5189
        %v5197 = vadd.f32 %v5104, %v5191
        %v5198 = vadd.f32 %v5105, %v5193
        %5199 = vrot.lane.b32.xlu0 %v4580, 112
        %v5200 = vpop.permute.xlu0 %5199
        %5201 = vrot.lane.b32.xlu0 %v4582, 112
        %v5202 = vpop.permute.xlu0 %5201
        %5203 = vrot.lane.b32.xlu0 %v4584, 112
        %v5204 = vpop.permute.xlu0 %5203
        %5205 = vrot.lane.b32.xlu0 %v4586, 112
        %v5206 = vpop.permute.xlu0 %5205
        %5207 = vrot.lane.b32.xlu0 %v4581, 112
        %v5208 = vpop.permute.xlu0 %5207
        %5209 = vrot.lane.b32.xlu0 %v4583, 112
        %v5210 = vpop.permute.xlu0 %5209
        %5211 = vrot.lane.b32.xlu0 %v4585, 112
        %v5212 = vpop.permute.xlu0 %5211
        %5213 = vrot.lane.b32.xlu0 %v4587, 112
        %v5214 = vpop.permute.xlu0 %5213
        %v5215 = vsel %vm980, %v5200, %v5208
        %v5216 = vsel %vm980, %v5202, %v5210
        %v5217 = vsel %vm980, %v5204, %v5212
        %v5218 = vsel %vm980, %v5206, %v5214
        %v5219 = vsel %vm980, %v5208, %v5200
        %v5220 = vsel %vm980, %v5210, %v5202
        %v5221 = vsel %vm980, %v5212, %v5204
        %v5222 = vsel %vm980, %v5214, %v5206
        %v5223 = vsel %vm985, %v5215, 0.0
        %v5224 = vsel %vm986, %v5219, 0.0
        %v5225 = vsel %vm985, %v5216, 0.0
        %v5226 = vsel %vm986, %v5220, 0.0
        %v5227 = vsel %vm985, %v5217, 0.0
        %v5228 = vsel %vm986, %v5221, 0.0
        %v5229 = vsel %vm985, %v5218, 0.0
        %v5230 = vsel %vm986, %v5222, 0.0
        %v5231 = vld [vmem:[%s1868] sm:$0xf]
        %v5232 = vld [vmem:[%s1868 + $0x4] sm:$0xf]
        %v5233 = vpack.c.bf16 %v5225, %v5223
        %v5234 = vpack.c.bf16 %v5226, %v5224
        %v5235 = vpack.c.bf16 %v5229, %v5227
        %v5236 = vpack.c.bf16 %v5230, %v5228
        %v5239 = vunpack.c.l.b16 %v5231
        %v5240 = vunpack.c.l.b16 %v5232
        %v5241 = vpack.c.b16 %v5240, %v5239
        %v5243 = vsel %vm1300, %v5241, 0
        %5245 = vmatprep.subr.bf16.mxu0 %v5234
        %5246 = vmatpush1.bf16.msra.mxu0 %v5233
        %5247 = vmatprep.subr.bf16.mxu0 %v5236
        %5248 = vmatpush1.bf16.msra.mxu0 %v5235
        %5249 = vmatprep.subr.bf16.mxu0 0
        %5250 = vmatpush1.bf16.msra.mxu0 0
        %5251 = vmatprep.subr.bf16.mxu0 0
        %5252 = vmatpush1.bf16.msra.mxu0 0
        %5253 = vmatprep.subr.bf16.mxu0 0
        %5254 = vmatpush1.bf16.msra.mxu0 0
        %5255 = vmatprep.subr.bf16.mxu0 0
        %5256 = vmatpush1.bf16.msra.mxu0 0
        %5257 = vmatprep.subr.bf16.mxu0 0
        %5258 = vmatpush1.bf16.msra.mxu0 0
        %5259 = vmatprep.subr.bf16.mxu0 0
        %5260 = vmatpush1.bf16.msra.mxu0 0
        %5261 = vmatprep.subr.bf16.mxu0 0
        %5262 = vmatpush1.bf16.msra.mxu0 0
        %5263 = vmatprep.subr.bf16.mxu0 0
        %5264 = vmatpush1.bf16.msra.mxu0 0
        %5265 = vmatprep.subr.bf16.mxu0 0
        %5266 = vmatpush1.bf16.msra.mxu0 0
        %5267 = vmatprep.subr.bf16.mxu0 0
        %5268 = vmatpush1.bf16.msra.mxu0 0
        %5269 = vmatprep.subr.bf16.mxu0 0
        %5270 = vmatpush1.bf16.msra.mxu0 0
        %5271 = vmatprep.subr.bf16.mxu0 0
        %5272 = vmatpush1.bf16.msra.mxu0 0
        %5273 = vmatprep.subr.bf16.mxu0 0
        %5274 = vmatpush1.bf16.msra.mxu0 0
        %5275 = vmatprep.subr.bf16.mxu0 0
        %5276 = vmatpush1.bf16.msra.mxu0 0
        %5277 = vmatprep.mubr.bf16.mxu0 0
        %5278 = vmatmul.mubr.bf16.gmra.mrb[0].mxu0 %v5243
        %v5279 = vpop.f32.mrb[0].mxu0
        %v5280 = vadd.f32 0.0, %v5279
        %v5281 = vpop.f32.mrb[0].mxu0
        %v5282 = vadd.f32 0.0, %v5281
        %v5283 = vpop.f32.mrb[0].mxu0
        %v5284 = vadd.f32 0.0, %v5283
        %v5285 = vpop.f32.mrb[0].mxu0
        %v5286 = vadd.f32 0.0, %v5285
        %5287 = vdwg.mxu0
        %v5288 = vadd.f32 %v5195, %v5280
        %v5289 = vadd.f32 %v5196, %v5282
        %v5290 = vadd.f32 %v5197, %v5284
        %v5291 = vadd.f32 %v5198, %v5286
        %5292 = vrot.lane.b32.xlu0 %v4580, 111
        %v5293 = vpop.permute.xlu0 %5292
        %5294 = vrot.lane.b32.xlu0 %v4582, 111
        %v5295 = vpop.permute.xlu0 %5294
        %5296 = vrot.lane.b32.xlu0 %v4584, 111
        %v5297 = vpop.permute.xlu0 %5296
        %5298 = vrot.lane.b32.xlu0 %v4586, 111
        %v5299 = vpop.permute.xlu0 %5298
        %5300 = vrot.lane.b32.xlu0 %v4581, 111
        %v5301 = vpop.permute.xlu0 %5300
        %5302 = vrot.lane.b32.xlu0 %v4583, 111
        %v5303 = vpop.permute.xlu0 %5302
        %5304 = vrot.lane.b32.xlu0 %v4585, 111
        %v5305 = vpop.permute.xlu0 %5304
        %5306 = vrot.lane.b32.xlu0 %v4587, 111
        %v5307 = vpop.permute.xlu0 %5306
        %v5308 = vsel %vm1083, %v5293, %v5301
        %v5309 = vsel %vm1083, %v5295, %v5303
        %v5310 = vsel %vm1083, %v5297, %v5305
        %v5311 = vsel %vm1083, %v5299, %v5307
        %v5312 = vsel %vm1083, %v5301, %v5293
        %v5313 = vsel %vm1083, %v5303, %v5295
        %v5314 = vsel %vm1083, %v5305, %v5297
        %v5315 = vsel %vm1083, %v5307, %v5299
        %v5316 = vsel %vm1088, %v5308, 0.0
        %v5317 = vsel %vm1089, %v5312, 0.0
        %v5318 = vsel %vm1088, %v5309, 0.0
        %v5319 = vsel %vm1089, %v5313, 0.0
        %v5320 = vsel %vm1088, %v5310, 0.0
        %v5321 = vsel %vm1089, %v5314, 0.0
        %v5322 = vsel %vm1088, %v5311, 0.0
        %v5323 = vsel %vm1089, %v5315, 0.0
        %v5324 = vld [vmem:[%s1962] sm:$0xf]
        %v5325 = vld [vmem:[%s1962 + $0x4] sm:$0xf]
        %v5326 = vpack.c.bf16 %v5318, %v5316
        %v5327 = vpack.c.bf16 %v5319, %v5317
        %v5328 = vpack.c.bf16 %v5322, %v5320
        %v5329 = vpack.c.bf16 %v5323, %v5321
        %v5332 = vunpack.c.l.b16 %v5324
        %v5333 = vunpack.c.l.b16 %v5325
        %v5334 = vpack.c.b16 %v5333, %v5332
        %v5336 = vsel %vm1300, %v5334, 0
        %5338 = vmatprep.subr.bf16.mxu0 %v5327
        %5339 = vmatpush1.bf16.msra.mxu0 %v5326
        %5340 = vmatprep.subr.bf16.mxu0 %v5329
        %5341 = vmatpush1.bf16.msra.mxu0 %v5328
        %5342 = vmatprep.subr.bf16.mxu0 0
        %5343 = vmatpush1.bf16.msra.mxu0 0
        %5344 = vmatprep.subr.bf16.mxu0 0
        %5345 = vmatpush1.bf16.msra.mxu0 0
        %5346 = vmatprep.subr.bf16.mxu0 0
        %5347 = vmatpush1.bf16.msra.mxu0 0
        %5348 = vmatprep.subr.bf16.mxu0 0
        %5349 = vmatpush1.bf16.msra.mxu0 0
        %5350 = vmatprep.subr.bf16.mxu0 0
        %5351 = vmatpush1.bf16.msra.mxu0 0
        %5352 = vmatprep.subr.bf16.mxu0 0
        %5353 = vmatpush1.bf16.msra.mxu0 0
        %5354 = vmatprep.subr.bf16.mxu0 0
        %5355 = vmatpush1.bf16.msra.mxu0 0
        %5356 = vmatprep.subr.bf16.mxu0 0
        %5357 = vmatpush1.bf16.msra.mxu0 0
        %5358 = vmatprep.subr.bf16.mxu0 0
        %5359 = vmatpush1.bf16.msra.mxu0 0
        %5360 = vmatprep.subr.bf16.mxu0 0
        %5361 = vmatpush1.bf16.msra.mxu0 0
        %5362 = vmatprep.subr.bf16.mxu0 0
        %5363 = vmatpush1.bf16.msra.mxu0 0
        %5364 = vmatprep.subr.bf16.mxu0 0
        %5365 = vmatpush1.bf16.msra.mxu0 0
        %5366 = vmatprep.subr.bf16.mxu0 0
        %5367 = vmatpush1.bf16.msra.mxu0 0
        %5368 = vmatprep.subr.bf16.mxu0 0
        %5369 = vmatpush1.bf16.msra.mxu0 0
        %5370 = vmatprep.mubr.bf16.mxu0 0
        %5371 = vmatmul.mubr.bf16.gmra.mrb[0].mxu0 %v5336
        %v5372 = vpop.f32.mrb[0].mxu0
        %v5373 = vadd.f32 0.0, %v5372
        %v5374 = vpop.f32.mrb[0].mxu0
        %v5375 = vadd.f32 0.0, %v5374
        %v5376 = vpop.f32.mrb[0].mxu0
        %v5377 = vadd.f32 0.0, %v5376
        %v5378 = vpop.f32.mrb[0].mxu0
        %v5379 = vadd.f32 0.0, %v5378
        %5380 = vdwg.mxu0
        %v5381 = vadd.f32 %v5288, %v5373
        %v5382 = vadd.f32 %v5289, %v5375
        %v5383 = vadd.f32 %v5290, %v5377
        %v5384 = vadd.f32 %v5291, %v5379
        %v5385 = vadd.f32 %v5381, %v2027
        %v5386 = vadd.f32 %v5382, %v2027
        %v5387 = vadd.f32 %v5383, %v2032
        %v5388 = vadd.f32 %v5384, %v2032
        %s5389 = scalar_lea.vmem %s220, 64 [#allocation2]
        %5390 = vst [vmem:[%s5389] sm:$0xff] %v5385
        %5391 = vst [vmem:[%s5389 + $0x8] sm:$0xff] %v5386
        %5392 = vst [vmem:[%s5389 + $0x10] sm:$0xff] %v5387
        %5393 = vst [vmem:[%s5389 + $0x18] sm:$0xff] %v5388
        %s5394 = scalar_lea.vmem %s226, 24
        %v5395 = vld [vmem:[%s5394] sm:$0xff]
        %v5397 = vcombine.high %v5395, %v5395
        %5399 = vrot.lane.b32.xlu0 %v5395, 17
        %v5400 = vpop.permute.xlu0 %5399
        %5401 = vrot.lane.b32.xlu0 %v5397, 17
        %v5402 = vpop.permute.xlu0 %5401
        %v5403 = vsel %vm287, %v5400, %v5402
        %v5404 = vsel %vm287, %v5402, %v5400
        %v5405 = vsel %vm292, %v5404, 0.0
        %v5406 = vsel %vm293, %v5403, 0.0
        %v5407 = vld [vmem:[%s1] sm:$0xf]
        %v5408 = vld [vmem:[%s1 + $0x4] sm:$0xf]
        %v5409 = vld [vmem:[%s1 + $0x8] sm:$0xf]
        %v5410 = vld [vmem:[%s1 + $0xc] sm:$0xf]
        %v5411 = vpack.c.bf16 %v5405, %v5405
        %v5412 = vpack.c.bf16 %v5406, %v5406
        %5413 = vrot.lane.b32.xlu0 %v5395, 16
        %v5414 = vpop.permute.xlu0 %5413
        %5415 = vrot.lane.b32.xlu0 %v5397, 16
        %v5416 = vpop.permute.xlu0 %5415
        %v5417 = vsel %vm306, %v5414, %v5416
        %v5418 = vsel %vm306, %v5416, %v5414
        %v5419 = vsel %vm311, %v5418, 0.0
        %v5420 = vsel %vm312, %v5417, 0.0
        %v5421 = vld [vmem:[%s315] sm:$0xf]
        %v5422 = vld [vmem:[%s315 + $0x4] sm:$0xf]
        %v5423 = vld [vmem:[%s315 + $0x8] sm:$0xf]
        %v5424 = vld [vmem:[%s315 + $0xc] sm:$0xf]
        %v5425 = vpack.c.bf16 %v5419, %v5419
        %v5426 = vpack.c.bf16 %v5420, %v5420
        %v5431 = vunpack.c.l.b16 %v5421
        %v5432 = vunpack.c.l.b16 %v5422
        %v5433 = vunpack.c.l.b16 %v5423
        %v5434 = vunpack.c.l.b16 %v5424
        %v5435 = vpack.c.b16 %v5432, %v5431
        %v5436 = vpack.c.b16 %v5434, %v5433
        %v5438 = vsel %vm332, %v5435, 0
        %v5441 = vsel %vm332, %v5436, 0
        %v5444 = vsel %vm339, %v5425, 0
        %v5447 = vsel %vm339, %v5426, 0
        %5449 = vmatprep.subr.bf16.mxu0 %v5447
        %5450 = vmatpush1.bf16.msra.mxu0 %v5444
        %5451 = vmatprep.subr.bf16.mxu0 0
        %5452 = vmatpush1.bf16.msra.mxu0 0
        %5453 = vmatprep.subr.bf16.mxu0 0
        %5454 = vmatpush1.bf16.msra.mxu0 0
        %5455 = vmatprep.subr.bf16.mxu0 0
        %5456 = vmatpush1.bf16.msra.mxu0 0
        %5457 = vmatprep.subr.bf16.mxu0 0
        %5458 = vmatpush1.bf16.msra.mxu0 0
        %5459 = vmatprep.subr.bf16.mxu0 0
        %5460 = vmatpush1.bf16.msra.mxu0 0
        %5461 = vmatprep.subr.bf16.mxu0 0
        %5462 = vmatpush1.bf16.msra.mxu0 0
        %5463 = vmatprep.subr.bf16.mxu0 0
        %5464 = vmatpush1.bf16.msra.mxu0 0
        %5465 = vmatprep.subr.bf16.mxu0 0
        %5466 = vmatpush1.bf16.msra.mxu0 0
        %5467 = vmatprep.subr.bf16.mxu0 0
        %5468 = vmatpush1.bf16.msra.mxu0 0
        %5469 = vmatprep.subr.bf16.mxu0 0
        %5470 = vmatpush1.bf16.msra.mxu0 0
        %5471 = vmatprep.subr.bf16.mxu0 0
        %5472 = vmatpush1.bf16.msra.mxu0 0
        %5473 = vmatprep.subr.bf16.mxu0 0
        %5474 = vmatpush1.bf16.msra.mxu0 0
        %5475 = vmatprep.subr.bf16.mxu0 0
        %5476 = vmatpush1.bf16.msra.mxu0 0
        %5477 = vmatprep.subr.bf16.mxu0 0
        %5478 = vmatpush1.bf16.msra.mxu0 0
        %5479 = vmatprep.subr.bf16.mxu0 0
        %5480 = vmatpush1.bf16.msra.mxu0 0
        %5481 = vmatprep.mubr.bf16.mxu0 0
        %5482 = vmatmul.mubr.bf16.gmra.mrb[0].mxu0 %v5438
        %v5483 = vpop.f32.mrb[0].mxu0
        %v5484 = vadd.f32 0.0, %v5483
        %v5485 = vpop.f32.mrb[0].mxu0
        %v5486 = vadd.f32 0.0, %v5485
        %v5487 = vpop.f32.mrb[0].mxu0
        %v5488 = vadd.f32 0.0, %v5487
        %v5489 = vpop.f32.mrb[0].mxu0
        %v5490 = vadd.f32 0.0, %v5489
        %5491 = vmatprep.mubr.bf16.mxu0 0
        %5492 = vmatmul.mubr.bf16.gmra.mrb[0].mxu0 %v5441
        %v5493 = vpop.f32.mrb[0].mxu0
        %v5494 = vadd.f32 0.0, %v5493
        %v5495 = vpop.f32.mrb[0].mxu0
        %v5496 = vadd.f32 0.0, %v5495
        %v5497 = vpop.f32.mrb[0].mxu0
        %v5498 = vadd.f32 0.0, %v5497
        %v5499 = vpop.f32.mrb[0].mxu0
        %v5500 = vadd.f32 0.0, %v5499
        %5501 = vdwg.mxu0
        %v5506 = vunpack.c.l.b16 %v5407
        %v5507 = vunpack.c.l.b16 %v5408
        %v5508 = vunpack.c.l.b16 %v5409
        %v5509 = vunpack.c.l.b16 %v5410
        %v5510 = vpack.c.b16 %v5507, %v5506
        %v5511 = vpack.c.b16 %v5509, %v5508
        %v5513 = vsel %vm332, %v5510, 0
        %v5516 = vsel %vm332, %v5511, 0
        %v5519 = vsel %vm339, %v5411, 0
        %v5522 = vsel %vm339, %v5412, 0
        %5524 = vmatprep.subr.bf16.mxu0 %v5522
        %5525 = vmatpush1.bf16.msra.mxu0 %v5519
        %5526 = vmatprep.subr.bf16.mxu0 0
        %5527 = vmatpush1.bf16.msra.mxu0 0
        %5528 = vmatprep.subr.bf16.mxu0 0
        %5529 = vmatpush1.bf16.msra.mxu0 0
        %5530 = vmatprep.subr.bf16.mxu0 0
        %5531 = vmatpush1.bf16.msra.mxu0 0
        %5532 = vmatprep.subr.bf16.mxu0 0
        %5533 = vmatpush1.bf16.msra.mxu0 0
        %5534 = vmatprep.subr.bf16.mxu0 0
        %5535 = vmatpush1.bf16.msra.mxu0 0
        %5536 = vmatprep.subr.bf16.mxu0 0
        %5537 = vmatpush1.bf16.msra.mxu0 0
        %5538 = vmatprep.subr.bf16.mxu0 0
        %5539 = vmatpush1.bf16.msra.mxu0 0
        %5540 = vmatprep.subr.bf16.mxu0 0
        %5541 = vmatpush1.bf16.msra.mxu0 0
        %5542 = vmatprep.subr.bf16.mxu0 0
        %5543 = vmatpush1.bf16.msra.mxu0 0
        %5544 = vmatprep.subr.bf16.mxu0 0
        %5545 = vmatpush1.bf16.msra.mxu0 0
        %5546 = vmatprep.subr.bf16.mxu0 0
        %5547 = vmatpush1.bf16.msra.mxu0 0
        %5548 = vmatprep.subr.bf16.mxu0 0
        %5549 = vmatpush1.bf16.msra.mxu0 0
        %5550 = vmatprep.subr.bf16.mxu0 0
        %5551 = vmatpush1.bf16.msra.mxu0 0
        %5552 = vmatprep.subr.bf16.mxu0 0
        %5553 = vmatpush1.bf16.msra.mxu0 0
        %5554 = vmatprep.subr.bf16.mxu0 0
        %5555 = vmatpush1.bf16.msra.mxu0 0
        %5556 = vmatprep.mubr.bf16.mxu0 0
        %5557 = vmatmul.mubr.bf16.gmra.mrb[0].mxu0 %v5513
        %v5558 = vpop.f32.mrb[0].mxu0
        %v5559 = vadd.f32 %v5484, %v5558
        %v5560 = vpop.f32.mrb[0].mxu0
        %v5561 = vadd.f32 %v5486, %v5560
        %v5562 = vpop.f32.mrb[0].mxu0
        %v5563 = vadd.f32 %v5488, %v5562
        %v5564 = vpop.f32.mrb[0].mxu0
        %v5565 = vadd.f32 %v5490, %v5564
        %5566 = vmatprep.mubr.bf16.mxu0 0
        %5567 = vmatmul.mubr.bf16.gmra.mrb[0].mxu0 %v5516
        %v5568 = vpop.f32.mrb[0].mxu0
        %v5569 = vadd.f32 %v5494, %v5568
        %v5570 = vpop.f32.mrb[0].mxu0
        %v5571 = vadd.f32 %v5496, %v5570
        %v5572 = vpop.f32.mrb[0].mxu0
        %v5573 = vadd.f32 %v5498, %v5572
        %v5574 = vpop.f32.mrb[0].mxu0
        %v5575 = vadd.f32 %v5500, %v5574
        %5576 = vdwg.mxu0
        %5577 = vrot.lane.b32.xlu0 %v5395, 15
        %v5578 = vpop.permute.xlu0 %5577
        %5579 = vrot.lane.b32.xlu0 %v5397, 15
        %v5580 = vpop.permute.xlu0 %5579
        %v5581 = vsel %vm478, %v5578, %v5580
        %v5582 = vsel %vm478, %v5580, %v5578
        %v5583 = vsel %vm483, %v5582, 0.0
        %v5584 = vsel %vm484, %v5581, 0.0
        %v5585 = vld [vmem:[%s487] sm:$0xf]
        %v5586 = vld [vmem:[%s487 + $0x4] sm:$0xf]
        %v5587 = vld [vmem:[%s487 + $0x8] sm:$0xf]
        %v5588 = vld [vmem:[%s487 + $0xc] sm:$0xf]
        %v5589 = vpack.c.bf16 %v5583, %v5583
        %v5590 = vpack.c.bf16 %v5584, %v5584
        %v5595 = vunpack.c.l.b16 %v5585
        %v5596 = vunpack.c.l.b16 %v5586
        %v5597 = vunpack.c.l.b16 %v5587
        %v5598 = vunpack.c.l.b16 %v5588
        %v5599 = vpack.c.b16 %v5596, %v5595
        %v5600 = vpack.c.b16 %v5598, %v5597
        %v5602 = vsel %vm332, %v5599, 0
        %v5605 = vsel %vm332, %v5600, 0
        %v5608 = vsel %vm339, %v5589, 0
        %v5611 = vsel %vm339, %v5590, 0
        %5613 = vmatprep.subr.bf16.mxu0 %v5611
        %5614 = vmatpush1.bf16.msra.mxu0 %v5608
        %5615 = vmatprep.subr.bf16.mxu0 0
        %5616 = vmatpush1.bf16.msra.mxu0 0
        %5617 = vmatprep.subr.bf16.mxu0 0
        %5618 = vmatpush1.bf16.msra.mxu0 0
        %5619 = vmatprep.subr.bf16.mxu0 0
        %5620 = vmatpush1.bf16.msra.mxu0 0
        %5621 = vmatprep.subr.bf16.mxu0 0
        %5622 = vmatpush1.bf16.msra.mxu0 0
        %5623 = vmatprep.subr.bf16.mxu0 0
        %5624 = vmatpush1.bf16.msra.mxu0 0
        %5625 = vmatprep.subr.bf16.mxu0 0
        %5626 = vmatpush1.bf16.msra.mxu0 0
        %5627 = vmatprep.subr.bf16.mxu0 0
        %5628 = vmatpush1.bf16.msra.mxu0 0
        %5629 = vmatprep.subr.bf16.mxu0 0
        %5630 = vmatpush1.bf16.msra.mxu0 0
        %5631 = vmatprep.subr.bf16.mxu0 0
        %5632 = vmatpush1.bf16.msra.mxu0 0
        %5633 = vmatprep.subr.bf16.mxu0 0
        %5634 = vmatpush1.bf16.msra.mxu0 0
        %5635 = vmatprep.subr.bf16.mxu0 0
        %5636 = vmatpush1.bf16.msra.mxu0 0
        %5637 = vmatprep.subr.bf16.mxu0 0
        %5638 = vmatpush1.bf16.msra.mxu0 0
        %5639 = vmatprep.subr.bf16.mxu0 0
        %5640 = vmatpush1.bf16.msra.mxu0 0
        %5641 = vmatprep.subr.bf16.mxu0 0
        %5642 = vmatpush1.bf16.msra.mxu0 0
        %5643 = vmatprep.subr.bf16.mxu0 0
        %5644 = vmatpush1.bf16.msra.mxu0 0
        %5645 = vmatprep.mubr.bf16.mxu0 0
        %5646 = vmatmul.mubr.bf16.gmra.mrb[0].mxu0 %v5602
        %v5647 = vpop.f32.mrb[0].mxu0
        %v5648 = vadd.f32 0.0, %v5647
        %v5649 = vpop.f32.mrb[0].mxu0
        %v5650 = vadd.f32 0.0, %v5649
        %v5651 = vpop.f32.mrb[0].mxu0
        %v5652 = vadd.f32 0.0, %v5651
        %v5653 = vpop.f32.mrb[0].mxu0
        %v5654 = vadd.f32 0.0, %v5653
        %5655 = vmatprep.mubr.bf16.mxu0 0
        %5656 = vmatmul.mubr.bf16.gmra.mrb[0].mxu0 %v5605
        %v5657 = vpop.f32.mrb[0].mxu0
        %v5658 = vadd.f32 0.0, %v5657
        %v5659 = vpop.f32.mrb[0].mxu0
        %v5660 = vadd.f32 0.0, %v5659
        %v5661 = vpop.f32.mrb[0].mxu0
        %v5662 = vadd.f32 0.0, %v5661
        %v5663 = vpop.f32.mrb[0].mxu0
        %v5664 = vadd.f32 0.0, %v5663
        %5665 = vdwg.mxu0
        %v5666 = vadd.f32 %v5559, %v5648
        %v5667 = vadd.f32 %v5561, %v5650
        %v5668 = vadd.f32 %v5563, %v5652
        %v5669 = vadd.f32 %v5565, %v5654
        %v5670 = vadd.f32 %v5569, %v5658
        %v5671 = vadd.f32 %v5571, %v5660
        %v5672 = vadd.f32 %v5573, %v5662
        %v5673 = vadd.f32 %v5575, %v5664
        %5674 = vrot.lane.b32.xlu0 %v5395, 1
        %v5675 = vpop.permute.xlu0 %5674
        %5676 = vrot.lane.b32.xlu0 %v5397, 1
        %v5677 = vpop.permute.xlu0 %5676
        %v5678 = vsel %vm581, %v5675, %v5677
        %v5679 = vsel %vm581, %v5677, %v5675
        %v5680 = vsel %vm586, %v5679, 0.0
        %v5681 = vsel %vm587, %v5678, 0.0
        %v5682 = vld [vmem:[%s590] sm:$0xf]
        %v5683 = vld [vmem:[%s590 + $0x4] sm:$0xf]
        %v5684 = vld [vmem:[%s590 + $0x8] sm:$0xf]
        %v5685 = vld [vmem:[%s590 + $0xc] sm:$0xf]
        %v5686 = vpack.c.bf16 %v5680, %v5680
        %v5687 = vpack.c.bf16 %v5681, %v5681
        %v5692 = vunpack.c.l.b16 %v5682
        %v5693 = vunpack.c.l.b16 %v5683
        %v5694 = vunpack.c.l.b16 %v5684
        %v5695 = vunpack.c.l.b16 %v5685
        %v5696 = vpack.c.b16 %v5693, %v5692
        %v5697 = vpack.c.b16 %v5695, %v5694
        %v5699 = vsel %vm332, %v5696, 0
        %v5702 = vsel %vm332, %v5697, 0
        %v5705 = vsel %vm339, %v5686, 0
        %v5708 = vsel %vm339, %v5687, 0
        %5710 = vmatprep.subr.bf16.mxu0 %v5708
        %5711 = vmatpush1.bf16.msra.mxu0 %v5705
        %5712 = vmatprep.subr.bf16.mxu0 0
        %5713 = vmatpush1.bf16.msra.mxu0 0
        %5714 = vmatprep.subr.bf16.mxu0 0
        %5715 = vmatpush1.bf16.msra.mxu0 0
        %5716 = vmatprep.subr.bf16.mxu0 0
        %5717 = vmatpush1.bf16.msra.mxu0 0
        %5718 = vmatprep.subr.bf16.mxu0 0
        %5719 = vmatpush1.bf16.msra.mxu0 0
        %5720 = vmatprep.subr.bf16.mxu0 0
        %5721 = vmatpush1.bf16.msra.mxu0 0
        %5722 = vmatprep.subr.bf16.mxu0 0
        %5723 = vmatpush1.bf16.msra.mxu0 0
        %5724 = vmatprep.subr.bf16.mxu0 0
        %5725 = vmatpush1.bf16.msra.mxu0 0
        %5726 = vmatprep.subr.bf16.mxu0 0
        %5727 = vmatpush1.bf16.msra.mxu0 0
        %5728 = vmatprep.subr.bf16.mxu0 0
        %5729 = vmatpush1.bf16.msra.mxu0 0
        %5730 = vmatprep.subr.bf16.mxu0 0
        %5731 = vmatpush1.bf16.msra.mxu0 0
        %5732 = vmatprep.subr.bf16.mxu0 0
        %5733 = vmatpush1.bf16.msra.mxu0 0
        %5734 = vmatprep.subr.bf16.mxu0 0
        %5735 = vmatpush1.bf16.msra.mxu0 0
        %5736 = vmatprep.subr.bf16.mxu0 0
        %5737 = vmatpush1.bf16.msra.mxu0 0
        %5738 = vmatprep.subr.bf16.mxu0 0
        %5739 = vmatpush1.bf16.msra.mxu0 0
        %5740 = vmatprep.subr.bf16.mxu0 0
        %5741 = vmatpush1.bf16.msra.mxu0 0
        %5742 = vmatprep.mubr.bf16.mxu0 0
        %5743 = vmatmul.mubr.bf16.gmra.mrb[0].mxu0 %v5699
        %v5744 = vpop.f32.mrb[0].mxu0
        %v5745 = vadd.f32 0.0, %v5744
        %v5746 = vpop.f32.mrb[0].mxu0
        %v5747 = vadd.f32 0.0, %v5746
        %v5748 = vpop.f32.mrb[0].mxu0
        %v5749 = vadd.f32 0.0, %v5748
        %v5750 = vpop.f32.mrb[0].mxu0
        %v5751 = vadd.f32 0.0, %v5750
        %5752 = vmatprep.mubr.bf16.mxu0 0
        %5753 = vmatmul.mubr.bf16.gmra.mrb[0].mxu0 %v5702
        %v5754 = vpop.f32.mrb[0].mxu0
        %v5755 = vadd.f32 0.0, %v5754
        %v5756 = vpop.f32.mrb[0].mxu0
        %v5757 = vadd.f32 0.0, %v5756
        %v5758 = vpop.f32.mrb[0].mxu0
        %v5759 = vadd.f32 0.0, %v5758
        %v5760 = vpop.f32.mrb[0].mxu0
        %v5761 = vadd.f32 0.0, %v5760
        %5762 = vdwg.mxu0
        %v5763 = vadd.f32 %v5666, %v5745
        %v5764 = vadd.f32 %v5667, %v5747
        %v5765 = vadd.f32 %v5668, %v5749
        %v5766 = vadd.f32 %v5669, %v5751
        %v5767 = vadd.f32 %v5670, %v5755
        %v5768 = vadd.f32 %v5671, %v5757
        %v5769 = vadd.f32 %v5672, %v5759
        %v5770 = vadd.f32 %v5673, %v5761
        %v5771 = vld [vmem:[%s680] sm:$0xf]
        %v5772 = vld [vmem:[%s680 + $0x4] sm:$0xf]
        %v5773 = vld [vmem:[%s680 + $0x8] sm:$0xf]
        %v5774 = vld [vmem:[%s680 + $0xc] sm:$0xf]
        %v5775 = vpack.c.bf16 %v5395, %v5395
        %v5776 = vpack.c.bf16 %v5397, %v5397
        %v5781 = vunpack.c.l.b16 %v5771
        %v5782 = vunpack.c.l.b16 %v5772
        %v5783 = vunpack.c.l.b16 %v5773
        %v5784 = vunpack.c.l.b16 %v5774
        %v5785 = vpack.c.b16 %v5782, %v5781
        %v5786 = vpack.c.b16 %v5784, %v5783
        %v5788 = vsel %vm332, %v5785, 0
        %v5791 = vsel %vm332, %v5786, 0
        %v5794 = vsel %vm339, %v5775, 0
        %v5797 = vsel %vm339, %v5776, 0
        %5799 = vmatprep.subr.bf16.mxu0 %v5797
        %5800 = vmatpush1.bf16.msra.mxu0 %v5794
        %5801 = vmatprep.subr.bf16.mxu0 0
        %5802 = vmatpush1.bf16.msra.mxu0 0
        %5803 = vmatprep.subr.bf16.mxu0 0
        %5804 = vmatpush1.bf16.msra.mxu0 0
        %5805 = vmatprep.subr.bf16.mxu0 0
        %5806 = vmatpush1.bf16.msra.mxu0 0
        %5807 = vmatprep.subr.bf16.mxu0 0
        %5808 = vmatpush1.bf16.msra.mxu0 0
        %5809 = vmatprep.subr.bf16.mxu0 0
        %5810 = vmatpush1.bf16.msra.mxu0 0
        %5811 = vmatprep.subr.bf16.mxu0 0
        %5812 = vmatpush1.bf16.msra.mxu0 0
        %5813 = vmatprep.subr.bf16.mxu0 0
        %5814 = vmatpush1.bf16.msra.mxu0 0
        %5815 = vmatprep.subr.bf16.mxu0 0
        %5816 = vmatpush1.bf16.msra.mxu0 0
        %5817 = vmatprep.subr.bf16.mxu0 0
        %5818 = vmatpush1.bf16.msra.mxu0 0
        %5819 = vmatprep.subr.bf16.mxu0 0
        %5820 = vmatpush1.bf16.msra.mxu0 0
        %5821 = vmatprep.subr.bf16.mxu0 0
        %5822 = vmatpush1.bf16.msra.mxu0 0
        %5823 = vmatprep.subr.bf16.mxu0 0
        %5824 = vmatpush1.bf16.msra.mxu0 0
        %5825 = vmatprep.subr.bf16.mxu0 0
        %5826 = vmatpush1.bf16.msra.mxu0 0
        %5827 = vmatprep.subr.bf16.mxu0 0
        %5828 = vmatpush1.bf16.msra.mxu0 0
        %5829 = vmatprep.subr.bf16.mxu0 0
        %5830 = vmatpush1.bf16.msra.mxu0 0
        %5831 = vmatprep.mubr.bf16.mxu0 0
        %5832 = vmatmul.mubr.bf16.gmra.mrb[0].mxu0 %v5788
        %v5833 = vpop.f32.mrb[0].mxu0
        %v5834 = vadd.f32 0.0, %v5833
        %v5835 = vpop.f32.mrb[0].mxu0
        %v5836 = vadd.f32 0.0, %v5835
        %v5837 = vpop.f32.mrb[0].mxu0
        %v5838 = vadd.f32 0.0, %v5837
        %v5839 = vpop.f32.mrb[0].mxu0
        %v5840 = vadd.f32 0.0, %v5839
        %5841 = vmatprep.mubr.bf16.mxu0 0
        %5842 = vmatmul.mubr.bf16.gmra.mrb[0].mxu0 %v5791
        %v5843 = vpop.f32.mrb[0].mxu0
        %v5844 = vadd.f32 0.0, %v5843
        %v5845 = vpop.f32.mrb[0].mxu0
        %v5846 = vadd.f32 0.0, %v5845
        %v5847 = vpop.f32.mrb[0].mxu0
        %v5848 = vadd.f32 0.0, %v5847
        %v5849 = vpop.f32.mrb[0].mxu0
        %v5850 = vadd.f32 0.0, %v5849
        %5851 = vdwg.mxu0
        %v5852 = vadd.f32 %v5763, %v5834
        %v5853 = vadd.f32 %v5764, %v5836
        %v5854 = vadd.f32 %v5765, %v5838
        %v5855 = vadd.f32 %v5766, %v5840
        %v5856 = vadd.f32 %v5767, %v5844
        %v5857 = vadd.f32 %v5768, %v5846
        %v5858 = vadd.f32 %v5769, %v5848
        %v5859 = vadd.f32 %v5770, %v5850
        %5860 = vrot.lane.b32.xlu0 %v5395, 127
        %v5861 = vpop.permute.xlu0 %5860
        %5862 = vrot.lane.b32.xlu0 %v5397, 127
        %v5863 = vpop.permute.xlu0 %5862
        %v5864 = vsel %vm774, %v5861, %v5863
        %v5865 = vsel %vm774, %v5863, %v5861
        %v5866 = vsel %vm779, %v5864, 0.0
        %v5867 = vsel %vm780, %v5865, 0.0
        %v5868 = vld [vmem:[%s783] sm:$0xf]
        %v5869 = vld [vmem:[%s783 + $0x4] sm:$0xf]
        %v5870 = vld [vmem:[%s783 + $0x8] sm:$0xf]
        %v5871 = vld [vmem:[%s783 + $0xc] sm:$0xf]
        %v5872 = vpack.c.bf16 %v5866, %v5866
        %v5873 = vpack.c.bf16 %v5867, %v5867
        %v5878 = vunpack.c.l.b16 %v5868
        %v5879 = vunpack.c.l.b16 %v5869
        %v5880 = vunpack.c.l.b16 %v5870
        %v5881 = vunpack.c.l.b16 %v5871
        %v5882 = vpack.c.b16 %v5879, %v5878
        %v5883 = vpack.c.b16 %v5881, %v5880
        %v5885 = vsel %vm332, %v5882, 0
        %v5888 = vsel %vm332, %v5883, 0
        %v5891 = vsel %vm339, %v5872, 0
        %v5894 = vsel %vm339, %v5873, 0
        %5896 = vmatprep.subr.bf16.mxu0 %v5894
        %5897 = vmatpush1.bf16.msra.mxu0 %v5891
        %5898 = vmatprep.subr.bf16.mxu0 0
        %5899 = vmatpush1.bf16.msra.mxu0 0
        %5900 = vmatprep.subr.bf16.mxu0 0
        %5901 = vmatpush1.bf16.msra.mxu0 0
        %5902 = vmatprep.subr.bf16.mxu0 0
        %5903 = vmatpush1.bf16.msra.mxu0 0
        %5904 = vmatprep.subr.bf16.mxu0 0
        %5905 = vmatpush1.bf16.msra.mxu0 0
        %5906 = vmatprep.subr.bf16.mxu0 0
        %5907 = vmatpush1.bf16.msra.mxu0 0
        %5908 = vmatprep.subr.bf16.mxu0 0
        %5909 = vmatpush1.bf16.msra.mxu0 0
        %5910 = vmatprep.subr.bf16.mxu0 0
        %5911 = vmatpush1.bf16.msra.mxu0 0
        %5912 = vmatprep.subr.bf16.mxu0 0
        %5913 = vmatpush1.bf16.msra.mxu0 0
        %5914 = vmatprep.subr.bf16.mxu0 0
        %5915 = vmatpush1.bf16.msra.mxu0 0
        %5916 = vmatprep.subr.bf16.mxu0 0
        %5917 = vmatpush1.bf16.msra.mxu0 0
        %5918 = vmatprep.subr.bf16.mxu0 0
        %5919 = vmatpush1.bf16.msra.mxu0 0
        %5920 = vmatprep.subr.bf16.mxu0 0
        %5921 = vmatpush1.bf16.msra.mxu0 0
        %5922 = vmatprep.subr.bf16.mxu0 0
        %5923 = vmatpush1.bf16.msra.mxu0 0
        %5924 = vmatprep.subr.bf16.mxu0 0
        %5925 = vmatpush1.bf16.msra.mxu0 0
        %5926 = vmatprep.subr.bf16.mxu0 0
        %5927 = vmatpush1.bf16.msra.mxu0 0
        %5928 = vmatprep.mubr.bf16.mxu0 0
        %5929 = vmatmul.mubr.bf16.gmra.mrb[0].mxu0 %v5885
        %v5930 = vpop.f32.mrb[0].mxu0
        %v5931 = vadd.f32 0.0, %v5930
        %v5932 = vpop.f32.mrb[0].mxu0
        %v5933 = vadd.f32 0.0, %v5932
        %v5934 = vpop.f32.mrb[0].mxu0
        %v5935 = vadd.f32 0.0, %v5934
        %v5936 = vpop.f32.mrb[0].mxu0
        %v5937 = vadd.f32 0.0, %v5936
        %5938 = vmatprep.mubr.bf16.mxu0 0
        %5939 = vmatmul.mubr.bf16.gmra.mrb[0].mxu0 %v5888
        %v5940 = vpop.f32.mrb[0].mxu0
        %v5941 = vadd.f32 0.0, %v5940
        %v5942 = vpop.f32.mrb[0].mxu0
        %v5943 = vadd.f32 0.0, %v5942
        %v5944 = vpop.f32.mrb[0].mxu0
        %v5945 = vadd.f32 0.0, %v5944
        %v5946 = vpop.f32.mrb[0].mxu0
        %v5947 = vadd.f32 0.0, %v5946
        %5948 = vdwg.mxu0
        %v5949 = vadd.f32 %v5852, %v5931
        %v5950 = vadd.f32 %v5853, %v5933
        %v5951 = vadd.f32 %v5854, %v5935
        %v5952 = vadd.f32 %v5855, %v5937
        %v5953 = vadd.f32 %v5856, %v5941
        %v5954 = vadd.f32 %v5857, %v5943
        %v5955 = vadd.f32 %v5858, %v5945
        %v5956 = vadd.f32 %v5859, %v5947
        %5957 = vrot.lane.b32.xlu0 %v5395, 113
        %v5958 = vpop.permute.xlu0 %5957
        %5959 = vrot.lane.b32.xlu0 %v5397, 113
        %v5960 = vpop.permute.xlu0 %5959
        %v5961 = vsel %vm877, %v5958, %v5960
        %v5962 = vsel %vm877, %v5960, %v5958
        %v5963 = vsel %vm882, %v5961, 0.0
        %v5964 = vsel %vm883, %v5962, 0.0
        %v5965 = vld [vmem:[%s886] sm:$0xf]
        %v5966 = vld [vmem:[%s886 + $0x4] sm:$0xf]
        %v5967 = vld [vmem:[%s886 + $0x8] sm:$0xf]
        %v5968 = vld [vmem:[%s886 + $0xc] sm:$0xf]
        %v5969 = vpack.c.bf16 %v5963, %v5963
        %v5970 = vpack.c.bf16 %v5964, %v5964
        %v5975 = vunpack.c.l.b16 %v5965
        %v5976 = vunpack.c.l.b16 %v5966
        %v5977 = vunpack.c.l.b16 %v5967
        %v5978 = vunpack.c.l.b16 %v5968
        %v5979 = vpack.c.b16 %v5976, %v5975
        %v5980 = vpack.c.b16 %v5978, %v5977
        %v5982 = vsel %vm332, %v5979, 0
        %v5985 = vsel %vm332, %v5980, 0
        %v5988 = vsel %vm339, %v5969, 0
        %v5991 = vsel %vm339, %v5970, 0
        %5993 = vmatprep.subr.bf16.mxu0 %v5991
        %5994 = vmatpush1.bf16.msra.mxu0 %v5988
        %5995 = vmatprep.subr.bf16.mxu0 0
        %5996 = vmatpush1.bf16.msra.mxu0 0
        %5997 = vmatprep.subr.bf16.mxu0 0
        %5998 = vmatpush1.bf16.msra.mxu0 0
        %5999 = vmatprep.subr.bf16.mxu0 0
        %6000 = vmatpush1.bf16.msra.mxu0 0
        %6001 = vmatprep.subr.bf16.mxu0 0
        %6002 = vmatpush1.bf16.msra.mxu0 0
        %6003 = vmatprep.subr.bf16.mxu0 0
        %6004 = vmatpush1.bf16.msra.mxu0 0
        %6005 = vmatprep.subr.bf16.mxu0 0
        %6006 = vmatpush1.bf16.msra.mxu0 0
        %6007 = vmatprep.subr.bf16.mxu0 0
        %6008 = vmatpush1.bf16.msra.mxu0 0
        %6009 = vmatprep.subr.bf16.mxu0 0
        %6010 = vmatpush1.bf16.msra.mxu0 0
        %6011 = vmatprep.subr.bf16.mxu0 0
        %6012 = vmatpush1.bf16.msra.mxu0 0
        %6013 = vmatprep.subr.bf16.mxu0 0
        %6014 = vmatpush1.bf16.msra.mxu0 0
        %6015 = vmatprep.subr.bf16.mxu0 0
        %6016 = vmatpush1.bf16.msra.mxu0 0
        %6017 = vmatprep.subr.bf16.mxu0 0
        %6018 = vmatpush1.bf16.msra.mxu0 0
        %6019 = vmatprep.subr.bf16.mxu0 0
        %6020 = vmatpush1.bf16.msra.mxu0 0
        %6021 = vmatprep.subr.bf16.mxu0 0
        %6022 = vmatpush1.bf16.msra.mxu0 0
        %6023 = vmatprep.subr.bf16.mxu0 0
        %6024 = vmatpush1.bf16.msra.mxu0 0
        %6025 = vmatprep.mubr.bf16.mxu0 0
        %6026 = vmatmul.mubr.bf16.gmra.mrb[0].mxu0 %v5982
        %v6027 = vpop.f32.mrb[0].mxu0
        %v6028 = vadd.f32 0.0, %v6027
        %v6029 = vpop.f32.mrb[0].mxu0
        %v6030 = vadd.f32 0.0, %v6029
        %v6031 = vpop.f32.mrb[0].mxu0
        %v6032 = vadd.f32 0.0, %v6031
        %v6033 = vpop.f32.mrb[0].mxu0
        %v6034 = vadd.f32 0.0, %v6033
        %6035 = vmatprep.mubr.bf16.mxu0 0
        %6036 = vmatmul.mubr.bf16.gmra.mrb[0].mxu0 %v5985
        %v6037 = vpop.f32.mrb[0].mxu0
        %v6038 = vadd.f32 0.0, %v6037
        %v6039 = vpop.f32.mrb[0].mxu0
        %v6040 = vadd.f32 0.0, %v6039
        %v6041 = vpop.f32.mrb[0].mxu0
        %v6042 = vadd.f32 0.0, %v6041
        %v6043 = vpop.f32.mrb[0].mxu0
        %v6044 = vadd.f32 0.0, %v6043
        %6045 = vdwg.mxu0
        %v6046 = vadd.f32 %v5949, %v6028
        %v6047 = vadd.f32 %v5950, %v6030
        %v6048 = vadd.f32 %v5951, %v6032
        %v6049 = vadd.f32 %v5952, %v6034
        %v6050 = vadd.f32 %v5953, %v6038
        %v6051 = vadd.f32 %v5954, %v6040
        %v6052 = vadd.f32 %v5955, %v6042
        %v6053 = vadd.f32 %v5956, %v6044
        %6054 = vrot.lane.b32.xlu0 %v5395, 112
        %v6055 = vpop.permute.xlu0 %6054
        %6056 = vrot.lane.b32.xlu0 %v5397, 112
        %v6057 = vpop.permute.xlu0 %6056
        %v6058 = vsel %vm980, %v6055, %v6057
        %v6059 = vsel %vm980, %v6057, %v6055
        %v6060 = vsel %vm985, %v6058, 0.0
        %v6061 = vsel %vm986, %v6059, 0.0
        %v6062 = vld [vmem:[%s989] sm:$0xf]
        %v6063 = vld [vmem:[%s989 + $0x4] sm:$0xf]
        %v6064 = vld [vmem:[%s989 + $0x8] sm:$0xf]
        %v6065 = vld [vmem:[%s989 + $0xc] sm:$0xf]
        %v6066 = vpack.c.bf16 %v6060, %v6060
        %v6067 = vpack.c.bf16 %v6061, %v6061
        %v6072 = vunpack.c.l.b16 %v6062
        %v6073 = vunpack.c.l.b16 %v6063
        %v6074 = vunpack.c.l.b16 %v6064
        %v6075 = vunpack.c.l.b16 %v6065
        %v6076 = vpack.c.b16 %v6073, %v6072
        %v6077 = vpack.c.b16 %v6075, %v6074
        %v6079 = vsel %vm332, %v6076, 0
        %v6082 = vsel %vm332, %v6077, 0
        %v6085 = vsel %vm339, %v6066, 0
        %v6088 = vsel %vm339, %v6067, 0
        %6090 = vmatprep.subr.bf16.mxu0 %v6088
        %6091 = vmatpush1.bf16.msra.mxu0 %v6085
        %6092 = vmatprep.subr.bf16.mxu0 0
        %6093 = vmatpush1.bf16.msra.mxu0 0
        %6094 = vmatprep.subr.bf16.mxu0 0
        %6095 = vmatpush1.bf16.msra.mxu0 0
        %6096 = vmatprep.subr.bf16.mxu0 0
        %6097 = vmatpush1.bf16.msra.mxu0 0
        %6098 = vmatprep.subr.bf16.mxu0 0
        %6099 = vmatpush1.bf16.msra.mxu0 0
        %6100 = vmatprep.subr.bf16.mxu0 0
        %6101 = vmatpush1.bf16.msra.mxu0 0
        %6102 = vmatprep.subr.bf16.mxu0 0
        %6103 = vmatpush1.bf16.msra.mxu0 0
        %6104 = vmatprep.subr.bf16.mxu0 0
        %6105 = vmatpush1.bf16.msra.mxu0 0
        %6106 = vmatprep.subr.bf16.mxu0 0
        %6107 = vmatpush1.bf16.msra.mxu0 0
        %6108 = vmatprep.subr.bf16.mxu0 0
        %6109 = vmatpush1.bf16.msra.mxu0 0
        %6110 = vmatprep.subr.bf16.mxu0 0
        %6111 = vmatpush1.bf16.msra.mxu0 0
        %6112 = vmatprep.subr.bf16.mxu0 0
        %6113 = vmatpush1.bf16.msra.mxu0 0
        %6114 = vmatprep.subr.bf16.mxu0 0
        %6115 = vmatpush1.bf16.msra.mxu0 0
        %6116 = vmatprep.subr.bf16.mxu0 0
        %6117 = vmatpush1.bf16.msra.mxu0 0
        %6118 = vmatprep.subr.bf16.mxu0 0
        %6119 = vmatpush1.bf16.msra.mxu0 0
        %6120 = vmatprep.subr.bf16.mxu0 0
        %6121 = vmatpush1.bf16.msra.mxu0 0
        %6122 = vmatprep.mubr.bf16.mxu0 0
        %6123 = vmatmul.mubr.bf16.gmra.mrb[0].mxu0 %v6079
        %v6124 = vpop.f32.mrb[0].mxu0
        %v6125 = vadd.f32 0.0, %v6124
        %v6126 = vpop.f32.mrb[0].mxu0
        %v6127 = vadd.f32 0.0, %v6126
        %v6128 = vpop.f32.mrb[0].mxu0
        %v6129 = vadd.f32 0.0, %v6128
        %v6130 = vpop.f32.mrb[0].mxu0
        %v6131 = vadd.f32 0.0, %v6130
        %6132 = vmatprep.mubr.bf16.mxu0 0
        %6133 = vmatmul.mubr.bf16.gmra.mrb[0].mxu0 %v6082
        %v6134 = vpop.f32.mrb[0].mxu0
        %v6135 = vadd.f32 0.0, %v6134
        %v6136 = vpop.f32.mrb[0].mxu0
        %v6137 = vadd.f32 0.0, %v6136
        %v6138 = vpop.f32.mrb[0].mxu0
        %v6139 = vadd.f32 0.0, %v6138
        %v6140 = vpop.f32.mrb[0].mxu0
        %v6141 = vadd.f32 0.0, %v6140
        %6142 = vdwg.mxu0
        %v6143 = vadd.f32 %v6046, %v6125
        %v6144 = vadd.f32 %v6047, %v6127
        %v6145 = vadd.f32 %v6048, %v6129
        %v6146 = vadd.f32 %v6049, %v6131
        %v6147 = vadd.f32 %v6050, %v6135
        %v6148 = vadd.f32 %v6051, %v6137
        %v6149 = vadd.f32 %v6052, %v6139
        %v6150 = vadd.f32 %v6053, %v6141
        %6151 = vrot.lane.b32.xlu0 %v5395, 111
        %v6152 = vpop.permute.xlu0 %6151
        %6153 = vrot.lane.b32.xlu0 %v5397, 111
        %v6154 = vpop.permute.xlu0 %6153
        %v6155 = vsel %vm1083, %v6152, %v6154
        %v6156 = vsel %vm1083, %v6154, %v6152
        %v6157 = vsel %vm1088, %v6155, 0.0
        %v6158 = vsel %vm1089, %v6156, 0.0
        %v6159 = vld [vmem:[%s1092] sm:$0xf]
        %v6160 = vld [vmem:[%s1092 + $0x4] sm:$0xf]
        %v6161 = vld [vmem:[%s1092 + $0x8] sm:$0xf]
        %v6162 = vld [vmem:[%s1092 + $0xc] sm:$0xf]
        %v6163 = vpack.c.bf16 %v6157, %v6157
        %v6164 = vpack.c.bf16 %v6158, %v6158
        %v6169 = vunpack.c.l.b16 %v6159
        %v6170 = vunpack.c.l.b16 %v6160
        %v6171 = vunpack.c.l.b16 %v6161
        %v6172 = vunpack.c.l.b16 %v6162
        %v6173 = vpack.c.b16 %v6170, %v6169
        %v6174 = vpack.c.b16 %v6172, %v6171
        %v6176 = vsel %vm332, %v6173, 0
        %v6179 = vsel %vm332, %v6174, 0
        %v6182 = vsel %vm339, %v6163, 0
        %v6185 = vsel %vm339, %v6164, 0
        %6187 = vmatprep.subr.bf16.mxu0 %v6185
        %6188 = vmatpush1.bf16.msra.mxu0 %v6182
        %6189 = vmatprep.subr.bf16.mxu0 0
        %6190 = vmatpush1.bf16.msra.mxu0 0
        %6191 = vmatprep.subr.bf16.mxu0 0
        %6192 = vmatpush1.bf16.msra.mxu0 0
        %6193 = vmatprep.subr.bf16.mxu0 0
        %6194 = vmatpush1.bf16.msra.mxu0 0
        %6195 = vmatprep.subr.bf16.mxu0 0
        %6196 = vmatpush1.bf16.msra.mxu0 0
        %6197 = vmatprep.subr.bf16.mxu0 0
        %6198 = vmatpush1.bf16.msra.mxu0 0
        %6199 = vmatprep.subr.bf16.mxu0 0
        %6200 = vmatpush1.bf16.msra.mxu0 0
        %6201 = vmatprep.subr.bf16.mxu0 0
        %6202 = vmatpush1.bf16.msra.mxu0 0
        %6203 = vmatprep.subr.bf16.mxu0 0
        %6204 = vmatpush1.bf16.msra.mxu0 0
        %6205 = vmatprep.subr.bf16.mxu0 0
        %6206 = vmatpush1.bf16.msra.mxu0 0
        %6207 = vmatprep.subr.bf16.mxu0 0
        %6208 = vmatpush1.bf16.msra.mxu0 0
        %6209 = vmatprep.subr.bf16.mxu0 0
        %6210 = vmatpush1.bf16.msra.mxu0 0
        %6211 = vmatprep.subr.bf16.mxu0 0
        %6212 = vmatpush1.bf16.msra.mxu0 0
        %6213 = vmatprep.subr.bf16.mxu0 0
        %6214 = vmatpush1.bf16.msra.mxu0 0
        %6215 = vmatprep.subr.bf16.mxu0 0
        %6216 = vmatpush1.bf16.msra.mxu0 0
        %6217 = vmatprep.subr.bf16.mxu0 0
        %6218 = vmatpush1.bf16.msra.mxu0 0
        %6219 = vmatprep.mubr.bf16.mxu0 0
        %6220 = vmatmul.mubr.bf16.gmra.mrb[0].mxu0 %v6176
        %v6221 = vpop.f32.mrb[0].mxu0
        %v6222 = vadd.f32 0.0, %v6221
        %v6223 = vpop.f32.mrb[0].mxu0
        %v6224 = vadd.f32 0.0, %v6223
        %v6225 = vpop.f32.mrb[0].mxu0
        %v6226 = vadd.f32 0.0, %v6225
        %v6227 = vpop.f32.mrb[0].mxu0
        %v6228 = vadd.f32 0.0, %v6227
        %6229 = vmatprep.mubr.bf16.mxu0 0
        %6230 = vmatmul.mubr.bf16.gmra.mrb[0].mxu0 %v6179
        %v6231 = vpop.f32.mrb[0].mxu0
        %v6232 = vadd.f32 0.0, %v6231
        %v6233 = vpop.f32.mrb[0].mxu0
        %v6234 = vadd.f32 0.0, %v6233
        %v6235 = vpop.f32.mrb[0].mxu0
        %v6236 = vadd.f32 0.0, %v6235
        %v6237 = vpop.f32.mrb[0].mxu0
        %v6238 = vadd.f32 0.0, %v6237
        %6239 = vdwg.mxu0
        %v6240 = vadd.f32 %v6143, %v6222
        %v6241 = vadd.f32 %v6144, %v6224
        %v6242 = vadd.f32 %v6145, %v6226
        %v6243 = vadd.f32 %v6146, %v6228
        %v6244 = vadd.f32 %v6147, %v6232
        %v6245 = vadd.f32 %v6148, %v6234
        %v6246 = vadd.f32 %v6149, %v6236
        %v6247 = vadd.f32 %v6150, %v6238
        %v6248 = vadd.f32 %v6240, %v1185
        %v6249 = vadd.f32 %v6241, %v1185
        %v6250 = vadd.f32 %v6242, %v1190
        %v6251 = vadd.f32 %v6243, %v1190
        %v6252 = vadd.f32 %v6244, %v1195
        %v6253 = vadd.f32 %v6245, %v1195
        %v6254 = vadd.f32 %v6246, %v1200
        %v6255 = vadd.f32 %v6247, %v1200
        %v6256 = vmax.f32 %v6248, 0.0
        %v6257 = vmax.f32 %v6249, 0.0
        %v6258 = vmax.f32 %v6250, 0.0
        %v6259 = vmax.f32 %v6251, 0.0
        %v6260 = vmax.f32 %v6252, 0.0
        %v6261 = vmax.f32 %v6253, 0.0
        %v6262 = vmax.f32 %v6254, 0.0
        %v6263 = vmax.f32 %v6255, 0.0
        %6264 = vrot.lane.b32.xlu0 %v6256, 17
        %v6265 = vpop.permute.xlu0 %6264
        %6266 = vrot.lane.b32.xlu0 %v6258, 17
        %v6267 = vpop.permute.xlu0 %6266
        %6268 = vrot.lane.b32.xlu0 %v6260, 17
        %v6269 = vpop.permute.xlu0 %6268
        %6270 = vrot.lane.b32.xlu0 %v6262, 17
        %v6271 = vpop.permute.xlu0 %6270
        %6272 = vrot.lane.b32.xlu0 %v6257, 17
        %v6273 = vpop.permute.xlu0 %6272
        %6274 = vrot.lane.b32.xlu0 %v6259, 17
        %v6275 = vpop.permute.xlu0 %6274
        %6276 = vrot.lane.b32.xlu0 %v6261, 17
        %v6277 = vpop.permute.xlu0 %6276
        %6278 = vrot.lane.b32.xlu0 %v6263, 17
        %v6279 = vpop.permute.xlu0 %6278
        %v6280 = vsel %vm287, %v6265, %v6273
        %v6281 = vsel %vm287, %v6267, %v6275
        %v6282 = vsel %vm287, %v6269, %v6277
        %v6283 = vsel %vm287, %v6271, %v6279
        %v6284 = vsel %vm287, %v6273, %v6265
        %v6285 = vsel %vm287, %v6275, %v6267
        %v6286 = vsel %vm287, %v6277, %v6269
        %v6287 = vsel %vm287, %v6279, %v6271
        %v6288 = vsel %vm292, %v6284, 0.0
        %v6289 = vsel %vm293, %v6280, 0.0
        %v6290 = vsel %vm292, %v6285, 0.0
        %v6291 = vsel %vm293, %v6281, 0.0
        %v6292 = vsel %vm292, %v6286, 0.0
        %v6293 = vsel %vm293, %v6282, 0.0
        %v6294 = vsel %vm292, %v6287, 0.0
        %v6295 = vsel %vm293, %v6283, 0.0
        %v6296 = vld [vmem:[%s3] sm:$0xf]
        %v6297 = vld [vmem:[%s3 + $0x4] sm:$0xf]
        %v6298 = vpack.c.bf16 %v6290, %v6288
        %v6299 = vpack.c.bf16 %v6291, %v6289
        %v6300 = vpack.c.bf16 %v6294, %v6292
        %v6301 = vpack.c.bf16 %v6295, %v6293
        %6302 = vrot.lane.b32.xlu0 %v6256, 16
        %v6303 = vpop.permute.xlu0 %6302
        %6304 = vrot.lane.b32.xlu0 %v6258, 16
        %v6305 = vpop.permute.xlu0 %6304
        %6306 = vrot.lane.b32.xlu0 %v6260, 16
        %v6307 = vpop.permute.xlu0 %6306
        %6308 = vrot.lane.b32.xlu0 %v6262, 16
        %v6309 = vpop.permute.xlu0 %6308
        %6310 = vrot.lane.b32.xlu0 %v6257, 16
        %v6311 = vpop.permute.xlu0 %6310
        %6312 = vrot.lane.b32.xlu0 %v6259, 16
        %v6313 = vpop.permute.xlu0 %6312
        %6314 = vrot.lane.b32.xlu0 %v6261, 16
        %v6315 = vpop.permute.xlu0 %6314
        %6316 = vrot.lane.b32.xlu0 %v6263, 16
        %v6317 = vpop.permute.xlu0 %6316
        %v6318 = vsel %vm306, %v6303, %v6311
        %v6319 = vsel %vm306, %v6305, %v6313
        %v6320 = vsel %vm306, %v6307, %v6315
        %v6321 = vsel %vm306, %v6309, %v6317
        %v6322 = vsel %vm306, %v6311, %v6303
        %v6323 = vsel %vm306, %v6313, %v6305
        %v6324 = vsel %vm306, %v6315, %v6307
        %v6325 = vsel %vm306, %v6317, %v6309
        %v6326 = vsel %vm311, %v6322, 0.0
        %v6327 = vsel %vm312, %v6318, 0.0
        %v6328 = vsel %vm311, %v6323, 0.0
        %v6329 = vsel %vm312, %v6319, 0.0
        %v6330 = vsel %vm311, %v6324, 0.0
        %v6331 = vsel %vm312, %v6320, 0.0
        %v6332 = vsel %vm311, %v6325, 0.0
        %v6333 = vsel %vm312, %v6321, 0.0
        %v6334 = vld [vmem:[%s1288] sm:$0xf]
        %v6335 = vld [vmem:[%s1288 + $0x4] sm:$0xf]
        %v6336 = vpack.c.bf16 %v6328, %v6326
        %v6337 = vpack.c.bf16 %v6329, %v6327
        %v6338 = vpack.c.bf16 %v6332, %v6330
        %v6339 = vpack.c.bf16 %v6333, %v6331
        %v6342 = vunpack.c.l.b16 %v6334
        %v6343 = vunpack.c.l.b16 %v6335
        %v6344 = vpack.c.b16 %v6343, %v6342
        %v6346 = vsel %vm1300, %v6344, 0
        %6348 = vmatprep.subr.bf16.mxu0 %v6337
        %6349 = vmatpush1.bf16.msra.mxu0 %v6336
        %6350 = vmatprep.subr.bf16.mxu0 %v6339
        %6351 = vmatpush1.bf16.msra.mxu0 %v6338
        %6352 = vmatprep.subr.bf16.mxu0 0
        %6353 = vmatpush1.bf16.msra.mxu0 0
        %6354 = vmatprep.subr.bf16.mxu0 0
        %6355 = vmatpush1.bf16.msra.mxu0 0
        %6356 = vmatprep.subr.bf16.mxu0 0
        %6357 = vmatpush1.bf16.msra.mxu0 0
        %6358 = vmatprep.subr.bf16.mxu0 0
        %6359 = vmatpush1.bf16.msra.mxu0 0
        %6360 = vmatprep.subr.bf16.mxu0 0
        %6361 = vmatpush1.bf16.msra.mxu0 0
        %6362 = vmatprep.subr.bf16.mxu0 0
        %6363 = vmatpush1.bf16.msra.mxu0 0
        %6364 = vmatprep.subr.bf16.mxu0 0
        %6365 = vmatpush1.bf16.msra.mxu0 0
        %6366 = vmatprep.subr.bf16.mxu0 0
        %6367 = vmatpush1.bf16.msra.mxu0 0
        %6368 = vmatprep.subr.bf16.mxu0 0
        %6369 = vmatpush1.bf16.msra.mxu0 0
        %6370 = vmatprep.subr.bf16.mxu0 0
        %6371 = vmatpush1.bf16.msra.mxu0 0
        %6372 = vmatprep.subr.bf16.mxu0 0
        %6373 = vmatpush1.bf16.msra.mxu0 0
        %6374 = vmatprep.subr.bf16.mxu0 0
        %6375 = vmatpush1.bf16.msra.mxu0 0
        %6376 = vmatprep.subr.bf16.mxu0 0
        %6377 = vmatpush1.bf16.msra.mxu0 0
        %6378 = vmatprep.subr.bf16.mxu0 0
        %6379 = vmatpush1.bf16.msra.mxu0 0
        %6380 = vmatprep.mubr.bf16.mxu0 0
        %6381 = vmatmul.mubr.bf16.gmra.mrb[0].mxu0 %v6346
        %v6382 = vpop.f32.mrb[0].mxu0
        %v6383 = vadd.f32 0.0, %v6382
        %v6384 = vpop.f32.mrb[0].mxu0
        %v6385 = vadd.f32 0.0, %v6384
        %v6386 = vpop.f32.mrb[0].mxu0
        %v6387 = vadd.f32 0.0, %v6386
        %v6388 = vpop.f32.mrb[0].mxu0
        %v6389 = vadd.f32 0.0, %v6388
        %6390 = vdwg.mxu0
        %v6393 = vunpack.c.l.b16 %v6296
        %v6394 = vunpack.c.l.b16 %v6297
        %v6395 = vpack.c.b16 %v6394, %v6393
        %v6397 = vsel %vm1300, %v6395, 0
        %6399 = vmatprep.subr.bf16.mxu0 %v6299
        %6400 = vmatpush1.bf16.msra.mxu0 %v6298
        %6401 = vmatprep.subr.bf16.mxu0 %v6301
        %6402 = vmatpush1.bf16.msra.mxu0 %v6300
        %6403 = vmatprep.subr.bf16.mxu0 0
        %6404 = vmatpush1.bf16.msra.mxu0 0
        %6405 = vmatprep.subr.bf16.mxu0 0
        %6406 = vmatpush1.bf16.msra.mxu0 0
        %6407 = vmatprep.subr.bf16.mxu0 0
        %6408 = vmatpush1.bf16.msra.mxu0 0
        %6409 = vmatprep.subr.bf16.mxu0 0
        %6410 = vmatpush1.bf16.msra.mxu0 0
        %6411 = vmatprep.subr.bf16.mxu0 0
        %6412 = vmatpush1.bf16.msra.mxu0 0
        %6413 = vmatprep.subr.bf16.mxu0 0
        %6414 = vmatpush1.bf16.msra.mxu0 0
        %6415 = vmatprep.subr.bf16.mxu0 0
        %6416 = vmatpush1.bf16.msra.mxu0 0
        %6417 = vmatprep.subr.bf16.mxu0 0
        %6418 = vmatpush1.bf16.msra.mxu0 0
        %6419 = vmatprep.subr.bf16.mxu0 0
        %6420 = vmatpush1.bf16.msra.mxu0 0
        %6421 = vmatprep.subr.bf16.mxu0 0
        %6422 = vmatpush1.bf16.msra.mxu0 0
        %6423 = vmatprep.subr.bf16.mxu0 0
        %6424 = vmatpush1.bf16.msra.mxu0 0
        %6425 = vmatprep.subr.bf16.mxu0 0
        %6426 = vmatpush1.bf16.msra.mxu0 0
        %6427 = vmatprep.subr.bf16.mxu0 0
        %6428 = vmatpush1.bf16.msra.mxu0 0
        %6429 = vmatprep.subr.bf16.mxu0 0
        %6430 = vmatpush1.bf16.msra.mxu0 0
        %6431 = vmatprep.mubr.bf16.mxu0 0
        %6432 = vmatmul.mubr.bf16.gmra.mrb[0].mxu0 %v6397
        %v6433 = vpop.f32.mrb[0].mxu0
        %v6434 = vadd.f32 %v6383, %v6433
        %v6435 = vpop.f32.mrb[0].mxu0
        %v6436 = vadd.f32 %v6385, %v6435
        %v6437 = vpop.f32.mrb[0].mxu0
        %v6438 = vadd.f32 %v6387, %v6437
        %v6439 = vpop.f32.mrb[0].mxu0
        %v6440 = vadd.f32 %v6389, %v6439
        %6441 = vdwg.mxu0
        %6442 = vrot.lane.b32.xlu0 %v6256, 15
        %v6443 = vpop.permute.xlu0 %6442
        %6444 = vrot.lane.b32.xlu0 %v6258, 15
        %v6445 = vpop.permute.xlu0 %6444
        %6446 = vrot.lane.b32.xlu0 %v6260, 15
        %v6447 = vpop.permute.xlu0 %6446
        %6448 = vrot.lane.b32.xlu0 %v6262, 15
        %v6449 = vpop.permute.xlu0 %6448
        %6450 = vrot.lane.b32.xlu0 %v6257, 15
        %v6451 = vpop.permute.xlu0 %6450
        %6452 = vrot.lane.b32.xlu0 %v6259, 15
        %v6453 = vpop.permute.xlu0 %6452
        %6454 = vrot.lane.b32.xlu0 %v6261, 15
        %v6455 = vpop.permute.xlu0 %6454
        %6456 = vrot.lane.b32.xlu0 %v6263, 15
        %v6457 = vpop.permute.xlu0 %6456
        %v6458 = vsel %vm478, %v6443, %v6451
        %v6459 = vsel %vm478, %v6445, %v6453
        %v6460 = vsel %vm478, %v6447, %v6455
        %v6461 = vsel %vm478, %v6449, %v6457
        %v6462 = vsel %vm478, %v6451, %v6443
        %v6463 = vsel %vm478, %v6453, %v6445
        %v6464 = vsel %vm478, %v6455, %v6447
        %v6465 = vsel %vm478, %v6457, %v6449
        %v6466 = vsel %vm483, %v6462, 0.0
        %v6467 = vsel %vm484, %v6458, 0.0
        %v6468 = vsel %vm483, %v6463, 0.0
        %v6469 = vsel %vm484, %v6459, 0.0
        %v6470 = vsel %vm483, %v6464, 0.0
        %v6471 = vsel %vm484, %v6460, 0.0
        %v6472 = vsel %vm483, %v6465, 0.0
        %v6473 = vsel %vm484, %v6461, 0.0
        %v6474 = vld [vmem:[%s1430] sm:$0xf]
        %v6475 = vld [vmem:[%s1430 + $0x4] sm:$0xf]
        %v6476 = vpack.c.bf16 %v6468, %v6466
        %v6477 = vpack.c.bf16 %v6469, %v6467
        %v6478 = vpack.c.bf16 %v6472, %v6470
        %v6479 = vpack.c.bf16 %v6473, %v6471
        %v6482 = vunpack.c.l.b16 %v6474
        %v6483 = vunpack.c.l.b16 %v6475
        %v6484 = vpack.c.b16 %v6483, %v6482
        %v6486 = vsel %vm1300, %v6484, 0
        %6488 = vmatprep.subr.bf16.mxu0 %v6477
        %6489 = vmatpush1.bf16.msra.mxu0 %v6476
        %6490 = vmatprep.subr.bf16.mxu0 %v6479
        %6491 = vmatpush1.bf16.msra.mxu0 %v6478
        %6492 = vmatprep.subr.bf16.mxu0 0
        %6493 = vmatpush1.bf16.msra.mxu0 0
        %6494 = vmatprep.subr.bf16.mxu0 0
        %6495 = vmatpush1.bf16.msra.mxu0 0
        %6496 = vmatprep.subr.bf16.mxu0 0
        %6497 = vmatpush1.bf16.msra.mxu0 0
        %6498 = vmatprep.subr.bf16.mxu0 0
        %6499 = vmatpush1.bf16.msra.mxu0 0
        %6500 = vmatprep.subr.bf16.mxu0 0
        %6501 = vmatpush1.bf16.msra.mxu0 0
        %6502 = vmatprep.subr.bf16.mxu0 0
        %6503 = vmatpush1.bf16.msra.mxu0 0
        %6504 = vmatprep.subr.bf16.mxu0 0
        %6505 = vmatpush1.bf16.msra.mxu0 0
        %6506 = vmatprep.subr.bf16.mxu0 0
        %6507 = vmatpush1.bf16.msra.mxu0 0
        %6508 = vmatprep.subr.bf16.mxu0 0
        %6509 = vmatpush1.bf16.msra.mxu0 0
        %6510 = vmatprep.subr.bf16.mxu0 0
        %6511 = vmatpush1.bf16.msra.mxu0 0
        %6512 = vmatprep.subr.bf16.mxu0 0
        %6513 = vmatpush1.bf16.msra.mxu0 0
        %6514 = vmatprep.subr.bf16.mxu0 0
        %6515 = vmatpush1.bf16.msra.mxu0 0
        %6516 = vmatprep.subr.bf16.mxu0 0
        %6517 = vmatpush1.bf16.msra.mxu0 0
        %6518 = vmatprep.subr.bf16.mxu0 0
        %6519 = vmatpush1.bf16.msra.mxu0 0
        %6520 = vmatprep.mubr.bf16.mxu0 0
        %6521 = vmatmul.mubr.bf16.gmra.mrb[0].mxu0 %v6486
        %v6522 = vpop.f32.mrb[0].mxu0
        %v6523 = vadd.f32 0.0, %v6522
        %v6524 = vpop.f32.mrb[0].mxu0
        %v6525 = vadd.f32 0.0, %v6524
        %v6526 = vpop.f32.mrb[0].mxu0
        %v6527 = vadd.f32 0.0, %v6526
        %v6528 = vpop.f32.mrb[0].mxu0
        %v6529 = vadd.f32 0.0, %v6528
        %6530 = vdwg.mxu0
        %v6531 = vadd.f32 %v6434, %v6523
        %v6532 = vadd.f32 %v6436, %v6525
        %v6533 = vadd.f32 %v6438, %v6527
        %v6534 = vadd.f32 %v6440, %v6529
        %6535 = vrot.lane.b32.xlu0 %v6256, 1
        %v6536 = vpop.permute.xlu0 %6535
        %6537 = vrot.lane.b32.xlu0 %v6258, 1
        %v6538 = vpop.permute.xlu0 %6537
        %6539 = vrot.lane.b32.xlu0 %v6260, 1
        %v6540 = vpop.permute.xlu0 %6539
        %6541 = vrot.lane.b32.xlu0 %v6262, 1
        %v6542 = vpop.permute.xlu0 %6541
        %6543 = vrot.lane.b32.xlu0 %v6257, 1
        %v6544 = vpop.permute.xlu0 %6543
        %6545 = vrot.lane.b32.xlu0 %v6259, 1
        %v6546 = vpop.permute.xlu0 %6545
        %6547 = vrot.lane.b32.xlu0 %v6261, 1
        %v6548 = vpop.permute.xlu0 %6547
        %6549 = vrot.lane.b32.xlu0 %v6263, 1
        %v6550 = vpop.permute.xlu0 %6549
        %v6551 = vsel %vm581, %v6536, %v6544
        %v6552 = vsel %vm581, %v6538, %v6546
        %v6553 = vsel %vm581, %v6540, %v6548
        %v6554 = vsel %vm581, %v6542, %v6550
        %v6555 = vsel %vm581, %v6544, %v6536
        %v6556 = vsel %vm581, %v6546, %v6538
        %v6557 = vsel %vm581, %v6548, %v6540
        %v6558 = vsel %vm581, %v6550, %v6542
        %v6559 = vsel %vm586, %v6555, 0.0
        %v6560 = vsel %vm587, %v6551, 0.0
        %v6561 = vsel %vm586, %v6556, 0.0
        %v6562 = vsel %vm587, %v6552, 0.0
        %v6563 = vsel %vm586, %v6557, 0.0
        %v6564 = vsel %vm587, %v6553, 0.0
        %v6565 = vsel %vm586, %v6558, 0.0
        %v6566 = vsel %vm587, %v6554, 0.0
        %v6567 = vld [vmem:[%s1524] sm:$0xf]
        %v6568 = vld [vmem:[%s1524 + $0x4] sm:$0xf]
        %v6569 = vpack.c.bf16 %v6561, %v6559
        %v6570 = vpack.c.bf16 %v6562, %v6560
        %v6571 = vpack.c.bf16 %v6565, %v6563
        %v6572 = vpack.c.bf16 %v6566, %v6564
        %v6575 = vunpack.c.l.b16 %v6567
        %v6576 = vunpack.c.l.b16 %v6568
        %v6577 = vpack.c.b16 %v6576, %v6575
        %v6579 = vsel %vm1300, %v6577, 0
        %6581 = vmatprep.subr.bf16.mxu0 %v6570
        %6582 = vmatpush1.bf16.msra.mxu0 %v6569
        %6583 = vmatprep.subr.bf16.mxu0 %v6572
        %6584 = vmatpush1.bf16.msra.mxu0 %v6571
        %6585 = vmatprep.subr.bf16.mxu0 0
        %6586 = vmatpush1.bf16.msra.mxu0 0
        %6587 = vmatprep.subr.bf16.mxu0 0
        %6588 = vmatpush1.bf16.msra.mxu0 0
        %6589 = vmatprep.subr.bf16.mxu0 0
        %6590 = vmatpush1.bf16.msra.mxu0 0
        %6591 = vmatprep.subr.bf16.mxu0 0
        %6592 = vmatpush1.bf16.msra.mxu0 0
        %6593 = vmatprep.subr.bf16.mxu0 0
        %6594 = vmatpush1.bf16.msra.mxu0 0
        %6595 = vmatprep.subr.bf16.mxu0 0
        %6596 = vmatpush1.bf16.msra.mxu0 0
        %6597 = vmatprep.subr.bf16.mxu0 0
        %6598 = vmatpush1.bf16.msra.mxu0 0
        %6599 = vmatprep.subr.bf16.mxu0 0
        %6600 = vmatpush1.bf16.msra.mxu0 0
        %6601 = vmatprep.subr.bf16.mxu0 0
        %6602 = vmatpush1.bf16.msra.mxu0 0
        %6603 = vmatprep.subr.bf16.mxu0 0
        %6604 = vmatpush1.bf16.msra.mxu0 0
        %6605 = vmatprep.subr.bf16.mxu0 0
        %6606 = vmatpush1.bf16.msra.mxu0 0
        %6607 = vmatprep.subr.bf16.mxu0 0
        %6608 = vmatpush1.bf16.msra.mxu0 0
        %6609 = vmatprep.subr.bf16.mxu0 0
        %6610 = vmatpush1.bf16.msra.mxu0 0
        %6611 = vmatprep.subr.bf16.mxu0 0
        %6612 = vmatpush1.bf16.msra.mxu0 0
        %6613 = vmatprep.mubr.bf16.mxu0 0
        %6614 = vmatmul.mubr.bf16.gmra.mrb[0].mxu0 %v6579
        %v6615 = vpop.f32.mrb[0].mxu0
        %v6616 = vadd.f32 0.0, %v6615
        %v6617 = vpop.f32.mrb[0].mxu0
        %v6618 = vadd.f32 0.0, %v6617
        %v6619 = vpop.f32.mrb[0].mxu0
        %v6620 = vadd.f32 0.0, %v6619
        %v6621 = vpop.f32.mrb[0].mxu0
        %v6622 = vadd.f32 0.0, %v6621
        %6623 = vdwg.mxu0
        %v6624 = vadd.f32 %v6531, %v6616
        %v6625 = vadd.f32 %v6532, %v6618
        %v6626 = vadd.f32 %v6533, %v6620
        %v6627 = vadd.f32 %v6534, %v6622
        %v6628 = vld [vmem:[%s1586] sm:$0xf]
        %v6629 = vld [vmem:[%s1586 + $0x4] sm:$0xf]
        %v6630 = vpack.c.bf16 %v6258, %v6256
        %v6631 = vpack.c.bf16 %v6259, %v6257
        %v6632 = vpack.c.bf16 %v6262, %v6260
        %v6633 = vpack.c.bf16 %v6263, %v6261
        %v6636 = vunpack.c.l.b16 %v6628
        %v6637 = vunpack.c.l.b16 %v6629
        %v6638 = vpack.c.b16 %v6637, %v6636
        %v6640 = vsel %vm1300, %v6638, 0
        %6642 = vmatprep.subr.bf16.mxu0 %v6631
        %6643 = vmatpush1.bf16.msra.mxu0 %v6630
        %6644 = vmatprep.subr.bf16.mxu0 %v6633
        %6645 = vmatpush1.bf16.msra.mxu0 %v6632
        %6646 = vmatprep.subr.bf16.mxu0 0
        %6647 = vmatpush1.bf16.msra.mxu0 0
        %6648 = vmatprep.subr.bf16.mxu0 0
        %6649 = vmatpush1.bf16.msra.mxu0 0
        %6650 = vmatprep.subr.bf16.mxu0 0
        %6651 = vmatpush1.bf16.msra.mxu0 0
        %6652 = vmatprep.subr.bf16.mxu0 0
        %6653 = vmatpush1.bf16.msra.mxu0 0
        %6654 = vmatprep.subr.bf16.mxu0 0
        %6655 = vmatpush1.bf16.msra.mxu0 0
        %6656 = vmatprep.subr.bf16.mxu0 0
        %6657 = vmatpush1.bf16.msra.mxu0 0
        %6658 = vmatprep.subr.bf16.mxu0 0
        %6659 = vmatpush1.bf16.msra.mxu0 0
        %6660 = vmatprep.subr.bf16.mxu0 0
        %6661 = vmatpush1.bf16.msra.mxu0 0
        %6662 = vmatprep.subr.bf16.mxu0 0
        %6663 = vmatpush1.bf16.msra.mxu0 0
        %6664 = vmatprep.subr.bf16.mxu0 0
        %6665 = vmatpush1.bf16.msra.mxu0 0
        %6666 = vmatprep.subr.bf16.mxu0 0
        %6667 = vmatpush1.bf16.msra.mxu0 0
        %6668 = vmatprep.subr.bf16.mxu0 0
        %6669 = vmatpush1.bf16.msra.mxu0 0
        %6670 = vmatprep.subr.bf16.mxu0 0
        %6671 = vmatpush1.bf16.msra.mxu0 0
        %6672 = vmatprep.subr.bf16.mxu0 0
        %6673 = vmatpush1.bf16.msra.mxu0 0
        %6674 = vmatprep.mubr.bf16.mxu0 0
        %6675 = vmatmul.mubr.bf16.gmra.mrb[0].mxu0 %v6640
        %v6676 = vpop.f32.mrb[0].mxu0
        %v6677 = vadd.f32 0.0, %v6676
        %v6678 = vpop.f32.mrb[0].mxu0
        %v6679 = vadd.f32 0.0, %v6678
        %v6680 = vpop.f32.mrb[0].mxu0
        %v6681 = vadd.f32 0.0, %v6680
        %v6682 = vpop.f32.mrb[0].mxu0
        %v6683 = vadd.f32 0.0, %v6682
        %6684 = vdwg.mxu0
        %v6685 = vadd.f32 %v6624, %v6677
        %v6686 = vadd.f32 %v6625, %v6679
        %v6687 = vadd.f32 %v6626, %v6681
        %v6688 = vadd.f32 %v6627, %v6683
        %6689 = vrot.lane.b32.xlu0 %v6256, 127
        %v6690 = vpop.permute.xlu0 %6689
        %6691 = vrot.lane.b32.xlu0 %v6258, 127
        %v6692 = vpop.permute.xlu0 %6691
        %6693 = vrot.lane.b32.xlu0 %v6260, 127
        %v6694 = vpop.permute.xlu0 %6693
        %6695 = vrot.lane.b32.xlu0 %v6262, 127
        %v6696 = vpop.permute.xlu0 %6695
        %6697 = vrot.lane.b32.xlu0 %v6257, 127
        %v6698 = vpop.permute.xlu0 %6697
        %6699 = vrot.lane.b32.xlu0 %v6259, 127
        %v6700 = vpop.permute.xlu0 %6699
        %6701 = vrot.lane.b32.xlu0 %v6261, 127
        %v6702 = vpop.permute.xlu0 %6701
        %6703 = vrot.lane.b32.xlu0 %v6263, 127
        %v6704 = vpop.permute.xlu0 %6703
        %v6705 = vsel %vm774, %v6690, %v6698
        %v6706 = vsel %vm774, %v6692, %v6700
        %v6707 = vsel %vm774, %v6694, %v6702
        %v6708 = vsel %vm774, %v6696, %v6704
        %v6709 = vsel %vm774, %v6698, %v6690
        %v6710 = vsel %vm774, %v6700, %v6692
        %v6711 = vsel %vm774, %v6702, %v6694
        %v6712 = vsel %vm774, %v6704, %v6696
        %v6713 = vsel %vm779, %v6705, 0.0
        %v6714 = vsel %vm780, %v6709, 0.0
        %v6715 = vsel %vm779, %v6706, 0.0
        %v6716 = vsel %vm780, %v6710, 0.0
        %v6717 = vsel %vm779, %v6707, 0.0
        %v6718 = vsel %vm780, %v6711, 0.0
        %v6719 = vsel %vm779, %v6708, 0.0
        %v6720 = vsel %vm780, %v6712, 0.0
        %v6721 = vld [vmem:[%s1680] sm:$0xf]
        %v6722 = vld [vmem:[%s1680 + $0x4] sm:$0xf]
        %v6723 = vpack.c.bf16 %v6715, %v6713
        %v6724 = vpack.c.bf16 %v6716, %v6714
        %v6725 = vpack.c.bf16 %v6719, %v6717
        %v6726 = vpack.c.bf16 %v6720, %v6718
        %v6729 = vunpack.c.l.b16 %v6721
        %v6730 = vunpack.c.l.b16 %v6722
        %v6731 = vpack.c.b16 %v6730, %v6729
        %v6733 = vsel %vm1300, %v6731, 0
        %6735 = vmatprep.subr.bf16.mxu0 %v6724
        %6736 = vmatpush1.bf16.msra.mxu0 %v6723
        %6737 = vmatprep.subr.bf16.mxu0 %v6726
        %6738 = vmatpush1.bf16.msra.mxu0 %v6725
        %6739 = vmatprep.subr.bf16.mxu0 0
        %6740 = vmatpush1.bf16.msra.mxu0 0
        %6741 = vmatprep.subr.bf16.mxu0 0
        %6742 = vmatpush1.bf16.msra.mxu0 0
        %6743 = vmatprep.subr.bf16.mxu0 0
        %6744 = vmatpush1.bf16.msra.mxu0 0
        %6745 = vmatprep.subr.bf16.mxu0 0
        %6746 = vmatpush1.bf16.msra.mxu0 0
        %6747 = vmatprep.subr.bf16.mxu0 0
        %6748 = vmatpush1.bf16.msra.mxu0 0
        %6749 = vmatprep.subr.bf16.mxu0 0
        %6750 = vmatpush1.bf16.msra.mxu0 0
        %6751 = vmatprep.subr.bf16.mxu0 0
        %6752 = vmatpush1.bf16.msra.mxu0 0
        %6753 = vmatprep.subr.bf16.mxu0 0
        %6754 = vmatpush1.bf16.msra.mxu0 0
        %6755 = vmatprep.subr.bf16.mxu0 0
        %6756 = vmatpush1.bf16.msra.mxu0 0
        %6757 = vmatprep.subr.bf16.mxu0 0
        %6758 = vmatpush1.bf16.msra.mxu0 0
        %6759 = vmatprep.subr.bf16.mxu0 0
        %6760 = vmatpush1.bf16.msra.mxu0 0
        %6761 = vmatprep.subr.bf16.mxu0 0
        %6762 = vmatpush1.bf16.msra.mxu0 0
        %6763 = vmatprep.subr.bf16.mxu0 0
        %6764 = vmatpush1.bf16.msra.mxu0 0
        %6765 = vmatprep.subr.bf16.mxu0 0
        %6766 = vmatpush1.bf16.msra.mxu0 0
        %6767 = vmatprep.mubr.bf16.mxu0 0
        %6768 = vmatmul.mubr.bf16.gmra.mrb[0].mxu0 %v6733
        %v6769 = vpop.f32.mrb[0].mxu0
        %v6770 = vadd.f32 0.0, %v6769
        %v6771 = vpop.f32.mrb[0].mxu0
        %v6772 = vadd.f32 0.0, %v6771
        %v6773 = vpop.f32.mrb[0].mxu0
        %v6774 = vadd.f32 0.0, %v6773
        %v6775 = vpop.f32.mrb[0].mxu0
        %v6776 = vadd.f32 0.0, %v6775
        %6777 = vdwg.mxu0
        %v6778 = vadd.f32 %v6685, %v6770
        %v6779 = vadd.f32 %v6686, %v6772
        %v6780 = vadd.f32 %v6687, %v6774
        %v6781 = vadd.f32 %v6688, %v6776
        %6782 = vrot.lane.b32.xlu0 %v6256, 113
        %v6783 = vpop.permute.xlu0 %6782
        %6784 = vrot.lane.b32.xlu0 %v6258, 113
        %v6785 = vpop.permute.xlu0 %6784
        %6786 = vrot.lane.b32.xlu0 %v6260, 113
        %v6787 = vpop.permute.xlu0 %6786
        %6788 = vrot.lane.b32.xlu0 %v6262, 113
        %v6789 = vpop.permute.xlu0 %6788
        %6790 = vrot.lane.b32.xlu0 %v6257, 113
        %v6791 = vpop.permute.xlu0 %6790
        %6792 = vrot.lane.b32.xlu0 %v6259, 113
        %v6793 = vpop.permute.xlu0 %6792
        %6794 = vrot.lane.b32.xlu0 %v6261, 113
        %v6795 = vpop.permute.xlu0 %6794
        %6796 = vrot.lane.b32.xlu0 %v6263, 113
        %v6797 = vpop.permute.xlu0 %6796
        %v6798 = vsel %vm877, %v6783, %v6791
        %v6799 = vsel %vm877, %v6785, %v6793
        %v6800 = vsel %vm877, %v6787, %v6795
        %v6801 = vsel %vm877, %v6789, %v6797
        %v6802 = vsel %vm877, %v6791, %v6783
        %v6803 = vsel %vm877, %v6793, %v6785
        %v6804 = vsel %vm877, %v6795, %v6787
        %v6805 = vsel %vm877, %v6797, %v6789
        %v6806 = vsel %vm882, %v6798, 0.0
        %v6807 = vsel %vm883, %v6802, 0.0
        %v6808 = vsel %vm882, %v6799, 0.0
        %v6809 = vsel %vm883, %v6803, 0.0
        %v6810 = vsel %vm882, %v6800, 0.0
        %v6811 = vsel %vm883, %v6804, 0.0
        %v6812 = vsel %vm882, %v6801, 0.0
        %v6813 = vsel %vm883, %v6805, 0.0
        %v6814 = vld [vmem:[%s1774] sm:$0xf]
        %v6815 = vld [vmem:[%s1774 + $0x4] sm:$0xf]
        %v6816 = vpack.c.bf16 %v6808, %v6806
        %v6817 = vpack.c.bf16 %v6809, %v6807
        %v6818 = vpack.c.bf16 %v6812, %v6810
        %v6819 = vpack.c.bf16 %v6813, %v6811
        %v6822 = vunpack.c.l.b16 %v6814
        %v6823 = vunpack.c.l.b16 %v6815
        %v6824 = vpack.c.b16 %v6823, %v6822
        %v6826 = vsel %vm1300, %v6824, 0
        %6828 = vmatprep.subr.bf16.mxu0 %v6817
        %6829 = vmatpush1.bf16.msra.mxu0 %v6816
        %6830 = vmatprep.subr.bf16.mxu0 %v6819
        %6831 = vmatpush1.bf16.msra.mxu0 %v6818
        %6832 = vmatprep.subr.bf16.mxu0 0
        %6833 = vmatpush1.bf16.msra.mxu0 0
        %6834 = vmatprep.subr.bf16.mxu0 0
        %6835 = vmatpush1.bf16.msra.mxu0 0
        %6836 = vmatprep.subr.bf16.mxu0 0
        %6837 = vmatpush1.bf16.msra.mxu0 0
        %6838 = vmatprep.subr.bf16.mxu0 0
        %6839 = vmatpush1.bf16.msra.mxu0 0
        %6840 = vmatprep.subr.bf16.mxu0 0
        %6841 = vmatpush1.bf16.msra.mxu0 0
        %6842 = vmatprep.subr.bf16.mxu0 0
        %6843 = vmatpush1.bf16.msra.mxu0 0
        %6844 = vmatprep.subr.bf16.mxu0 0
        %6845 = vmatpush1.bf16.msra.mxu0 0
        %6846 = vmatprep.subr.bf16.mxu0 0
        %6847 = vmatpush1.bf16.msra.mxu0 0
        %6848 = vmatprep.subr.bf16.mxu0 0
        %6849 = vmatpush1.bf16.msra.mxu0 0
        %6850 = vmatprep.subr.bf16.mxu0 0
        %6851 = vmatpush1.bf16.msra.mxu0 0
        %6852 = vmatprep.subr.bf16.mxu0 0
        %6853 = vmatpush1.bf16.msra.mxu0 0
        %6854 = vmatprep.subr.bf16.mxu0 0
        %6855 = vmatpush1.bf16.msra.mxu0 0
        %6856 = vmatprep.subr.bf16.mxu0 0
        %6857 = vmatpush1.bf16.msra.mxu0 0
        %6858 = vmatprep.subr.bf16.mxu0 0
        %6859 = vmatpush1.bf16.msra.mxu0 0
        %6860 = vmatprep.mubr.bf16.mxu0 0
        %6861 = vmatmul.mubr.bf16.gmra.mrb[0].mxu0 %v6826
        %v6862 = vpop.f32.mrb[0].mxu0
        %v6863 = vadd.f32 0.0, %v6862
        %v6864 = vpop.f32.mrb[0].mxu0
        %v6865 = vadd.f32 0.0, %v6864
        %v6866 = vpop.f32.mrb[0].mxu0
        %v6867 = vadd.f32 0.0, %v6866
        %v6868 = vpop.f32.mrb[0].mxu0
        %v6869 = vadd.f32 0.0, %v6868
        %6870 = vdwg.mxu0
        %v6871 = vadd.f32 %v6778, %v6863
        %v6872 = vadd.f32 %v6779, %v6865
        %v6873 = vadd.f32 %v6780, %v6867
        %v6874 = vadd.f32 %v6781, %v6869
        %6875 = vrot.lane.b32.xlu0 %v6256, 112
        %v6876 = vpop.permute.xlu0 %6875
        %6877 = vrot.lane.b32.xlu0 %v6258, 112
        %v6878 = vpop.permute.xlu0 %6877
        %6879 = vrot.lane.b32.xlu0 %v6260, 112
        %v6880 = vpop.permute.xlu0 %6879
        %6881 = vrot.lane.b32.xlu0 %v6262, 112
        %v6882 = vpop.permute.xlu0 %6881
        %6883 = vrot.lane.b32.xlu0 %v6257, 112
        %v6884 = vpop.permute.xlu0 %6883
        %6885 = vrot.lane.b32.xlu0 %v6259, 112
        %v6886 = vpop.permute.xlu0 %6885
        %6887 = vrot.lane.b32.xlu0 %v6261, 112
        %v6888 = vpop.permute.xlu0 %6887
        %6889 = vrot.lane.b32.xlu0 %v6263, 112
        %v6890 = vpop.permute.xlu0 %6889
        %v6891 = vsel %vm980, %v6876, %v6884
        %v6892 = vsel %vm980, %v6878, %v6886
        %v6893 = vsel %vm980, %v6880, %v6888
        %v6894 = vsel %vm980, %v6882, %v6890
        %v6895 = vsel %vm980, %v6884, %v6876
        %v6896 = vsel %vm980, %v6886, %v6878
        %v6897 = vsel %vm980, %v6888, %v6880
        %v6898 = vsel %vm980, %v6890, %v6882
        %v6899 = vsel %vm985, %v6891, 0.0
        %v6900 = vsel %vm986, %v6895, 0.0
        %v6901 = vsel %vm985, %v6892, 0.0
        %v6902 = vsel %vm986, %v6896, 0.0
        %v6903 = vsel %vm985, %v6893, 0.0
        %v6904 = vsel %vm986, %v6897, 0.0
        %v6905 = vsel %vm985, %v6894, 0.0
        %v6906 = vsel %vm986, %v6898, 0.0
        %v6907 = vld [vmem:[%s1868] sm:$0xf]
        %v6908 = vld [vmem:[%s1868 + $0x4] sm:$0xf]
        %v6909 = vpack.c.bf16 %v6901, %v6899
        %v6910 = vpack.c.bf16 %v6902, %v6900
        %v6911 = vpack.c.bf16 %v6905, %v6903
        %v6912 = vpack.c.bf16 %v6906, %v6904
        %v6915 = vunpack.c.l.b16 %v6907
        %v6916 = vunpack.c.l.b16 %v6908
        %v6917 = vpack.c.b16 %v6916, %v6915
        %v6919 = vsel %vm1300, %v6917, 0
        %6921 = vmatprep.subr.bf16.mxu0 %v6910
        %6922 = vmatpush1.bf16.msra.mxu0 %v6909
        %6923 = vmatprep.subr.bf16.mxu0 %v6912
        %6924 = vmatpush1.bf16.msra.mxu0 %v6911
        %6925 = vmatprep.subr.bf16.mxu0 0
        %6926 = vmatpush1.bf16.msra.mxu0 0
        %6927 = vmatprep.subr.bf16.mxu0 0
        %6928 = vmatpush1.bf16.msra.mxu0 0
        %6929 = vmatprep.subr.bf16.mxu0 0
        %6930 = vmatpush1.bf16.msra.mxu0 0
        %6931 = vmatprep.subr.bf16.mxu0 0
        %6932 = vmatpush1.bf16.msra.mxu0 0
        %6933 = vmatprep.subr.bf16.mxu0 0
        %6934 = vmatpush1.bf16.msra.mxu0 0
        %6935 = vmatprep.subr.bf16.mxu0 0
        %6936 = vmatpush1.bf16.msra.mxu0 0
        %6937 = vmatprep.subr.bf16.mxu0 0
        %6938 = vmatpush1.bf16.msra.mxu0 0
        %6939 = vmatprep.subr.bf16.mxu0 0
        %6940 = vmatpush1.bf16.msra.mxu0 0
        %6941 = vmatprep.subr.bf16.mxu0 0
        %6942 = vmatpush1.bf16.msra.mxu0 0
        %6943 = vmatprep.subr.bf16.mxu0 0
        %6944 = vmatpush1.bf16.msra.mxu0 0
        %6945 = vmatprep.subr.bf16.mxu0 0
        %6946 = vmatpush1.bf16.msra.mxu0 0
        %6947 = vmatprep.subr.bf16.mxu0 0
        %6948 = vmatpush1.bf16.msra.mxu0 0
        %6949 = vmatprep.subr.bf16.mxu0 0
        %6950 = vmatpush1.bf16.msra.mxu0 0
        %6951 = vmatprep.subr.bf16.mxu0 0
        %6952 = vmatpush1.bf16.msra.mxu0 0
        %6953 = vmatprep.mubr.bf16.mxu0 0
        %6954 = vmatmul.mubr.bf16.gmra.mrb[0].mxu0 %v6919
        %v6955 = vpop.f32.mrb[0].mxu0
        %v6956 = vadd.f32 0.0, %v6955
        %v6957 = vpop.f32.mrb[0].mxu0
        %v6958 = vadd.f32 0.0, %v6957
        %v6959 = vpop.f32.mrb[0].mxu0
        %v6960 = vadd.f32 0.0, %v6959
        %v6961 = vpop.f32.mrb[0].mxu0
        %v6962 = vadd.f32 0.0, %v6961
        %6963 = vdwg.mxu0
        %v6964 = vadd.f32 %v6871, %v6956
        %v6965 = vadd.f32 %v6872, %v6958
        %v6966 = vadd.f32 %v6873, %v6960
        %v6967 = vadd.f32 %v6874, %v6962
        %6968 = vrot.lane.b32.xlu0 %v6256, 111
        %v6969 = vpop.permute.xlu0 %6968
        %6970 = vrot.lane.b32.xlu0 %v6258, 111
        %v6971 = vpop.permute.xlu0 %6970
        %6972 = vrot.lane.b32.xlu0 %v6260, 111
        %v6973 = vpop.permute.xlu0 %6972
        %6974 = vrot.lane.b32.xlu0 %v6262, 111
        %v6975 = vpop.permute.xlu0 %6974
        %6976 = vrot.lane.b32.xlu0 %v6257, 111
        %v6977 = vpop.permute.xlu0 %6976
        %6978 = vrot.lane.b32.xlu0 %v6259, 111
        %v6979 = vpop.permute.xlu0 %6978
        %6980 = vrot.lane.b32.xlu0 %v6261, 111
        %v6981 = vpop.permute.xlu0 %6980
        %6982 = vrot.lane.b32.xlu0 %v6263, 111
        %v6983 = vpop.permute.xlu0 %6982
        %v6984 = vsel %vm1083, %v6969, %v6977
        %v6985 = vsel %vm1083, %v6971, %v6979
        %v6986 = vsel %vm1083, %v6973, %v6981
        %v6987 = vsel %vm1083, %v6975, %v6983
        %v6988 = vsel %vm1083, %v6977, %v6969
        %v6989 = vsel %vm1083, %v6979, %v6971
        %v6990 = vsel %vm1083, %v6981, %v6973
        %v6991 = vsel %vm1083, %v6983, %v6975
        %v6992 = vsel %vm1088, %v6984, 0.0
        %v6993 = vsel %vm1089, %v6988, 0.0
        %v6994 = vsel %vm1088, %v6985, 0.0
        %v6995 = vsel %vm1089, %v6989, 0.0
        %v6996 = vsel %vm1088, %v6986, 0.0
        %v6997 = vsel %vm1089, %v6990, 0.0
        %v6998 = vsel %vm1088, %v6987, 0.0
        %v6999 = vsel %vm1089, %v6991, 0.0
        %v7000 = vld [vmem:[%s1962] sm:$0xf]
        %v7001 = vld [vmem:[%s1962 + $0x4] sm:$0xf]
        %v7002 = vpack.c.bf16 %v6994, %v6992
        %v7003 = vpack.c.bf16 %v6995, %v6993
        %v7004 = vpack.c.bf16 %v6998, %v6996
        %v7005 = vpack.c.bf16 %v6999, %v6997
        %v7008 = vunpack.c.l.b16 %v7000
        %v7009 = vunpack.c.l.b16 %v7001
        %v7010 = vpack.c.b16 %v7009, %v7008
        %v7012 = vsel %vm1300, %v7010, 0
        %7014 = vmatprep.subr.bf16.mxu0 %v7003
        %7015 = vmatpush1.bf16.msra.mxu0 %v7002
        %7016 = vmatprep.subr.bf16.mxu0 %v7005
        %7017 = vmatpush1.bf16.msra.mxu0 %v7004
        %7018 = vmatprep.subr.bf16.mxu0 0
        %7019 = vmatpush1.bf16.msra.mxu0 0
        %7020 = vmatprep.subr.bf16.mxu0 0
        %7021 = vmatpush1.bf16.msra.mxu0 0
        %7022 = vmatprep.subr.bf16.mxu0 0
        %7023 = vmatpush1.bf16.msra.mxu0 0
        %7024 = vmatprep.subr.bf16.mxu0 0
        %7025 = vmatpush1.bf16.msra.mxu0 0
        %7026 = vmatprep.subr.bf16.mxu0 0
        %7027 = vmatpush1.bf16.msra.mxu0 0
        %7028 = vmatprep.subr.bf16.mxu0 0
        %7029 = vmatpush1.bf16.msra.mxu0 0
        %7030 = vmatprep.subr.bf16.mxu0 0
        %7031 = vmatpush1.bf16.msra.mxu0 0
        %7032 = vmatprep.subr.bf16.mxu0 0
        %7033 = vmatpush1.bf16.msra.mxu0 0
        %7034 = vmatprep.subr.bf16.mxu0 0
        %7035 = vmatpush1.bf16.msra.mxu0 0
        %7036 = vmatprep.subr.bf16.mxu0 0
        %7037 = vmatpush1.bf16.msra.mxu0 0
        %7038 = vmatprep.subr.bf16.mxu0 0
        %7039 = vmatpush1.bf16.msra.mxu0 0
        %7040 = vmatprep.subr.bf16.mxu0 0
        %7041 = vmatpush1.bf16.msra.mxu0 0
        %7042 = vmatprep.subr.bf16.mxu0 0
        %7043 = vmatpush1.bf16.msra.mxu0 0
        %7044 = vmatprep.subr.bf16.mxu0 0
        %7045 = vmatpush1.bf16.msra.mxu0 0
        %7046 = vmatprep.mubr.bf16.mxu0 0
        %7047 = vmatmul.mubr.bf16.gmra.mrb[0].mxu0 %v7012
        %v7048 = vpop.f32.mrb[0].mxu0
        %v7049 = vadd.f32 0.0, %v7048
        %v7050 = vpop.f32.mrb[0].mxu0
        %v7051 = vadd.f32 0.0, %v7050
        %v7052 = vpop.f32.mrb[0].mxu0
        %v7053 = vadd.f32 0.0, %v7052
        %v7054 = vpop.f32.mrb[0].mxu0
        %v7055 = vadd.f32 0.0, %v7054
        %7056 = vdwg.mxu0
        %v7057 = vadd.f32 %v6964, %v7049
        %v7058 = vadd.f32 %v6965, %v7051
        %v7059 = vadd.f32 %v6966, %v7053
        %v7060 = vadd.f32 %v6967, %v7055
        %v7061 = vadd.f32 %v7057, %v2027
        %v7062 = vadd.f32 %v7058, %v2027
        %v7063 = vadd.f32 %v7059, %v2032
        %v7064 = vadd.f32 %v7060, %v2032
        %s7065 = scalar_lea.vmem %s220, 96 [#allocation2]
        %7066 = vst [vmem:[%s7065] sm:$0xff] %v7061
        %7067 = vst [vmem:[%s7065 + $0x8] sm:$0xff] %v7062
        %7068 = vst [vmem:[%s7065 + $0x10] sm:$0xff] %v7063
        %7069 = vst [vmem:[%s7065 + $0x18] sm:$0xff] %v7064
        %s7070 = sand.u32 %s137, 1
        %s7071 = scalar_lea.sflag [#allocation3], %s7070
        %s7072 = sand.u32 %s137, 1
        %s7073 = smul.addr %s7072, 128
        %s7074 = scalar_lea.vmem [#allocation2], %s7073
        // Predicated region
        $region41: #{tpu_custom_call.1} parent=39 // pred_check
          %p7075 = pneg %p147
        $region42: #{tpu_custom_call.1} parent=39 // pred_check_branch
          %7077 = sbr.rel (%p7075) target = $region44
        $region43: #{tpu_custom_call.1} parent=39 // pred_region
          %s7078 = smul.u32 4, %s19
          %s7080 = ssub.s32 2048, 2048
          %7081 = vsyncadd %s7071, %s7080
          %s7082 = smul.addr %s7078, 4
          %s7083 = smul.addr %s7082, 128
          %s7084 = scalar_lea.hbm %s5, %s7083
          %s7085 = sshll.u32 %s7074, 4
          %s7086 = int_to_ptr.vmem [resolvable:$true] %s7085
          %7091 = dma.vmem_to_hbm [thread:$0]  %s7086, 2048, %s7084, %s7071, 256, 256, 16
        $region44: #{tpu_custom_call.1} parent=39 // pred_fallthru
          _
      $region40: #{tpu_custom_call.1} parent=5 // pred_fallthru
        _
      %p7092 = scmp.le.s32.totalorder 2, %s14
      // Predicated region
      $region45: #{tpu_custom_call.1} parent=5 // pred_check
        %p7093 = pneg %p7092
      $region46: #{tpu_custom_call.1} parent=5 // pred_check_branch
        %7095 = sbr.rel (%p7093) target = $region48
      $region47: #{tpu_custom_call.1} parent=5 // pred_region
        %s7096 = ssub.s32 %s14, 2
        // Predicated region
        $region49: #{tpu_custom_call.1} parent=47 // pred_check
          %p7097 = pneg %p153
        $region50: #{tpu_custom_call.1} parent=47 // pred_check_branch
          %7099 = sbr.rel (%p7097) target = $region52
        $region51: #{tpu_custom_call.1} parent=47 // pred_region
          %s7100 = sand.u32 %s138, 1
          %s7101 = scalar_lea.sflag [#allocation3], %s7100
          %s7102 = sand.u32 %s138, 1
          %s7103 = smul.addr %s7102, 128
          %s7104 = scalar_lea.vmem [#allocation2], %s7103
          %7105 = dma.done %s7101, 2048
        $region52: #{tpu_custom_call.1} parent=47 // pred_fallthru
          _
      $region48: #{tpu_custom_call.1} parent=5 // pred_fallthru
        _
    $region6: #{tpu_custom_call.1} parent=1 // loop_footer
      %s18 = sadd.s32 1, %s14
    $region7: #{tpu_custom_call.1} parent=1 // loop_footer_branch
      %13 = sbr.rel target = $region3
    $region8: #{tpu_custom_call.1} parent=1 // loop_exit
      _
    %7106 = vsyncpa [#allocation3], 1
    %s7107 = scalar_lea.sflag [#allocation3], 1
    %7108 = vsyncpa %s7107, 1

</llo_original>
